<compile_context>
chip_gen: v7x
topology: tpu7x:2x2x1
jax: 0.10.0
libtpu: 0.0.40
codegen_flags: <defaults>
</compile_context>

<pallas_src>
import jax
import jax.numpy as jnp
from jax.experimental import pallas as pl
from jax.experimental.pallas import tpu as pltpu


# ---------------------------------------------------------------------------
# Pallas kernel 1: fused matmul + bias + ReLU (one call per conv layer)
# ---------------------------------------------------------------------------
def _conv_mm_kernel(p_ref, w_ref, b_ref, o_ref):
    acc = jnp.dot(p_ref[...], w_ref[...], preferred_element_type=jnp.float32)
    acc = jnp.maximum(acc + b_ref[...], 0.0)        # bias + ReLU in f32
    o_ref[...] = acc.astype(o_ref.dtype)


def conv_matmul_relu(patches, w, b):
    """relu((M, K) @ (K, N) + b), whole arrays resident in VMEM, bf16 out."""
    M, K = patches.shape
    K2, N = w.shape
    assert K == K2, (K, K2)
    return pl.pallas_call(
        _conv_mm_kernel,
        out_shape=jax.ShapeDtypeStruct((M, N), jnp.bfloat16),
        in_specs=[pl.BlockSpec(memory_space=pltpu.MemorySpace.VMEM)] * 3,
        out_specs=pl.BlockSpec(memory_space=pltpu.MemorySpace.VMEM),
    )(patches, w, b)


# ---------------------------------------------------------------------------
# Pallas kernel 2: fully fused FC stage (policy + value, hidden + heads)
#   grid=(2,) over two independent 384-wide hidden-unit chunks:
#     chunk 0 = policy hidden units   0..383
#     chunk 1 = policy hidden 384..511  +  value hidden 0..255
#   Each chunk: h = leaky_relu(flat @ Wh + bh); out = h @ W2 + b2  (1, 128).
#   The two chunk outputs are summed in the wrapper (head is linear in h).
# ---------------------------------------------------------------------------
def _fc_fused_kernel(flat_ref, wh_ref, bh_ref, w2_ref, b2_ref, o_ref):
    h = jnp.dot(flat_ref[...], wh_ref[...], preferred_element_type=jnp.float32)
    h = h + bh_ref[...]
    h = jnp.maximum(h, 0.01 * h)                    # LeakyReLU (PyTorch slope)
    out = jnp.dot(h.astype(jnp.bfloat16), w2_ref[...],
                  preferred_element_type=jnp.float32)
    o_ref[...] = out + b2_ref[...]


def fc_fused(flat, wh_c, bh_c, w2_c, b2_c):
    # flat (1, 3136) bf16 ; wh_c (2, 3136, 384) bf16 ; bh_c (2, 1, 384) f32
    # w2_c (2, 384, 128) bf16 ; b2_c (2, 1, 128) f32  ->  out (2, 1, 128) f32
    return pl.pallas_call(
        _fc_fused_kernel,
        out_shape=jax.ShapeDtypeStruct((2, 1, 128), jnp.float32),
        grid=(2,),
        in_specs=[
            pl.BlockSpec((1, 3136), lambda i: (0, 0)),
            pl.BlockSpec((None, 3136, 384), lambda i: (i, 0, 0)),
            pl.BlockSpec((None, 1, 384), lambda i: (i, 0, 0)),
            pl.BlockSpec((None, 384, 128), lambda i: (i, 0, 0)),
            pl.BlockSpec((None, 1, 128), lambda i: (i, 0, 0)),
        ],
        out_specs=pl.BlockSpec((None, 1, 128), lambda i: (i, 0, 0)),
        compiler_params=pltpu.CompilerParams(
            dimension_semantics=("parallel",)),
    )(flat, wh_c, bh_c, w2_c, b2_c)


# ---------------------------------------------------------------------------
# Glue: im2col (layout plumbing on tiny arrays, plain JAX)
# ---------------------------------------------------------------------------
def im2col(x_hwc, kh, kw, stride):
    H, W, C = x_hwc.shape
    oh = (H - kh) // stride + 1
    ow = (W - kw) // stride + 1
    cols = []
    for i in range(kh):
        for j in range(kw):
            cols.append(
                x_hwc[i: i + stride * oh: stride, j: j + stride * ow: stride, :])
    p = jnp.stack(cols, axis=2)                     # (oh, ow, kh*kw, C)
    return p.reshape(oh * ow, kh * kw * C)


# ---------------------------------------------------------------------------
# A2CNetwork forward (observation is HWC; PyTorch permutes HWC -> CHW)
# ---------------------------------------------------------------------------
def a2c_forward(obs_hwc, kp):
    x = obs_hwc.astype(jnp.bfloat16)

    p1 = im2col(x, 8, 8, 4)                                   # (400, 256)
    y1 = conv_matmul_relu(p1, kp["c1_w"], kp["c1_b"])         # (400, 128) [32 valid]
    y1 = y1[:, :32].reshape(20, 20, 32)

    p2 = im2col(y1, 4, 4, 2)                                  # (81, 512)
    y2 = conv_matmul_relu(p2, kp["c2_w"], kp["c2_b"])         # (81, 128) [64 valid]
    y2 = y2[:, :64].reshape(9, 9, 64)

    p3 = im2col(y2, 3, 3, 1)                                  # (49, 576)
    y3 = conv_matmul_relu(p3, kp["c3_w"], kp["c3_b"])         # (49, 64)

    # HWC-order flatten (zero-cost reshape); FC weight rows are pre-permuted
    # offline from PyTorch's CHW order to match, so no runtime transpose.
    flat = y3.reshape(1, 7 * 7 * 64)

    out = fc_fused(flat, kp["wh_c"], kp["bh_c"], kp["w2_c"], kp["b2_c"])
    head = out[0] + out[1]                                    # (1, 128)
    policy = head[:, 0:4]
    v = head[:, 4:5]
    return policy, v


# ---------------------------------------------------------------------------
# Parameter init (PyTorch-style uniform(-1/sqrt(fan_in), ...)) — canonical
# PyTorch layouts (OIHW convs, (in, out) FC with CHW-flatten row order).
# ---------------------------------------------------------------------------
def init_params(key):
    ks = jax.random.split(key, 14)

    def u(k, shape, fan_in):
        bound = 1.0 / float(fan_in) ** 0.5
        return jax.random.uniform(k, shape, jnp.float32, -bound, bound)

    return {
        "conv1_w": u(ks[0], (32, 4, 8, 8), 4 * 8 * 8),
        "conv1_b": u(ks[1], (32,), 4 * 8 * 8),
        "conv2_w": u(ks[2], (64, 32, 4, 4), 32 * 4 * 4),
        "conv2_b": u(ks[3], (64,), 32 * 4 * 4),
        "conv3_w": u(ks[4], (64, 64, 3, 3), 64 * 3 * 3),
        "conv3_b": u(ks[5], (64,), 64 * 3 * 3),
        "p1_w": u(ks[6], (7 * 7 * 64, 512), 7 * 7 * 64),   # (in, out) == torch weight.T
        "p1_b": u(ks[7], (512,), 7 * 7 * 64),
        "p2_w": u(ks[8], (512, 4), 512),
        "p2_b": u(ks[9], (4,), 512),
        "v1_w": u(ks[10], (7 * 7 * 64, 256), 7 * 7 * 64),
        "v1_b": u(ks[11], (256,), 7 * 7 * 64),
        "v2_w": u(ks[12], (256, 1), 256),
        "v2_b": u(ks[13], (1,), 256),
    }


# ---------------------------------------------------------------------------
# One-time (offline) conversion of canonical params into kernel layouts.
# ---------------------------------------------------------------------------
def prepare_params(p):
    bf, f = jnp.bfloat16, jnp.float32

    def conv_w(w_oihw, pad_to):
        OC, IC, KH, KW = w_oihw.shape
        w = jnp.transpose(w_oihw, (2, 3, 1, 0)).reshape(KH * KW * IC, OC)
        if pad_to > OC:
            w = jnp.pad(w, ((0, 0), (0, pad_to - OC)))
        return w.astype(bf)

    def conv_b(b, pad_to):
        if pad_to > b.shape[0]:
            b = jnp.pad(b, (0, pad_to - b.shape[0]))
        return b.reshape(1, -1).astype(f)

    # Row permutation: PyTorch flatten index c*49 + h*7 + w  ->  HWC index.
    perm = jnp.transpose(jnp.arange(64 * 7 * 7).reshape(64, 7, 7),
                         (1, 2, 0)).reshape(-1)
    p1 = p["p1_w"][perm]                              # (3136, 512), HWC rows
    v1 = p["v1_w"][perm]                              # (3136, 256), HWC rows

    wh = jnp.concatenate([p1, v1], axis=1)            # (3136, 768)
    bh = jnp.concatenate([p["p1_b"], p["v1_b"]])      # (768,)
    wh_c = jnp.stack([wh[:, :384], wh[:, 384:]]).astype(bf)          # (2,3136,384)
    bh_c = jnp.stack([bh[:384], bh[384:]]).reshape(2, 1, 384).astype(f)

    # Block-diagonal head: cols 0..3 = policy logits, col 4 = value.
    w2 = jnp.zeros((768, 128), f)
    w2 = w2.at[:512, 0:4].set(p["p2_w"])
    w2 = w2.at[512:, 4:5].set(p["v2_w"])
    w2_c = jnp.stack([w2[:384], w2[384:]]).astype(bf)                # (2,384,128)

    b2_c = jnp.zeros((2, 1, 128), f)
    b2_c = b2_c.at[0, 0, 0:4].set(p["p2_b"])          # policy bias added once
    b2_c = b2_c.at[1, 0, 4].set(p["v2_b"][0])         # value bias added once

    return {
        "c1_w": conv_w(p["conv1_w"], 128), "c1_b": conv_b(p["conv1_b"], 128),
        "c2_w": conv_w(p["conv2_w"], 128), "c2_b": conv_b(p["conv2_b"], 128),
        "c3_w": conv_w(p["conv3_w"], 64),  "c3_b": conv_b(p["conv3_b"], 64),
        "wh_c": wh_c, "bh_c": bh_c, "w2_c": w2_c, "b2_c": b2_c,
    }


# ---------------------------------------------------------------------------
# Pure-JAX f32 reference (PyTorch semantics: NCHW convs, CHW flatten)
# ---------------------------------------------------------------------------
def reference_forward(obs_hwc, params):
    x = jnp.transpose(obs_hwc, (2, 0, 1))[None]       # (1, 4, 84, 84)

    def conv(x, w, b, s):
        y = jax.lax.conv_general_dilated(
            x, w, (s, s), "VALID", dimension_numbers=("NCHW", "OIHW", "NCHW"),
            precision=jax.lax.Precision.HIGHEST)
        return jax.nn.relu(y + b[None, :, None, None])

    x = conv(x, params["conv1_w"], params["conv1_b"], 4)
    x = conv(x, params["conv2_w"], params["conv2_b"], 2)
    x = conv(x, params["conv3_w"], params["conv3_b"], 1)
    flat = x.reshape(1, -1)

    def lin(h, w, b):
        return jnp.dot(h, w, precision=jax.lax.Precision.HIGHEST) + b

    hp = jax.nn.leaky_relu(lin(flat, params["p1_w"], params["p1_b"]), 0.01)
    policy = lin(hp, params["p2_w"], params["p2_b"])
    hv = jax.nn.leaky_relu(lin(flat, params["v1_w"], params["v1_b"]), 0.01)
    v = lin(hv, params["v2_w"], params["v2_b"])
    return policy, v


if __name__ == "__main__":
    key = jax.random.PRNGKey(0)
    k_obs, k_par = jax.random.split(key)

    # (H, W, C) = (84, 84, 4): the 7*7*64 flatten dim in the module fixes the
    # spatial size to 84x84 Atari frames.
    obs = jax.random.uniform(k_obs, (84, 84, 4), jnp.float32)
    params = init_params(k_par)
    kparams = prepare_params(params)

    fwd = jax.jit(a2c_forward)
    policy, v = fwd(obs, kparams)
    jax.block_until_ready((policy, v))
    assert policy.shape == (1, 4) and v.shape == (1, 1)

    # Correctness vs f32 reference (bf16 MXU math -> relaxed tolerance).
    policy_ref, v_ref = jax.jit(reference_forward)(obs, params)
    assert jnp.allclose(policy, policy_ref, rtol=2e-2, atol=2e-2), "policy mismatch"
    assert jnp.allclose(v, v_ref, rtol=2e-2, atol=2e-2), "value mismatch"

    print("KERNEL_OK")
</pallas_src>

<mosaic_0001>
module attributes {stable_mosaic.version = 11 : i64} {
  func.func @_conv_mm_kernel(%arg0: memref<400x256xbf16, #tpu.memory_space<vmem>>, %arg1: memref<256x128xbf16, #tpu.memory_space<vmem>>, %arg2: memref<1x128xf32, #tpu.memory_space<vmem>>, %arg3: memref<400x128xbf16, #tpu.memory_space<vmem>>) attributes {dimension_semantics = [], scalar_prefetch = 0 : i64, scratch_operands = 0 : i64, tpu.core_type = #tpu.core_type<tc>} {
    %c0 = arith.constant 0 : index
    %c0_0 = arith.constant 0 : index
    %0 = vector.load %arg0[%c0, %c0_0] : memref<400x256xbf16, #tpu.memory_space<vmem>>, vector<400x256xbf16>
    %c0_1 = arith.constant 0 : index
    %c0_2 = arith.constant 0 : index
    %1 = vector.load %arg1[%c0_1, %c0_2] : memref<256x128xbf16, #tpu.memory_space<vmem>>, vector<256x128xbf16>
    %cst = arith.constant dense<0.000000e+00> : vector<400x128xf32>
    %2 = tpu.matmul %0, %1, %cst {dimension_numbers = #tpu.dot_dimension_numbers<[1], [0], [0], [1], [0, 0, 1, 1], [], []>} : vector<400x256xbf16>, vector<256x128xbf16>, vector<400x128xf32> -> vector<400x128xf32>
    %c0_3 = arith.constant 0 : index
    %c0_4 = arith.constant 0 : index
    %3 = vector.load %arg2[%c0_3, %c0_4] : memref<1x128xf32, #tpu.memory_space<vmem>>, vector<1x128xf32>
    %4 = vector.broadcast %3 : vector<1x128xf32> to vector<400x128xf32>
    %5 = arith.addf %2, %4 : vector<400x128xf32>
    %cst_5 = arith.constant 0.000000e+00 : f32
    %6 = vector.broadcast %cst_5 : f32 to vector<400x128xf32>
    %7 = arith.maximumf %5, %6 : vector<400x128xf32>
    %8 = arith.truncf %7 : vector<400x128xf32> to vector<400x128xbf16>
    %c0_6 = arith.constant 0 : index
    %c0_7 = arith.constant 0 : index
    %9 = vector.load %arg3[%c0_6, %c0_7] : memref<400x128xbf16, #tpu.memory_space<vmem>>, vector<400x128xbf16>
    tpu.vector_store %arg3[%c0_6, %c0_7], %8 {strides = array<i32>} : memref<400x128xbf16, #tpu.memory_space<vmem>>, vector<400x128xbf16>,
    return
  }
}

module attributes {stable_mosaic.version = 11 : i64} {
  func.func @_conv_mm_kernel(%arg0: memref<81x512xbf16, #tpu.memory_space<vmem>>, %arg1: memref<512x128xbf16, #tpu.memory_space<vmem>>, %arg2: memref<1x128xf32, #tpu.memory_space<vmem>>, %arg3: memref<81x128xbf16, #tpu.memory_space<vmem>>) attributes {dimension_semantics = [], scalar_prefetch = 0 : i64, scratch_operands = 0 : i64, tpu.core_type = #tpu.core_type<tc>} {
    %c0 = arith.constant 0 : index
    %c0_0 = arith.constant 0 : index
    %0 = vector.load %arg0[%c0, %c0_0] : memref<81x512xbf16, #tpu.memory_space<vmem>>, vector<81x512xbf16>
    %c0_1 = arith.constant 0 : index
    %c0_2 = arith.constant 0 : index
    %1 = vector.load %arg1[%c0_1, %c0_2] : memref<512x128xbf16, #tpu.memory_space<vmem>>, vector<512x128xbf16>
    %cst = arith.constant dense<0.000000e+00> : vector<81x128xf32>
    %2 = tpu.matmul %0, %1, %cst {dimension_numbers = #tpu.dot_dimension_numbers<[1], [0], [0], [1], [0, 0, 1, 1], [], []>} : vector<81x512xbf16>, vector<512x128xbf16>, vector<81x128xf32> -> vector<81x128xf32>
    %c0_3 = arith.constant 0 : index
    %c0_4 = arith.constant 0 : index
    %3 = vector.load %arg2[%c0_3, %c0_4] : memref<1x128xf32, #tpu.memory_space<vmem>>, vector<1x128xf32>
    %4 = vector.broadcast %3 : vector<1x128xf32> to vector<81x128xf32>
    %5 = arith.addf %2, %4 : vector<81x128xf32>
    %cst_5 = arith.constant 0.000000e+00 : f32
    %6 = vector.broadcast %cst_5 : f32 to vector<81x128xf32>
    %7 = arith.maximumf %5, %6 : vector<81x128xf32>
    %8 = arith.truncf %7 : vector<81x128xf32> to vector<81x128xbf16>
    %c0_6 = arith.constant 0 : index
    %c0_7 = arith.constant 0 : index
    %9 = vector.load %arg3[%c0_6, %c0_7] : memref<81x128xbf16, #tpu.memory_space<vmem>>, vector<81x128xbf16>
    tpu.vector_store %arg3[%c0_6, %c0_7], %8 {strides = array<i32>} : memref<81x128xbf16, #tpu.memory_space<vmem>>, vector<81x128xbf16>,
    return
  }
}

module attributes {stable_mosaic.version = 11 : i64} {
  func.func @_conv_mm_kernel(%arg0: memref<49x576xbf16, #tpu.memory_space<vmem>>, %arg1: memref<576x64xbf16, #tpu.memory_space<vmem>>, %arg2: memref<1x64xf32, #tpu.memory_space<vmem>>, %arg3: memref<49x64xbf16, #tpu.memory_space<vmem>>) attributes {dimension_semantics = [], scalar_prefetch = 0 : i64, scratch_operands = 0 : i64, tpu.core_type = #tpu.core_type<tc>} {
    %c0 = arith.constant 0 : index
    %c0_0 = arith.constant 0 : index
    %0 = vector.load %arg0[%c0, %c0_0] : memref<49x576xbf16, #tpu.memory_space<vmem>>, vector<49x576xbf16>
    %c0_1 = arith.constant 0 : index
    %c0_2 = arith.constant 0 : index
    %1 = vector.load %arg1[%c0_1, %c0_2] : memref<576x64xbf16, #tpu.memory_space<vmem>>, vector<576x64xbf16>
    %cst = arith.constant dense<0.000000e+00> : vector<49x64xf32>
    %2 = tpu.matmul %0, %1, %cst {dimension_numbers = #tpu.dot_dimension_numbers<[1], [0], [0], [1], [0, 0, 1, 1], [], []>} : vector<49x576xbf16>, vector<576x64xbf16>, vector<49x64xf32> -> vector<49x64xf32>
    %c0_3 = arith.constant 0 : index
    %c0_4 = arith.constant 0 : index
    %3 = vector.load %arg2[%c0_3, %c0_4] : memref<1x64xf32, #tpu.memory_space<vmem>>, vector<1x64xf32>
    %4 = vector.broadcast %3 : vector<1x64xf32> to vector<49x64xf32>
    %5 = arith.addf %2, %4 : vector<49x64xf32>
    %cst_5 = arith.constant 0.000000e+00 : f32
    %6 = vector.broadcast %cst_5 : f32 to vector<49x64xf32>
    %7 = arith.maximumf %5, %6 : vector<49x64xf32>
    %8 = arith.truncf %7 : vector<49x64xf32> to vector<49x64xbf16>
    %c0_6 = arith.constant 0 : index
    %c0_7 = arith.constant 0 : index
    %9 = vector.load %arg3[%c0_6, %c0_7] : memref<49x64xbf16, #tpu.memory_space<vmem>>, vector<49x64xbf16>
    tpu.vector_store %arg3[%c0_6, %c0_7], %8 {strides = array<i32>} : memref<49x64xbf16, #tpu.memory_space<vmem>>, vector<49x64xbf16>,
    return
  }
}

module attributes {stable_mosaic.version = 11 : i64} {
  func.func @_fc_fused_kernel(%arg0: i32, %arg1: memref<1x3136xbf16, #tpu.memory_space<vmem>>, %arg2: memref<1x3136x384xbf16, #tpu.memory_space<vmem>>, %arg3: memref<1x1x384xf32, #tpu.memory_space<vmem>>, %arg4: memref<1x384x128xbf16, #tpu.memory_space<vmem>>, %arg5: memref<1x1x128xf32, #tpu.memory_space<vmem>>, %arg6: memref<1x1x128xf32, #tpu.memory_space<vmem>>) attributes {dimension_semantics = [#tpu.dimension_semantics<parallel>], iteration_bounds = array<i64: 2>, scalar_prefetch = 0 : i64, scratch_operands = 0 : i64, tpu.core_type = #tpu.core_type<tc>, window_params = [{pipeline_mode = #tpu.pipeline_mode<synchronous>, transform_indices = @transform_0, window_bounds = array<i64: 1, 3136>}, {transform_indices = @transform_1, window_bounds = array<i64: 1, 3136, 384>}, {transform_indices = @transform_2, window_bounds = array<i64: 1, 1, 384>}, {transform_indices = @transform_3, window_bounds = array<i64: 1, 384, 128>}, {transform_indices = @transform_4, window_bounds = array<i64: 1, 1, 128>}, {transform_indices = @transform_5, window_bounds = array<i64: 1, 1, 128>}]} {
    %c0 = arith.constant 0 : index
    %c0_0 = arith.constant 0 : index
    %0 = vector.load %arg1[%c0, %c0_0] : memref<1x3136xbf16, #tpu.memory_space<vmem>>, vector<1x3136xbf16>
    %c0_1 = arith.constant 0 : index
    %c0_2 = arith.constant 0 : index
    %c0_3 = arith.constant 0 : index
    %1 = vector.load %arg2[%c0_1, %c0_2, %c0_3] : memref<1x3136x384xbf16, #tpu.memory_space<vmem>>, vector<1x3136x384xbf16>
    %2 = vector.shape_cast %1 : vector<1x3136x384xbf16> to vector<3136x384xbf16>
    %cst = arith.constant dense<0.000000e+00> : vector<1x384xf32>
    %3 = tpu.matmul %0, %2, %cst {dimension_numbers = #tpu.dot_dimension_numbers<[1], [0], [0], [1], [0, 0, 1, 1], [], []>} : vector<1x3136xbf16>, vector<3136x384xbf16>, vector<1x384xf32> -> vector<1x384xf32>
    %c0_4 = arith.constant 0 : index
    %c0_5 = arith.constant 0 : index
    %c0_6 = arith.constant 0 : index
    %4 = vector.load %arg3[%c0_4, %c0_5, %c0_6] : memref<1x1x384xf32, #tpu.memory_space<vmem>>, vector<1x1x384xf32>
    %5 = vector.shape_cast %4 : vector<1x1x384xf32> to vector<1x384xf32>
    %6 = arith.addf %3, %5 : vector<1x384xf32>
    %cst_7 = arith.constant 0.00999999977 : f32
    %7 = vector.broadcast %cst_7 : f32 to vector<1x384xf32>
    %8 = arith.mulf %7, %6 : vector<1x384xf32>
    %9 = arith.maximumf %6, %8 : vector<1x384xf32>
    %10 = arith.truncf %9 : vector<1x384xf32> to vector<1x384xbf16>
    %c0_8 = arith.constant 0 : index
    %c0_9 = arith.constant 0 : index
    %c0_10 = arith.constant 0 : index
    %11 = vector.load %arg4[%c0_8, %c0_9, %c0_10] : memref<1x384x128xbf16, #tpu.memory_space<vmem>>, vector<1x384x128xbf16>
    %12 = vector.shape_cast %11 : vector<1x384x128xbf16> to vector<384x128xbf16>
    %cst_11 = arith.constant dense<0.000000e+00> : vector<1x128xf32>
    %13 = tpu.matmul %10, %12, %cst_11 {dimension_numbers = #tpu.dot_dimension_numbers<[1], [0], [0], [1], [0, 0, 1, 1], [], []>} : vector<1x384xbf16>, vector<384x128xbf16>, vector<1x128xf32> -> vector<1x128xf32>
    %c0_12 = arith.constant 0 : index
    %c0_13 = arith.constant 0 : index
    %c0_14 = arith.constant 0 : index
    %14 = vector.load %arg5[%c0_12, %c0_13, %c0_14] : memref<1x1x128xf32, #tpu.memory_space<vmem>>, vector<1x1x128xf32>
    %15 = vector.shape_cast %14 : vector<1x1x128xf32> to vector<1x128xf32>
    %16 = arith.addf %13, %15 : vector<1x128xf32>
    %c0_15 = arith.constant 0 : index
    %c0_16 = arith.constant 0 : index
    %c0_17 = arith.constant 0 : index
    %17 = vector.load %arg6[%c0_15, %c0_16, %c0_17] : memref<1x1x128xf32, #tpu.memory_space<vmem>>, vector<1x1x128xf32>
    %18 = vector.shape_cast %17 : vector<1x1x128xf32> to vector<1x128xf32>
    %19 = vector.shape_cast %16 : vector<1x128xf32> to vector<1x1x128xf32>
    tpu.vector_store %arg6[%c0_15, %c0_16, %c0_17], %19 {strides = array<i32>} : memref<1x1x128xf32, #tpu.memory_space<vmem>>, vector<1x1x128xf32>,
    return
  }
  func.func @transform_0(%arg0: i32) -> (i32, i32) {
    %c0_i32 = arith.constant 0 : i32
    %c0_i32_0 = arith.constant 0 : i32
    %c0_i32_1 = arith.constant 0 : i32
    return %c0_i32, %c0_i32_0 : i32, i32
  }
  func.func @transform_1(%arg0: i32) -> (i32, i32, i32) {
    %c0_i32 = arith.constant 0 : i32
    %c0_i32_0 = arith.constant 0 : i32
    %c0_i32_1 = arith.constant 0 : i32
    return %arg0, %c0_i32, %c0_i32_0 : i32, i32, i32
  }
  func.func @transform_2(%arg0: i32) -> (i32, i32, i32) {
    %c0_i32 = arith.constant 0 : i32
    %c0_i32_0 = arith.constant 0 : i32
    %c0_i32_1 = arith.constant 0 : i32
    return %arg0, %c0_i32, %c0_i32_0 : i32, i32, i32
  }
  func.func @transform_3(%arg0: i32) -> (i32, i32, i32) {
    %c0_i32 = arith.constant 0 : i32
    %c0_i32_0 = arith.constant 0 : i32
    %c0_i32_1 = arith.constant 0 : i32
    return %arg0, %c0_i32, %c0_i32_0 : i32, i32, i32
  }
  func.func @transform_4(%arg0: i32) -> (i32, i32, i32) {
    %c0_i32 = arith.constant 0 : i32
    %c0_i32_0 = arith.constant 0 : i32
    %c0_i32_1 = arith.constant 0 : i32
    return %arg0, %c0_i32, %c0_i32_0 : i32, i32, i32
  }
  func.func @transform_5(%arg0: i32) -> (i32, i32, i32) {
    %c0_i32 = arith.constant 0 : i32
    %c0_i32_0 = arith.constant 0 : i32
    %c0_i32_1 = arith.constant 0 : i32
    return %arg0, %c0_i32, %c0_i32_0 : i32, i32, i32
  }
}

</mosaic_0001>

<llo_original>
// kernel: a2c_forward.4
$region0: #{a2c_forward.4}
  #allocation0 [shape = 'u32[]', space=smem, size = 0x4, offset = 0x4, fixed_abs, tag = 'smem constant byte address 0x4 - core index']
  #allocation1 [shape = 'u32[144,128]{1,0:T(1,128)}', space=vmem, size = 0x12000, scoped, tag = 'internal scratch']
  %s0 = inlined_call_operand.vmem [shape: bf16[400,256], index: 0, kind: input, shape index: {}]
  %s1 = inlined_call_operand.vmem [shape: bf16[256,128], index: 1, kind: input, shape index: {}]
  %s2 = inlined_call_operand.vmem [shape: f32[1,128], index: 2, kind: input, shape index: {}]
  %s3 = inlined_call_operand.vmem [shape: bf16[400,128], index: 3, kind: output, shape index: {}]
  %s4 = sld [smem:[#allocation0]]
  $region22: #{a2c_forward.4} parent=0
    _
  %s6 = ssub.s32 1, %s4
  %s7 = scalar_select 0, %s6, %s4
  // Predicated region
  $region2: #{a2c_forward.4} parent=0 // pred_check
    _
  $region3: #{a2c_forward.4} parent=0 // pred_check_branch
    %9 = sbr.rel (0) target = $region5
  $region4: #{a2c_forward.4} parent=0 // pred_region
    _
  $region5: #{a2c_forward.4} parent=0 // pred_fallthru
    _
  // Predicated region
  $region6: #{a2c_forward.4} parent=0 // pred_check
    _
  $region7: #{a2c_forward.4} parent=0 // pred_check_branch
    %11 = sbr.rel (0) target = $region9
  $region8: #{a2c_forward.4} parent=0 // pred_region
    _
  $region9: #{a2c_forward.4} parent=0 // pred_fallthru
    _
  // Predicated region
  $region10: #{a2c_forward.4} parent=0 // pred_check
    _
  $region11: #{a2c_forward.4} parent=0 // pred_check_branch
    %13 = sbr.rel (0) target = $region13
  $region12: #{a2c_forward.4} parent=0 // pred_region
    _
  $region13: #{a2c_forward.4} parent=0 // pred_fallthru
    _
  %v15 = vld [vmem:[%s0] sm:$0xff]
  %v16 = vld [vmem:[%s0 + $0x8] sm:$0xff]
  %v17 = vld [vmem:[%s0 + $0x10] sm:$0xff]
  %v18 = vld [vmem:[%s0 + $0x18] sm:$0xff]
  %v19 = vld [vmem:[%s0 + $0x20] sm:$0xff]
  %v20 = vld [vmem:[%s0 + $0x28] sm:$0xff]
  %v21 = vld [vmem:[%s0 + $0x30] sm:$0xff]
  %v22 = vld [vmem:[%s0 + $0x38] sm:$0xff]
  %v23 = vld [vmem:[%s0 + $0x40] sm:$0xff]
  %v24 = vld [vmem:[%s0 + $0x48] sm:$0xff]
  %v25 = vld [vmem:[%s0 + $0x50] sm:$0xff]
  %v26 = vld [vmem:[%s0 + $0x58] sm:$0xff]
  %v27 = vld [vmem:[%s0 + $0x60] sm:$0xff]
  %v28 = vld [vmem:[%s0 + $0x68] sm:$0xff]
  %v29 = vld [vmem:[%s0 + $0x70] sm:$0xff]
  %v30 = vld [vmem:[%s0 + $0x78] sm:$0xff]
  %v31 = vld [vmem:[%s0 + $0x80] sm:$0xff]
  %v32 = vld [vmem:[%s0 + $0x88] sm:$0xff]
  %v33 = vld [vmem:[%s0 + $0x90] sm:$0xff]
  %v34 = vld [vmem:[%s0 + $0x98] sm:$0xff]
  %v35 = vld [vmem:[%s0 + $0xa0] sm:$0xff]
  %v36 = vld [vmem:[%s0 + $0xa8] sm:$0xff]
  %v37 = vld [vmem:[%s0 + $0xb0] sm:$0xff]
  %v38 = vld [vmem:[%s0 + $0xb8] sm:$0xff]
  %v39 = vld [vmem:[%s0 + $0xc0] sm:$0xff]
  %v40 = vld [vmem:[%s0 + $0xc8] sm:$0xff]
  %v41 = vld [vmem:[%s0 + $0xd0] sm:$0xff]
  %v42 = vld [vmem:[%s0 + $0xd8] sm:$0xff]
  %v43 = vld [vmem:[%s0 + $0xe0] sm:$0xff]
  %v44 = vld [vmem:[%s0 + $0xe8] sm:$0xff]
  %v45 = vld [vmem:[%s0 + $0xf0] sm:$0xff]
  %v46 = vld [vmem:[%s0 + $0xf8] sm:$0xff]
  %v47 = vld [vmem:[%s0 + $0x100] sm:$0xff]
  %v48 = vld [vmem:[%s0 + $0x108] sm:$0xff]
  %v49 = vld [vmem:[%s0 + $0x110] sm:$0xff]
  %v50 = vld [vmem:[%s0 + $0x118] sm:$0xff]
  %v51 = vld [vmem:[%s0 + $0x120] sm:$0xff]
  %v52 = vld [vmem:[%s0 + $0x128] sm:$0xff]
  %v53 = vld [vmem:[%s0 + $0x130] sm:$0xff]
  %v54 = vld [vmem:[%s0 + $0x138] sm:$0xff]
  %v55 = vld [vmem:[%s0 + $0x140] sm:$0xff]
  %v56 = vld [vmem:[%s0 + $0x148] sm:$0xff]
  %v57 = vld [vmem:[%s0 + $0x150] sm:$0xff]
  %v58 = vld [vmem:[%s0 + $0x158] sm:$0xff]
  %v59 = vld [vmem:[%s0 + $0x160] sm:$0xff]
  %v60 = vld [vmem:[%s0 + $0x168] sm:$0xff]
  %v61 = vld [vmem:[%s0 + $0x170] sm:$0xff]
  %v62 = vld [vmem:[%s0 + $0x178] sm:$0xff]
  %v63 = vld [vmem:[%s0 + $0x180] sm:$0xff]
  %v64 = vld [vmem:[%s0 + $0x188] sm:$0xff]
  %v65 = vld [vmem:[%s1] sm:$0xf]
  %v66 = vld [vmem:[%s1 + $0x4] sm:$0xf]
  %v67 = vld [vmem:[%s1 + $0x8] sm:$0xf]
  %v68 = vld [vmem:[%s1 + $0xc] sm:$0xf]
  %v69 = vld [vmem:[%s1 + $0x10] sm:$0xf]
  %v70 = vld [vmem:[%s1 + $0x14] sm:$0xf]
  %v71 = vld [vmem:[%s1 + $0x18] sm:$0xf]
  %v72 = vld [vmem:[%s1 + $0x1c] sm:$0xf]
  %v73 = vld [vmem:[%s1 + $0x20] sm:$0xf]
  %v74 = vld [vmem:[%s1 + $0x24] sm:$0xf]
  %v75 = vld [vmem:[%s1 + $0x28] sm:$0xf]
  %v76 = vld [vmem:[%s1 + $0x2c] sm:$0xf]
  %v77 = vld [vmem:[%s1 + $0x30] sm:$0xf]
  %v78 = vld [vmem:[%s1 + $0x34] sm:$0xf]
  %v79 = vld [vmem:[%s1 + $0x38] sm:$0xf]
  %v80 = vld [vmem:[%s1 + $0x3c] sm:$0xf]
  %v81 = vld [vmem:[%s1 + $0x40] sm:$0xf]
  %v82 = vld [vmem:[%s1 + $0x44] sm:$0xf]
  %v83 = vld [vmem:[%s1 + $0x48] sm:$0xf]
  %v84 = vld [vmem:[%s1 + $0x4c] sm:$0xf]
  %v85 = vld [vmem:[%s1 + $0x50] sm:$0xf]
  %v86 = vld [vmem:[%s1 + $0x54] sm:$0xf]
  %v87 = vld [vmem:[%s1 + $0x58] sm:$0xf]
  %v88 = vld [vmem:[%s1 + $0x5c] sm:$0xf]
  %v89 = vld [vmem:[%s1 + $0x60] sm:$0xf]
  %v90 = vld [vmem:[%s1 + $0x64] sm:$0xf]
  %v91 = vld [vmem:[%s1 + $0x68] sm:$0xf]
  %v92 = vld [vmem:[%s1 + $0x6c] sm:$0xf]
  %v93 = vld [vmem:[%s1 + $0x70] sm:$0xf]
  %v94 = vld [vmem:[%s1 + $0x74] sm:$0xf]
  %v95 = vld [vmem:[%s1 + $0x78] sm:$0xf]
  %v96 = vld [vmem:[%s1 + $0x7c] sm:$0xf]
  %v97 = vld [vmem:[%s2] sm:$0x1]
  %v99 = vlaneseq
  %v100 = vshrl.u32 %v99, 7
  %v101 = vsub.s32 0, %v100
  %v102 = vrot.slane %v97, %v101
  %v154 = vunpack.c.l.b16 %v15
  %v155 = vunpack.c.h.b16 %v15
  %v156 = vunpack.c.l.b16 %v16
  %v157 = vunpack.c.h.b16 %v16
  %v158 = vunpack.c.l.b16 %v17
  %v159 = vunpack.c.h.b16 %v17
  %v160 = vunpack.c.l.b16 %v18
  %v161 = vunpack.c.h.b16 %v18
  %v162 = vunpack.c.l.b16 %v19
  %v163 = vunpack.c.h.b16 %v19
  %v164 = vunpack.c.l.b16 %v20
  %v165 = vunpack.c.h.b16 %v20
  %v166 = vunpack.c.l.b16 %v21
  %v167 = vunpack.c.h.b16 %v21
  %v168 = vunpack.c.l.b16 %v22
  %v169 = vunpack.c.h.b16 %v22
  %v170 = vunpack.c.l.b16 %v23
  %v171 = vunpack.c.h.b16 %v23
  %v172 = vunpack.c.l.b16 %v24
  %v173 = vunpack.c.h.b16 %v24
  %v174 = vunpack.c.l.b16 %v25
  %v175 = vunpack.c.h.b16 %v25
  %v176 = vunpack.c.l.b16 %v26
  %v177 = vunpack.c.h.b16 %v26
  %v178 = vunpack.c.l.b16 %v27
  %v179 = vunpack.c.h.b16 %v27
  %v180 = vunpack.c.l.b16 %v28
  %v181 = vunpack.c.h.b16 %v28
  %v182 = vunpack.c.l.b16 %v29
  %v183 = vunpack.c.h.b16 %v29
  %v184 = vunpack.c.l.b16 %v30
  %v185 = vunpack.c.h.b16 %v30
  %v186 = vunpack.c.l.b16 %v31
  %v187 = vunpack.c.h.b16 %v31
  %v188 = vunpack.c.l.b16 %v32
  %v189 = vunpack.c.h.b16 %v32
  %v190 = vunpack.c.l.b16 %v33
  %v191 = vunpack.c.h.b16 %v33
  %v192 = vunpack.c.l.b16 %v34
  %v193 = vunpack.c.h.b16 %v34
  %v194 = vunpack.c.l.b16 %v35
  %v195 = vunpack.c.h.b16 %v35
  %v196 = vunpack.c.l.b16 %v36
  %v197 = vunpack.c.h.b16 %v36
  %v198 = vunpack.c.l.b16 %v37
  %v199 = vunpack.c.h.b16 %v37
  %v200 = vunpack.c.l.b16 %v38
  %v201 = vunpack.c.h.b16 %v38
  %v202 = vunpack.c.l.b16 %v39
  %v203 = vunpack.c.h.b16 %v39
  %v204 = vunpack.c.l.b16 %v40
  %v205 = vunpack.c.h.b16 %v40
  %v206 = vunpack.c.l.b16 %v41
  %v207 = vunpack.c.h.b16 %v41
  %v208 = vunpack.c.l.b16 %v42
  %v209 = vunpack.c.h.b16 %v42
  %v210 = vunpack.c.l.b16 %v43
  %v211 = vunpack.c.h.b16 %v43
  %v212 = vunpack.c.l.b16 %v44
  %v213 = vunpack.c.h.b16 %v44
  %v214 = vunpack.c.l.b16 %v45
  %v215 = vunpack.c.h.b16 %v45
  %v216 = vunpack.c.l.b16 %v46
  %v217 = vunpack.c.h.b16 %v46
  %v218 = vunpack.c.l.b16 %v47
  %v219 = vunpack.c.h.b16 %v47
  %v220 = vunpack.c.l.b16 %v48
  %v221 = vunpack.c.h.b16 %v48
  %v222 = vunpack.c.l.b16 %v49
  %v223 = vunpack.c.h.b16 %v49
  %v224 = vunpack.c.l.b16 %v50
  %v225 = vunpack.c.h.b16 %v50
  %v226 = vunpack.c.l.b16 %v51
  %v227 = vunpack.c.h.b16 %v51
  %v228 = vunpack.c.l.b16 %v52
  %v229 = vunpack.c.h.b16 %v52
  %v230 = vunpack.c.l.b16 %v53
  %v231 = vunpack.c.h.b16 %v53
  %v232 = vunpack.c.l.b16 %v54
  %v233 = vunpack.c.h.b16 %v54
  %v234 = vunpack.c.l.b16 %v55
  %v235 = vunpack.c.h.b16 %v55
  %v236 = vunpack.c.l.b16 %v56
  %v237 = vunpack.c.h.b16 %v56
  %v238 = vunpack.c.l.b16 %v57
  %v239 = vunpack.c.h.b16 %v57
  %v240 = vunpack.c.l.b16 %v58
  %v241 = vunpack.c.h.b16 %v58
  %v242 = vunpack.c.l.b16 %v59
  %v243 = vunpack.c.h.b16 %v59
  %v244 = vunpack.c.l.b16 %v60
  %v245 = vunpack.c.h.b16 %v60
  %v246 = vunpack.c.l.b16 %v61
  %v247 = vunpack.c.h.b16 %v61
  %v248 = vunpack.c.l.b16 %v62
  %v249 = vunpack.c.h.b16 %v62
  %v250 = vunpack.c.l.b16 %v63
  %v251 = vunpack.c.h.b16 %v63
  %v252 = vunpack.c.l.b16 %v64
  %v253 = vunpack.c.h.b16 %v64
  %v254 = vpack.c.b16 %v156, %v154
  %v255 = vpack.c.b16 %v157, %v155
  %v256 = vpack.c.b16 %v160, %v158
  %v257 = vpack.c.b16 %v161, %v159
  %v258 = vpack.c.b16 %v164, %v162
  %v259 = vpack.c.b16 %v165, %v163
  %v260 = vpack.c.b16 %v168, %v166
  %v261 = vpack.c.b16 %v169, %v167
  %v262 = vpack.c.b16 %v172, %v170
  %v263 = vpack.c.b16 %v173, %v171
  %v264 = vpack.c.b16 %v176, %v174
  %v265 = vpack.c.b16 %v177, %v175
  %v266 = vpack.c.b16 %v180, %v178
  %v267 = vpack.c.b16 %v181, %v179
  %v268 = vpack.c.b16 %v184, %v182
  %v269 = vpack.c.b16 %v185, %v183
  %v270 = vpack.c.b16 %v188, %v186
  %v271 = vpack.c.b16 %v189, %v187
  %v272 = vpack.c.b16 %v192, %v190
  %v273 = vpack.c.b16 %v193, %v191
  %v274 = vpack.c.b16 %v196, %v194
  %v275 = vpack.c.b16 %v197, %v195
  %v276 = vpack.c.b16 %v200, %v198
  %v277 = vpack.c.b16 %v201, %v199
  %v278 = vpack.c.b16 %v204, %v202
  %v279 = vpack.c.b16 %v205, %v203
  %v280 = vpack.c.b16 %v208, %v206
  %v281 = vpack.c.b16 %v209, %v207
  %v282 = vpack.c.b16 %v212, %v210
  %v283 = vpack.c.b16 %v213, %v211
  %v284 = vpack.c.b16 %v216, %v214
  %v285 = vpack.c.b16 %v217, %v215
  %v286 = vpack.c.b16 %v220, %v218
  %v287 = vpack.c.b16 %v221, %v219
  %v288 = vpack.c.b16 %v224, %v222
  %v289 = vpack.c.b16 %v225, %v223
  %v290 = vpack.c.b16 %v228, %v226
  %v291 = vpack.c.b16 %v229, %v227
  %v292 = vpack.c.b16 %v232, %v230
  %v293 = vpack.c.b16 %v233, %v231
  %v294 = vpack.c.b16 %v236, %v234
  %v295 = vpack.c.b16 %v237, %v235
  %v296 = vpack.c.b16 %v240, %v238
  %v297 = vpack.c.b16 %v241, %v239
  %v298 = vpack.c.b16 %v244, %v242
  %v299 = vpack.c.b16 %v245, %v243
  %v300 = vpack.c.b16 %v248, %v246
  %v301 = vpack.c.b16 %v249, %v247
  %v302 = vpack.c.b16 %v252, %v250
  %v303 = vpack.c.b16 %v253, %v251
  %v386 = vunpack.c.l.b16 %v65
  %v387 = vunpack.c.l.b16 %v66
  %v388 = vunpack.c.l.b16 %v67
  %v389 = vunpack.c.l.b16 %v68
  %v390 = vunpack.c.l.b16 %v69
  %v391 = vunpack.c.l.b16 %v70
  %v392 = vunpack.c.l.b16 %v71
  %v393 = vunpack.c.l.b16 %v72
  %v394 = vunpack.c.l.b16 %v73
  %v395 = vunpack.c.l.b16 %v74
  %v396 = vunpack.c.l.b16 %v75
  %v397 = vunpack.c.l.b16 %v76
  %v398 = vunpack.c.l.b16 %v77
  %v399 = vunpack.c.l.b16 %v78
  %v400 = vunpack.c.l.b16 %v79
  %v401 = vunpack.c.l.b16 %v80
  %v402 = vunpack.c.l.b16 %v81
  %v403 = vunpack.c.l.b16 %v82
  %v404 = vunpack.c.l.b16 %v83
  %v405 = vunpack.c.l.b16 %v84
  %v406 = vunpack.c.l.b16 %v85
  %v407 = vunpack.c.l.b16 %v86
  %v408 = vunpack.c.l.b16 %v87
  %v409 = vunpack.c.l.b16 %v88
  %v410 = vunpack.c.l.b16 %v89
  %v411 = vunpack.c.l.b16 %v90
  %v412 = vunpack.c.l.b16 %v91
  %v413 = vunpack.c.l.b16 %v92
  %v414 = vunpack.c.l.b16 %v93
  %v415 = vunpack.c.l.b16 %v94
  %v416 = vunpack.c.l.b16 %v95
  %v417 = vunpack.c.l.b16 %v96
  %v418 = vpack.c.b16 %v387, %v386
  %v419 = vpack.c.b16 %v389, %v388
  %v420 = vpack.c.b16 %v391, %v390
  %v421 = vpack.c.b16 %v393, %v392
  %v422 = vpack.c.b16 %v395, %v394
  %v423 = vpack.c.b16 %v397, %v396
  %v424 = vpack.c.b16 %v399, %v398
  %v425 = vpack.c.b16 %v401, %v400
  %v426 = vpack.c.b16 %v403, %v402
  %v427 = vpack.c.b16 %v405, %v404
  %v428 = vpack.c.b16 %v407, %v406
  %v429 = vpack.c.b16 %v409, %v408
  %v430 = vpack.c.b16 %v411, %v410
  %v431 = vpack.c.b16 %v413, %v412
  %v432 = vpack.c.b16 %v415, %v414
  %v433 = vpack.c.b16 %v417, %v416
  %450 = vmatprep.subr.bf16.mxu0 0
  %451 = vmatpush1.bf16.msra.mxu0 %v418
  %452 = vmatprep.subr.bf16.mxu0 0
  %453 = vmatpush1.bf16.msra.mxu0 %v419
  %454 = vmatprep.subr.bf16.mxu0 0
  %455 = vmatpush1.bf16.msra.mxu0 %v420
  %456 = vmatprep.subr.bf16.mxu0 0
  %457 = vmatpush1.bf16.msra.mxu0 %v421
  %458 = vmatprep.subr.bf16.mxu0 0
  %459 = vmatpush1.bf16.msra.mxu0 %v422
  %460 = vmatprep.subr.bf16.mxu0 0
  %461 = vmatpush1.bf16.msra.mxu0 %v423
  %462 = vmatprep.subr.bf16.mxu0 0
  %463 = vmatpush1.bf16.msra.mxu0 %v424
  %464 = vmatprep.subr.bf16.mxu0 0
  %465 = vmatpush1.bf16.msra.mxu0 %v425
  %466 = vmatprep.subr.bf16.mxu0 0
  %467 = vmatpush1.bf16.msra.mxu0 %v426
  %468 = vmatprep.subr.bf16.mxu0 0
  %469 = vmatpush1.bf16.msra.mxu0 %v427
  %470 = vmatprep.subr.bf16.mxu0 0
  %471 = vmatpush1.bf16.msra.mxu0 %v428
  %472 = vmatprep.subr.bf16.mxu0 0
  %473 = vmatpush1.bf16.msra.mxu0 %v429
  %474 = vmatprep.subr.bf16.mxu0 0
  %475 = vmatpush1.bf16.msra.mxu0 %v430
  %476 = vmatprep.subr.bf16.mxu0 0
  %477 = vmatpush1.bf16.msra.mxu0 %v431
  %478 = vmatprep.subr.bf16.mxu0 0
  %479 = vmatpush1.bf16.msra.mxu0 %v432
  %480 = vmatprep.subr.bf16.mxu0 0
  %481 = vmatpush1.bf16.msra.mxu0 %v433
  %482 = vmatprep.mubr.bf16.mxu0 %v255
  %483 = vmatmul.mubr.bf16.gmra.mrb[0].mxu0 %v254
  %v484 = vpop.f32.mrb[0].mxu0
  %v485 = vadd.f32 %v102, %v484
  %v486 = vpop.f32.mrb[0].mxu0
  %v487 = vpop.f32.mrb[0].mxu0
  %v488 = vadd.f32 %v102, %v487
  %v489 = vpop.f32.mrb[0].mxu0
  %490 = vmatprep.mubr.bf16.mxu0 %v257
  %491 = vmatmul.mubr.bf16.gmra.mrb[0].mxu0 %v256
  %v492 = vpop.f32.mrb[0].mxu0
  %v493 = vadd.f32 %v102, %v492
  %v494 = vpop.f32.mrb[0].mxu0
  %v495 = vpop.f32.mrb[0].mxu0
  %v496 = vadd.f32 %v102, %v495
  %v497 = vpop.f32.mrb[0].mxu0
  %498 = vmatprep.mubr.bf16.mxu0 %v259
  %499 = vmatmul.mubr.bf16.gmra.mrb[0].mxu0 %v258
  %v500 = vpop.f32.mrb[0].mxu0
  %v501 = vadd.f32 %v102, %v500
  %v502 = vpop.f32.mrb[0].mxu0
  %v503 = vpop.f32.mrb[0].mxu0
  %v504 = vadd.f32 %v102, %v503
  %v505 = vpop.f32.mrb[0].mxu0
  %506 = vmatprep.mubr.bf16.mxu0 %v261
  %507 = vmatmul.mubr.bf16.gmra.mrb[0].mxu0 %v260
  %v508 = vpop.f32.mrb[0].mxu0
  %v509 = vadd.f32 %v102, %v508
  %v510 = vpop.f32.mrb[0].mxu0
  %v511 = vpop.f32.mrb[0].mxu0
  %v512 = vadd.f32 %v102, %v511
  %v513 = vpop.f32.mrb[0].mxu0
  %514 = vmatprep.mubr.bf16.mxu0 %v263
  %515 = vmatmul.mubr.bf16.gmra.mrb[0].mxu0 %v262
  %v516 = vpop.f32.mrb[0].mxu0
  %v517 = vadd.f32 %v102, %v516
  %v518 = vpop.f32.mrb[0].mxu0
  %v519 = vpop.f32.mrb[0].mxu0
  %v520 = vadd.f32 %v102, %v519
  %v521 = vpop.f32.mrb[0].mxu0
  %522 = vmatprep.mubr.bf16.mxu0 %v265
  %523 = vmatmul.mubr.bf16.gmra.mrb[0].mxu0 %v264
  %v524 = vpop.f32.mrb[0].mxu0
  %v525 = vadd.f32 %v102, %v524
  %v526 = vpop.f32.mrb[0].mxu0
  %v527 = vpop.f32.mrb[0].mxu0
  %v528 = vadd.f32 %v102, %v527
  %v529 = vpop.f32.mrb[0].mxu0
  %530 = vmatprep.mubr.bf16.mxu0 %v267
  %531 = vmatmul.mubr.bf16.gmra.mrb[0].mxu0 %v266
  %v532 = vpop.f32.mrb[0].mxu0
  %v533 = vadd.f32 %v102, %v532
  %v534 = vpop.f32.mrb[0].mxu0
  %v535 = vpop.f32.mrb[0].mxu0
  %v536 = vadd.f32 %v102, %v535
  %v537 = vpop.f32.mrb[0].mxu0
  %538 = vmatprep.mubr.bf16.mxu0 %v269
  %539 = vmatmul.mubr.bf16.gmra.mrb[0].mxu0 %v268
  %v540 = vpop.f32.mrb[0].mxu0
  %v541 = vadd.f32 %v102, %v540
  %v542 = vpop.f32.mrb[0].mxu0
  %v543 = vpop.f32.mrb[0].mxu0
  %v544 = vadd.f32 %v102, %v543
  %v545 = vpop.f32.mrb[0].mxu0
  %546 = vmatprep.mubr.bf16.mxu0 %v271
  %547 = vmatmul.mubr.bf16.gmra.mrb[0].mxu0 %v270
  %v548 = vpop.f32.mrb[0].mxu0
  %v549 = vadd.f32 %v102, %v548
  %v550 = vpop.f32.mrb[0].mxu0
  %v551 = vpop.f32.mrb[0].mxu0
  %v552 = vadd.f32 %v102, %v551
  %v553 = vpop.f32.mrb[0].mxu0
  %554 = vmatprep.mubr.bf16.mxu0 %v273
  %555 = vmatmul.mubr.bf16.gmra.mrb[0].mxu0 %v272
  %v556 = vpop.f32.mrb[0].mxu0
  %v557 = vadd.f32 %v102, %v556
  %v558 = vpop.f32.mrb[0].mxu0
  %v559 = vpop.f32.mrb[0].mxu0
  %v560 = vadd.f32 %v102, %v559
  %v561 = vpop.f32.mrb[0].mxu0
  %562 = vmatprep.mubr.bf16.mxu0 %v275
  %563 = vmatmul.mubr.bf16.gmra.mrb[0].mxu0 %v274
  %v564 = vpop.f32.mrb[0].mxu0
  %v565 = vadd.f32 %v102, %v564
  %v566 = vpop.f32.mrb[0].mxu0
  %v567 = vpop.f32.mrb[0].mxu0
  %v568 = vadd.f32 %v102, %v567
  %v569 = vpop.f32.mrb[0].mxu0
  %570 = vmatprep.mubr.bf16.mxu0 %v277
  %571 = vmatmul.mubr.bf16.gmra.mrb[0].mxu0 %v276
  %v572 = vpop.f32.mrb[0].mxu0
  %v573 = vadd.f32 %v102, %v572
  %v574 = vpop.f32.mrb[0].mxu0
  %v575 = vpop.f32.mrb[0].mxu0
  %v576 = vadd.f32 %v102, %v575
  %v577 = vpop.f32.mrb[0].mxu0
  %578 = vmatprep.mubr.bf16.mxu0 %v279
  %579 = vmatmul.mubr.bf16.gmra.mrb[0].mxu0 %v278
  %v580 = vpop.f32.mrb[0].mxu0
  %v581 = vadd.f32 %v102, %v580
  %v582 = vpop.f32.mrb[0].mxu0
  %v583 = vpop.f32.mrb[0].mxu0
  %v584 = vadd.f32 %v102, %v583
  %v585 = vpop.f32.mrb[0].mxu0
  %586 = vmatprep.mubr.bf16.mxu0 %v281
  %587 = vmatmul.mubr.bf16.gmra.mrb[0].mxu0 %v280
  %v588 = vpop.f32.mrb[0].mxu0
  %v589 = vadd.f32 %v102, %v588
  %v590 = vpop.f32.mrb[0].mxu0
  %v591 = vpop.f32.mrb[0].mxu0
  %v592 = vadd.f32 %v102, %v591
  %v593 = vpop.f32.mrb[0].mxu0
  %594 = vmatprep.mubr.bf16.mxu0 %v283
  %595 = vmatmul.mubr.bf16.gmra.mrb[0].mxu0 %v282
  %v596 = vpop.f32.mrb[0].mxu0
  %v597 = vadd.f32 %v102, %v596
  %v598 = vpop.f32.mrb[0].mxu0
  %v599 = vpop.f32.mrb[0].mxu0
  %v600 = vadd.f32 %v102, %v599
  %v601 = vpop.f32.mrb[0].mxu0
  %602 = vmatprep.mubr.bf16.mxu0 %v285
  %603 = vmatmul.mubr.bf16.gmra.mrb[0].mxu0 %v284
  %v604 = vpop.f32.mrb[0].mxu0
  %v605 = vadd.f32 %v102, %v604
  %v606 = vpop.f32.mrb[0].mxu0
  %v607 = vpop.f32.mrb[0].mxu0
  %v608 = vadd.f32 %v102, %v607
  %v609 = vpop.f32.mrb[0].mxu0
  %610 = vmatprep.mubr.bf16.mxu0 %v287
  %611 = vmatmul.mubr.bf16.gmra.mrb[0].mxu0 %v286
  %v612 = vpop.f32.mrb[0].mxu0
  %v613 = vadd.f32 %v102, %v612
  %v614 = vpop.f32.mrb[0].mxu0
  %v615 = vpop.f32.mrb[0].mxu0
  %v616 = vadd.f32 %v102, %v615
  %v617 = vpop.f32.mrb[0].mxu0
  %618 = vmatprep.mubr.bf16.mxu0 %v289
  %619 = vmatmul.mubr.bf16.gmra.mrb[0].mxu0 %v288
  %v620 = vpop.f32.mrb[0].mxu0
  %v621 = vadd.f32 %v102, %v620
  %v622 = vpop.f32.mrb[0].mxu0
  %v623 = vpop.f32.mrb[0].mxu0
  %v624 = vadd.f32 %v102, %v623
  %v625 = vpop.f32.mrb[0].mxu0
  %626 = vmatprep.mubr.bf16.mxu0 %v291
  %627 = vmatmul.mubr.bf16.gmra.mrb[0].mxu0 %v290
  %v628 = vpop.f32.mrb[0].mxu0
  %v629 = vadd.f32 %v102, %v628
  %v630 = vpop.f32.mrb[0].mxu0
  %v631 = vpop.f32.mrb[0].mxu0
  %v632 = vadd.f32 %v102, %v631
  %v633 = vpop.f32.mrb[0].mxu0
  %634 = vmatprep.mubr.bf16.mxu0 %v293
  %635 = vmatmul.mubr.bf16.gmra.mrb[0].mxu0 %v292
  %v636 = vpop.f32.mrb[0].mxu0
  %v637 = vadd.f32 %v102, %v636
  %v638 = vpop.f32.mrb[0].mxu0
  %v639 = vpop.f32.mrb[0].mxu0
  %v640 = vadd.f32 %v102, %v639
  %v641 = vpop.f32.mrb[0].mxu0
  %642 = vmatprep.mubr.bf16.mxu0 %v295
  %643 = vmatmul.mubr.bf16.gmra.mrb[0].mxu0 %v294
  %v644 = vpop.f32.mrb[0].mxu0
  %v645 = vadd.f32 %v102, %v644
  %v646 = vpop.f32.mrb[0].mxu0
  %v647 = vpop.f32.mrb[0].mxu0
  %v648 = vadd.f32 %v102, %v647
  %v649 = vpop.f32.mrb[0].mxu0
  %650 = vmatprep.mubr.bf16.mxu0 %v297
  %651 = vmatmul.mubr.bf16.gmra.mrb[0].mxu0 %v296
  %v652 = vpop.f32.mrb[0].mxu0
  %v653 = vadd.f32 %v102, %v652
  %v654 = vpop.f32.mrb[0].mxu0
  %v655 = vpop.f32.mrb[0].mxu0
  %v656 = vadd.f32 %v102, %v655
  %v657 = vpop.f32.mrb[0].mxu0
  %658 = vmatprep.mubr.bf16.mxu0 %v299
  %659 = vmatmul.mubr.bf16.gmra.mrb[0].mxu0 %v298
  %v660 = vpop.f32.mrb[0].mxu0
  %v661 = vadd.f32 %v102, %v660
  %v662 = vpop.f32.mrb[0].mxu0
  %v663 = vpop.f32.mrb[0].mxu0
  %v664 = vadd.f32 %v102, %v663
  %v665 = vpop.f32.mrb[0].mxu0
  %666 = vmatprep.mubr.bf16.mxu0 %v301
  %667 = vmatmul.mubr.bf16.gmra.mrb[0].mxu0 %v300
  %v668 = vpop.f32.mrb[0].mxu0
  %v669 = vadd.f32 %v102, %v668
  %v670 = vpop.f32.mrb[0].mxu0
  %v671 = vpop.f32.mrb[0].mxu0
  %v672 = vadd.f32 %v102, %v671
  %v673 = vpop.f32.mrb[0].mxu0
  %674 = vmatprep.mubr.bf16.mxu0 %v303
  %675 = vmatmul.mubr.bf16.gmra.mrb[0].mxu0 %v302
  %v676 = vpop.f32.mrb[0].mxu0
  %v677 = vadd.f32 %v102, %v676
  %v678 = vpop.f32.mrb[0].mxu0
  %v679 = vpop.f32.mrb[0].mxu0
  %v680 = vadd.f32 %v102, %v679
  %v681 = vpop.f32.mrb[0].mxu0
  %682 = vdwg.mxu0
  %v683 = vmax.f32 %v485, 0.0
  %v684 = vmax.f32 %v488, 0.0
  %v685 = vmax.f32 %v493, 0.0
  %v686 = vmax.f32 %v496, 0.0
  %v687 = vmax.f32 %v501, 0.0
  %v688 = vmax.f32 %v504, 0.0
  %v689 = vmax.f32 %v509, 0.0
  %v690 = vmax.f32 %v512, 0.0
  %v691 = vmax.f32 %v517, 0.0
  %v692 = vmax.f32 %v520, 0.0
  %v693 = vmax.f32 %v525, 0.0
  %v694 = vmax.f32 %v528, 0.0
  %v695 = vmax.f32 %v533, 0.0
  %v696 = vmax.f32 %v536, 0.0
  %v697 = vmax.f32 %v541, 0.0
  %v698 = vmax.f32 %v544, 0.0
  %v699 = vmax.f32 %v549, 0.0
  %v700 = vmax.f32 %v552, 0.0
  %v701 = vmax.f32 %v557, 0.0
  %v702 = vmax.f32 %v560, 0.0
  %v703 = vmax.f32 %v565, 0.0
  %v704 = vmax.f32 %v568, 0.0
  %v705 = vmax.f32 %v573, 0.0
  %v706 = vmax.f32 %v576, 0.0
  %v707 = vmax.f32 %v581, 0.0
  %v708 = vmax.f32 %v584, 0.0
  %v709 = vmax.f32 %v589, 0.0
  %v710 = vmax.f32 %v592, 0.0
  %v711 = vmax.f32 %v597, 0.0
  %v712 = vmax.f32 %v600, 0.0
  %v713 = vmax.f32 %v605, 0.0
  %v714 = vmax.f32 %v608, 0.0
  %v715 = vmax.f32 %v613, 0.0
  %v716 = vmax.f32 %v616, 0.0
  %v717 = vmax.f32 %v621, 0.0
  %v718 = vmax.f32 %v624, 0.0
  %v719 = vmax.f32 %v629, 0.0
  %v720 = vmax.f32 %v632, 0.0
  %v721 = vmax.f32 %v637, 0.0
  %v722 = vmax.f32 %v640, 0.0
  %v723 = vmax.f32 %v645, 0.0
  %v724 = vmax.f32 %v648, 0.0
  %v725 = vmax.f32 %v653, 0.0
  %v726 = vmax.f32 %v656, 0.0
  %v727 = vmax.f32 %v661, 0.0
  %v728 = vmax.f32 %v664, 0.0
  %v729 = vmax.f32 %v669, 0.0
  %v730 = vmax.f32 %v672, 0.0
  %v731 = vmax.f32 %v677, 0.0
  %v732 = vmax.f32 %v680, 0.0
  %v733 = vpack.c.bf16 %v684, %v683
  %v734 = vpack.c.bf16 %v686, %v685
  %v735 = vpack.c.bf16 %v688, %v687
  %v736 = vpack.c.bf16 %v690, %v689
  %v737 = vpack.c.bf16 %v692, %v691
  %v738 = vpack.c.bf16 %v694, %v693
  %v739 = vpack.c.bf16 %v696, %v695
  %v740 = vpack.c.bf16 %v698, %v697
  %v741 = vpack.c.bf16 %v700, %v699
  %v742 = vpack.c.bf16 %v702, %v701
  %v743 = vpack.c.bf16 %v704, %v703
  %v744 = vpack.c.bf16 %v706, %v705
  %v745 = vpack.c.bf16 %v708, %v707
  %v746 = vpack.c.bf16 %v710, %v709
  %v747 = vpack.c.bf16 %v712, %v711
  %v748 = vpack.c.bf16 %v714, %v713
  %v749 = vpack.c.bf16 %v716, %v715
  %v750 = vpack.c.bf16 %v718, %v717
  %v751 = vpack.c.bf16 %v720, %v719
  %v752 = vpack.c.bf16 %v722, %v721
  %v753 = vpack.c.bf16 %v724, %v723
  %v754 = vpack.c.bf16 %v726, %v725
  %v755 = vpack.c.bf16 %v728, %v727
  %v756 = vpack.c.bf16 %v730, %v729
  %v757 = vpack.c.bf16 %v732, %v731
  %v783 = vunpack.c.l.b16 %v733
  %v784 = vunpack.c.h.b16 %v733
  %v785 = vunpack.c.l.b16 %v734
  %v786 = vunpack.c.h.b16 %v734
  %v787 = vunpack.c.l.b16 %v735
  %v788 = vunpack.c.h.b16 %v735
  %v789 = vunpack.c.l.b16 %v736
  %v790 = vunpack.c.h.b16 %v736
  %v791 = vunpack.c.l.b16 %v737
  %v792 = vunpack.c.h.b16 %v737
  %v793 = vunpack.c.l.b16 %v738
  %v794 = vunpack.c.h.b16 %v738
  %v795 = vunpack.c.l.b16 %v739
  %v796 = vunpack.c.h.b16 %v739
  %v797 = vunpack.c.l.b16 %v740
  %v798 = vunpack.c.h.b16 %v740
  %v799 = vunpack.c.l.b16 %v741
  %v800 = vunpack.c.h.b16 %v741
  %v801 = vunpack.c.l.b16 %v742
  %v802 = vunpack.c.h.b16 %v742
  %v803 = vunpack.c.l.b16 %v743
  %v804 = vunpack.c.h.b16 %v743
  %v805 = vunpack.c.l.b16 %v744
  %v806 = vunpack.c.h.b16 %v744
  %v807 = vunpack.c.l.b16 %v745
  %v808 = vunpack.c.h.b16 %v745
  %v809 = vunpack.c.l.b16 %v746
  %v810 = vunpack.c.h.b16 %v746
  %v811 = vunpack.c.l.b16 %v747
  %v812 = vunpack.c.h.b16 %v747
  %v813 = vunpack.c.l.b16 %v748
  %v814 = vunpack.c.h.b16 %v748
  %v815 = vunpack.c.l.b16 %v749
  %v816 = vunpack.c.h.b16 %v749
  %v817 = vunpack.c.l.b16 %v750
  %v818 = vunpack.c.h.b16 %v750
  %v819 = vunpack.c.l.b16 %v751
  %v820 = vunpack.c.h.b16 %v751
  %v821 = vunpack.c.l.b16 %v752
  %v822 = vunpack.c.h.b16 %v752
  %v823 = vunpack.c.l.b16 %v753
  %v824 = vunpack.c.h.b16 %v753
  %v825 = vunpack.c.l.b16 %v754
  %v826 = vunpack.c.h.b16 %v754
  %v827 = vunpack.c.l.b16 %v755
  %v828 = vunpack.c.h.b16 %v755
  %v829 = vunpack.c.l.b16 %v756
  %v830 = vunpack.c.h.b16 %v756
  %v831 = vunpack.c.l.b16 %v757
  %v832 = vunpack.c.h.b16 %v757
  %v833 = vpack.c.b16 %v783, %v783
  %v834 = vpack.c.b16 %v784, %v784
  %v835 = vpack.c.b16 %v785, %v785
  %v836 = vpack.c.b16 %v786, %v786
  %v837 = vpack.c.b16 %v787, %v787
  %v838 = vpack.c.b16 %v788, %v788
  %v839 = vpack.c.b16 %v789, %v789
  %v840 = vpack.c.b16 %v790, %v790
  %v841 = vpack.c.b16 %v791, %v791
  %v842 = vpack.c.b16 %v792, %v792
  %v843 = vpack.c.b16 %v793, %v793
  %v844 = vpack.c.b16 %v794, %v794
  %v845 = vpack.c.b16 %v795, %v795
  %v846 = vpack.c.b16 %v796, %v796
  %v847 = vpack.c.b16 %v797, %v797
  %v848 = vpack.c.b16 %v798, %v798
  %v849 = vpack.c.b16 %v799, %v799
  %v850 = vpack.c.b16 %v800, %v800
  %v851 = vpack.c.b16 %v801, %v801
  %v852 = vpack.c.b16 %v802, %v802
  %v853 = vpack.c.b16 %v803, %v803
  %v854 = vpack.c.b16 %v804, %v804
  %v855 = vpack.c.b16 %v805, %v805
  %v856 = vpack.c.b16 %v806, %v806
  %v857 = vpack.c.b16 %v807, %v807
  %v858 = vpack.c.b16 %v808, %v808
  %v859 = vpack.c.b16 %v809, %v809
  %v860 = vpack.c.b16 %v810, %v810
  %v861 = vpack.c.b16 %v811, %v811
  %v862 = vpack.c.b16 %v812, %v812
  %v863 = vpack.c.b16 %v813, %v813
  %v864 = vpack.c.b16 %v814, %v814
  %v865 = vpack.c.b16 %v815, %v815
  %v866 = vpack.c.b16 %v816, %v816
  %v867 = vpack.c.b16 %v817, %v817
  %v868 = vpack.c.b16 %v818, %v818
  %v869 = vpack.c.b16 %v819, %v819
  %v870 = vpack.c.b16 %v820, %v820
  %v871 = vpack.c.b16 %v821, %v821
  %v872 = vpack.c.b16 %v822, %v822
  %v873 = vpack.c.b16 %v823, %v823
  %v874 = vpack.c.b16 %v824, %v824
  %v875 = vpack.c.b16 %v825, %v825
  %v876 = vpack.c.b16 %v826, %v826
  %v877 = vpack.c.b16 %v827, %v827
  %v878 = vpack.c.b16 %v828, %v828
  %v879 = vpack.c.b16 %v829, %v829
  %v880 = vpack.c.b16 %v830, %v830
  %v881 = vpack.c.b16 %v831, %v831
  %v882 = vpack.c.b16 %v832, %v832
  %933 = vst [vmem:[%s3] sm:$0xf] %v833
  %934 = vst [vmem:[%s3 + $0x4] sm:$0xf] %v834
  %935 = vst [vmem:[%s3 + $0x8] sm:$0xf] %v835
  %936 = vst [vmem:[%s3 + $0xc] sm:$0xf] %v836
  %937 = vst [vmem:[%s3 + $0x10] sm:$0xf] %v837
  %938 = vst [vmem:[%s3 + $0x14] sm:$0xf] %v838
  %939 = vst [vmem:[%s3 + $0x18] sm:$0xf] %v839
  %940 = vst [vmem:[%s3 + $0x1c] sm:$0xf] %v840
  %941 = vst [vmem:[%s3 + $0x20] sm:$0xf] %v841
  %942 = vst [vmem:[%s3 + $0x24] sm:$0xf] %v842
  %943 = vst [vmem:[%s3 + $0x28] sm:$0xf] %v843
  %944 = vst [vmem:[%s3 + $0x2c] sm:$0xf] %v844
  %945 = vst [vmem:[%s3 + $0x30] sm:$0xf] %v845
  %946 = vst [vmem:[%s3 + $0x34] sm:$0xf] %v846
  %947 = vst [vmem:[%s3 + $0x38] sm:$0xf] %v847
  %948 = vst [vmem:[%s3 + $0x3c] sm:$0xf] %v848
  %949 = vst [vmem:[%s3 + $0x40] sm:$0xf] %v849
  %950 = vst [vmem:[%s3 + $0x44] sm:$0xf] %v850
  %951 = vst [vmem:[%s3 + $0x48] sm:$0xf] %v851
  %952 = vst [vmem:[%s3 + $0x4c] sm:$0xf] %v852
  %953 = vst [vmem:[%s3 + $0x50] sm:$0xf] %v853
  %954 = vst [vmem:[%s3 + $0x54] sm:$0xf] %v854
  %955 = vst [vmem:[%s3 + $0x58] sm:$0xf] %v855
  %956 = vst [vmem:[%s3 + $0x5c] sm:$0xf] %v856
  %957 = vst [vmem:[%s3 + $0x60] sm:$0xf] %v857
  %958 = vst [vmem:[%s3 + $0x64] sm:$0xf] %v858
  %959 = vst [vmem:[%s3 + $0x68] sm:$0xf] %v859
  %960 = vst [vmem:[%s3 + $0x6c] sm:$0xf] %v860
  %961 = vst [vmem:[%s3 + $0x70] sm:$0xf] %v861
  %962 = vst [vmem:[%s3 + $0x74] sm:$0xf] %v862
  %963 = vst [vmem:[%s3 + $0x78] sm:$0xf] %v863
  %964 = vst [vmem:[%s3 + $0x7c] sm:$0xf] %v864
  %965 = vst [vmem:[%s3 + $0x80] sm:$0xf] %v865
  %966 = vst [vmem:[%s3 + $0x84] sm:$0xf] %v866
  %967 = vst [vmem:[%s3 + $0x88] sm:$0xf] %v867
  %968 = vst [vmem:[%s3 + $0x8c] sm:$0xf] %v868
  %969 = vst [vmem:[%s3 + $0x90] sm:$0xf] %v869
  %970 = vst [vmem:[%s3 + $0x94] sm:$0xf] %v870
  %971 = vst [vmem:[%s3 + $0x98] sm:$0xf] %v871
  %972 = vst [vmem:[%s3 + $0x9c] sm:$0xf] %v872
  %973 = vst [vmem:[%s3 + $0xa0] sm:$0xf] %v873
  %974 = vst [vmem:[%s3 + $0xa4] sm:$0xf] %v874
  %975 = vst [vmem:[%s3 + $0xa8] sm:$0xf] %v875
  %976 = vst [vmem:[%s3 + $0xac] sm:$0xf] %v876
  %977 = vst [vmem:[%s3 + $0xb0] sm:$0xf] %v877
  %978 = vst [vmem:[%s3 + $0xb4] sm:$0xf] %v878
  %979 = vst [vmem:[%s3 + $0xb8] sm:$0xf] %v879
  %980 = vst [vmem:[%s3 + $0xbc] sm:$0xf] %v880
  %981 = vst [vmem:[%s3 + $0xc0] sm:$0xf] %v881
  %982 = vst [vmem:[%s3 + $0xc4] sm:$0xf] %v882
  // Predicated region
  $region14: #{a2c_forward.4} parent=0 // pred_check
    _
  $region15: #{a2c_forward.4} parent=0 // pred_check_branch
    %984 = sbr.rel (0) target = $region17
  $region16: #{a2c_forward.4} parent=0 // pred_region
    _
  $region17: #{a2c_forward.4} parent=0 // pred_fallthru
    _
  // Predicated region
  $region18: #{a2c_forward.4} parent=0 // pred_check
    _
  $region19: #{a2c_forward.4} parent=0 // pred_check_branch
    %986 = sbr.rel (0) target = $region21
  $region20: #{a2c_forward.4} parent=0 // pred_region
    _
  $region21: #{a2c_forward.4} parent=0 // pred_fallthru
    _

// kernel: a2c_forward.5
$region0: #{a2c_forward.5}
  #allocation0 [shape = 'u32[]', space=smem, size = 0x4, offset = 0x4, fixed_abs, tag = 'smem constant byte address 0x4 - core index']
  #allocation1 [shape = 'u32[144,128]{1,0:T(1,128)}', space=vmem, size = 0x12000, scoped, tag = 'internal scratch']
  %s0 = inlined_call_operand.vmem [shape: bf16[81,512], index: 0, kind: input, shape index: {}]
  %s1 = inlined_call_operand.vmem [shape: bf16[512,128], index: 1, kind: input, shape index: {}]
  %s2 = inlined_call_operand.vmem [shape: f32[1,128], index: 2, kind: input, shape index: {}]
  %s3 = inlined_call_operand.vmem [shape: bf16[81,128], index: 3, kind: output, shape index: {}]
  %s4 = sld [smem:[#allocation0]]
  $region22: #{a2c_forward.5} parent=0
    _
  %s6 = ssub.s32 1, %s4
  %s7 = scalar_select 0, %s6, %s4
  // Predicated region
  $region2: #{a2c_forward.5} parent=0 // pred_check
    _
  $region3: #{a2c_forward.5} parent=0 // pred_check_branch
    %9 = sbr.rel (0) target = $region5
  $region4: #{a2c_forward.5} parent=0 // pred_region
    _
  $region5: #{a2c_forward.5} parent=0 // pred_fallthru
    _
  // Predicated region
  $region6: #{a2c_forward.5} parent=0 // pred_check
    _
  $region7: #{a2c_forward.5} parent=0 // pred_check_branch
    %11 = sbr.rel (0) target = $region9
  $region8: #{a2c_forward.5} parent=0 // pred_region
    _
  $region9: #{a2c_forward.5} parent=0 // pred_fallthru
    _
  // Predicated region
  $region10: #{a2c_forward.5} parent=0 // pred_check
    _
  $region11: #{a2c_forward.5} parent=0 // pred_check_branch
    %13 = sbr.rel (0) target = $region13
  $region12: #{a2c_forward.5} parent=0 // pred_region
    _
  $region13: #{a2c_forward.5} parent=0 // pred_fallthru
    _
  %v15 = vld [vmem:[%s0] sm:$0xff]
  %v16 = vld [vmem:[%s0 + $0x8] sm:$0xff]
  %v17 = vld [vmem:[%s0 + $0x10] sm:$0xff]
  %v18 = vld [vmem:[%s0 + $0x18] sm:$0xff]
  %v19 = vld [vmem:[%s0 + $0x20] sm:$0xff]
  %v20 = vld [vmem:[%s0 + $0x28] sm:$0xff]
  %v21 = vld [vmem:[%s0 + $0x30] sm:$0xff]
  %v22 = vld [vmem:[%s0 + $0x38] sm:$0xff]
  %v23 = vld [vmem:[%s0 + $0x40] sm:$0xff]
  %v24 = vld [vmem:[%s0 + $0x48] sm:$0xff]
  %v25 = vld [vmem:[%s0 + $0x50] sm:$0xff]
  %v26 = vld [vmem:[%s0 + $0x58] sm:$0xff]
  %v27 = vld [vmem:[%s0 + $0x60] sm:$0xff]
  %v28 = vld [vmem:[%s0 + $0x68] sm:$0xff]
  %v29 = vld [vmem:[%s0 + $0x70] sm:$0xff]
  %v30 = vld [vmem:[%s0 + $0x78] sm:$0xff]
  %v31 = vld [vmem:[%s0 + $0x80] sm:$0xff]
  %v32 = vld [vmem:[%s0 + $0x88] sm:$0xff]
  %v33 = vld [vmem:[%s0 + $0x90] sm:$0xff]
  %v34 = vld [vmem:[%s0 + $0x98] sm:$0xff]
  %v35 = vld [vmem:[%s0 + $0xa0] sm:$0x11]
  %v36 = vld [vmem:[%s0 + $0xa8] sm:$0x11]
  %v37 = vld [vmem:[%s1] sm:$0xf]
  %v38 = vld [vmem:[%s1 + $0x4] sm:$0xf]
  %v39 = vld [vmem:[%s1 + $0x8] sm:$0xf]
  %v40 = vld [vmem:[%s1 + $0xc] sm:$0xf]
  %v41 = vld [vmem:[%s1 + $0x10] sm:$0xf]
  %v42 = vld [vmem:[%s1 + $0x14] sm:$0xf]
  %v43 = vld [vmem:[%s1 + $0x18] sm:$0xf]
  %v44 = vld [vmem:[%s1 + $0x1c] sm:$0xf]
  %v45 = vld [vmem:[%s1 + $0x20] sm:$0xf]
  %v46 = vld [vmem:[%s1 + $0x24] sm:$0xf]
  %v47 = vld [vmem:[%s1 + $0x28] sm:$0xf]
  %v48 = vld [vmem:[%s1 + $0x2c] sm:$0xf]
  %v49 = vld [vmem:[%s1 + $0x30] sm:$0xf]
  %v50 = vld [vmem:[%s1 + $0x34] sm:$0xf]
  %v51 = vld [vmem:[%s1 + $0x38] sm:$0xf]
  %v52 = vld [vmem:[%s1 + $0x3c] sm:$0xf]
  %v53 = vld [vmem:[%s1 + $0x40] sm:$0xf]
  %v54 = vld [vmem:[%s1 + $0x44] sm:$0xf]
  %v55 = vld [vmem:[%s1 + $0x48] sm:$0xf]
  %v56 = vld [vmem:[%s1 + $0x4c] sm:$0xf]
  %v57 = vld [vmem:[%s1 + $0x50] sm:$0xf]
  %v58 = vld [vmem:[%s1 + $0x54] sm:$0xf]
  %v59 = vld [vmem:[%s1 + $0x58] sm:$0xf]
  %v60 = vld [vmem:[%s1 + $0x5c] sm:$0xf]
  %v61 = vld [vmem:[%s1 + $0x60] sm:$0xf]
  %v62 = vld [vmem:[%s1 + $0x64] sm:$0xf]
  %v63 = vld [vmem:[%s1 + $0x68] sm:$0xf]
  %v64 = vld [vmem:[%s1 + $0x6c] sm:$0xf]
  %v65 = vld [vmem:[%s1 + $0x70] sm:$0xf]
  %v66 = vld [vmem:[%s1 + $0x74] sm:$0xf]
  %v67 = vld [vmem:[%s1 + $0x78] sm:$0xf]
  %v68 = vld [vmem:[%s1 + $0x7c] sm:$0xf]
  %v69 = vld [vmem:[%s1 + $0x80] sm:$0xf]
  %v70 = vld [vmem:[%s1 + $0x84] sm:$0xf]
  %v71 = vld [vmem:[%s1 + $0x88] sm:$0xf]
  %v72 = vld [vmem:[%s1 + $0x8c] sm:$0xf]
  %v73 = vld [vmem:[%s1 + $0x90] sm:$0xf]
  %v74 = vld [vmem:[%s1 + $0x94] sm:$0xf]
  %v75 = vld [vmem:[%s1 + $0x98] sm:$0xf]
  %v76 = vld [vmem:[%s1 + $0x9c] sm:$0xf]
  %v77 = vld [vmem:[%s1 + $0xa0] sm:$0xf]
  %v78 = vld [vmem:[%s1 + $0xa4] sm:$0xf]
  %v79 = vld [vmem:[%s1 + $0xa8] sm:$0xf]
  %v80 = vld [vmem:[%s1 + $0xac] sm:$0xf]
  %v81 = vld [vmem:[%s1 + $0xb0] sm:$0xf]
  %v82 = vld [vmem:[%s1 + $0xb4] sm:$0xf]
  %v83 = vld [vmem:[%s1 + $0xb8] sm:$0xf]
  %v84 = vld [vmem:[%s1 + $0xbc] sm:$0xf]
  %v85 = vld [vmem:[%s1 + $0xc0] sm:$0xf]
  %v86 = vld [vmem:[%s1 + $0xc4] sm:$0xf]
  %v87 = vld [vmem:[%s1 + $0xc8] sm:$0xf]
  %v88 = vld [vmem:[%s1 + $0xcc] sm:$0xf]
  %v89 = vld [vmem:[%s1 + $0xd0] sm:$0xf]
  %v90 = vld [vmem:[%s1 + $0xd4] sm:$0xf]
  %v91 = vld [vmem:[%s1 + $0xd8] sm:$0xf]
  %v92 = vld [vmem:[%s1 + $0xdc] sm:$0xf]
  %v93 = vld [vmem:[%s1 + $0xe0] sm:$0xf]
  %v94 = vld [vmem:[%s1 + $0xe4] sm:$0xf]
  %v95 = vld [vmem:[%s1 + $0xe8] sm:$0xf]
  %v96 = vld [vmem:[%s1 + $0xec] sm:$0xf]
  %v97 = vld [vmem:[%s1 + $0xf0] sm:$0xf]
  %v98 = vld [vmem:[%s1 + $0xf4] sm:$0xf]
  %v99 = vld [vmem:[%s1 + $0xf8] sm:$0xf]
  %v100 = vld [vmem:[%s1 + $0xfc] sm:$0xf]
  %v101 = vld [vmem:[%s2] sm:$0x1]
  %v103 = vlaneseq
  %v104 = vshrl.u32 %v103, 7
  %v105 = vsub.s32 0, %v104
  %v106 = vrot.slane %v101, %v105
  %v130 = vunpack.c.l.b16 %v15
  %v131 = vunpack.c.h.b16 %v15
  %v132 = vunpack.c.l.b16 %v16
  %v133 = vunpack.c.h.b16 %v16
  %v134 = vunpack.c.l.b16 %v17
  %v135 = vunpack.c.h.b16 %v17
  %v136 = vunpack.c.l.b16 %v18
  %v137 = vunpack.c.h.b16 %v18
  %v138 = vunpack.c.l.b16 %v19
  %v139 = vunpack.c.h.b16 %v19
  %v140 = vunpack.c.l.b16 %v20
  %v141 = vunpack.c.h.b16 %v20
  %v142 = vunpack.c.l.b16 %v21
  %v143 = vunpack.c.h.b16 %v21
  %v144 = vunpack.c.l.b16 %v22
  %v145 = vunpack.c.h.b16 %v22
  %v146 = vunpack.c.l.b16 %v23
  %v147 = vunpack.c.h.b16 %v23
  %v148 = vunpack.c.l.b16 %v24
  %v149 = vunpack.c.h.b16 %v24
  %v150 = vunpack.c.l.b16 %v25
  %v151 = vunpack.c.h.b16 %v25
  %v152 = vunpack.c.l.b16 %v26
  %v153 = vunpack.c.h.b16 %v26
  %v154 = vunpack.c.l.b16 %v27
  %v155 = vunpack.c.h.b16 %v27
  %v156 = vunpack.c.l.b16 %v28
  %v157 = vunpack.c.h.b16 %v28
  %v158 = vunpack.c.l.b16 %v29
  %v159 = vunpack.c.h.b16 %v29
  %v160 = vunpack.c.l.b16 %v30
  %v161 = vunpack.c.h.b16 %v30
  %v162 = vunpack.c.l.b16 %v31
  %v163 = vunpack.c.h.b16 %v31
  %v164 = vunpack.c.l.b16 %v32
  %v165 = vunpack.c.h.b16 %v32
  %v166 = vunpack.c.l.b16 %v33
  %v167 = vunpack.c.h.b16 %v33
  %v168 = vunpack.c.l.b16 %v34
  %v169 = vunpack.c.h.b16 %v34
  %v170 = vunpack.c.l.b16 %v35
  %v171 = vunpack.c.h.b16 %v35
  %v172 = vunpack.c.l.b16 %v36
  %v173 = vunpack.c.h.b16 %v36
  %v174 = vpack.c.b16 %v134, %v130
  %v175 = vpack.c.b16 %v135, %v131
  %v176 = vpack.c.b16 %v136, %v132
  %v177 = vpack.c.b16 %v137, %v133
  %v178 = vpack.c.b16 %v142, %v138
  %v179 = vpack.c.b16 %v143, %v139
  %v180 = vpack.c.b16 %v144, %v140
  %v181 = vpack.c.b16 %v145, %v141
  %v182 = vpack.c.b16 %v150, %v146
  %v183 = vpack.c.b16 %v151, %v147
  %v184 = vpack.c.b16 %v152, %v148
  %v185 = vpack.c.b16 %v153, %v149
  %v186 = vpack.c.b16 %v158, %v154
  %v187 = vpack.c.b16 %v159, %v155
  %v188 = vpack.c.b16 %v160, %v156
  %v189 = vpack.c.b16 %v161, %v157
  %v190 = vpack.c.b16 %v166, %v162
  %v191 = vpack.c.b16 %v167, %v163
  %v192 = vpack.c.b16 %v168, %v164
  %v193 = vpack.c.b16 %v169, %v165
  %v194 = vpack.c.b16 %v170, %v170
  %v195 = vpack.c.b16 %v171, %v171
  %v196 = vpack.c.b16 %v172, %v172
  %v197 = vpack.c.b16 %v173, %v173
  %v286 = vunpack.c.l.b16 %v37
  %v287 = vunpack.c.l.b16 %v38
  %v288 = vunpack.c.l.b16 %v39
  %v289 = vunpack.c.l.b16 %v40
  %v290 = vunpack.c.l.b16 %v41
  %v291 = vunpack.c.l.b16 %v42
  %v292 = vunpack.c.l.b16 %v43
  %v293 = vunpack.c.l.b16 %v44
  %v294 = vunpack.c.l.b16 %v45
  %v295 = vunpack.c.l.b16 %v46
  %v296 = vunpack.c.l.b16 %v47
  %v297 = vunpack.c.l.b16 %v48
  %v298 = vunpack.c.l.b16 %v49
  %v299 = vunpack.c.l.b16 %v50
  %v300 = vunpack.c.l.b16 %v51
  %v301 = vunpack.c.l.b16 %v52
  %v302 = vunpack.c.l.b16 %v53
  %v303 = vunpack.c.l.b16 %v54
  %v304 = vunpack.c.l.b16 %v55
  %v305 = vunpack.c.l.b16 %v56
  %v306 = vunpack.c.l.b16 %v57
  %v307 = vunpack.c.l.b16 %v58
  %v308 = vunpack.c.l.b16 %v59
  %v309 = vunpack.c.l.b16 %v60
  %v310 = vunpack.c.l.b16 %v61
  %v311 = vunpack.c.l.b16 %v62
  %v312 = vunpack.c.l.b16 %v63
  %v313 = vunpack.c.l.b16 %v64
  %v314 = vunpack.c.l.b16 %v65
  %v315 = vunpack.c.l.b16 %v66
  %v316 = vunpack.c.l.b16 %v67
  %v317 = vunpack.c.l.b16 %v68
  %v318 = vunpack.c.l.b16 %v69
  %v319 = vunpack.c.l.b16 %v70
  %v320 = vunpack.c.l.b16 %v71
  %v321 = vunpack.c.l.b16 %v72
  %v322 = vunpack.c.l.b16 %v73
  %v323 = vunpack.c.l.b16 %v74
  %v324 = vunpack.c.l.b16 %v75
  %v325 = vunpack.c.l.b16 %v76
  %v326 = vunpack.c.l.b16 %v77
  %v327 = vunpack.c.l.b16 %v78
  %v328 = vunpack.c.l.b16 %v79
  %v329 = vunpack.c.l.b16 %v80
  %v330 = vunpack.c.l.b16 %v81
  %v331 = vunpack.c.l.b16 %v82
  %v332 = vunpack.c.l.b16 %v83
  %v333 = vunpack.c.l.b16 %v84
  %v334 = vunpack.c.l.b16 %v85
  %v335 = vunpack.c.l.b16 %v86
  %v336 = vunpack.c.l.b16 %v87
  %v337 = vunpack.c.l.b16 %v88
  %v338 = vunpack.c.l.b16 %v89
  %v339 = vunpack.c.l.b16 %v90
  %v340 = vunpack.c.l.b16 %v91
  %v341 = vunpack.c.l.b16 %v92
  %v342 = vunpack.c.l.b16 %v93
  %v343 = vunpack.c.l.b16 %v94
  %v344 = vunpack.c.l.b16 %v95
  %v345 = vunpack.c.l.b16 %v96
  %v346 = vunpack.c.l.b16 %v97
  %v347 = vunpack.c.l.b16 %v98
  %v348 = vunpack.c.l.b16 %v99
  %v349 = vunpack.c.l.b16 %v100
  %v350 = vpack.c.b16 %v287, %v286
  %v351 = vpack.c.b16 %v289, %v288
  %v352 = vpack.c.b16 %v291, %v290
  %v353 = vpack.c.b16 %v293, %v292
  %v354 = vpack.c.b16 %v295, %v294
  %v355 = vpack.c.b16 %v297, %v296
  %v356 = vpack.c.b16 %v299, %v298
  %v357 = vpack.c.b16 %v301, %v300
  %v358 = vpack.c.b16 %v303, %v302
  %v359 = vpack.c.b16 %v305, %v304
  %v360 = vpack.c.b16 %v307, %v306
  %v361 = vpack.c.b16 %v309, %v308
  %v362 = vpack.c.b16 %v311, %v310
  %v363 = vpack.c.b16 %v313, %v312
  %v364 = vpack.c.b16 %v315, %v314
  %v365 = vpack.c.b16 %v317, %v316
  %v366 = vpack.c.b16 %v319, %v318
  %v367 = vpack.c.b16 %v321, %v320
  %v368 = vpack.c.b16 %v323, %v322
  %v369 = vpack.c.b16 %v325, %v324
  %v370 = vpack.c.b16 %v327, %v326
  %v371 = vpack.c.b16 %v329, %v328
  %v372 = vpack.c.b16 %v331, %v330
  %v373 = vpack.c.b16 %v333, %v332
  %v374 = vpack.c.b16 %v335, %v334
  %v375 = vpack.c.b16 %v337, %v336
  %v376 = vpack.c.b16 %v339, %v338
  %v377 = vpack.c.b16 %v341, %v340
  %v378 = vpack.c.b16 %v343, %v342
  %v379 = vpack.c.b16 %v345, %v344
  %v380 = vpack.c.b16 %v347, %v346
  %v381 = vpack.c.b16 %v349, %v348
  %414 = vmatprep.subr.bf16.mxu0 0
  %415 = vmatpush1.bf16.msra.mxu0 %v350
  %416 = vmatprep.subr.bf16.mxu0 0
  %417 = vmatpush1.bf16.msra.mxu0 %v351
  %418 = vmatprep.subr.bf16.mxu0 0
  %419 = vmatpush1.bf16.msra.mxu0 %v352
  %420 = vmatprep.subr.bf16.mxu0 0
  %421 = vmatpush1.bf16.msra.mxu0 %v353
  %422 = vmatprep.subr.bf16.mxu0 0
  %423 = vmatpush1.bf16.msra.mxu0 %v354
  %424 = vmatprep.subr.bf16.mxu0 0
  %425 = vmatpush1.bf16.msra.mxu0 %v355
  %426 = vmatprep.subr.bf16.mxu0 0
  %427 = vmatpush1.bf16.msra.mxu0 %v356
  %428 = vmatprep.subr.bf16.mxu0 0
  %429 = vmatpush1.bf16.msra.mxu0 %v357
  %430 = vmatprep.subr.bf16.mxu0 0
  %431 = vmatpush1.bf16.msra.mxu0 %v358
  %432 = vmatprep.subr.bf16.mxu0 0
  %433 = vmatpush1.bf16.msra.mxu0 %v359
  %434 = vmatprep.subr.bf16.mxu0 0
  %435 = vmatpush1.bf16.msra.mxu0 %v360
  %436 = vmatprep.subr.bf16.mxu0 0
  %437 = vmatpush1.bf16.msra.mxu0 %v361
  %438 = vmatprep.subr.bf16.mxu0 0
  %439 = vmatpush1.bf16.msra.mxu0 %v362
  %440 = vmatprep.subr.bf16.mxu0 0
  %441 = vmatpush1.bf16.msra.mxu0 %v363
  %442 = vmatprep.subr.bf16.mxu0 0
  %443 = vmatpush1.bf16.msra.mxu0 %v364
  %444 = vmatprep.subr.bf16.mxu0 0
  %445 = vmatpush1.bf16.msra.mxu0 %v365
  %446 = vmatprep.mubr.bf16.mxu0 %v175
  %447 = vmatmul.mubr.bf16.gmra.mrb[0].mxu0 %v174
  %v448 = vpop.f32.mrb[0].mxu0
  %v449 = vadd.f32 %v106, %v448
  %v450 = vpop.f32.mrb[0].mxu0
  %v451 = vpop.f32.mrb[0].mxu0
  %v452 = vadd.f32 %v106, %v451
  %v453 = vpop.f32.mrb[0].mxu0
  %454 = vmatprep.mubr.bf16.mxu0 %v179
  %455 = vmatmul.mubr.bf16.gmra.mrb[0].mxu0 %v178
  %v456 = vpop.f32.mrb[0].mxu0
  %v457 = vadd.f32 %v106, %v456
  %v458 = vpop.f32.mrb[0].mxu0
  %v459 = vpop.f32.mrb[0].mxu0
  %v460 = vadd.f32 %v106, %v459
  %v461 = vpop.f32.mrb[0].mxu0
  %462 = vmatprep.mubr.bf16.mxu0 %v183
  %463 = vmatmul.mubr.bf16.gmra.mrb[0].mxu0 %v182
  %v464 = vpop.f32.mrb[0].mxu0
  %v465 = vadd.f32 %v106, %v464
  %v466 = vpop.f32.mrb[0].mxu0
  %v467 = vpop.f32.mrb[0].mxu0
  %v468 = vadd.f32 %v106, %v467
  %v469 = vpop.f32.mrb[0].mxu0
  %470 = vmatprep.mubr.bf16.mxu0 %v187
  %471 = vmatmul.mubr.bf16.gmra.mrb[0].mxu0 %v186
  %v472 = vpop.f32.mrb[0].mxu0
  %v473 = vadd.f32 %v106, %v472
  %v474 = vpop.f32.mrb[0].mxu0
  %v475 = vpop.f32.mrb[0].mxu0
  %v476 = vadd.f32 %v106, %v475
  %v477 = vpop.f32.mrb[0].mxu0
  %478 = vmatprep.mubr.bf16.mxu0 %v191
  %479 = vmatmul.mubr.bf16.gmra.mrb[0].mxu0 %v190
  %v480 = vpop.f32.mrb[0].mxu0
  %v481 = vadd.f32 %v106, %v480
  %v482 = vpop.f32.mrb[0].mxu0
  %v483 = vpop.f32.mrb[0].mxu0
  %v484 = vadd.f32 %v106, %v483
  %v485 = vpop.f32.mrb[0].mxu0
  %486 = vmatprep.mubr.bf16.mxu0 %v195
  %487 = vmatmul.mubr.bf16.gmra.mrb[0].mxu0 %v194
  %v488 = vpop.f32.mrb[0].mxu0
  %v489 = vadd.f32 %v106, %v488
  %v490 = vpop.f32.mrb[0].mxu0
  %v491 = vpop.f32.mrb[0].mxu0
  %v492 = vpop.f32.mrb[0].mxu0
  %493 = vdwg.mxu0
  %494 = vmatprep.subr.bf16.mxu0 0
  %495 = vmatpush1.bf16.msra.mxu0 %v366
  %496 = vmatprep.subr.bf16.mxu0 0
  %497 = vmatpush1.bf16.msra.mxu0 %v367
  %498 = vmatprep.subr.bf16.mxu0 0
  %499 = vmatpush1.bf16.msra.mxu0 %v368
  %500 = vmatprep.subr.bf16.mxu0 0
  %501 = vmatpush1.bf16.msra.mxu0 %v369
  %502 = vmatprep.subr.bf16.mxu0 0
  %503 = vmatpush1.bf16.msra.mxu0 %v370
  %504 = vmatprep.subr.bf16.mxu0 0
  %505 = vmatpush1.bf16.msra.mxu0 %v371
  %506 = vmatprep.subr.bf16.mxu0 0
  %507 = vmatpush1.bf16.msra.mxu0 %v372
  %508 = vmatprep.subr.bf16.mxu0 0
  %509 = vmatpush1.bf16.msra.mxu0 %v373
  %510 = vmatprep.subr.bf16.mxu0 0
  %511 = vmatpush1.bf16.msra.mxu0 %v374
  %512 = vmatprep.subr.bf16.mxu0 0
  %513 = vmatpush1.bf16.msra.mxu0 %v375
  %514 = vmatprep.subr.bf16.mxu0 0
  %515 = vmatpush1.bf16.msra.mxu0 %v376
  %516 = vmatprep.subr.bf16.mxu0 0
  %517 = vmatpush1.bf16.msra.mxu0 %v377
  %518 = vmatprep.subr.bf16.mxu0 0
  %519 = vmatpush1.bf16.msra.mxu0 %v378
  %520 = vmatprep.subr.bf16.mxu0 0
  %521 = vmatpush1.bf16.msra.mxu0 %v379
  %522 = vmatprep.subr.bf16.mxu0 0
  %523 = vmatpush1.bf16.msra.mxu0 %v380
  %524 = vmatprep.subr.bf16.mxu0 0
  %525 = vmatpush1.bf16.msra.mxu0 %v381
  %526 = vmatprep.mubr.bf16.mxu0 %v177
  %527 = vmatmul.mubr.bf16.gmra.mrb[0].mxu0 %v176
  %v528 = vpop.f32.mrb[0].mxu0
  %v529 = vadd.f32 %v449, %v528
  %v530 = vpop.f32.mrb[0].mxu0
  %v531 = vpop.f32.mrb[0].mxu0
  %v532 = vadd.f32 %v452, %v531
  %v533 = vpop.f32.mrb[0].mxu0
  %534 = vmatprep.mubr.bf16.mxu0 %v181
  %535 = vmatmul.mubr.bf16.gmra.mrb[0].mxu0 %v180
  %v536 = vpop.f32.mrb[0].mxu0
  %v537 = vadd.f32 %v457, %v536
  %v538 = vpop.f32.mrb[0].mxu0
  %v539 = vpop.f32.mrb[0].mxu0
  %v540 = vadd.f32 %v460, %v539
  %v541 = vpop.f32.mrb[0].mxu0
  %542 = vmatprep.mubr.bf16.mxu0 %v185
  %543 = vmatmul.mubr.bf16.gmra.mrb[0].mxu0 %v184
  %v544 = vpop.f32.mrb[0].mxu0
  %v545 = vadd.f32 %v465, %v544
  %v546 = vpop.f32.mrb[0].mxu0
  %v547 = vpop.f32.mrb[0].mxu0
  %v548 = vadd.f32 %v468, %v547
  %v549 = vpop.f32.mrb[0].mxu0
  %550 = vmatprep.mubr.bf16.mxu0 %v189
  %551 = vmatmul.mubr.bf16.gmra.mrb[0].mxu0 %v188
  %v552 = vpop.f32.mrb[0].mxu0
  %v553 = vadd.f32 %v473, %v552
  %v554 = vpop.f32.mrb[0].mxu0
  %v555 = vpop.f32.mrb[0].mxu0
  %v556 = vadd.f32 %v476, %v555
  %v557 = vpop.f32.mrb[0].mxu0
  %558 = vmatprep.mubr.bf16.mxu0 %v193
  %559 = vmatmul.mubr.bf16.gmra.mrb[0].mxu0 %v192
  %v560 = vpop.f32.mrb[0].mxu0
  %v561 = vadd.f32 %v481, %v560
  %v562 = vpop.f32.mrb[0].mxu0
  %v563 = vpop.f32.mrb[0].mxu0
  %v564 = vadd.f32 %v484, %v563
  %v565 = vpop.f32.mrb[0].mxu0
  %566 = vmatprep.mubr.bf16.mxu0 %v197
  %567 = vmatmul.mubr.bf16.gmra.mrb[0].mxu0 %v196
  %v568 = vpop.f32.mrb[0].mxu0
  %v569 = vadd.f32 %v489, %v568
  %v570 = vpop.f32.mrb[0].mxu0
  %v571 = vpop.f32.mrb[0].mxu0
  %v572 = vpop.f32.mrb[0].mxu0
  %573 = vdwg.mxu0
  %v574 = vmax.f32 %v529, 0.0
  %v575 = vmax.f32 %v532, 0.0
  %v576 = vmax.f32 %v537, 0.0
  %v577 = vmax.f32 %v540, 0.0
  %v578 = vmax.f32 %v545, 0.0
  %v579 = vmax.f32 %v548, 0.0
  %v580 = vmax.f32 %v553, 0.0
  %v581 = vmax.f32 %v556, 0.0
  %v582 = vmax.f32 %v561, 0.0
  %v583 = vmax.f32 %v564, 0.0
  %v584 = vmax.f32 %v569, 0.0
  %v585 = vpack.c.bf16 %v575, %v574
  %v586 = vpack.c.bf16 %v577, %v576
  %v587 = vpack.c.bf16 %v579, %v578
  %v588 = vpack.c.bf16 %v581, %v580
  %v589 = vpack.c.bf16 %v583, %v582
  %v590 = vpack.c.bf16 %v584, %v584
  %v597 = vunpack.c.l.b16 %v585
  %v598 = vunpack.c.h.b16 %v585
  %v599 = vunpack.c.l.b16 %v586
  %v600 = vunpack.c.h.b16 %v586
  %v601 = vunpack.c.l.b16 %v587
  %v602 = vunpack.c.h.b16 %v587
  %v603 = vunpack.c.l.b16 %v588
  %v604 = vunpack.c.h.b16 %v588
  %v605 = vunpack.c.l.b16 %v589
  %v606 = vunpack.c.h.b16 %v589
  %v607 = vunpack.c.l.b16 %v590
  %v608 = vpack.c.b16 %v597, %v597
  %v609 = vpack.c.b16 %v598, %v598
  %v610 = vpack.c.b16 %v599, %v599
  %v611 = vpack.c.b16 %v600, %v600
  %v612 = vpack.c.b16 %v601, %v601
  %v613 = vpack.c.b16 %v602, %v602
  %v614 = vpack.c.b16 %v603, %v603
  %v615 = vpack.c.b16 %v604, %v604
  %v616 = vpack.c.b16 %v605, %v605
  %v617 = vpack.c.b16 %v606, %v606
  %v618 = vpack.c.b16 %v607, %v607
  %630 = vst [vmem:[%s3] sm:$0xf] %v608
  %631 = vst [vmem:[%s3 + $0x4] sm:$0xf] %v609
  %632 = vst [vmem:[%s3 + $0x8] sm:$0xf] %v610
  %633 = vst [vmem:[%s3 + $0xc] sm:$0xf] %v611
  %634 = vst [vmem:[%s3 + $0x10] sm:$0xf] %v612
  %635 = vst [vmem:[%s3 + $0x14] sm:$0xf] %v613
  %636 = vst [vmem:[%s3 + $0x18] sm:$0xf] %v614
  %637 = vst [vmem:[%s3 + $0x1c] sm:$0xf] %v615
  %638 = vst [vmem:[%s3 + $0x20] sm:$0xf] %v616
  %639 = vst [vmem:[%s3 + $0x24] sm:$0xf] %v617
  %vm640 = vcmask 1040384
  %vm641 = vsmask.f32 256
  %vm642 = vmand %vm640, %vm641
  %v643 = vld [vmem:[%s3 + $0x28] sm:$0x1]
  %v644 = vsel %vm642, %v618, %v643
  %645 = vst [vmem:[%s3 + $0x28] sm:$0x1] %v644
  // Predicated region
  $region14: #{a2c_forward.5} parent=0 // pred_check
    _
  $region15: #{a2c_forward.5} parent=0 // pred_check_branch
    %647 = sbr.rel (0) target = $region17
  $region16: #{a2c_forward.5} parent=0 // pred_region
    _
  $region17: #{a2c_forward.5} parent=0 // pred_fallthru
    _
  // Predicated region
  $region18: #{a2c_forward.5} parent=0 // pred_check
    _
  $region19: #{a2c_forward.5} parent=0 // pred_check_branch
    %649 = sbr.rel (0) target = $region21
  $region20: #{a2c_forward.5} parent=0 // pred_region
    _
  $region21: #{a2c_forward.5} parent=0 // pred_fallthru
    _

// kernel: a2c_forward.6
$region0: #{a2c_forward.6}
  #allocation0 [shape = 'u32[]', space=smem, size = 0x4, offset = 0x4, fixed_abs, tag = 'smem constant byte address 0x4 - core index']
  #allocation1 [shape = 'u32[144,128]{1,0:T(1,128)}', space=vmem, size = 0x12000, scoped, tag = 'internal scratch']
  %s0 = inlined_call_operand.vmem [shape: bf16[49,576], index: 0, kind: input, shape index: {}]
  %s1 = inlined_call_operand.vmem [shape: bf16[576,64], index: 1, kind: input, shape index: {}]
  %s2 = inlined_call_operand.vmem [shape: f32[1,64], index: 2, kind: input, shape index: {}]
  %s3 = inlined_call_operand.vmem [shape: bf16[49,64], index: 3, kind: output, shape index: {}]
  %s4 = sld [smem:[#allocation0]]
  $region22: #{a2c_forward.6} parent=0
    _
  %s6 = ssub.s32 1, %s4
  %s7 = scalar_select 0, %s6, %s4
  // Predicated region
  $region2: #{a2c_forward.6} parent=0 // pred_check
    _
  $region3: #{a2c_forward.6} parent=0 // pred_check_branch
    %9 = sbr.rel (0) target = $region5
  $region4: #{a2c_forward.6} parent=0 // pred_region
    _
  $region5: #{a2c_forward.6} parent=0 // pred_fallthru
    _
  // Predicated region
  $region6: #{a2c_forward.6} parent=0 // pred_check
    _
  $region7: #{a2c_forward.6} parent=0 // pred_check_branch
    %11 = sbr.rel (0) target = $region9
  $region8: #{a2c_forward.6} parent=0 // pred_region
    _
  $region9: #{a2c_forward.6} parent=0 // pred_fallthru
    _
  // Predicated region
  $region10: #{a2c_forward.6} parent=0 // pred_check
    _
  $region11: #{a2c_forward.6} parent=0 // pred_check_branch
    %13 = sbr.rel (0) target = $region13
  $region12: #{a2c_forward.6} parent=0 // pred_region
    _
  $region13: #{a2c_forward.6} parent=0 // pred_fallthru
    _
  %v15 = vld [vmem:[%s0] sm:$0xff]
  %v16 = vld [vmem:[%s0 + $0x8] sm:$0xff]
  %v17 = vld [vmem:[%s0 + $0x10] sm:$0xf]
  %v18 = vld [vmem:[%s0 + $0x14] sm:$0xff]
  %v19 = vld [vmem:[%s0 + $0x1c] sm:$0xff]
  %v20 = vld [vmem:[%s0 + $0x24] sm:$0xf]
  %v21 = vld [vmem:[%s0 + $0x28] sm:$0xff]
  %v22 = vld [vmem:[%s0 + $0x30] sm:$0xff]
  %v23 = vld [vmem:[%s0 + $0x38] sm:$0xf]
  %v24 = vld [vmem:[%s0 + $0x3c] sm:$0xff]
  %v25 = vld [vmem:[%s0 + $0x44] sm:$0xff]
  %v26 = vld [vmem:[%s0 + $0x4c] sm:$0xf]
  %v27 = vld [vmem:[%s0 + $0x50] sm:$0xff]
  %v28 = vld [vmem:[%s0 + $0x58] sm:$0xff]
  %v29 = vld [vmem:[%s0 + $0x60] sm:$0xf]
  %v30 = vld [vmem:[%s0 + $0x64] sm:$0xff]
  %v31 = vld [vmem:[%s0 + $0x6c] sm:$0xff]
  %v32 = vld [vmem:[%s0 + $0x74] sm:$0xf]
  %v33 = vld [vmem:[%s0 + $0x78] sm:$0x11]
  %v34 = vld [vmem:[%s0 + $0x80] sm:$0x11]
  %v35 = vld [vmem:[%s0 + $0x88] sm:$0x1]
  %v36 = vld [vmem:[%s1] sm:$0xf]
  %v37 = vld [vmem:[%s1 + $0x4] sm:$0xf]
  %v38 = vld [vmem:[%s1 + $0x8] sm:$0xf]
  %v39 = vld [vmem:[%s1 + $0xc] sm:$0xf]
  %v40 = vld [vmem:[%s1 + $0x10] sm:$0xf]
  %v41 = vld [vmem:[%s1 + $0x14] sm:$0xf]
  %v42 = vld [vmem:[%s1 + $0x18] sm:$0xf]
  %v43 = vld [vmem:[%s1 + $0x1c] sm:$0xf]
  %v44 = vld [vmem:[%s1 + $0x20] sm:$0xf]
  %v45 = vld [vmem:[%s1 + $0x24] sm:$0xf]
  %v46 = vld [vmem:[%s1 + $0x28] sm:$0xf]
  %v47 = vld [vmem:[%s1 + $0x2c] sm:$0xf]
  %v48 = vld [vmem:[%s1 + $0x30] sm:$0xf]
  %v49 = vld [vmem:[%s1 + $0x34] sm:$0xf]
  %v50 = vld [vmem:[%s1 + $0x38] sm:$0xf]
  %v51 = vld [vmem:[%s1 + $0x3c] sm:$0xf]
  %v52 = vld [vmem:[%s1 + $0x40] sm:$0xf]
  %v53 = vld [vmem:[%s1 + $0x44] sm:$0xf]
  %v54 = vld [vmem:[%s1 + $0x48] sm:$0xf]
  %v55 = vld [vmem:[%s1 + $0x4c] sm:$0xf]
  %v56 = vld [vmem:[%s1 + $0x50] sm:$0xf]
  %v57 = vld [vmem:[%s1 + $0x54] sm:$0xf]
  %v58 = vld [vmem:[%s1 + $0x58] sm:$0xf]
  %v59 = vld [vmem:[%s1 + $0x5c] sm:$0xf]
  %v60 = vld [vmem:[%s1 + $0x60] sm:$0xf]
  %v61 = vld [vmem:[%s1 + $0x64] sm:$0xf]
  %v62 = vld [vmem:[%s1 + $0x68] sm:$0xf]
  %v63 = vld [vmem:[%s1 + $0x6c] sm:$0xf]
  %v64 = vld [vmem:[%s1 + $0x70] sm:$0xf]
  %v65 = vld [vmem:[%s1 + $0x74] sm:$0xf]
  %v66 = vld [vmem:[%s1 + $0x78] sm:$0xf]
  %v67 = vld [vmem:[%s1 + $0x7c] sm:$0xf]
  %v68 = vld [vmem:[%s1 + $0x80] sm:$0xf]
  %v69 = vld [vmem:[%s1 + $0x84] sm:$0xf]
  %v70 = vld [vmem:[%s1 + $0x88] sm:$0xf]
  %v71 = vld [vmem:[%s1 + $0x8c] sm:$0xf]
  %v72 = vld [vmem:[%s1 + $0x90] sm:$0xf]
  %v73 = vld [vmem:[%s1 + $0x94] sm:$0xf]
  %v74 = vld [vmem:[%s1 + $0x98] sm:$0xf]
  %v75 = vld [vmem:[%s1 + $0x9c] sm:$0xf]
  %v76 = vld [vmem:[%s1 + $0xa0] sm:$0xf]
  %v77 = vld [vmem:[%s1 + $0xa4] sm:$0xf]
  %v78 = vld [vmem:[%s1 + $0xa8] sm:$0xf]
  %v79 = vld [vmem:[%s1 + $0xac] sm:$0xf]
  %v80 = vld [vmem:[%s1 + $0xb0] sm:$0xf]
  %v81 = vld [vmem:[%s1 + $0xb4] sm:$0xf]
  %v82 = vld [vmem:[%s1 + $0xb8] sm:$0xf]
  %v83 = vld [vmem:[%s1 + $0xbc] sm:$0xf]
  %v84 = vld [vmem:[%s1 + $0xc0] sm:$0xf]
  %v85 = vld [vmem:[%s1 + $0xc4] sm:$0xf]
  %v86 = vld [vmem:[%s1 + $0xc8] sm:$0xf]
  %v87 = vld [vmem:[%s1 + $0xcc] sm:$0xf]
  %v88 = vld [vmem:[%s1 + $0xd0] sm:$0xf]
  %v89 = vld [vmem:[%s1 + $0xd4] sm:$0xf]
  %v90 = vld [vmem:[%s1 + $0xd8] sm:$0xf]
  %v91 = vld [vmem:[%s1 + $0xdc] sm:$0xf]
  %v92 = vld [vmem:[%s1 + $0xe0] sm:$0xf]
  %v93 = vld [vmem:[%s1 + $0xe4] sm:$0xf]
  %v94 = vld [vmem:[%s1 + $0xe8] sm:$0xf]
  %v95 = vld [vmem:[%s1 + $0xec] sm:$0xf]
  %v96 = vld [vmem:[%s1 + $0xf0] sm:$0xf]
  %v97 = vld [vmem:[%s1 + $0xf4] sm:$0xf]
  %v98 = vld [vmem:[%s1 + $0xf8] sm:$0xf]
  %v99 = vld [vmem:[%s1 + $0xfc] sm:$0xf]
  %v100 = vld [vmem:[%s1 + $0x100] sm:$0xf]
  %v101 = vld [vmem:[%s1 + $0x104] sm:$0xf]
  %v102 = vld [vmem:[%s1 + $0x108] sm:$0xf]
  %v103 = vld [vmem:[%s1 + $0x10c] sm:$0xf]
  %v104 = vld [vmem:[%s1 + $0x110] sm:$0xf]
  %v105 = vld [vmem:[%s1 + $0x114] sm:$0xf]
  %v106 = vld [vmem:[%s1 + $0x118] sm:$0xf]
  %v107 = vld [vmem:[%s1 + $0x11c] sm:$0xf]
  %v108 = vld [vmem:[%s2] sm:$0x1]
  %v110 = vlaneseq
  %v111 = vshrl.u32 %v110, 7
  %v112 = vsub.s32 0, %v111
  %v113 = vrot.slane %v108, %v112
  %v136 = vunpack.c.l.b16 %v15
  %v137 = vunpack.c.h.b16 %v15
  %v138 = vunpack.c.l.b16 %v16
  %v139 = vunpack.c.h.b16 %v16
  %v140 = vunpack.c.l.b16 %v17
  %v141 = vunpack.c.l.b16 %v18
  %v142 = vunpack.c.h.b16 %v18
  %v143 = vunpack.c.l.b16 %v19
  %v144 = vunpack.c.h.b16 %v19
  %v145 = vunpack.c.l.b16 %v20
  %v146 = vunpack.c.l.b16 %v21
  %v147 = vunpack.c.h.b16 %v21
  %v148 = vunpack.c.l.b16 %v22
  %v149 = vunpack.c.h.b16 %v22
  %v150 = vunpack.c.l.b16 %v23
  %v151 = vunpack.c.l.b16 %v24
  %v152 = vunpack.c.h.b16 %v24
  %v153 = vunpack.c.l.b16 %v25
  %v154 = vunpack.c.h.b16 %v25
  %v155 = vunpack.c.l.b16 %v26
  %v156 = vunpack.c.l.b16 %v27
  %v157 = vunpack.c.h.b16 %v27
  %v158 = vunpack.c.l.b16 %v28
  %v159 = vunpack.c.h.b16 %v28
  %v160 = vunpack.c.l.b16 %v29
  %v161 = vunpack.c.l.b16 %v30
  %v162 = vunpack.c.h.b16 %v30
  %v163 = vunpack.c.l.b16 %v31
  %v164 = vunpack.c.h.b16 %v31
  %v165 = vunpack.c.l.b16 %v32
  %v166 = vunpack.c.l.b16 %v33
  %v167 = vunpack.c.h.b16 %v33
  %v168 = vunpack.c.l.b16 %v34
  %v169 = vunpack.c.h.b16 %v34
  %v170 = vunpack.c.l.b16 %v35
  %v171 = vpack.c.b16 %v141, %v136
  %v172 = vpack.c.b16 %v142, %v137
  %v173 = vpack.c.b16 %v143, %v138
  %v174 = vpack.c.b16 %v144, %v139
  %v175 = vpack.c.b16 %v145, %v140
  %v176 = vpack.c.b16 %v151, %v146
  %v177 = vpack.c.b16 %v152, %v147
  %v178 = vpack.c.b16 %v153, %v148
  %v179 = vpack.c.b16 %v154, %v149
  %v180 = vpack.c.b16 %v155, %v150
  %v181 = vpack.c.b16 %v161, %v156
  %v182 = vpack.c.b16 %v162, %v157
  %v183 = vpack.c.b16 %v163, %v158
  %v184 = vpack.c.b16 %v164, %v159
  %v185 = vpack.c.b16 %v165, %v160
  %v186 = vpack.c.b16 %v166, %v166
  %v187 = vpack.c.b16 %v167, %v167
  %v188 = vpack.c.b16 %v168, %v168
  %v189 = vpack.c.b16 %v169, %v169
  %v190 = vpack.c.b16 %v170, %v170
  %v279 = vunpack.c.l.b16 %v36
  %v280 = vunpack.c.l.b16 %v37
  %v281 = vunpack.c.l.b16 %v38
  %v282 = vunpack.c.l.b16 %v39
  %v283 = vunpack.c.l.b16 %v40
  %v284 = vunpack.c.l.b16 %v41
  %v285 = vunpack.c.l.b16 %v42
  %v286 = vunpack.c.l.b16 %v43
  %v287 = vunpack.c.l.b16 %v44
  %v288 = vunpack.c.l.b16 %v45
  %v289 = vunpack.c.l.b16 %v46
  %v290 = vunpack.c.l.b16 %v47
  %v291 = vunpack.c.l.b16 %v48
  %v292 = vunpack.c.l.b16 %v49
  %v293 = vunpack.c.l.b16 %v50
  %v294 = vunpack.c.l.b16 %v51
  %v295 = vunpack.c.l.b16 %v52
  %v296 = vunpack.c.l.b16 %v53
  %v297 = vunpack.c.l.b16 %v54
  %v298 = vunpack.c.l.b16 %v55
  %v299 = vunpack.c.l.b16 %v56
  %v300 = vunpack.c.l.b16 %v57
  %v301 = vunpack.c.l.b16 %v58
  %v302 = vunpack.c.l.b16 %v59
  %v303 = vunpack.c.l.b16 %v60
  %v304 = vunpack.c.l.b16 %v61
  %v305 = vunpack.c.l.b16 %v62
  %v306 = vunpack.c.l.b16 %v63
  %v307 = vunpack.c.l.b16 %v64
  %v308 = vunpack.c.l.b16 %v65
  %v309 = vunpack.c.l.b16 %v66
  %v310 = vunpack.c.l.b16 %v67
  %v311 = vunpack.c.l.b16 %v68
  %v312 = vunpack.c.l.b16 %v69
  %v313 = vunpack.c.l.b16 %v70
  %v314 = vunpack.c.l.b16 %v71
  %v315 = vunpack.c.l.b16 %v72
  %v316 = vunpack.c.l.b16 %v73
  %v317 = vunpack.c.l.b16 %v74
  %v318 = vunpack.c.l.b16 %v75
  %v319 = vunpack.c.l.b16 %v76
  %v320 = vunpack.c.l.b16 %v77
  %v321 = vunpack.c.l.b16 %v78
  %v322 = vunpack.c.l.b16 %v79
  %v323 = vunpack.c.l.b16 %v80
  %v324 = vunpack.c.l.b16 %v81
  %v325 = vunpack.c.l.b16 %v82
  %v326 = vunpack.c.l.b16 %v83
  %v327 = vunpack.c.l.b16 %v84
  %v328 = vunpack.c.l.b16 %v85
  %v329 = vunpack.c.l.b16 %v86
  %v330 = vunpack.c.l.b16 %v87
  %v331 = vunpack.c.l.b16 %v88
  %v332 = vunpack.c.l.b16 %v89
  %v333 = vunpack.c.l.b16 %v90
  %v334 = vunpack.c.l.b16 %v91
  %v335 = vunpack.c.l.b16 %v92
  %v336 = vunpack.c.l.b16 %v93
  %v337 = vunpack.c.l.b16 %v94
  %v338 = vunpack.c.l.b16 %v95
  %v339 = vunpack.c.l.b16 %v96
  %v340 = vunpack.c.l.b16 %v97
  %v341 = vunpack.c.l.b16 %v98
  %v342 = vunpack.c.l.b16 %v99
  %v343 = vunpack.c.l.b16 %v100
  %v344 = vunpack.c.l.b16 %v101
  %v345 = vunpack.c.l.b16 %v102
  %v346 = vunpack.c.l.b16 %v103
  %v347 = vunpack.c.l.b16 %v104
  %v348 = vunpack.c.l.b16 %v105
  %v349 = vunpack.c.l.b16 %v106
  %v350 = vunpack.c.l.b16 %v107
  %v351 = vpack.c.b16 %v280, %v279
  %v352 = vpack.c.b16 %v282, %v281
  %v353 = vpack.c.b16 %v284, %v283
  %v354 = vpack.c.b16 %v286, %v285
  %v355 = vpack.c.b16 %v288, %v287
  %v356 = vpack.c.b16 %v290, %v289
  %v357 = vpack.c.b16 %v292, %v291
  %v358 = vpack.c.b16 %v294, %v293
  %v359 = vpack.c.b16 %v296, %v295
  %v360 = vpack.c.b16 %v298, %v297
  %v361 = vpack.c.b16 %v300, %v299
  %v362 = vpack.c.b16 %v302, %v301
  %v363 = vpack.c.b16 %v304, %v303
  %v364 = vpack.c.b16 %v306, %v305
  %v365 = vpack.c.b16 %v308, %v307
  %v366 = vpack.c.b16 %v310, %v309
  %v367 = vpack.c.b16 %v312, %v311
  %v368 = vpack.c.b16 %v314, %v313
  %v369 = vpack.c.b16 %v316, %v315
  %v370 = vpack.c.b16 %v318, %v317
  %v371 = vpack.c.b16 %v320, %v319
  %v372 = vpack.c.b16 %v322, %v321
  %v373 = vpack.c.b16 %v324, %v323
  %v374 = vpack.c.b16 %v326, %v325
  %v375 = vpack.c.b16 %v328, %v327
  %v376 = vpack.c.b16 %v330, %v329
  %v377 = vpack.c.b16 %v332, %v331
  %v378 = vpack.c.b16 %v334, %v333
  %v379 = vpack.c.b16 %v336, %v335
  %v380 = vpack.c.b16 %v338, %v337
  %v381 = vpack.c.b16 %v340, %v339
  %v382 = vpack.c.b16 %v342, %v341
  %v383 = vpack.c.b16 %v344, %v343
  %v384 = vpack.c.b16 %v346, %v345
  %v385 = vpack.c.b16 %v348, %v347
  %v386 = vpack.c.b16 %v350, %v349
  %vm423 = vcmask 523264
  %v425 = vsel %vm423, %v175, 0
  %v428 = vsel %vm423, %v180, 0
  %v431 = vsel %vm423, %v185, 0
  %v434 = vsel %vm423, %v190, 0
  %436 = vmatprep.subr.bf16.mxu0 0
  %437 = vmatpush1.bf16.msra.mxu0 %v351
  %438 = vmatprep.subr.bf16.mxu0 0
  %439 = vmatpush1.bf16.msra.mxu0 %v352
  %440 = vmatprep.subr.bf16.mxu0 0
  %441 = vmatpush1.bf16.msra.mxu0 %v353
  %442 = vmatprep.subr.bf16.mxu0 0
  %443 = vmatpush1.bf16.msra.mxu0 %v354
  %444 = vmatprep.subr.bf16.mxu0 0
  %445 = vmatpush1.bf16.msra.mxu0 %v355
  %446 = vmatprep.subr.bf16.mxu0 0
  %447 = vmatpush1.bf16.msra.mxu0 %v356
  %448 = vmatprep.subr.bf16.mxu0 0
  %449 = vmatpush1.bf16.msra.mxu0 %v357
  %450 = vmatprep.subr.bf16.mxu0 0
  %451 = vmatpush1.bf16.msra.mxu0 %v358
  %452 = vmatprep.subr.bf16.mxu0 0
  %453 = vmatpush1.bf16.msra.mxu0 %v359
  %454 = vmatprep.subr.bf16.mxu0 0
  %455 = vmatpush1.bf16.msra.mxu0 %v360
  %456 = vmatprep.subr.bf16.mxu0 0
  %457 = vmatpush1.bf16.msra.mxu0 %v361
  %458 = vmatprep.subr.bf16.mxu0 0
  %459 = vmatpush1.bf16.msra.mxu0 %v362
  %460 = vmatprep.subr.bf16.mxu0 0
  %461 = vmatpush1.bf16.msra.mxu0 %v363
  %462 = vmatprep.subr.bf16.mxu0 0
  %463 = vmatpush1.bf16.msra.mxu0 %v364
  %464 = vmatprep.subr.bf16.mxu0 0
  %465 = vmatpush1.bf16.msra.mxu0 %v365
  %466 = vmatprep.subr.bf16.mxu0 0
  %467 = vmatpush1.bf16.msra.mxu0 %v366
  %468 = vmatprep.mubr.bf16.mxu0 %v172
  %469 = vmatmul.mubr.bf16.gmra.mrb[0].mxu0 %v171
  %v470 = vpop.f32.mrb[0].mxu0
  %v471 = vadd.f32 %v113, %v470
  %v472 = vpop.f32.mrb[0].mxu0
  %v473 = vpop.f32.mrb[0].mxu0
  %v474 = vadd.f32 %v113, %v473
  %v475 = vpop.f32.mrb[0].mxu0
  %476 = vmatprep.mubr.bf16.mxu0 %v177
  %477 = vmatmul.mubr.bf16.gmra.mrb[0].mxu0 %v176
  %v478 = vpop.f32.mrb[0].mxu0
  %v479 = vadd.f32 %v113, %v478
  %v480 = vpop.f32.mrb[0].mxu0
  %v481 = vpop.f32.mrb[0].mxu0
  %v482 = vadd.f32 %v113, %v481
  %v483 = vpop.f32.mrb[0].mxu0
  %484 = vmatprep.mubr.bf16.mxu0 %v182
  %485 = vmatmul.mubr.bf16.gmra.mrb[0].mxu0 %v181
  %v486 = vpop.f32.mrb[0].mxu0
  %v487 = vadd.f32 %v113, %v486
  %v488 = vpop.f32.mrb[0].mxu0
  %v489 = vpop.f32.mrb[0].mxu0
  %v490 = vadd.f32 %v113, %v489
  %v491 = vpop.f32.mrb[0].mxu0
  %492 = vmatprep.mubr.bf16.mxu0 %v187
  %493 = vmatmul.mubr.bf16.gmra.mrb[0].mxu0 %v186
  %v494 = vpop.f32.mrb[0].mxu0
  %v495 = vadd.f32 %v113, %v494
  %v496 = vpop.f32.mrb[0].mxu0
  %v497 = vpop.f32.mrb[0].mxu0
  %v498 = vpop.f32.mrb[0].mxu0
  %499 = vdwg.mxu0
  %500 = vmatprep.subr.bf16.mxu0 0
  %501 = vmatpush1.bf16.msra.mxu0 %v367
  %502 = vmatprep.subr.bf16.mxu0 0
  %503 = vmatpush1.bf16.msra.mxu0 %v368
  %504 = vmatprep.subr.bf16.mxu0 0
  %505 = vmatpush1.bf16.msra.mxu0 %v369
  %506 = vmatprep.subr.bf16.mxu0 0
  %507 = vmatpush1.bf16.msra.mxu0 %v370
  %508 = vmatprep.subr.bf16.mxu0 0
  %509 = vmatpush1.bf16.msra.mxu0 %v371
  %510 = vmatprep.subr.bf16.mxu0 0
  %511 = vmatpush1.bf16.msra.mxu0 %v372
  %512 = vmatprep.subr.bf16.mxu0 0
  %513 = vmatpush1.bf16.msra.mxu0 %v373
  %514 = vmatprep.subr.bf16.mxu0 0
  %515 = vmatpush1.bf16.msra.mxu0 %v374
  %516 = vmatprep.subr.bf16.mxu0 0
  %517 = vmatpush1.bf16.msra.mxu0 %v375
  %518 = vmatprep.subr.bf16.mxu0 0
  %519 = vmatpush1.bf16.msra.mxu0 %v376
  %520 = vmatprep.subr.bf16.mxu0 0
  %521 = vmatpush1.bf16.msra.mxu0 %v377
  %522 = vmatprep.subr.bf16.mxu0 0
  %523 = vmatpush1.bf16.msra.mxu0 %v378
  %524 = vmatprep.subr.bf16.mxu0 0
  %525 = vmatpush1.bf16.msra.mxu0 %v379
  %526 = vmatprep.subr.bf16.mxu0 0
  %527 = vmatpush1.bf16.msra.mxu0 %v380
  %528 = vmatprep.subr.bf16.mxu0 0
  %529 = vmatpush1.bf16.msra.mxu0 %v381
  %530 = vmatprep.subr.bf16.mxu0 0
  %531 = vmatpush1.bf16.msra.mxu0 %v382
  %532 = vmatprep.mubr.bf16.mxu0 %v174
  %533 = vmatmul.mubr.bf16.gmra.mrb[0].mxu0 %v173
  %v534 = vpop.f32.mrb[0].mxu0
  %v535 = vadd.f32 %v471, %v534
  %v536 = vpop.f32.mrb[0].mxu0
  %v537 = vpop.f32.mrb[0].mxu0
  %v538 = vadd.f32 %v474, %v537
  %v539 = vpop.f32.mrb[0].mxu0
  %540 = vmatprep.mubr.bf16.mxu0 %v179
  %541 = vmatmul.mubr.bf16.gmra.mrb[0].mxu0 %v178
  %v542 = vpop.f32.mrb[0].mxu0
  %v543 = vadd.f32 %v479, %v542
  %v544 = vpop.f32.mrb[0].mxu0
  %v545 = vpop.f32.mrb[0].mxu0
  %v546 = vadd.f32 %v482, %v545
  %v547 = vpop.f32.mrb[0].mxu0
  %548 = vmatprep.mubr.bf16.mxu0 %v184
  %549 = vmatmul.mubr.bf16.gmra.mrb[0].mxu0 %v183
  %v550 = vpop.f32.mrb[0].mxu0
  %v551 = vadd.f32 %v487, %v550
  %v552 = vpop.f32.mrb[0].mxu0
  %v553 = vpop.f32.mrb[0].mxu0
  %v554 = vadd.f32 %v490, %v553
  %v555 = vpop.f32.mrb[0].mxu0
  %556 = vmatprep.mubr.bf16.mxu0 %v189
  %557 = vmatmul.mubr.bf16.gmra.mrb[0].mxu0 %v188
  %v558 = vpop.f32.mrb[0].mxu0
  %v559 = vadd.f32 %v495, %v558
  %v560 = vpop.f32.mrb[0].mxu0
  %v561 = vpop.f32.mrb[0].mxu0
  %v562 = vpop.f32.mrb[0].mxu0
  %563 = vdwg.mxu0
  %564 = vmatprep.subr.bf16.mxu0 0
  %565 = vmatpush1.bf16.msra.mxu0 %v383
  %566 = vmatprep.subr.bf16.mxu0 0
  %567 = vmatpush1.bf16.msra.mxu0 %v384
  %568 = vmatprep.subr.bf16.mxu0 0
  %569 = vmatpush1.bf16.msra.mxu0 %v385
  %570 = vmatprep.subr.bf16.mxu0 0
  %571 = vmatpush1.bf16.msra.mxu0 %v386
  %572 = vmatprep.subr.bf16.mxu0 0
  %573 = vmatpush1.bf16.msra.mxu0 0
  %574 = vmatprep.subr.bf16.mxu0 0
  %575 = vmatpush1.bf16.msra.mxu0 0
  %576 = vmatprep.subr.bf16.mxu0 0
  %577 = vmatpush1.bf16.msra.mxu0 0
  %578 = vmatprep.subr.bf16.mxu0 0
  %579 = vmatpush1.bf16.msra.mxu0 0
  %580 = vmatprep.subr.bf16.mxu0 0
  %581 = vmatpush1.bf16.msra.mxu0 0
  %582 = vmatprep.subr.bf16.mxu0 0
  %583 = vmatpush1.bf16.msra.mxu0 0
  %584 = vmatprep.subr.bf16.mxu0 0
  %585 = vmatpush1.bf16.msra.mxu0 0
  %586 = vmatprep.subr.bf16.mxu0 0
  %587 = vmatpush1.bf16.msra.mxu0 0
  %588 = vmatprep.subr.bf16.mxu0 0
  %589 = vmatpush1.bf16.msra.mxu0 0
  %590 = vmatprep.subr.bf16.mxu0 0
  %591 = vmatpush1.bf16.msra.mxu0 0
  %592 = vmatprep.subr.bf16.mxu0 0
  %593 = vmatpush1.bf16.msra.mxu0 0
  %594 = vmatprep.subr.bf16.mxu0 0
  %595 = vmatpush1.bf16.msra.mxu0 0
  %596 = vmatprep.mubr.bf16.mxu0 0
  %597 = vmatmul.mubr.bf16.gmra.mrb[0].mxu0 %v425
  %v598 = vpop.f32.mrb[0].mxu0
  %v599 = vadd.f32 %v535, %v598
  %v600 = vpop.f32.mrb[0].mxu0
  %v601 = vpop.f32.mrb[0].mxu0
  %v602 = vadd.f32 %v538, %v601
  %v603 = vpop.f32.mrb[0].mxu0
  %604 = vmatprep.mubr.bf16.mxu0 0
  %605 = vmatmul.mubr.bf16.gmra.mrb[0].mxu0 %v428
  %v606 = vpop.f32.mrb[0].mxu0
  %v607 = vadd.f32 %v543, %v606
  %v608 = vpop.f32.mrb[0].mxu0
  %v609 = vpop.f32.mrb[0].mxu0
  %v610 = vadd.f32 %v546, %v609
  %v611 = vpop.f32.mrb[0].mxu0
  %612 = vmatprep.mubr.bf16.mxu0 0
  %613 = vmatmul.mubr.bf16.gmra.mrb[0].mxu0 %v431
  %v614 = vpop.f32.mrb[0].mxu0
  %v615 = vadd.f32 %v551, %v614
  %v616 = vpop.f32.mrb[0].mxu0
  %v617 = vpop.f32.mrb[0].mxu0
  %v618 = vadd.f32 %v554, %v617
  %v619 = vpop.f32.mrb[0].mxu0
  %620 = vmatprep.mubr.bf16.mxu0 0
  %621 = vmatmul.mubr.bf16.gmra.mrb[0].mxu0 %v434
  %v622 = vpop.f32.mrb[0].mxu0
  %v623 = vadd.f32 %v559, %v622
  %v624 = vpop.f32.mrb[0].mxu0
  %v625 = vpop.f32.mrb[0].mxu0
  %v626 = vpop.f32.mrb[0].mxu0
  %627 = vdwg.mxu0
  %v628 = vmax.f32 %v599, 0.0
  %v629 = vmax.f32 %v602, 0.0
  %v630 = vmax.f32 %v607, 0.0
  %v631 = vmax.f32 %v610, 0.0
  %v632 = vmax.f32 %v615, 0.0
  %v633 = vmax.f32 %v618, 0.0
  %v634 = vmax.f32 %v623, 0.0
  %v635 = vpack.c.bf16 %v629, %v628
  %v636 = vpack.c.bf16 %v631, %v630
  %v637 = vpack.c.bf16 %v633, %v632
  %v638 = vpack.c.bf16 %v634, %v634
  %v643 = vunpack.c.l.b16 %v635
  %v644 = vunpack.c.h.b16 %v635
  %v645 = vunpack.c.l.b16 %v636
  %v646 = vunpack.c.h.b16 %v636
  %v647 = vunpack.c.l.b16 %v637
  %v648 = vunpack.c.h.b16 %v637
  %v649 = vunpack.c.l.b16 %v638
  %v650 = vpack.c.b16 %v643, %v643
  %v651 = vpack.c.b16 %v644, %v644
  %v652 = vpack.c.b16 %v645, %v645
  %v653 = vpack.c.b16 %v646, %v646
  %v654 = vpack.c.b16 %v647, %v647
  %v655 = vpack.c.b16 %v648, %v648
  %v656 = vpack.c.b16 %v649, %v649
  %vm664 = vcmask 519168
  %665 = vst.msk [vmem:[%s3] sm:$0xf] %vm664, %v650
  %666 = vst.msk [vmem:[%s3 + $0x4] sm:$0xf] %vm664, %v651
  %667 = vst.msk [vmem:[%s3 + $0x8] sm:$0xf] %vm664, %v652
  %668 = vst.msk [vmem:[%s3 + $0xc] sm:$0xf] %vm664, %v653
  %669 = vst.msk [vmem:[%s3 + $0x10] sm:$0xf] %vm664, %v654
  %670 = vst.msk [vmem:[%s3 + $0x14] sm:$0xf] %vm664, %v655
  %vm671 = vcmask 516096
  %vm672 = vsmask.f32 256
  %vm673 = vmand %vm671, %vm672
  %v674 = vld [vmem:[%s3 + $0x18] sm:$0x1]
  %v675 = vsel %vm673, %v656, %v674
  %676 = vst [vmem:[%s3 + $0x18] sm:$0x1] %v675
  // Predicated region
  $region14: #{a2c_forward.6} parent=0 // pred_check
    _
  $region15: #{a2c_forward.6} parent=0 // pred_check_branch
    %678 = sbr.rel (0) target = $region17
  $region16: #{a2c_forward.6} parent=0 // pred_region
    _
  $region17: #{a2c_forward.6} parent=0 // pred_fallthru
    _
  // Predicated region
  $region18: #{a2c_forward.6} parent=0 // pred_check
    _
  $region19: #{a2c_forward.6} parent=0 // pred_check_branch
    %680 = sbr.rel (0) target = $region21
  $region20: #{a2c_forward.6} parent=0 // pred_region
    _
  $region21: #{a2c_forward.6} parent=0 // pred_fallthru
    _

// kernel: a2c_forward.7
$region0: #{a2c_forward.7}
  #allocation0 [shape = 'u32[]', space=smem, size = 0x4, offset = 0x4, fixed_abs, tag = 'smem constant byte address 0x4 - core index']
  #allocation1 [shape = 'u32[144,128]{1,0:T(1,128)}', space=vmem, size = 0x12000, scoped, tag = 'internal scratch']
  %s0 = inlined_call_operand.vmem [shape: bf16[1,3136], index: 0, kind: input, shape index: {}]
  %s1 = inlined_call_operand.vmem [shape: bf16[2,3136,384], index: 1, kind: input, shape index: {}]
  %s2 = inlined_call_operand.vmem [shape: f32[2,1,384], index: 2, kind: input, shape index: {}]
  %s3 = inlined_call_operand.vmem [shape: bf16[2,384,128], index: 3, kind: input, shape index: {}]
  %s4 = inlined_call_operand.vmem [shape: f32[2,1,128], index: 4, kind: input, shape index: {}]
  %s5 = inlined_call_operand.vmem [shape: f32[2,1,128], index: 5, kind: output, shape index: {}]
  %s6 = sld [smem:[#allocation0]]
  $region53: #{a2c_forward.7} parent=0
    _
  %s8 = ssub.s32 1, %s6
  %s9 = scalar_select 0, %s8, %s6
  loop: start=0, step=1, limit=4
  $region2: #{a2c_forward.7} parent=0 // loop_pre_header
    _
  $region3: #{a2c_forward.7} parent=0 // loop_header
    %s11 = sphi 0, %s15
    %p12 = scmp.ge.s32.totalorder %s11, 4
    %s19 = sphi 0, %s19
    %s21 = sphi 0, %s19
    %s22 = sphi 0, %s21
    %s36 = sphi 0, %s22
    %s42 = sphi 0, %s44
    %s45 = sphi 0, %s42
    %s46 = sphi 0, %s45
    %s62 = sphi 0, %s46
    %s68 = sphi 0, %s70
    %s71 = sphi 0, %s68
    %s72 = sphi 0, %s71
    %s88 = sphi 0, %s72
    %s94 = sphi 0, %s96
    %s97 = sphi 0, %s94
    %s98 = sphi 0, %s97
    %s114 = sphi 0, %s98
    %s120 = sphi 0, %s122
    %s123 = sphi 0, %s120
    %s124 = sphi 0, %s123
    %s140 = sphi 0, %s124
    %s146 = sphi 0, %s148
    %s149 = sphi 0, %s146
    %s150 = sphi 0, %s149
    %s166 = sphi 0, %s150
  $region4: #{a2c_forward.7} parent=0 // loop_header_branch
    %14 = sbr.rel (%p12) target = $region8
  $region5: #{a2c_forward.7} parent=0 // loop_body
    %s16 = ssub.s32 %s11, 1
    %s17 = ssub.s32 %s11, 2
    %s18 = sadd.s32 %s11, 1
    %s20 = sadd.s32 %s19, 1
    %p23 = scmp.eq.s32.totalorder %s11, 1
    %p24 = scmp.ne.s32.totalorder %s19, %s21
    %p25 = scmp.eq.s32.totalorder %s11, 0
    %p26 = por %p24, %p25
    %p27 = scmp.ne.s32.totalorder %s19, %s21
    %p28 = scmp.eq.s32.totalorder %s16, 1
    %p29 = por %p27, %p28
    %p30 = scmp.ne.s32.totalorder %s21, %s22
    %p31 = scmp.eq.s32.totalorder %s16, 0
    %p32 = por %p30, %p31
    %p33 = scmp.ne.s32.totalorder %s21, %s22
    %p34 = scmp.eq.s32.totalorder %s17, 1
    %p35 = por %p33, %p34
    %p37 = scmp.ne.s32.totalorder %s22, %s36
    %p38 = scmp.eq.s32.totalorder %s17, 0
    %p39 = por %p37, %p38
    %s40 = ssub.s32 %s11, %s18
    %p41 = scmp.eq.s32.totalorder %s40, 0
    %s43 = sadd.s32 %s42, 1
    %s44 = scalar_select %p41, %s42, %s43
    %p47 = pneg %p41
    %p48 = scmp.eq.s32.totalorder %s11, 1
    %p49 = por %p47, %p48
    %p50 = scmp.ne.s32.totalorder %s42, %s45
    %p51 = scmp.eq.s32.totalorder %s11, 0
    %p52 = por %p50, %p51
    %p53 = scmp.ne.s32.totalorder %s42, %s45
    %p54 = scmp.eq.s32.totalorder %s16, 1
    %p55 = por %p53, %p54
    %p56 = scmp.ne.s32.totalorder %s45, %s46
    %p57 = scmp.eq.s32.totalorder %s16, 0
    %p58 = por %p56, %p57
    %p59 = scmp.ne.s32.totalorder %s45, %s46
    %p60 = scmp.eq.s32.totalorder %s17, 1
    %p61 = por %p59, %p60
    %p63 = scmp.ne.s32.totalorder %s46, %s62
    %p64 = scmp.eq.s32.totalorder %s17, 0
    %p65 = por %p63, %p64
    %s66 = ssub.s32 %s11, %s18
    %p67 = scmp.eq.s32.totalorder %s66, 0
    %s69 = sadd.s32 %s68, 1
    %s70 = scalar_select %p67, %s68, %s69
    %p73 = pneg %p67
    %p74 = scmp.eq.s32.totalorder %s11, 1
    %p75 = por %p73, %p74
    %p76 = scmp.ne.s32.totalorder %s68, %s71
    %p77 = scmp.eq.s32.totalorder %s11, 0
    %p78 = por %p76, %p77
    %p79 = scmp.ne.s32.totalorder %s68, %s71
    %p80 = scmp.eq.s32.totalorder %s16, 1
    %p81 = por %p79, %p80
    %p82 = scmp.ne.s32.totalorder %s71, %s72
    %p83 = scmp.eq.s32.totalorder %s16, 0
    %p84 = por %p82, %p83
    %p85 = scmp.ne.s32.totalorder %s71, %s72
    %p86 = scmp.eq.s32.totalorder %s17, 1
    %p87 = por %p85, %p86
    %p89 = scmp.ne.s32.totalorder %s72, %s88
    %p90 = scmp.eq.s32.totalorder %s17, 0
    %p91 = por %p89, %p90
    %s92 = ssub.s32 %s11, %s18
    %p93 = scmp.eq.s32.totalorder %s92, 0
    %s95 = sadd.s32 %s94, 1
    %s96 = scalar_select %p93, %s94, %s95
    %p99 = pneg %p93
    %p100 = scmp.eq.s32.totalorder %s11, 1
    %p101 = por %p99, %p100
    %p102 = scmp.ne.s32.totalorder %s94, %s97
    %p103 = scmp.eq.s32.totalorder %s11, 0
    %p104 = por %p102, %p103
    %p105 = scmp.ne.s32.totalorder %s94, %s97
    %p106 = scmp.eq.s32.totalorder %s16, 1
    %p107 = por %p105, %p106
    %p108 = scmp.ne.s32.totalorder %s97, %s98
    %p109 = scmp.eq.s32.totalorder %s16, 0
    %p110 = por %p108, %p109
    %p111 = scmp.ne.s32.totalorder %s97, %s98
    %p112 = scmp.eq.s32.totalorder %s17, 1
    %p113 = por %p111, %p112
    %p115 = scmp.ne.s32.totalorder %s98, %s114
    %p116 = scmp.eq.s32.totalorder %s17, 0
    %p117 = por %p115, %p116
    %s118 = ssub.s32 %s11, %s18
    %p119 = scmp.eq.s32.totalorder %s118, 0
    %s121 = sadd.s32 %s120, 1
    %s122 = scalar_select %p119, %s120, %s121
    %p125 = pneg %p119
    %p126 = scmp.eq.s32.totalorder %s11, 1
    %p127 = por %p125, %p126
    %p128 = scmp.ne.s32.totalorder %s120, %s123
    %p129 = scmp.eq.s32.totalorder %s11, 0
    %p130 = por %p128, %p129
    %p131 = scmp.ne.s32.totalorder %s120, %s123
    %p132 = scmp.eq.s32.totalorder %s16, 1
    %p133 = por %p131, %p132
    %p134 = scmp.ne.s32.totalorder %s123, %s124
    %p135 = scmp.eq.s32.totalorder %s16, 0
    %p136 = por %p134, %p135
    %p137 = scmp.ne.s32.totalorder %s123, %s124
    %p138 = scmp.eq.s32.totalorder %s17, 1
    %p139 = por %p137, %p138
    %p141 = scmp.ne.s32.totalorder %s124, %s140
    %p142 = scmp.eq.s32.totalorder %s17, 0
    %p143 = por %p141, %p142
    %s144 = ssub.s32 %s11, %s18
    %p145 = scmp.eq.s32.totalorder %s144, 0
    %s147 = sadd.s32 %s146, 1
    %s148 = scalar_select %p145, %s146, %s147
    %p151 = pneg %p145
    %p152 = scmp.eq.s32.totalorder %s11, 1
    %p153 = por %p151, %p152
    %p154 = scmp.ne.s32.totalorder %s146, %s149
    %p155 = scmp.eq.s32.totalorder %s11, 0
    %p156 = por %p154, %p155
    %p157 = scmp.ne.s32.totalorder %s146, %s149
    %p158 = scmp.eq.s32.totalorder %s16, 1
    %p159 = por %p157, %p158
    %p160 = scmp.ne.s32.totalorder %s149, %s150
    %p161 = scmp.eq.s32.totalorder %s16, 0
    %p162 = por %p160, %p161
    %p163 = scmp.ne.s32.totalorder %s149, %s150
    %p164 = scmp.eq.s32.totalorder %s17, 1
    %p165 = por %p163, %p164
    %p167 = scmp.ne.s32.totalorder %s150, %s166
    %p168 = scmp.eq.s32.totalorder %s17, 0
    %p169 = por %p167, %p168
    %p170 = scmp.le.s32.totalorder 1, %s11
    %p171 = scmp.lt.s32.totalorder %s11, 3
    %p172 = pnand %p170, %p171
    %p173 = pneg %p172
    // Predicated region
    $region9: #{a2c_forward.7} parent=5 // pred_check
      _
    $region10: #{a2c_forward.7} parent=5 // pred_check_branch
      %175 = sbr.rel (%p172) target = $region12
    $region11: #{a2c_forward.7} parent=5 // pred_region
      %s176 = ssub.s32 %s11, 1
      // Predicated region
      $region13: #{a2c_forward.7} parent=11 // pred_check
        %p177 = pneg %p32
      $region14: #{a2c_forward.7} parent=11 // pred_check_branch
        %179 = sbr.rel (%p177) target = $region16
      $region15: #{a2c_forward.7} parent=11 // pred_region
        _
      $region16: #{a2c_forward.7} parent=11 // pred_fallthru
        _
    $region12: #{a2c_forward.7} parent=5 // pred_fallthru
      _
    %p180 = scmp.lt.s32.totalorder %s11, 2
    // Predicated region
    $region17: #{a2c_forward.7} parent=5 // pred_check
      %p181 = pneg %p180
    $region18: #{a2c_forward.7} parent=5 // pred_check_branch
      %183 = sbr.rel (%p181) target = $region20
    $region19: #{a2c_forward.7} parent=5 // pred_region
      // Predicated region
      $region21: #{a2c_forward.7} parent=19 // pred_check
        %p184 = pneg %p52
      $region22: #{a2c_forward.7} parent=19 // pred_check_branch
        %186 = sbr.rel (%p184) target = $region24
      $region23: #{a2c_forward.7} parent=19 // pred_region
        %p187 = scmp.lt.s32.totalorder %s11, 1
        %s188 = scalar_select %p187, %s11, 1
        %s189 = smul.addr %s188, 1176
        %s190 = smul.addr %s189, 4
        %s191 = scalar_lea.vmem %s1, %s190
      $region24: #{a2c_forward.7} parent=19 // pred_fallthru
        _
      // Predicated region
      $region25: #{a2c_forward.7} parent=19 // pred_check
        %p192 = pneg %p78
      $region26: #{a2c_forward.7} parent=19 // pred_check_branch
        %194 = sbr.rel (%p192) target = $region28
      $region27: #{a2c_forward.7} parent=19 // pred_region
        %p195 = scmp.lt.s32.totalorder %s11, 1
        %s196 = scalar_select %p195, %s11, 1
        %s197 = smul.addr %s196, 3
        %s198 = scalar_lea.vmem %s2, %s197
      $region28: #{a2c_forward.7} parent=19 // pred_fallthru
        _
      // Predicated region
      $region29: #{a2c_forward.7} parent=19 // pred_check
        %p199 = pneg %p104
      $region30: #{a2c_forward.7} parent=19 // pred_check_branch
        %201 = sbr.rel (%p199) target = $region32
      $region31: #{a2c_forward.7} parent=19 // pred_region
        %p202 = scmp.lt.s32.totalorder %s11, 1
        %s203 = scalar_select %p202, %s11, 1
        %s204 = smul.addr %s203, 48
        %s205 = smul.addr %s204, 4
        %s206 = scalar_lea.vmem %s3, %s205
      $region32: #{a2c_forward.7} parent=19 // pred_fallthru
        _
      // Predicated region
      $region33: #{a2c_forward.7} parent=19 // pred_check
        %p207 = pneg %p130
      $region34: #{a2c_forward.7} parent=19 // pred_check_branch
        %209 = sbr.rel (%p207) target = $region36
      $region35: #{a2c_forward.7} parent=19 // pred_region
        %p210 = scmp.lt.s32.totalorder %s11, 1
        %s211 = scalar_select %p210, %s11, 1
        %s212 = scalar_lea.vmem %s4, %s211
      $region36: #{a2c_forward.7} parent=19 // pred_fallthru
        _
    $region20: #{a2c_forward.7} parent=5 // pred_fallthru
      _
    %p213 = scmp.le.s32.totalorder 1, %s11
    %p214 = scmp.lt.s32.totalorder %s11, 3
    %p215 = pnand %p213, %p214
    %p216 = pneg %p215
    // Predicated region
    $region37: #{a2c_forward.7} parent=5 // pred_check
      _
    $region38: #{a2c_forward.7} parent=5 // pred_check_branch
      %218 = sbr.rel (%p215) target = $region40
    $region39: #{a2c_forward.7} parent=5 // pred_region
      %s219 = ssub.s32 %s11, 1
      %p220 = pneg %p32
      %p221 = pneg %p29
      %p222 = scmp.lt.s32.totalorder %s16, 1
      %s223 = scalar_select %p222, %s16, 1
      %s224 = smul.addr %s223, 1176
      %s225 = smul.addr %s224, 4
      %s226 = scalar_lea.vmem %s1, %s225
      %p227 = pneg %p58
      %p228 = pneg %p55
      %p229 = scmp.lt.s32.totalorder %s16, 1
      %s230 = scalar_select %p229, %s16, 1
      %s231 = smul.addr %s230, 3
      %s232 = scalar_lea.vmem %s2, %s231
      %p233 = pneg %p84
      %p234 = pneg %p81
      %p235 = scmp.lt.s32.totalorder %s16, 1
      %s236 = scalar_select %p235, %s16, 1
      %s237 = smul.addr %s236, 48
      %s238 = smul.addr %s237, 4
      %s239 = scalar_lea.vmem %s3, %s238
      %p240 = pneg %p110
      %p241 = pneg %p107
      %p242 = scmp.lt.s32.totalorder %s16, 1
      %s243 = scalar_select %p242, %s16, 1
      %s244 = scalar_lea.vmem %s4, %s243
      %p245 = pneg %p136
      %p246 = pneg %p133
      %p247 = pneg %p162
      %p248 = pneg %p159
      %p249 = scmp.lt.s32.totalorder %s16, 1
      %s250 = scalar_select %p249, %s16, 1
      %s251 = scalar_lea.vmem %s5, %s250
      %p252 = scmp.lt.s32.totalorder %s16, 1
      %s253 = scalar_select %p252, %s16, 1
      %s254 = smul.addr %s253, 1176
      %s255 = smul.addr %s254, 4
      %s256 = scalar_lea.vmem %s1, %s255
      %p257 = scmp.lt.s32.totalorder %s16, 1
      %s258 = scalar_select %p257, %s16, 1
      %s259 = smul.addr %s258, 3
      %s260 = scalar_lea.vmem %s2, %s259
      %p261 = scmp.lt.s32.totalorder %s16, 1
      %s262 = scalar_select %p261, %s16, 1
      %s263 = smul.addr %s262, 48
      %s264 = smul.addr %s263, 4
      %s265 = scalar_lea.vmem %s3, %s264
      %p266 = scmp.lt.s32.totalorder %s16, 1
      %s267 = scalar_select %p266, %s16, 1
      %s268 = scalar_lea.vmem %s4, %s267
      %p269 = scmp.lt.s32.totalorder %s16, 1
      %s270 = scalar_select %p269, %s16, 1
      %s271 = scalar_lea.vmem %s5, %s270
      %v273 = vld [vmem:[%s0] sm:$0xff]
      %v274 = vld [vmem:[%s0 + $0x8] sm:$0xff]
      %v275 = vld [vmem:[%s0 + $0x10] sm:$0xff]
      %v276 = vld [vmem:[%s0 + $0x18] sm:$0x1]
      %v277 = vld [vmem:[%s256] sm:$0xff]
      %v278 = vld [vmem:[%s256 + $0x8] sm:$0xf]
      %v279 = vld [vmem:[%s256 + $0xc] sm:$0xff]
      %v280 = vld [vmem:[%s256 + $0x14] sm:$0xf]
      %v281 = vld [vmem:[%s256 + $0x18] sm:$0xff]
      %v282 = vld [vmem:[%s256 + $0x20] sm:$0xf]
      %v283 = vld [vmem:[%s256 + $0x24] sm:$0xff]
      %v284 = vld [vmem:[%s256 + $0x2c] sm:$0xf]
      %v285 = vld [vmem:[%s256 + $0x30] sm:$0xff]
      %v286 = vld [vmem:[%s256 + $0x38] sm:$0xf]
      %v287 = vld [vmem:[%s256 + $0x3c] sm:$0xff]
      %v288 = vld [vmem:[%s256 + $0x44] sm:$0xf]
      %v289 = vld [vmem:[%s256 + $0x48] sm:$0xff]
      %v290 = vld [vmem:[%s256 + $0x50] sm:$0xf]
      %v291 = vld [vmem:[%s256 + $0x54] sm:$0xff]
      %v292 = vld [vmem:[%s256 + $0x5c] sm:$0xf]
      %v293 = vld [vmem:[%s256 + $0x60] sm:$0xff]
      %v294 = vld [vmem:[%s256 + $0x68] sm:$0xf]
      %v295 = vld [vmem:[%s256 + $0x6c] sm:$0xff]
      %v296 = vld [vmem:[%s256 + $0x74] sm:$0xf]
      %v297 = vld [vmem:[%s256 + $0x78] sm:$0xff]
      %v298 = vld [vmem:[%s256 + $0x80] sm:$0xf]
      %v299 = vld [vmem:[%s256 + $0x84] sm:$0xff]
      %v300 = vld [vmem:[%s256 + $0x8c] sm:$0xf]
      %v301 = vld [vmem:[%s256 + $0x90] sm:$0xff]
      %v302 = vld [vmem:[%s256 + $0x98] sm:$0xf]
      %v303 = vld [vmem:[%s256 + $0x9c] sm:$0xff]
      %v304 = vld [vmem:[%s256 + $0xa4] sm:$0xf]
      %v305 = vld [vmem:[%s256 + $0xa8] sm:$0xff]
      %v306 = vld [vmem:[%s256 + $0xb0] sm:$0xf]
      %v307 = vld [vmem:[%s256 + $0xb4] sm:$0xff]
      %v308 = vld [vmem:[%s256 + $0xbc] sm:$0xf]
      %v309 = vld [vmem:[%s256 + $0xc0] sm:$0xff]
      %v310 = vld [vmem:[%s256 + $0xc8] sm:$0xf]
      %v311 = vld [vmem:[%s256 + $0xcc] sm:$0xff]
      %v312 = vld [vmem:[%s256 + $0xd4] sm:$0xf]
      %v313 = vld [vmem:[%s256 + $0xd8] sm:$0xff]
      %v314 = vld [vmem:[%s256 + $0xe0] sm:$0xf]
      %v315 = vld [vmem:[%s256 + $0xe4] sm:$0xff]
      %v316 = vld [vmem:[%s256 + $0xec] sm:$0xf]
      %v317 = vld [vmem:[%s256 + $0xf0] sm:$0xff]
      %v318 = vld [vmem:[%s256 + $0xf8] sm:$0xf]
      %v319 = vld [vmem:[%s256 + $0xfc] sm:$0xff]
      %v320 = vld [vmem:[%s256 + $0x104] sm:$0xf]
      %v321 = vld [vmem:[%s256 + $0x108] sm:$0xff]
      %v322 = vld [vmem:[%s256 + $0x110] sm:$0xf]
      %v323 = vld [vmem:[%s256 + $0x114] sm:$0xff]
      %v324 = vld [vmem:[%s256 + $0x11c] sm:$0xf]
      %v325 = vld [vmem:[%s256 + $0x120] sm:$0xff]
      %v326 = vld [vmem:[%s256 + $0x128] sm:$0xf]
      %v327 = vld [vmem:[%s256 + $0x12c] sm:$0xff]
      %v328 = vld [vmem:[%s256 + $0x134] sm:$0xf]
      %v329 = vld [vmem:[%s256 + $0x138] sm:$0xff]
      %v330 = vld [vmem:[%s256 + $0x140] sm:$0xf]
      %v331 = vld [vmem:[%s256 + $0x144] sm:$0xff]
      %v332 = vld [vmem:[%s256 + $0x14c] sm:$0xf]
      %v333 = vld [vmem:[%s256 + $0x150] sm:$0xff]
      %v334 = vld [vmem:[%s256 + $0x158] sm:$0xf]
      %v335 = vld [vmem:[%s256 + $0x15c] sm:$0xff]
      %v336 = vld [vmem:[%s256 + $0x164] sm:$0xf]
      %v337 = vld [vmem:[%s256 + $0x168] sm:$0xff]
      %v338 = vld [vmem:[%s256 + $0x170] sm:$0xf]
      %v339 = vld [vmem:[%s256 + $0x174] sm:$0xff]
      %v340 = vld [vmem:[%s256 + $0x17c] sm:$0xf]
      %v341 = vld [vmem:[%s256 + $0x180] sm:$0xff]
      %v342 = vld [vmem:[%s256 + $0x188] sm:$0xf]
      %v343 = vld [vmem:[%s256 + $0x18c] sm:$0xff]
      %v344 = vld [vmem:[%s256 + $0x194] sm:$0xf]
      %v345 = vld [vmem:[%s256 + $0x198] sm:$0xff]
      %v346 = vld [vmem:[%s256 + $0x1a0] sm:$0xf]
      %v347 = vld [vmem:[%s256 + $0x1a4] sm:$0xff]
      %v348 = vld [vmem:[%s256 + $0x1ac] sm:$0xf]
      %v349 = vld [vmem:[%s256 + $0x1b0] sm:$0xff]
      %v350 = vld [vmem:[%s256 + $0x1b8] sm:$0xf]
      %v351 = vld [vmem:[%s256 + $0x1bc] sm:$0xff]
      %v352 = vld [vmem:[%s256 + $0x1c4] sm:$0xf]
      %v353 = vld [vmem:[%s256 + $0x1c8] sm:$0xff]
      %v354 = vld [vmem:[%s256 + $0x1d0] sm:$0xf]
      %v355 = vld [vmem:[%s256 + $0x1d4] sm:$0xff]
      %v356 = vld [vmem:[%s256 + $0x1dc] sm:$0xf]
      %v357 = vld [vmem:[%s256 + $0x1e0] sm:$0xff]
      %v358 = vld [vmem:[%s256 + $0x1e8] sm:$0xf]
      %v359 = vld [vmem:[%s256 + $0x1ec] sm:$0xff]
      %v360 = vld [vmem:[%s256 + $0x1f4] sm:$0xf]
      %v361 = vld [vmem:[%s256 + $0x1f8] sm:$0xff]
      %v362 = vld [vmem:[%s256 + $0x200] sm:$0xf]
      %v363 = vld [vmem:[%s256 + $0x204] sm:$0xff]
      %v364 = vld [vmem:[%s256 + $0x20c] sm:$0xf]
      %v365 = vld [vmem:[%s256 + $0x210] sm:$0xff]
      %v366 = vld [vmem:[%s256 + $0x218] sm:$0xf]
      %v367 = vld [vmem:[%s256 + $0x21c] sm:$0xff]
      %v368 = vld [vmem:[%s256 + $0x224] sm:$0xf]
      %v369 = vld [vmem:[%s256 + $0x228] sm:$0xff]
      %v370 = vld [vmem:[%s256 + $0x230] sm:$0xf]
      %v371 = vld [vmem:[%s256 + $0x234] sm:$0xff]
      %v372 = vld [vmem:[%s256 + $0x23c] sm:$0xf]
      %v373 = vld [vmem:[%s256 + $0x240] sm:$0xff]
      %v374 = vld [vmem:[%s256 + $0x248] sm:$0xf]
      %v375 = vld [vmem:[%s256 + $0x24c] sm:$0xff]
      %v376 = vld [vmem:[%s256 + $0x254] sm:$0xf]
      %v377 = vld [vmem:[%s256 + $0x258] sm:$0xff]
      %v378 = vld [vmem:[%s256 + $0x260] sm:$0xf]
      %v379 = vld [vmem:[%s256 + $0x264] sm:$0xff]
      %v380 = vld [vmem:[%s256 + $0x26c] sm:$0xf]
      %v381 = vld [vmem:[%s256 + $0x270] sm:$0xff]
      %v382 = vld [vmem:[%s256 + $0x278] sm:$0xf]
      %v383 = vld [vmem:[%s256 + $0x27c] sm:$0xff]
      %v384 = vld [vmem:[%s256 + $0x284] sm:$0xf]
      %v385 = vld [vmem:[%s256 + $0x288] sm:$0xff]
      %v386 = vld [vmem:[%s256 + $0x290] sm:$0xf]
      %v387 = vld [vmem:[%s256 + $0x294] sm:$0xff]
      %v388 = vld [vmem:[%s256 + $0x29c] sm:$0xf]
      %v389 = vld [vmem:[%s256 + $0x2a0] sm:$0xff]
      %v390 = vld [vmem:[%s256 + $0x2a8] sm:$0xf]
      %v391 = vld [vmem:[%s256 + $0x2ac] sm:$0xff]
      %v392 = vld [vmem:[%s256 + $0x2b4] sm:$0xf]
      %v393 = vld [vmem:[%s256 + $0x2b8] sm:$0xff]
      %v394 = vld [vmem:[%s256 + $0x2c0] sm:$0xf]
      %v395 = vld [vmem:[%s256 + $0x2c4] sm:$0xff]
      %v396 = vld [vmem:[%s256 + $0x2cc] sm:$0xf]
      %v397 = vld [vmem:[%s256 + $0x2d0] sm:$0xff]
      %v398 = vld [vmem:[%s256 + $0x2d8] sm:$0xf]
      %v399 = vld [vmem:[%s256 + $0x2dc] sm:$0xff]
      %v400 = vld [vmem:[%s256 + $0x2e4] sm:$0xf]
      %v401 = vld [vmem:[%s256 + $0x2e8] sm:$0xff]
      %v402 = vld [vmem:[%s256 + $0x2f0] sm:$0xf]
      %v403 = vld [vmem:[%s256 + $0x2f4] sm:$0xff]
      %v404 = vld [vmem:[%s256 + $0x2fc] sm:$0xf]
      %v405 = vld [vmem:[%s256 + $0x300] sm:$0xff]
      %v406 = vld [vmem:[%s256 + $0x308] sm:$0xf]
      %v407 = vld [vmem:[%s256 + $0x30c] sm:$0xff]
      %v408 = vld [vmem:[%s256 + $0x314] sm:$0xf]
      %v409 = vld [vmem:[%s256 + $0x318] sm:$0xff]
      %v410 = vld [vmem:[%s256 + $0x320] sm:$0xf]
      %v411 = vld [vmem:[%s256 + $0x324] sm:$0xff]
      %v412 = vld [vmem:[%s256 + $0x32c] sm:$0xf]
      %v413 = vld [vmem:[%s256 + $0x330] sm:$0xff]
      %v414 = vld [vmem:[%s256 + $0x338] sm:$0xf]
      %v415 = vld [vmem:[%s256 + $0x33c] sm:$0xff]
      %v416 = vld [vmem:[%s256 + $0x344] sm:$0xf]
      %v417 = vld [vmem:[%s256 + $0x348] sm:$0xff]
      %v418 = vld [vmem:[%s256 + $0x350] sm:$0xf]
      %v419 = vld [vmem:[%s256 + $0x354] sm:$0xff]
      %v420 = vld [vmem:[%s256 + $0x35c] sm:$0xf]
      %v421 = vld [vmem:[%s256 + $0x360] sm:$0xff]
      %v422 = vld [vmem:[%s256 + $0x368] sm:$0xf]
      %v423 = vld [vmem:[%s256 + $0x36c] sm:$0xff]
      %v424 = vld [vmem:[%s256 + $0x374] sm:$0xf]
      %v425 = vld [vmem:[%s256 + $0x378] sm:$0xff]
      %v426 = vld [vmem:[%s256 + $0x380] sm:$0xf]
      %v427 = vld [vmem:[%s256 + $0x384] sm:$0xff]
      %v428 = vld [vmem:[%s256 + $0x38c] sm:$0xf]
      %v429 = vld [vmem:[%s256 + $0x390] sm:$0xff]
      %v430 = vld [vmem:[%s256 + $0x398] sm:$0xf]
      %v431 = vld [vmem:[%s256 + $0x39c] sm:$0xff]
      %v432 = vld [vmem:[%s256 + $0x3a4] sm:$0xf]
      %v433 = vld [vmem:[%s256 + $0x3a8] sm:$0xff]
      %v434 = vld [vmem:[%s256 + $0x3b0] sm:$0xf]
      %v435 = vld [vmem:[%s256 + $0x3b4] sm:$0xff]
      %v436 = vld [vmem:[%s256 + $0x3bc] sm:$0xf]
      %v437 = vld [vmem:[%s256 + $0x3c0] sm:$0xff]
      %v438 = vld [vmem:[%s256 + $0x3c8] sm:$0xf]
      %v439 = vld [vmem:[%s256 + $0x3cc] sm:$0xff]
      %v440 = vld [vmem:[%s256 + $0x3d4] sm:$0xf]
      %v441 = vld [vmem:[%s256 + $0x3d8] sm:$0xff]
      %v442 = vld [vmem:[%s256 + $0x3e0] sm:$0xf]
      %v443 = vld [vmem:[%s256 + $0x3e4] sm:$0xff]
      %v444 = vld [vmem:[%s256 + $0x3ec] sm:$0xf]
      %v445 = vld [vmem:[%s256 + $0x3f0] sm:$0xff]
      %v446 = vld [vmem:[%s256 + $0x3f8] sm:$0xf]
      %v447 = vld [vmem:[%s256 + $0x3fc] sm:$0xff]
      %v448 = vld [vmem:[%s256 + $0x404] sm:$0xf]
      %v449 = vld [vmem:[%s256 + $0x408] sm:$0xff]
      %v450 = vld [vmem:[%s256 + $0x410] sm:$0xf]
      %v451 = vld [vmem:[%s256 + $0x414] sm:$0xff]
      %v452 = vld [vmem:[%s256 + $0x41c] sm:$0xf]
      %v453 = vld [vmem:[%s256 + $0x420] sm:$0xff]
      %v454 = vld [vmem:[%s256 + $0x428] sm:$0xf]
      %v455 = vld [vmem:[%s256 + $0x42c] sm:$0xff]
      %v456 = vld [vmem:[%s256 + $0x434] sm:$0xf]
      %v457 = vld [vmem:[%s256 + $0x438] sm:$0xff]
      %v458 = vld [vmem:[%s256 + $0x440] sm:$0xf]
      %v459 = vld [vmem:[%s256 + $0x444] sm:$0xff]
      %v460 = vld [vmem:[%s256 + $0x44c] sm:$0xf]
      %v461 = vld [vmem:[%s256 + $0x450] sm:$0xff]
      %v462 = vld [vmem:[%s256 + $0x458] sm:$0xf]
      %v463 = vld [vmem:[%s256 + $0x45c] sm:$0xff]
      %v464 = vld [vmem:[%s256 + $0x464] sm:$0xf]
      %v465 = vld [vmem:[%s256 + $0x468] sm:$0xff]
      %v466 = vld [vmem:[%s256 + $0x470] sm:$0xf]
      %v467 = vld [vmem:[%s256 + $0x474] sm:$0xff]
      %v468 = vld [vmem:[%s256 + $0x47c] sm:$0xf]
      %v469 = vld [vmem:[%s256 + $0x480] sm:$0xff]
      %v470 = vld [vmem:[%s256 + $0x488] sm:$0xf]
      %v471 = vld [vmem:[%s256 + $0x48c] sm:$0xff]
      %v472 = vld [vmem:[%s256 + $0x494] sm:$0xf]
      %v473 = vld [vmem:[%s256 + $0x498] sm:$0xff]
      %v474 = vld [vmem:[%s256 + $0x4a0] sm:$0xf]
      %v475 = vld [vmem:[%s256 + $0x4a4] sm:$0xff]
      %v476 = vld [vmem:[%s256 + $0x4ac] sm:$0xf]
      %v477 = vld [vmem:[%s256 + $0x4b0] sm:$0xff]
      %v478 = vld [vmem:[%s256 + $0x4b8] sm:$0xf]
      %v479 = vld [vmem:[%s256 + $0x4bc] sm:$0xff]
      %v480 = vld [vmem:[%s256 + $0x4c4] sm:$0xf]
      %v481 = vld [vmem:[%s256 + $0x4c8] sm:$0xff]
      %v482 = vld [vmem:[%s256 + $0x4d0] sm:$0xf]
      %v483 = vld [vmem:[%s256 + $0x4d4] sm:$0xff]
      %v484 = vld [vmem:[%s256 + $0x4dc] sm:$0xf]
      %v485 = vld [vmem:[%s256 + $0x4e0] sm:$0xff]
      %v486 = vld [vmem:[%s256 + $0x4e8] sm:$0xf]
      %v487 = vld [vmem:[%s256 + $0x4ec] sm:$0xff]
      %v488 = vld [vmem:[%s256 + $0x4f4] sm:$0xf]
      %v489 = vld [vmem:[%s256 + $0x4f8] sm:$0xff]
      %v490 = vld [vmem:[%s256 + $0x500] sm:$0xf]
      %v491 = vld [vmem:[%s256 + $0x504] sm:$0xff]
      %v492 = vld [vmem:[%s256 + $0x50c] sm:$0xf]
      %v493 = vld [vmem:[%s256 + $0x510] sm:$0xff]
      %v494 = vld [vmem:[%s256 + $0x518] sm:$0xf]
      %v495 = vld [vmem:[%s256 + $0x51c] sm:$0xff]
      %v496 = vld [vmem:[%s256 + $0x524] sm:$0xf]
      %v497 = vld [vmem:[%s256 + $0x528] sm:$0xff]
      %v498 = vld [vmem:[%s256 + $0x530] sm:$0xf]
      %v499 = vld [vmem:[%s256 + $0x534] sm:$0xff]
      %v500 = vld [vmem:[%s256 + $0x53c] sm:$0xf]
      %v501 = vld [vmem:[%s256 + $0x540] sm:$0xff]
      %v502 = vld [vmem:[%s256 + $0x548] sm:$0xf]
      %v503 = vld [vmem:[%s256 + $0x54c] sm:$0xff]
      %v504 = vld [vmem:[%s256 + $0x554] sm:$0xf]
      %v505 = vld [vmem:[%s256 + $0x558] sm:$0xff]
      %v506 = vld [vmem:[%s256 + $0x560] sm:$0xf]
      %v507 = vld [vmem:[%s256 + $0x564] sm:$0xff]
      %v508 = vld [vmem:[%s256 + $0x56c] sm:$0xf]
      %v509 = vld [vmem:[%s256 + $0x570] sm:$0xff]
      %v510 = vld [vmem:[%s256 + $0x578] sm:$0xf]
      %v511 = vld [vmem:[%s256 + $0x57c] sm:$0xff]
      %v512 = vld [vmem:[%s256 + $0x584] sm:$0xf]
      %v513 = vld [vmem:[%s256 + $0x588] sm:$0xff]
      %v514 = vld [vmem:[%s256 + $0x590] sm:$0xf]
      %v515 = vld [vmem:[%s256 + $0x594] sm:$0xff]
      %v516 = vld [vmem:[%s256 + $0x59c] sm:$0xf]
      %v517 = vld [vmem:[%s256 + $0x5a0] sm:$0xff]
      %v518 = vld [vmem:[%s256 + $0x5a8] sm:$0xf]
      %v519 = vld [vmem:[%s256 + $0x5ac] sm:$0xff]
      %v520 = vld [vmem:[%s256 + $0x5b4] sm:$0xf]
      %v521 = vld [vmem:[%s256 + $0x5b8] sm:$0xff]
      %v522 = vld [vmem:[%s256 + $0x5c0] sm:$0xf]
      %v523 = vld [vmem:[%s256 + $0x5c4] sm:$0xff]
      %v524 = vld [vmem:[%s256 + $0x5cc] sm:$0xf]
      %v525 = vld [vmem:[%s256 + $0x5d0] sm:$0xff]
      %v526 = vld [vmem:[%s256 + $0x5d8] sm:$0xf]
      %v527 = vld [vmem:[%s256 + $0x5dc] sm:$0xff]
      %v528 = vld [vmem:[%s256 + $0x5e4] sm:$0xf]
      %v529 = vld [vmem:[%s256 + $0x5e8] sm:$0xff]
      %v530 = vld [vmem:[%s256 + $0x5f0] sm:$0xf]
      %v531 = vld [vmem:[%s256 + $0x5f4] sm:$0xff]
      %v532 = vld [vmem:[%s256 + $0x5fc] sm:$0xf]
      %v533 = vld [vmem:[%s256 + $0x600] sm:$0xff]
      %v534 = vld [vmem:[%s256 + $0x608] sm:$0xf]
      %v535 = vld [vmem:[%s256 + $0x60c] sm:$0xff]
      %v536 = vld [vmem:[%s256 + $0x614] sm:$0xf]
      %v537 = vld [vmem:[%s256 + $0x618] sm:$0xff]
      %v538 = vld [vmem:[%s256 + $0x620] sm:$0xf]
      %v539 = vld [vmem:[%s256 + $0x624] sm:$0xff]
      %v540 = vld [vmem:[%s256 + $0x62c] sm:$0xf]
      %v541 = vld [vmem:[%s256 + $0x630] sm:$0xff]
      %v542 = vld [vmem:[%s256 + $0x638] sm:$0xf]
      %v543 = vld [vmem:[%s256 + $0x63c] sm:$0xff]
      %v544 = vld [vmem:[%s256 + $0x644] sm:$0xf]
      %v545 = vld [vmem:[%s256 + $0x648] sm:$0xff]
      %v546 = vld [vmem:[%s256 + $0x650] sm:$0xf]
      %v547 = vld [vmem:[%s256 + $0x654] sm:$0xff]
      %v548 = vld [vmem:[%s256 + $0x65c] sm:$0xf]
      %v549 = vld [vmem:[%s256 + $0x660] sm:$0xff]
      %v550 = vld [vmem:[%s256 + $0x668] sm:$0xf]
      %v551 = vld [vmem:[%s256 + $0x66c] sm:$0xff]
      %v552 = vld [vmem:[%s256 + $0x674] sm:$0xf]
      %v553 = vld [vmem:[%s256 + $0x678] sm:$0xff]
      %v554 = vld [vmem:[%s256 + $0x680] sm:$0xf]
      %v555 = vld [vmem:[%s256 + $0x684] sm:$0xff]
      %v556 = vld [vmem:[%s256 + $0x68c] sm:$0xf]
      %v557 = vld [vmem:[%s256 + $0x690] sm:$0xff]
      %v558 = vld [vmem:[%s256 + $0x698] sm:$0xf]
      %v559 = vld [vmem:[%s256 + $0x69c] sm:$0xff]
      %v560 = vld [vmem:[%s256 + $0x6a4] sm:$0xf]
      %v561 = vld [vmem:[%s256 + $0x6a8] sm:$0xff]
      %v562 = vld [vmem:[%s256 + $0x6b0] sm:$0xf]
      %v563 = vld [vmem:[%s256 + $0x6b4] sm:$0xff]
      %v564 = vld [vmem:[%s256 + $0x6bc] sm:$0xf]
      %v565 = vld [vmem:[%s256 + $0x6c0] sm:$0xff]
      %v566 = vld [vmem:[%s256 + $0x6c8] sm:$0xf]
      %v567 = vld [vmem:[%s256 + $0x6cc] sm:$0xff]
      %v568 = vld [vmem:[%s256 + $0x6d4] sm:$0xf]
      %v569 = vld [vmem:[%s256 + $0x6d8] sm:$0xff]
      %v570 = vld [vmem:[%s256 + $0x6e0] sm:$0xf]
      %v571 = vld [vmem:[%s256 + $0x6e4] sm:$0xff]
      %v572 = vld [vmem:[%s256 + $0x6ec] sm:$0xf]
      %v573 = vld [vmem:[%s256 + $0x6f0] sm:$0xff]
      %v574 = vld [vmem:[%s256 + $0x6f8] sm:$0xf]
      %v575 = vld [vmem:[%s256 + $0x6fc] sm:$0xff]
      %v576 = vld [vmem:[%s256 + $0x704] sm:$0xf]
      %v577 = vld [vmem:[%s256 + $0x708] sm:$0xff]
      %v578 = vld [vmem:[%s256 + $0x710] sm:$0xf]
      %v579 = vld [vmem:[%s256 + $0x714] sm:$0xff]
      %v580 = vld [vmem:[%s256 + $0x71c] sm:$0xf]
      %v581 = vld [vmem:[%s256 + $0x720] sm:$0xff]
      %v582 = vld [vmem:[%s256 + $0x728] sm:$0xf]
      %v583 = vld [vmem:[%s256 + $0x72c] sm:$0xff]
      %v584 = vld [vmem:[%s256 + $0x734] sm:$0xf]
      %v585 = vld [vmem:[%s256 + $0x738] sm:$0xff]
      %v586 = vld [vmem:[%s256 + $0x740] sm:$0xf]
      %v587 = vld [vmem:[%s256 + $0x744] sm:$0xff]
      %v588 = vld [vmem:[%s256 + $0x74c] sm:$0xf]
      %v589 = vld [vmem:[%s256 + $0x750] sm:$0xff]
      %v590 = vld [vmem:[%s256 + $0x758] sm:$0xf]
      %v591 = vld [vmem:[%s256 + $0x75c] sm:$0xff]
      %v592 = vld [vmem:[%s256 + $0x764] sm:$0xf]
      %v593 = vld [vmem:[%s256 + $0x768] sm:$0xff]
      %v594 = vld [vmem:[%s256 + $0x770] sm:$0xf]
      %v595 = vld [vmem:[%s256 + $0x774] sm:$0xff]
      %v596 = vld [vmem:[%s256 + $0x77c] sm:$0xf]
      %v597 = vld [vmem:[%s256 + $0x780] sm:$0xff]
      %v598 = vld [vmem:[%s256 + $0x788] sm:$0xf]
      %v599 = vld [vmem:[%s256 + $0x78c] sm:$0xff]
      %v600 = vld [vmem:[%s256 + $0x794] sm:$0xf]
      %v601 = vld [vmem:[%s256 + $0x798] sm:$0xff]
      %v602 = vld [vmem:[%s256 + $0x7a0] sm:$0xf]
      %v603 = vld [vmem:[%s256 + $0x7a4] sm:$0xff]
      %v604 = vld [vmem:[%s256 + $0x7ac] sm:$0xf]
      %v605 = vld [vmem:[%s256 + $0x7b0] sm:$0xff]
      %v606 = vld [vmem:[%s256 + $0x7b8] sm:$0xf]
      %v607 = vld [vmem:[%s256 + $0x7bc] sm:$0xff]
      %v608 = vld [vmem:[%s256 + $0x7c4] sm:$0xf]
      %v609 = vld [vmem:[%s256 + $0x7c8] sm:$0xff]
      %v610 = vld [vmem:[%s256 + $0x7d0] sm:$0xf]
      %v611 = vld [vmem:[%s256 + $0x7d4] sm:$0xff]
      %v612 = vld [vmem:[%s256 + $0x7dc] sm:$0xf]
      %v613 = vld [vmem:[%s256 + $0x7e0] sm:$0xff]
      %v614 = vld [vmem:[%s256 + $0x7e8] sm:$0xf]
      %v615 = vld [vmem:[%s256 + $0x7ec] sm:$0xff]
      %v616 = vld [vmem:[%s256 + $0x7f4] sm:$0xf]
      %v617 = vld [vmem:[%s256 + $0x7f8] sm:$0xff]
      %v618 = vld [vmem:[%s256 + $0x800] sm:$0xf]
      %v619 = vld [vmem:[%s256 + $0x804] sm:$0xff]
      %v620 = vld [vmem:[%s256 + $0x80c] sm:$0xf]
      %v621 = vld [vmem:[%s256 + $0x810] sm:$0xff]
      %v622 = vld [vmem:[%s256 + $0x818] sm:$0xf]
      %v623 = vld [vmem:[%s256 + $0x81c] sm:$0xff]
      %v624 = vld [vmem:[%s256 + $0x824] sm:$0xf]
      %v625 = vld [vmem:[%s256 + $0x828] sm:$0xff]
      %v626 = vld [vmem:[%s256 + $0x830] sm:$0xf]
      %v627 = vld [vmem:[%s256 + $0x834] sm:$0xff]
      %v628 = vld [vmem:[%s256 + $0x83c] sm:$0xf]
      %v629 = vld [vmem:[%s256 + $0x840] sm:$0xff]
      %v630 = vld [vmem:[%s256 + $0x848] sm:$0xf]
      %v631 = vld [vmem:[%s256 + $0x84c] sm:$0xff]
      %v632 = vld [vmem:[%s256 + $0x854] sm:$0xf]
      %v633 = vld [vmem:[%s256 + $0x858] sm:$0xff]
      %v634 = vld [vmem:[%s256 + $0x860] sm:$0xf]
      %v635 = vld [vmem:[%s256 + $0x864] sm:$0xff]
      %v636 = vld [vmem:[%s256 + $0x86c] sm:$0xf]
      %v637 = vld [vmem:[%s256 + $0x870] sm:$0xff]
      %v638 = vld [vmem:[%s256 + $0x878] sm:$0xf]
      %v639 = vld [vmem:[%s256 + $0x87c] sm:$0xff]
      %v640 = vld [vmem:[%s256 + $0x884] sm:$0xf]
      %v641 = vld [vmem:[%s256 + $0x888] sm:$0xff]
      %v642 = vld [vmem:[%s256 + $0x890] sm:$0xf]
      %v643 = vld [vmem:[%s256 + $0x894] sm:$0xff]
      %v644 = vld [vmem:[%s256 + $0x89c] sm:$0xf]
      %v645 = vld [vmem:[%s256 + $0x8a0] sm:$0xff]
      %v646 = vld [vmem:[%s256 + $0x8a8] sm:$0xf]
      %v647 = vld [vmem:[%s256 + $0x8ac] sm:$0xff]
      %v648 = vld [vmem:[%s256 + $0x8b4] sm:$0xf]
      %v649 = vld [vmem:[%s256 + $0x8b8] sm:$0xff]
      %v650 = vld [vmem:[%s256 + $0x8c0] sm:$0xf]
      %v651 = vld [vmem:[%s256 + $0x8c4] sm:$0xff]
      %v652 = vld [vmem:[%s256 + $0x8cc] sm:$0xf]
      %v653 = vld [vmem:[%s256 + $0x8d0] sm:$0xff]
      %v654 = vld [vmem:[%s256 + $0x8d8] sm:$0xf]
      %v655 = vld [vmem:[%s256 + $0x8dc] sm:$0xff]
      %v656 = vld [vmem:[%s256 + $0x8e4] sm:$0xf]
      %v657 = vld [vmem:[%s256 + $0x8e8] sm:$0xff]
      %v658 = vld [vmem:[%s256 + $0x8f0] sm:$0xf]
      %v659 = vld [vmem:[%s256 + $0x8f4] sm:$0xff]
      %v660 = vld [vmem:[%s256 + $0x8fc] sm:$0xf]
      %v661 = vld [vmem:[%s256 + $0x900] sm:$0xff]
      %v662 = vld [vmem:[%s256 + $0x908] sm:$0xf]
      %v663 = vld [vmem:[%s256 + $0x90c] sm:$0xff]
      %v664 = vld [vmem:[%s256 + $0x914] sm:$0xf]
      %v665 = vld [vmem:[%s256 + $0x918] sm:$0xff]
      %v666 = vld [vmem:[%s256 + $0x920] sm:$0xf]
      %v667 = vld [vmem:[%s256 + $0x924] sm:$0xff]
      %v668 = vld [vmem:[%s256 + $0x92c] sm:$0xf]
      %v669 = vld [vmem:[%s256 + $0x930] sm:$0xff]
      %v670 = vld [vmem:[%s256 + $0x938] sm:$0xf]
      %v671 = vld [vmem:[%s256 + $0x93c] sm:$0xff]
      %v672 = vld [vmem:[%s256 + $0x944] sm:$0xf]
      %v673 = vld [vmem:[%s256 + $0x948] sm:$0xff]
      %v674 = vld [vmem:[%s256 + $0x950] sm:$0xf]
      %v675 = vld [vmem:[%s256 + $0x954] sm:$0xff]
      %v676 = vld [vmem:[%s256 + $0x95c] sm:$0xf]
      %v677 = vld [vmem:[%s256 + $0x960] sm:$0xff]
      %v678 = vld [vmem:[%s256 + $0x968] sm:$0xf]
      %v679 = vld [vmem:[%s256 + $0x96c] sm:$0xff]
      %v680 = vld [vmem:[%s256 + $0x974] sm:$0xf]
      %v681 = vld [vmem:[%s256 + $0x978] sm:$0xff]
      %v682 = vld [vmem:[%s256 + $0x980] sm:$0xf]
      %v683 = vld [vmem:[%s256 + $0x984] sm:$0xff]
      %v684 = vld [vmem:[%s256 + $0x98c] sm:$0xf]
      %v685 = vld [vmem:[%s256 + $0x990] sm:$0xff]
      %v686 = vld [vmem:[%s256 + $0x998] sm:$0xf]
      %v687 = vld [vmem:[%s256 + $0x99c] sm:$0xff]
      %v688 = vld [vmem:[%s256 + $0x9a4] sm:$0xf]
      %v689 = vld [vmem:[%s256 + $0x9a8] sm:$0xff]
      %v690 = vld [vmem:[%s256 + $0x9b0] sm:$0xf]
      %v691 = vld [vmem:[%s256 + $0x9b4] sm:$0xff]
      %v692 = vld [vmem:[%s256 + $0x9bc] sm:$0xf]
      %v693 = vld [vmem:[%s256 + $0x9c0] sm:$0xff]
      %v694 = vld [vmem:[%s256 + $0x9c8] sm:$0xf]
      %v695 = vld [vmem:[%s256 + $0x9cc] sm:$0xff]
      %v696 = vld [vmem:[%s256 + $0x9d4] sm:$0xf]
      %v697 = vld [vmem:[%s256 + $0x9d8] sm:$0xff]
      %v698 = vld [vmem:[%s256 + $0x9e0] sm:$0xf]
      %v699 = vld [vmem:[%s256 + $0x9e4] sm:$0xff]
      %v700 = vld [vmem:[%s256 + $0x9ec] sm:$0xf]
      %v701 = vld [vmem:[%s256 + $0x9f0] sm:$0xff]
      %v702 = vld [vmem:[%s256 + $0x9f8] sm:$0xf]
      %v703 = vld [vmem:[%s256 + $0x9fc] sm:$0xff]
      %v704 = vld [vmem:[%s256 + $0xa04] sm:$0xf]
      %v705 = vld [vmem:[%s256 + $0xa08] sm:$0xff]
      %v706 = vld [vmem:[%s256 + $0xa10] sm:$0xf]
      %v707 = vld [vmem:[%s256 + $0xa14] sm:$0xff]
      %v708 = vld [vmem:[%s256 + $0xa1c] sm:$0xf]
      %v709 = vld [vmem:[%s256 + $0xa20] sm:$0xff]
      %v710 = vld [vmem:[%s256 + $0xa28] sm:$0xf]
      %v711 = vld [vmem:[%s256 + $0xa2c] sm:$0xff]
      %v712 = vld [vmem:[%s256 + $0xa34] sm:$0xf]
      %v713 = vld [vmem:[%s256 + $0xa38] sm:$0xff]
      %v714 = vld [vmem:[%s256 + $0xa40] sm:$0xf]
      %v715 = vld [vmem:[%s256 + $0xa44] sm:$0xff]
      %v716 = vld [vmem:[%s256 + $0xa4c] sm:$0xf]
      %v717 = vld [vmem:[%s256 + $0xa50] sm:$0xff]
      %v718 = vld [vmem:[%s256 + $0xa58] sm:$0xf]
      %v719 = vld [vmem:[%s256 + $0xa5c] sm:$0xff]
      %v720 = vld [vmem:[%s256 + $0xa64] sm:$0xf]
      %v721 = vld [vmem:[%s256 + $0xa68] sm:$0xff]
      %v722 = vld [vmem:[%s256 + $0xa70] sm:$0xf]
      %v723 = vld [vmem:[%s256 + $0xa74] sm:$0xff]
      %v724 = vld [vmem:[%s256 + $0xa7c] sm:$0xf]
      %v725 = vld [vmem:[%s256 + $0xa80] sm:$0xff]
      %v726 = vld [vmem:[%s256 + $0xa88] sm:$0xf]
      %v727 = vld [vmem:[%s256 + $0xa8c] sm:$0xff]
      %v728 = vld [vmem:[%s256 + $0xa94] sm:$0xf]
      %v729 = vld [vmem:[%s256 + $0xa98] sm:$0xff]
      %v730 = vld [vmem:[%s256 + $0xaa0] sm:$0xf]
      %v731 = vld [vmem:[%s256 + $0xaa4] sm:$0xff]
      %v732 = vld [vmem:[%s256 + $0xaac] sm:$0xf]
      %v733 = vld [vmem:[%s256 + $0xab0] sm:$0xff]
      %v734 = vld [vmem:[%s256 + $0xab8] sm:$0xf]
      %v735 = vld [vmem:[%s256 + $0xabc] sm:$0xff]
      %v736 = vld [vmem:[%s256 + $0xac4] sm:$0xf]
      %v737 = vld [vmem:[%s256 + $0xac8] sm:$0xff]
      %v738 = vld [vmem:[%s256 + $0xad0] sm:$0xf]
      %v739 = vld [vmem:[%s256 + $0xad4] sm:$0xff]
      %v740 = vld [vmem:[%s256 + $0xadc] sm:$0xf]
      %v741 = vld [vmem:[%s256 + $0xae0] sm:$0xff]
      %v742 = vld [vmem:[%s256 + $0xae8] sm:$0xf]
      %v743 = vld [vmem:[%s256 + $0xaec] sm:$0xff]
      %v744 = vld [vmem:[%s256 + $0xaf4] sm:$0xf]
      %v745 = vld [vmem:[%s256 + $0xaf8] sm:$0xff]
      %v746 = vld [vmem:[%s256 + $0xb00] sm:$0xf]
      %v747 = vld [vmem:[%s256 + $0xb04] sm:$0xff]
      %v748 = vld [vmem:[%s256 + $0xb0c] sm:$0xf]
      %v749 = vld [vmem:[%s256 + $0xb10] sm:$0xff]
      %v750 = vld [vmem:[%s256 + $0xb18] sm:$0xf]
      %v751 = vld [vmem:[%s256 + $0xb1c] sm:$0xff]
      %v752 = vld [vmem:[%s256 + $0xb24] sm:$0xf]
      %v753 = vld [vmem:[%s256 + $0xb28] sm:$0xff]
      %v754 = vld [vmem:[%s256 + $0xb30] sm:$0xf]
      %v755 = vld [vmem:[%s256 + $0xb34] sm:$0xff]
      %v756 = vld [vmem:[%s256 + $0xb3c] sm:$0xf]
      %v757 = vld [vmem:[%s256 + $0xb40] sm:$0xff]
      %v758 = vld [vmem:[%s256 + $0xb48] sm:$0xf]
      %v759 = vld [vmem:[%s256 + $0xb4c] sm:$0xff]
      %v760 = vld [vmem:[%s256 + $0xb54] sm:$0xf]
      %v761 = vld [vmem:[%s256 + $0xb58] sm:$0xff]
      %v762 = vld [vmem:[%s256 + $0xb60] sm:$0xf]
      %v763 = vld [vmem:[%s256 + $0xb64] sm:$0xff]
      %v764 = vld [vmem:[%s256 + $0xb6c] sm:$0xf]
      %v765 = vld [vmem:[%s256 + $0xb70] sm:$0xff]
      %v766 = vld [vmem:[%s256 + $0xb78] sm:$0xf]
      %v767 = vld [vmem:[%s256 + $0xb7c] sm:$0xff]
      %v768 = vld [vmem:[%s256 + $0xb84] sm:$0xf]
      %v769 = vld [vmem:[%s256 + $0xb88] sm:$0xff]
      %v770 = vld [vmem:[%s256 + $0xb90] sm:$0xf]
      %v771 = vld [vmem:[%s256 + $0xb94] sm:$0xff]
      %v772 = vld [vmem:[%s256 + $0xb9c] sm:$0xf]
      %v773 = vld [vmem:[%s256 + $0xba0] sm:$0xff]
      %v774 = vld [vmem:[%s256 + $0xba8] sm:$0xf]
      %v775 = vld [vmem:[%s256 + $0xbac] sm:$0xff]
      %v776 = vld [vmem:[%s256 + $0xbb4] sm:$0xf]
      %v777 = vld [vmem:[%s256 + $0xbb8] sm:$0xff]
      %v778 = vld [vmem:[%s256 + $0xbc0] sm:$0xf]
      %v779 = vld [vmem:[%s256 + $0xbc4] sm:$0xff]
      %v780 = vld [vmem:[%s256 + $0xbcc] sm:$0xf]
      %v781 = vld [vmem:[%s256 + $0xbd0] sm:$0xff]
      %v782 = vld [vmem:[%s256 + $0xbd8] sm:$0xf]
      %v783 = vld [vmem:[%s256 + $0xbdc] sm:$0xff]
      %v784 = vld [vmem:[%s256 + $0xbe4] sm:$0xf]
      %v785 = vld [vmem:[%s256 + $0xbe8] sm:$0xff]
      %v786 = vld [vmem:[%s256 + $0xbf0] sm:$0xf]
      %v787 = vld [vmem:[%s256 + $0xbf4] sm:$0xff]
      %v788 = vld [vmem:[%s256 + $0xbfc] sm:$0xf]
      %v789 = vld [vmem:[%s256 + $0xc00] sm:$0xff]
      %v790 = vld [vmem:[%s256 + $0xc08] sm:$0xf]
      %v791 = vld [vmem:[%s256 + $0xc0c] sm:$0xff]
      %v792 = vld [vmem:[%s256 + $0xc14] sm:$0xf]
      %v793 = vld [vmem:[%s256 + $0xc18] sm:$0xff]
      %v794 = vld [vmem:[%s256 + $0xc20] sm:$0xf]
      %v795 = vld [vmem:[%s256 + $0xc24] sm:$0xff]
      %v796 = vld [vmem:[%s256 + $0xc2c] sm:$0xf]
      %v797 = vld [vmem:[%s256 + $0xc30] sm:$0xff]
      %v798 = vld [vmem:[%s256 + $0xc38] sm:$0xf]
      %v799 = vld [vmem:[%s256 + $0xc3c] sm:$0xff]
      %v800 = vld [vmem:[%s256 + $0xc44] sm:$0xf]
      %v801 = vld [vmem:[%s256 + $0xc48] sm:$0xff]
      %v802 = vld [vmem:[%s256 + $0xc50] sm:$0xf]
      %v803 = vld [vmem:[%s256 + $0xc54] sm:$0xff]
      %v804 = vld [vmem:[%s256 + $0xc5c] sm:$0xf]
      %v805 = vld [vmem:[%s256 + $0xc60] sm:$0xff]
      %v806 = vld [vmem:[%s256 + $0xc68] sm:$0xf]
      %v807 = vld [vmem:[%s256 + $0xc6c] sm:$0xff]
      %v808 = vld [vmem:[%s256 + $0xc74] sm:$0xf]
      %v809 = vld [vmem:[%s256 + $0xc78] sm:$0xff]
      %v810 = vld [vmem:[%s256 + $0xc80] sm:$0xf]
      %v811 = vld [vmem:[%s256 + $0xc84] sm:$0xff]
      %v812 = vld [vmem:[%s256 + $0xc8c] sm:$0xf]
      %v813 = vld [vmem:[%s256 + $0xc90] sm:$0xff]
      %v814 = vld [vmem:[%s256 + $0xc98] sm:$0xf]
      %v815 = vld [vmem:[%s256 + $0xc9c] sm:$0xff]
      %v816 = vld [vmem:[%s256 + $0xca4] sm:$0xf]
      %v817 = vld [vmem:[%s256 + $0xca8] sm:$0xff]
      %v818 = vld [vmem:[%s256 + $0xcb0] sm:$0xf]
      %v819 = vld [vmem:[%s256 + $0xcb4] sm:$0xff]
      %v820 = vld [vmem:[%s256 + $0xcbc] sm:$0xf]
      %v821 = vld [vmem:[%s256 + $0xcc0] sm:$0xff]
      %v822 = vld [vmem:[%s256 + $0xcc8] sm:$0xf]
      %v823 = vld [vmem:[%s256 + $0xccc] sm:$0xff]
      %v824 = vld [vmem:[%s256 + $0xcd4] sm:$0xf]
      %v825 = vld [vmem:[%s256 + $0xcd8] sm:$0xff]
      %v826 = vld [vmem:[%s256 + $0xce0] sm:$0xf]
      %v827 = vld [vmem:[%s256 + $0xce4] sm:$0xff]
      %v828 = vld [vmem:[%s256 + $0xcec] sm:$0xf]
      %v829 = vld [vmem:[%s256 + $0xcf0] sm:$0xff]
      %v830 = vld [vmem:[%s256 + $0xcf8] sm:$0xf]
      %v831 = vld [vmem:[%s256 + $0xcfc] sm:$0xff]
      %v832 = vld [vmem:[%s256 + $0xd04] sm:$0xf]
      %v833 = vld [vmem:[%s256 + $0xd08] sm:$0xff]
      %v834 = vld [vmem:[%s256 + $0xd10] sm:$0xf]
      %v835 = vld [vmem:[%s256 + $0xd14] sm:$0xff]
      %v836 = vld [vmem:[%s256 + $0xd1c] sm:$0xf]
      %v837 = vld [vmem:[%s256 + $0xd20] sm:$0xff]
      %v838 = vld [vmem:[%s256 + $0xd28] sm:$0xf]
      %v839 = vld [vmem:[%s256 + $0xd2c] sm:$0xff]
      %v840 = vld [vmem:[%s256 + $0xd34] sm:$0xf]
      %v841 = vld [vmem:[%s256 + $0xd38] sm:$0xff]
      %v842 = vld [vmem:[%s256 + $0xd40] sm:$0xf]
      %v843 = vld [vmem:[%s256 + $0xd44] sm:$0xff]
      %v844 = vld [vmem:[%s256 + $0xd4c] sm:$0xf]
      %v845 = vld [vmem:[%s256 + $0xd50] sm:$0xff]
      %v846 = vld [vmem:[%s256 + $0xd58] sm:$0xf]
      %v847 = vld [vmem:[%s256 + $0xd5c] sm:$0xff]
      %v848 = vld [vmem:[%s256 + $0xd64] sm:$0xf]
      %v849 = vld [vmem:[%s256 + $0xd68] sm:$0xff]
      %v850 = vld [vmem:[%s256 + $0xd70] sm:$0xf]
      %v851 = vld [vmem:[%s256 + $0xd74] sm:$0xff]
      %v852 = vld [vmem:[%s256 + $0xd7c] sm:$0xf]
      %v853 = vld [vmem:[%s256 + $0xd80] sm:$0xff]
      %v854 = vld [vmem:[%s256 + $0xd88] sm:$0xf]
      %v855 = vld [vmem:[%s256 + $0xd8c] sm:$0xff]
      %v856 = vld [vmem:[%s256 + $0xd94] sm:$0xf]
      %v857 = vld [vmem:[%s256 + $0xd98] sm:$0xff]
      %v858 = vld [vmem:[%s256 + $0xda0] sm:$0xf]
      %v859 = vld [vmem:[%s256 + $0xda4] sm:$0xff]
      %v860 = vld [vmem:[%s256 + $0xdac] sm:$0xf]
      %v861 = vld [vmem:[%s256 + $0xdb0] sm:$0xff]
      %v862 = vld [vmem:[%s256 + $0xdb8] sm:$0xf]
      %v863 = vld [vmem:[%s256 + $0xdbc] sm:$0xff]
      %v864 = vld [vmem:[%s256 + $0xdc4] sm:$0xf]
      %v865 = vld [vmem:[%s256 + $0xdc8] sm:$0xff]
      %v866 = vld [vmem:[%s256 + $0xdd0] sm:$0xf]
      %v867 = vld [vmem:[%s256 + $0xdd4] sm:$0xff]
      %v868 = vld [vmem:[%s256 + $0xddc] sm:$0xf]
      %v869 = vld [vmem:[%s256 + $0xde0] sm:$0xff]
      %v870 = vld [vmem:[%s256 + $0xde8] sm:$0xf]
      %v871 = vld [vmem:[%s256 + $0xdec] sm:$0xff]
      %v872 = vld [vmem:[%s256 + $0xdf4] sm:$0xf]
      %v873 = vld [vmem:[%s256 + $0xdf8] sm:$0xff]
      %v874 = vld [vmem:[%s256 + $0xe00] sm:$0xf]
      %v875 = vld [vmem:[%s256 + $0xe04] sm:$0xff]
      %v876 = vld [vmem:[%s256 + $0xe0c] sm:$0xf]
      %v877 = vld [vmem:[%s256 + $0xe10] sm:$0xff]
      %v878 = vld [vmem:[%s256 + $0xe18] sm:$0xf]
      %v879 = vld [vmem:[%s256 + $0xe1c] sm:$0xff]
      %v880 = vld [vmem:[%s256 + $0xe24] sm:$0xf]
      %v881 = vld [vmem:[%s256 + $0xe28] sm:$0xff]
      %v882 = vld [vmem:[%s256 + $0xe30] sm:$0xf]
      %v883 = vld [vmem:[%s256 + $0xe34] sm:$0xff]
      %v884 = vld [vmem:[%s256 + $0xe3c] sm:$0xf]
      %v885 = vld [vmem:[%s256 + $0xe40] sm:$0xff]
      %v886 = vld [vmem:[%s256 + $0xe48] sm:$0xf]
      %v887 = vld [vmem:[%s256 + $0xe4c] sm:$0xff]
      %v888 = vld [vmem:[%s256 + $0xe54] sm:$0xf]
      %v889 = vld [vmem:[%s256 + $0xe58] sm:$0xff]
      %v890 = vld [vmem:[%s256 + $0xe60] sm:$0xf]
      %v891 = vld [vmem:[%s256 + $0xe64] sm:$0xff]
      %v892 = vld [vmem:[%s256 + $0xe6c] sm:$0xf]
      %v893 = vld [vmem:[%s256 + $0xe70] sm:$0xff]
      %v894 = vld [vmem:[%s256 + $0xe78] sm:$0xf]
      %v895 = vld [vmem:[%s256 + $0xe7c] sm:$0xff]
      %v896 = vld [vmem:[%s256 + $0xe84] sm:$0xf]
      %v897 = vld [vmem:[%s256 + $0xe88] sm:$0xff]
      %v898 = vld [vmem:[%s256 + $0xe90] sm:$0xf]
      %v899 = vld [vmem:[%s256 + $0xe94] sm:$0xff]
      %v900 = vld [vmem:[%s256 + $0xe9c] sm:$0xf]
      %v901 = vld [vmem:[%s256 + $0xea0] sm:$0xff]
      %v902 = vld [vmem:[%s256 + $0xea8] sm:$0xf]
      %v903 = vld [vmem:[%s256 + $0xeac] sm:$0xff]
      %v904 = vld [vmem:[%s256 + $0xeb4] sm:$0xf]
      %v905 = vld [vmem:[%s256 + $0xeb8] sm:$0xff]
      %v906 = vld [vmem:[%s256 + $0xec0] sm:$0xf]
      %v907 = vld [vmem:[%s256 + $0xec4] sm:$0xff]
      %v908 = vld [vmem:[%s256 + $0xecc] sm:$0xf]
      %v909 = vld [vmem:[%s256 + $0xed0] sm:$0xff]
      %v910 = vld [vmem:[%s256 + $0xed8] sm:$0xf]
      %v911 = vld [vmem:[%s256 + $0xedc] sm:$0xff]
      %v912 = vld [vmem:[%s256 + $0xee4] sm:$0xf]
      %v913 = vld [vmem:[%s256 + $0xee8] sm:$0xff]
      %v914 = vld [vmem:[%s256 + $0xef0] sm:$0xf]
      %v915 = vld [vmem:[%s256 + $0xef4] sm:$0xff]
      %v916 = vld [vmem:[%s256 + $0xefc] sm:$0xf]
      %v917 = vld [vmem:[%s256 + $0xf00] sm:$0xff]
      %v918 = vld [vmem:[%s256 + $0xf08] sm:$0xf]
      %v919 = vld [vmem:[%s256 + $0xf0c] sm:$0xff]
      %v920 = vld [vmem:[%s256 + $0xf14] sm:$0xf]
      %v921 = vld [vmem:[%s256 + $0xf18] sm:$0xff]
      %v922 = vld [vmem:[%s256 + $0xf20] sm:$0xf]
      %v923 = vld [vmem:[%s256 + $0xf24] sm:$0xff]
      %v924 = vld [vmem:[%s256 + $0xf2c] sm:$0xf]
      %v925 = vld [vmem:[%s256 + $0xf30] sm:$0xff]
      %v926 = vld [vmem:[%s256 + $0xf38] sm:$0xf]
      %v927 = vld [vmem:[%s256 + $0xf3c] sm:$0xff]
      %v928 = vld [vmem:[%s256 + $0xf44] sm:$0xf]
      %v929 = vld [vmem:[%s256 + $0xf48] sm:$0xff]
      %v930 = vld [vmem:[%s256 + $0xf50] sm:$0xf]
      %v931 = vld [vmem:[%s256 + $0xf54] sm:$0xff]
      %v932 = vld [vmem:[%s256 + $0xf5c] sm:$0xf]
      %v933 = vld [vmem:[%s256 + $0xf60] sm:$0xff]
      %v934 = vld [vmem:[%s256 + $0xf68] sm:$0xf]
      %v935 = vld [vmem:[%s256 + $0xf6c] sm:$0xff]
      %v936 = vld [vmem:[%s256 + $0xf74] sm:$0xf]
      %v937 = vld [vmem:[%s256 + $0xf78] sm:$0xff]
      %v938 = vld [vmem:[%s256 + $0xf80] sm:$0xf]
      %v939 = vld [vmem:[%s256 + $0xf84] sm:$0xff]
      %v940 = vld [vmem:[%s256 + $0xf8c] sm:$0xf]
      %v941 = vld [vmem:[%s256 + $0xf90] sm:$0xff]
      %v942 = vld [vmem:[%s256 + $0xf98] sm:$0xf]
      %v943 = vld [vmem:[%s256 + $0xf9c] sm:$0xff]
      %v944 = vld [vmem:[%s256 + $0xfa4] sm:$0xf]
      %v945 = vld [vmem:[%s256 + $0xfa8] sm:$0xff]
      %v946 = vld [vmem:[%s256 + $0xfb0] sm:$0xf]
      %v947 = vld [vmem:[%s256 + $0xfb4] sm:$0xff]
      %v948 = vld [vmem:[%s256 + $0xfbc] sm:$0xf]
      %v949 = vld [vmem:[%s256 + $0xfc0] sm:$0xff]
      %v950 = vld [vmem:[%s256 + $0xfc8] sm:$0xf]
      %v951 = vld [vmem:[%s256 + $0xfcc] sm:$0xff]
      %v952 = vld [vmem:[%s256 + $0xfd4] sm:$0xf]
      %v953 = vld [vmem:[%s256 + $0xfd8] sm:$0xff]
      %v954 = vld [vmem:[%s256 + $0xfe0] sm:$0xf]
      %v955 = vld [vmem:[%s256 + $0xfe4] sm:$0xff]
      %v956 = vld [vmem:[%s256 + $0xfec] sm:$0xf]
      %v957 = vld [vmem:[%s256 + $0xff0] sm:$0xff]
      %v958 = vld [vmem:[%s256 + $0xff8] sm:$0xf]
      %v959 = vld [vmem:[%s256 + $0xffc] sm:$0xff]
      %v960 = vld [vmem:[%s256 + $0x1004] sm:$0xf]
      %v961 = vld [vmem:[%s256 + $0x1008] sm:$0xff]
      %v962 = vld [vmem:[%s256 + $0x1010] sm:$0xf]
      %v963 = vld [vmem:[%s256 + $0x1014] sm:$0xff]
      %v964 = vld [vmem:[%s256 + $0x101c] sm:$0xf]
      %v965 = vld [vmem:[%s256 + $0x1020] sm:$0xff]
      %v966 = vld [vmem:[%s256 + $0x1028] sm:$0xf]
      %v967 = vld [vmem:[%s256 + $0x102c] sm:$0xff]
      %v968 = vld [vmem:[%s256 + $0x1034] sm:$0xf]
      %v969 = vld [vmem:[%s256 + $0x1038] sm:$0xff]
      %v970 = vld [vmem:[%s256 + $0x1040] sm:$0xf]
      %v971 = vld [vmem:[%s256 + $0x1044] sm:$0xff]
      %v972 = vld [vmem:[%s256 + $0x104c] sm:$0xf]
      %v973 = vld [vmem:[%s256 + $0x1050] sm:$0xff]
      %v974 = vld [vmem:[%s256 + $0x1058] sm:$0xf]
      %v975 = vld [vmem:[%s256 + $0x105c] sm:$0xff]
      %v976 = vld [vmem:[%s256 + $0x1064] sm:$0xf]
      %v977 = vld [vmem:[%s256 + $0x1068] sm:$0xff]
      %v978 = vld [vmem:[%s256 + $0x1070] sm:$0xf]
      %v979 = vld [vmem:[%s256 + $0x1074] sm:$0xff]
      %v980 = vld [vmem:[%s256 + $0x107c] sm:$0xf]
      %v981 = vld [vmem:[%s256 + $0x1080] sm:$0xff]
      %v982 = vld [vmem:[%s256 + $0x1088] sm:$0xf]
      %v983 = vld [vmem:[%s256 + $0x108c] sm:$0xff]
      %v984 = vld [vmem:[%s256 + $0x1094] sm:$0xf]
      %v985 = vld [vmem:[%s256 + $0x1098] sm:$0xff]
      %v986 = vld [vmem:[%s256 + $0x10a0] sm:$0xf]
      %v987 = vld [vmem:[%s256 + $0x10a4] sm:$0xff]
      %v988 = vld [vmem:[%s256 + $0x10ac] sm:$0xf]
      %v989 = vld [vmem:[%s256 + $0x10b0] sm:$0xff]
      %v990 = vld [vmem:[%s256 + $0x10b8] sm:$0xf]
      %v991 = vld [vmem:[%s256 + $0x10bc] sm:$0xff]
      %v992 = vld [vmem:[%s256 + $0x10c4] sm:$0xf]
      %v993 = vld [vmem:[%s256 + $0x10c8] sm:$0xff]
      %v994 = vld [vmem:[%s256 + $0x10d0] sm:$0xf]
      %v995 = vld [vmem:[%s256 + $0x10d4] sm:$0xff]
      %v996 = vld [vmem:[%s256 + $0x10dc] sm:$0xf]
      %v997 = vld [vmem:[%s256 + $0x10e0] sm:$0xff]
      %v998 = vld [vmem:[%s256 + $0x10e8] sm:$0xf]
      %v999 = vld [vmem:[%s256 + $0x10ec] sm:$0xff]
      %v1000 = vld [vmem:[%s256 + $0x10f4] sm:$0xf]
      %v1001 = vld [vmem:[%s256 + $0x10f8] sm:$0xff]
      %v1002 = vld [vmem:[%s256 + $0x1100] sm:$0xf]
      %v1003 = vld [vmem:[%s256 + $0x1104] sm:$0xff]
      %v1004 = vld [vmem:[%s256 + $0x110c] sm:$0xf]
      %v1005 = vld [vmem:[%s256 + $0x1110] sm:$0xff]
      %v1006 = vld [vmem:[%s256 + $0x1118] sm:$0xf]
      %v1007 = vld [vmem:[%s256 + $0x111c] sm:$0xff]
      %v1008 = vld [vmem:[%s256 + $0x1124] sm:$0xf]
      %v1009 = vld [vmem:[%s256 + $0x1128] sm:$0xff]
      %v1010 = vld [vmem:[%s256 + $0x1130] sm:$0xf]
      %v1011 = vld [vmem:[%s256 + $0x1134] sm:$0xff]
      %v1012 = vld [vmem:[%s256 + $0x113c] sm:$0xf]
      %v1013 = vld [vmem:[%s256 + $0x1140] sm:$0xff]
      %v1014 = vld [vmem:[%s256 + $0x1148] sm:$0xf]
      %v1015 = vld [vmem:[%s256 + $0x114c] sm:$0xff]
      %v1016 = vld [vmem:[%s256 + $0x1154] sm:$0xf]
      %v1017 = vld [vmem:[%s256 + $0x1158] sm:$0xff]
      %v1018 = vld [vmem:[%s256 + $0x1160] sm:$0xf]
      %v1019 = vld [vmem:[%s256 + $0x1164] sm:$0xff]
      %v1020 = vld [vmem:[%s256 + $0x116c] sm:$0xf]
      %v1021 = vld [vmem:[%s256 + $0x1170] sm:$0xff]
      %v1022 = vld [vmem:[%s256 + $0x1178] sm:$0xf]
      %v1023 = vld [vmem:[%s256 + $0x117c] sm:$0xff]
      %v1024 = vld [vmem:[%s256 + $0x1184] sm:$0xf]
      %v1025 = vld [vmem:[%s256 + $0x1188] sm:$0xff]
      %v1026 = vld [vmem:[%s256 + $0x1190] sm:$0xf]
      %v1027 = vld [vmem:[%s256 + $0x1194] sm:$0xff]
      %v1028 = vld [vmem:[%s256 + $0x119c] sm:$0xf]
      %v1029 = vld [vmem:[%s256 + $0x11a0] sm:$0xff]
      %v1030 = vld [vmem:[%s256 + $0x11a8] sm:$0xf]
      %v1031 = vld [vmem:[%s256 + $0x11ac] sm:$0xff]
      %v1032 = vld [vmem:[%s256 + $0x11b4] sm:$0xf]
      %v1033 = vld [vmem:[%s256 + $0x11b8] sm:$0xff]
      %v1034 = vld [vmem:[%s256 + $0x11c0] sm:$0xf]
      %v1035 = vld [vmem:[%s256 + $0x11c4] sm:$0xff]
      %v1036 = vld [vmem:[%s256 + $0x11cc] sm:$0xf]
      %v1037 = vld [vmem:[%s256 + $0x11d0] sm:$0xff]
      %v1038 = vld [vmem:[%s256 + $0x11d8] sm:$0xf]
      %v1039 = vld [vmem:[%s256 + $0x11dc] sm:$0xff]
      %v1040 = vld [vmem:[%s256 + $0x11e4] sm:$0xf]
      %v1041 = vld [vmem:[%s256 + $0x11e8] sm:$0xff]
      %v1042 = vld [vmem:[%s256 + $0x11f0] sm:$0xf]
      %v1043 = vld [vmem:[%s256 + $0x11f4] sm:$0xff]
      %v1044 = vld [vmem:[%s256 + $0x11fc] sm:$0xf]
      %v1045 = vld [vmem:[%s256 + $0x1200] sm:$0xff]
      %v1046 = vld [vmem:[%s256 + $0x1208] sm:$0xf]
      %v1047 = vld [vmem:[%s256 + $0x120c] sm:$0xff]
      %v1048 = vld [vmem:[%s256 + $0x1214] sm:$0xf]
      %v1049 = vld [vmem:[%s256 + $0x1218] sm:$0xff]
      %v1050 = vld [vmem:[%s256 + $0x1220] sm:$0xf]
      %v1051 = vld [vmem:[%s256 + $0x1224] sm:$0xff]
      %v1052 = vld [vmem:[%s256 + $0x122c] sm:$0xf]
      %v1053 = vld [vmem:[%s256 + $0x1230] sm:$0xff]
      %v1054 = vld [vmem:[%s256 + $0x1238] sm:$0xf]
      %v1055 = vld [vmem:[%s256 + $0x123c] sm:$0xff]
      %v1056 = vld [vmem:[%s256 + $0x1244] sm:$0xf]
      %v1057 = vld [vmem:[%s256 + $0x1248] sm:$0xff]
      %v1058 = vld [vmem:[%s256 + $0x1250] sm:$0xf]
      %v1059 = vld [vmem:[%s256 + $0x1254] sm:$0xff]
      %v1060 = vld [vmem:[%s256 + $0x125c] sm:$0xf]
      %v1061 = vld [vmem:[%s260] sm:$0x7]
      %v1066 = vcombine.high %v273, %v273
      %v1068 = vunpack.c.l.s4 1966171168
      %v1069 = vunpack.c.0.s8 %v1068
      %v1070 = vlaneseq
      %v1071 = vshrl.u32 %v1070, 7
      %v1072 = vsub.s32 %v1069, %v1071
      %v1073 = vrot.slane %v273, %v1072
      %v1075 = vunpack.c.l.s4 1966171168
      %v1076 = vunpack.c.0.s8 %v1075
      %v1077 = vlaneseq
      %v1078 = vshrl.u32 %v1077, 7
      %v1079 = vsub.s32 %v1076, %v1078
      %v1080 = vrot.slane %v1066, %v1079
      %v1081 = vcombine.high %v1073, %v1073
      %v1082 = vcombine.high %v1080, %v1080
      %v1084 = vunpack.c.l.s4 1966171168
      %v1085 = vunpack.c.0.s8 %v1084
      %v1086 = vlaneseq
      %v1087 = vshrl.u32 %v1086, 7
      %v1088 = vsub.s32 %v1085, %v1087
      %v1089 = vrot.slane %v1073, %v1088
      %v1091 = vunpack.c.l.s4 1966171168
      %v1092 = vunpack.c.0.s8 %v1091
      %v1093 = vlaneseq
      %v1094 = vshrl.u32 %v1093, 7
      %v1095 = vsub.s32 %v1092, %v1094
      %v1096 = vrot.slane %v1080, %v1095
      %v1098 = vunpack.c.l.s4 1966171168
      %v1099 = vunpack.c.0.s8 %v1098
      %v1100 = vlaneseq
      %v1101 = vshrl.u32 %v1100, 7
      %v1102 = vsub.s32 %v1099, %v1101
      %v1103 = vrot.slane %v1081, %v1102
      %v1105 = vunpack.c.l.s4 1966171168
      %v1106 = vunpack.c.0.s8 %v1105
      %v1107 = vlaneseq
      %v1108 = vshrl.u32 %v1107, 7
      %v1109 = vsub.s32 %v1106, %v1108
      %v1110 = vrot.slane %v1082, %v1109
      %v1111 = vcombine.high %v1089, %v1089
      %v1112 = vcombine.high %v1096, %v1096
      %v1113 = vcombine.high %v1103, %v1103
      %v1114 = vcombine.high %v1110, %v1110
      %v1115 = vcombine.high %v274, %v274
      %v1117 = vunpack.c.l.s4 1966171168
      %v1118 = vunpack.c.0.s8 %v1117
      %v1119 = vlaneseq
      %v1120 = vshrl.u32 %v1119, 7
      %v1121 = vsub.s32 %v1118, %v1120
      %v1122 = vrot.slane %v274, %v1121
      %v1124 = vunpack.c.l.s4 1966171168
      %v1125 = vunpack.c.0.s8 %v1124
      %v1126 = vlaneseq
      %v1127 = vshrl.u32 %v1126, 7
      %v1128 = vsub.s32 %v1125, %v1127
      %v1129 = vrot.slane %v1115, %v1128
      %v1130 = vcombine.high %v1122, %v1122
      %v1131 = vcombine.high %v1129, %v1129
      %v1133 = vunpack.c.l.s4 1966171168
      %v1134 = vunpack.c.0.s8 %v1133
      %v1135 = vlaneseq
      %v1136 = vshrl.u32 %v1135, 7
      %v1137 = vsub.s32 %v1134, %v1136
      %v1138 = vrot.slane %v1122, %v1137
      %v1140 = vunpack.c.l.s4 1966171168
      %v1141 = vunpack.c.0.s8 %v1140
      %v1142 = vlaneseq
      %v1143 = vshrl.u32 %v1142, 7
      %v1144 = vsub.s32 %v1141, %v1143
      %v1145 = vrot.slane %v1129, %v1144
      %v1147 = vunpack.c.l.s4 1966171168
      %v1148 = vunpack.c.0.s8 %v1147
      %v1149 = vlaneseq
      %v1150 = vshrl.u32 %v1149, 7
      %v1151 = vsub.s32 %v1148, %v1150
      %v1152 = vrot.slane %v1130, %v1151
      %v1154 = vunpack.c.l.s4 1966171168
      %v1155 = vunpack.c.0.s8 %v1154
      %v1156 = vlaneseq
      %v1157 = vshrl.u32 %v1156, 7
      %v1158 = vsub.s32 %v1155, %v1157
      %v1159 = vrot.slane %v1131, %v1158
      %v1160 = vcombine.high %v1138, %v1138
      %v1161 = vcombine.high %v1145, %v1145
      %v1162 = vcombine.high %v1152, %v1152
      %v1163 = vcombine.high %v1159, %v1159
      %v1164 = vcombine.high %v275, %v275
      %v1166 = vunpack.c.l.s4 1966171168
      %v1167 = vunpack.c.0.s8 %v1166
      %v1168 = vlaneseq
      %v1169 = vshrl.u32 %v1168, 7
      %v1170 = vsub.s32 %v1167, %v1169
      %v1171 = vrot.slane %v275, %v1170
      %v1173 = vunpack.c.l.s4 1966171168
      %v1174 = vunpack.c.0.s8 %v1173
      %v1175 = vlaneseq
      %v1176 = vshrl.u32 %v1175, 7
      %v1177 = vsub.s32 %v1174, %v1176
      %v1178 = vrot.slane %v1164, %v1177
      %v1179 = vcombine.high %v1171, %v1171
      %v1180 = vcombine.high %v1178, %v1178
      %v1182 = vunpack.c.l.s4 1966171168
      %v1183 = vunpack.c.0.s8 %v1182
      %v1184 = vlaneseq
      %v1185 = vshrl.u32 %v1184, 7
      %v1186 = vsub.s32 %v1183, %v1185
      %v1187 = vrot.slane %v1171, %v1186
      %v1189 = vunpack.c.l.s4 1966171168
      %v1190 = vunpack.c.0.s8 %v1189
      %v1191 = vlaneseq
      %v1192 = vshrl.u32 %v1191, 7
      %v1193 = vsub.s32 %v1190, %v1192
      %v1194 = vrot.slane %v1178, %v1193
      %v1196 = vunpack.c.l.s4 1966171168
      %v1197 = vunpack.c.0.s8 %v1196
      %v1198 = vlaneseq
      %v1199 = vshrl.u32 %v1198, 7
      %v1200 = vsub.s32 %v1197, %v1199
      %v1201 = vrot.slane %v1179, %v1200
      %v1203 = vunpack.c.l.s4 1966171168
      %v1204 = vunpack.c.0.s8 %v1203
      %v1205 = vlaneseq
      %v1206 = vshrl.u32 %v1205, 7
      %v1207 = vsub.s32 %v1204, %v1206
      %v1208 = vrot.slane %v1180, %v1207
      %v1209 = vcombine.high %v1187, %v1187
      %v1210 = vcombine.high %v1194, %v1194
      %v1211 = vcombine.high %v1201, %v1201
      %v1212 = vcombine.high %v1208, %v1208
      %v1214 = vunpack.c.l.s4 1966171168
      %v1215 = vunpack.c.0.s8 %v1214
      %v1216 = vlaneseq
      %v1217 = vshrl.u32 %v1216, 7
      %v1218 = vsub.s32 %v1215, %v1217
      %v1219 = vrot.slane %v276, %v1218
      %v1221 = vunpack.c.l.s4 1966171168
      %v1222 = vunpack.c.0.s8 %v1221
      %v1223 = vlaneseq
      %v1224 = vshrl.u32 %v1223, 7
      %v1225 = vsub.s32 %v1222, %v1224
      %v1226 = vrot.slane %v1219, %v1225
      %v2035 = vunpack.c.l.b16 %v277
      %v2036 = vunpack.c.h.b16 %v277
      %v2037 = vunpack.c.l.b16 %v278
      %v2038 = vunpack.c.l.b16 %v279
      %v2039 = vunpack.c.h.b16 %v279
      %v2040 = vunpack.c.l.b16 %v280
      %v2041 = vunpack.c.l.b16 %v281
      %v2042 = vunpack.c.h.b16 %v281
      %v2043 = vunpack.c.l.b16 %v282
      %v2044 = vunpack.c.l.b16 %v283
      %v2045 = vunpack.c.h.b16 %v283
      %v2046 = vunpack.c.l.b16 %v284
      %v2047 = vunpack.c.l.b16 %v285
      %v2048 = vunpack.c.h.b16 %v285
      %v2049 = vunpack.c.l.b16 %v286
      %v2050 = vunpack.c.l.b16 %v287
      %v2051 = vunpack.c.h.b16 %v287
      %v2052 = vunpack.c.l.b16 %v288
      %v2053 = vunpack.c.l.b16 %v289
      %v2054 = vunpack.c.h.b16 %v289
      %v2055 = vunpack.c.l.b16 %v290
      %v2056 = vunpack.c.l.b16 %v291
      %v2057 = vunpack.c.h.b16 %v291
      %v2058 = vunpack.c.l.b16 %v292
      %v2059 = vunpack.c.l.b16 %v293
      %v2060 = vunpack.c.h.b16 %v293
      %v2061 = vunpack.c.l.b16 %v294
      %v2062 = vunpack.c.l.b16 %v295
      %v2063 = vunpack.c.h.b16 %v295
      %v2064 = vunpack.c.l.b16 %v296
      %v2065 = vunpack.c.l.b16 %v297
      %v2066 = vunpack.c.h.b16 %v297
      %v2067 = vunpack.c.l.b16 %v298
      %v2068 = vunpack.c.l.b16 %v299
      %v2069 = vunpack.c.h.b16 %v299
      %v2070 = vunpack.c.l.b16 %v300
      %v2071 = vunpack.c.l.b16 %v301
      %v2072 = vunpack.c.h.b16 %v301
      %v2073 = vunpack.c.l.b16 %v302
      %v2074 = vunpack.c.l.b16 %v303
      %v2075 = vunpack.c.h.b16 %v303
      %v2076 = vunpack.c.l.b16 %v304
      %v2077 = vunpack.c.l.b16 %v305
      %v2078 = vunpack.c.h.b16 %v305
      %v2079 = vunpack.c.l.b16 %v306
      %v2080 = vunpack.c.l.b16 %v307
      %v2081 = vunpack.c.h.b16 %v307
      %v2082 = vunpack.c.l.b16 %v308
      %v2083 = vunpack.c.l.b16 %v309
      %v2084 = vunpack.c.h.b16 %v309
      %v2085 = vunpack.c.l.b16 %v310
      %v2086 = vunpack.c.l.b16 %v311
      %v2087 = vunpack.c.h.b16 %v311
      %v2088 = vunpack.c.l.b16 %v312
      %v2089 = vunpack.c.l.b16 %v313
      %v2090 = vunpack.c.h.b16 %v313
      %v2091 = vunpack.c.l.b16 %v314
      %v2092 = vunpack.c.l.b16 %v315
      %v2093 = vunpack.c.h.b16 %v315
      %v2094 = vunpack.c.l.b16 %v316
      %v2095 = vunpack.c.l.b16 %v317
      %v2096 = vunpack.c.h.b16 %v317
      %v2097 = vunpack.c.l.b16 %v318
      %v2098 = vunpack.c.l.b16 %v319
      %v2099 = vunpack.c.h.b16 %v319
      %v2100 = vunpack.c.l.b16 %v320
      %v2101 = vunpack.c.l.b16 %v321
      %v2102 = vunpack.c.h.b16 %v321
      %v2103 = vunpack.c.l.b16 %v322
      %v2104 = vunpack.c.l.b16 %v323
      %v2105 = vunpack.c.h.b16 %v323
      %v2106 = vunpack.c.l.b16 %v324
      %v2107 = vunpack.c.l.b16 %v325
      %v2108 = vunpack.c.h.b16 %v325
      %v2109 = vunpack.c.l.b16 %v326
      %v2110 = vunpack.c.l.b16 %v327
      %v2111 = vunpack.c.h.b16 %v327
      %v2112 = vunpack.c.l.b16 %v328
      %v2113 = vunpack.c.l.b16 %v329
      %v2114 = vunpack.c.h.b16 %v329
      %v2115 = vunpack.c.l.b16 %v330
      %v2116 = vunpack.c.l.b16 %v331
      %v2117 = vunpack.c.h.b16 %v331
      %v2118 = vunpack.c.l.b16 %v332
      %v2119 = vunpack.c.l.b16 %v333
      %v2120 = vunpack.c.h.b16 %v333
      %v2121 = vunpack.c.l.b16 %v334
      %v2122 = vunpack.c.l.b16 %v335
      %v2123 = vunpack.c.h.b16 %v335
      %v2124 = vunpack.c.l.b16 %v336
      %v2125 = vunpack.c.l.b16 %v337
      %v2126 = vunpack.c.h.b16 %v337
      %v2127 = vunpack.c.l.b16 %v338
      %v2128 = vunpack.c.l.b16 %v339
      %v2129 = vunpack.c.h.b16 %v339
      %v2130 = vunpack.c.l.b16 %v340
      %v2131 = vunpack.c.l.b16 %v341
      %v2132 = vunpack.c.h.b16 %v341
      %v2133 = vunpack.c.l.b16 %v342
      %v2134 = vunpack.c.l.b16 %v343
      %v2135 = vunpack.c.h.b16 %v343
      %v2136 = vunpack.c.l.b16 %v344
      %v2137 = vunpack.c.l.b16 %v345
      %v2138 = vunpack.c.h.b16 %v345
      %v2139 = vunpack.c.l.b16 %v346
      %v2140 = vunpack.c.l.b16 %v347
      %v2141 = vunpack.c.h.b16 %v347
      %v2142 = vunpack.c.l.b16 %v348
      %v2143 = vunpack.c.l.b16 %v349
      %v2144 = vunpack.c.h.b16 %v349
      %v2145 = vunpack.c.l.b16 %v350
      %v2146 = vunpack.c.l.b16 %v351
      %v2147 = vunpack.c.h.b16 %v351
      %v2148 = vunpack.c.l.b16 %v352
      %v2149 = vunpack.c.l.b16 %v353
      %v2150 = vunpack.c.h.b16 %v353
      %v2151 = vunpack.c.l.b16 %v354
      %v2152 = vunpack.c.l.b16 %v355
      %v2153 = vunpack.c.h.b16 %v355
      %v2154 = vunpack.c.l.b16 %v356
      %v2155 = vunpack.c.l.b16 %v357
      %v2156 = vunpack.c.h.b16 %v357
      %v2157 = vunpack.c.l.b16 %v358
      %v2158 = vunpack.c.l.b16 %v359
      %v2159 = vunpack.c.h.b16 %v359
      %v2160 = vunpack.c.l.b16 %v360
      %v2161 = vunpack.c.l.b16 %v361
      %v2162 = vunpack.c.h.b16 %v361
      %v2163 = vunpack.c.l.b16 %v362
      %v2164 = vunpack.c.l.b16 %v363
      %v2165 = vunpack.c.h.b16 %v363
      %v2166 = vunpack.c.l.b16 %v364
      %v2167 = vunpack.c.l.b16 %v365
      %v2168 = vunpack.c.h.b16 %v365
      %v2169 = vunpack.c.l.b16 %v366
      %v2170 = vunpack.c.l.b16 %v367
      %v2171 = vunpack.c.h.b16 %v367
      %v2172 = vunpack.c.l.b16 %v368
      %v2173 = vunpack.c.l.b16 %v369
      %v2174 = vunpack.c.h.b16 %v369
      %v2175 = vunpack.c.l.b16 %v370
      %v2176 = vunpack.c.l.b16 %v371
      %v2177 = vunpack.c.h.b16 %v371
      %v2178 = vunpack.c.l.b16 %v372
      %v2179 = vunpack.c.l.b16 %v373
      %v2180 = vunpack.c.h.b16 %v373
      %v2181 = vunpack.c.l.b16 %v374
      %v2182 = vunpack.c.l.b16 %v375
      %v2183 = vunpack.c.h.b16 %v375
      %v2184 = vunpack.c.l.b16 %v376
      %v2185 = vunpack.c.l.b16 %v377
      %v2186 = vunpack.c.h.b16 %v377
      %v2187 = vunpack.c.l.b16 %v378
      %v2188 = vunpack.c.l.b16 %v379
      %v2189 = vunpack.c.h.b16 %v379
      %v2190 = vunpack.c.l.b16 %v380
      %v2191 = vunpack.c.l.b16 %v381
      %v2192 = vunpack.c.h.b16 %v381
      %v2193 = vunpack.c.l.b16 %v382
      %v2194 = vunpack.c.l.b16 %v383
      %v2195 = vunpack.c.h.b16 %v383
      %v2196 = vunpack.c.l.b16 %v384
      %v2197 = vunpack.c.l.b16 %v385
      %v2198 = vunpack.c.h.b16 %v385
      %v2199 = vunpack.c.l.b16 %v386
      %v2200 = vunpack.c.l.b16 %v387
      %v2201 = vunpack.c.h.b16 %v387
      %v2202 = vunpack.c.l.b16 %v388
      %v2203 = vunpack.c.l.b16 %v389
      %v2204 = vunpack.c.h.b16 %v389
      %v2205 = vunpack.c.l.b16 %v390
      %v2206 = vunpack.c.l.b16 %v391
      %v2207 = vunpack.c.h.b16 %v391
      %v2208 = vunpack.c.l.b16 %v392
      %v2209 = vunpack.c.l.b16 %v393
      %v2210 = vunpack.c.h.b16 %v393
      %v2211 = vunpack.c.l.b16 %v394
      %v2212 = vunpack.c.l.b16 %v395
      %v2213 = vunpack.c.h.b16 %v395
      %v2214 = vunpack.c.l.b16 %v396
      %v2215 = vunpack.c.l.b16 %v397
      %v2216 = vunpack.c.h.b16 %v397
      %v2217 = vunpack.c.l.b16 %v398
      %v2218 = vunpack.c.l.b16 %v399
      %v2219 = vunpack.c.h.b16 %v399
      %v2220 = vunpack.c.l.b16 %v400
      %v2221 = vunpack.c.l.b16 %v401
      %v2222 = vunpack.c.h.b16 %v401
      %v2223 = vunpack.c.l.b16 %v402
      %v2224 = vunpack.c.l.b16 %v403
      %v2225 = vunpack.c.h.b16 %v403
      %v2226 = vunpack.c.l.b16 %v404
      %v2227 = vunpack.c.l.b16 %v405
      %v2228 = vunpack.c.h.b16 %v405
      %v2229 = vunpack.c.l.b16 %v406
      %v2230 = vunpack.c.l.b16 %v407
      %v2231 = vunpack.c.h.b16 %v407
      %v2232 = vunpack.c.l.b16 %v408
      %v2233 = vunpack.c.l.b16 %v409
      %v2234 = vunpack.c.h.b16 %v409
      %v2235 = vunpack.c.l.b16 %v410
      %v2236 = vunpack.c.l.b16 %v411
      %v2237 = vunpack.c.h.b16 %v411
      %v2238 = vunpack.c.l.b16 %v412
      %v2239 = vunpack.c.l.b16 %v413
      %v2240 = vunpack.c.h.b16 %v413
      %v2241 = vunpack.c.l.b16 %v414
      %v2242 = vunpack.c.l.b16 %v415
      %v2243 = vunpack.c.h.b16 %v415
      %v2244 = vunpack.c.l.b16 %v416
      %v2245 = vunpack.c.l.b16 %v417
      %v2246 = vunpack.c.h.b16 %v417
      %v2247 = vunpack.c.l.b16 %v418
      %v2248 = vunpack.c.l.b16 %v419
      %v2249 = vunpack.c.h.b16 %v419
      %v2250 = vunpack.c.l.b16 %v420
      %v2251 = vunpack.c.l.b16 %v421
      %v2252 = vunpack.c.h.b16 %v421
      %v2253 = vunpack.c.l.b16 %v422
      %v2254 = vunpack.c.l.b16 %v423
      %v2255 = vunpack.c.h.b16 %v423
      %v2256 = vunpack.c.l.b16 %v424
      %v2257 = vunpack.c.l.b16 %v425
      %v2258 = vunpack.c.h.b16 %v425
      %v2259 = vunpack.c.l.b16 %v426
      %v2260 = vunpack.c.l.b16 %v427
      %v2261 = vunpack.c.h.b16 %v427
      %v2262 = vunpack.c.l.b16 %v428
      %v2263 = vunpack.c.l.b16 %v429
      %v2264 = vunpack.c.h.b16 %v429
      %v2265 = vunpack.c.l.b16 %v430
      %v2266 = vunpack.c.l.b16 %v431
      %v2267 = vunpack.c.h.b16 %v431
      %v2268 = vunpack.c.l.b16 %v432
      %v2269 = vunpack.c.l.b16 %v433
      %v2270 = vunpack.c.h.b16 %v433
      %v2271 = vunpack.c.l.b16 %v434
      %v2272 = vunpack.c.l.b16 %v435
      %v2273 = vunpack.c.h.b16 %v435
      %v2274 = vunpack.c.l.b16 %v436
      %v2275 = vunpack.c.l.b16 %v437
      %v2276 = vunpack.c.h.b16 %v437
      %v2277 = vunpack.c.l.b16 %v438
      %v2278 = vunpack.c.l.b16 %v439
      %v2279 = vunpack.c.h.b16 %v439
      %v2280 = vunpack.c.l.b16 %v440
      %v2281 = vunpack.c.l.b16 %v441
      %v2282 = vunpack.c.h.b16 %v441
      %v2283 = vunpack.c.l.b16 %v442
      %v2284 = vunpack.c.l.b16 %v443
      %v2285 = vunpack.c.h.b16 %v443
      %v2286 = vunpack.c.l.b16 %v444
      %v2287 = vunpack.c.l.b16 %v445
      %v2288 = vunpack.c.h.b16 %v445
      %v2289 = vunpack.c.l.b16 %v446
      %v2290 = vunpack.c.l.b16 %v447
      %v2291 = vunpack.c.h.b16 %v447
      %v2292 = vunpack.c.l.b16 %v448
      %v2293 = vunpack.c.l.b16 %v449
      %v2294 = vunpack.c.h.b16 %v449
      %v2295 = vunpack.c.l.b16 %v450
      %v2296 = vunpack.c.l.b16 %v451
      %v2297 = vunpack.c.h.b16 %v451
      %v2298 = vunpack.c.l.b16 %v452
      %v2299 = vunpack.c.l.b16 %v453
      %v2300 = vunpack.c.h.b16 %v453
      %v2301 = vunpack.c.l.b16 %v454
      %v2302 = vunpack.c.l.b16 %v455
      %v2303 = vunpack.c.h.b16 %v455
      %v2304 = vunpack.c.l.b16 %v456
      %v2305 = vunpack.c.l.b16 %v457
      %v2306 = vunpack.c.h.b16 %v457
      %v2307 = vunpack.c.l.b16 %v458
      %v2308 = vunpack.c.l.b16 %v459
      %v2309 = vunpack.c.h.b16 %v459
      %v2310 = vunpack.c.l.b16 %v460
      %v2311 = vunpack.c.l.b16 %v461
      %v2312 = vunpack.c.h.b16 %v461
      %v2313 = vunpack.c.l.b16 %v462
      %v2314 = vunpack.c.l.b16 %v463
      %v2315 = vunpack.c.h.b16 %v463
      %v2316 = vunpack.c.l.b16 %v464
      %v2317 = vunpack.c.l.b16 %v465
      %v2318 = vunpack.c.h.b16 %v465
      %v2319 = vunpack.c.l.b16 %v466
      %v2320 = vunpack.c.l.b16 %v467
      %v2321 = vunpack.c.h.b16 %v467
      %v2322 = vunpack.c.l.b16 %v468
      %v2323 = vunpack.c.l.b16 %v469
      %v2324 = vunpack.c.h.b16 %v469
      %v2325 = vunpack.c.l.b16 %v470
      %v2326 = vunpack.c.l.b16 %v471
      %v2327 = vunpack.c.h.b16 %v471
      %v2328 = vunpack.c.l.b16 %v472
      %v2329 = vunpack.c.l.b16 %v473
      %v2330 = vunpack.c.h.b16 %v473
      %v2331 = vunpack.c.l.b16 %v474
      %v2332 = vunpack.c.l.b16 %v475
      %v2333 = vunpack.c.h.b16 %v475
      %v2334 = vunpack.c.l.b16 %v476
      %v2335 = vunpack.c.l.b16 %v477
      %v2336 = vunpack.c.h.b16 %v477
      %v2337 = vunpack.c.l.b16 %v478
      %v2338 = vunpack.c.l.b16 %v479
      %v2339 = vunpack.c.h.b16 %v479
      %v2340 = vunpack.c.l.b16 %v480
      %v2341 = vunpack.c.l.b16 %v481
      %v2342 = vunpack.c.h.b16 %v481
      %v2343 = vunpack.c.l.b16 %v482
      %v2344 = vunpack.c.l.b16 %v483
      %v2345 = vunpack.c.h.b16 %v483
      %v2346 = vunpack.c.l.b16 %v484
      %v2347 = vunpack.c.l.b16 %v485
      %v2348 = vunpack.c.h.b16 %v485
      %v2349 = vunpack.c.l.b16 %v486
      %v2350 = vunpack.c.l.b16 %v487
      %v2351 = vunpack.c.h.b16 %v487
      %v2352 = vunpack.c.l.b16 %v488
      %v2353 = vunpack.c.l.b16 %v489
      %v2354 = vunpack.c.h.b16 %v489
      %v2355 = vunpack.c.l.b16 %v490
      %v2356 = vunpack.c.l.b16 %v491
      %v2357 = vunpack.c.h.b16 %v491
      %v2358 = vunpack.c.l.b16 %v492
      %v2359 = vunpack.c.l.b16 %v493
      %v2360 = vunpack.c.h.b16 %v493
      %v2361 = vunpack.c.l.b16 %v494
      %v2362 = vunpack.c.l.b16 %v495
      %v2363 = vunpack.c.h.b16 %v495
      %v2364 = vunpack.c.l.b16 %v496
      %v2365 = vunpack.c.l.b16 %v497
      %v2366 = vunpack.c.h.b16 %v497
      %v2367 = vunpack.c.l.b16 %v498
      %v2368 = vunpack.c.l.b16 %v499
      %v2369 = vunpack.c.h.b16 %v499
      %v2370 = vunpack.c.l.b16 %v500
      %v2371 = vunpack.c.l.b16 %v501
      %v2372 = vunpack.c.h.b16 %v501
      %v2373 = vunpack.c.l.b16 %v502
      %v2374 = vunpack.c.l.b16 %v503
      %v2375 = vunpack.c.h.b16 %v503
      %v2376 = vunpack.c.l.b16 %v504
      %v2377 = vunpack.c.l.b16 %v505
      %v2378 = vunpack.c.h.b16 %v505
      %v2379 = vunpack.c.l.b16 %v506
      %v2380 = vunpack.c.l.b16 %v507
      %v2381 = vunpack.c.h.b16 %v507
      %v2382 = vunpack.c.l.b16 %v508
      %v2383 = vunpack.c.l.b16 %v509
      %v2384 = vunpack.c.h.b16 %v509
      %v2385 = vunpack.c.l.b16 %v510
      %v2386 = vunpack.c.l.b16 %v511
      %v2387 = vunpack.c.h.b16 %v511
      %v2388 = vunpack.c.l.b16 %v512
      %v2389 = vunpack.c.l.b16 %v513
      %v2390 = vunpack.c.h.b16 %v513
      %v2391 = vunpack.c.l.b16 %v514
      %v2392 = vunpack.c.l.b16 %v515
      %v2393 = vunpack.c.h.b16 %v515
      %v2394 = vunpack.c.l.b16 %v516
      %v2395 = vunpack.c.l.b16 %v517
      %v2396 = vunpack.c.h.b16 %v517
      %v2397 = vunpack.c.l.b16 %v518
      %v2398 = vunpack.c.l.b16 %v519
      %v2399 = vunpack.c.h.b16 %v519
      %v2400 = vunpack.c.l.b16 %v520
      %v2401 = vunpack.c.l.b16 %v521
      %v2402 = vunpack.c.h.b16 %v521
      %v2403 = vunpack.c.l.b16 %v522
      %v2404 = vunpack.c.l.b16 %v523
      %v2405 = vunpack.c.h.b16 %v523
      %v2406 = vunpack.c.l.b16 %v524
      %v2407 = vunpack.c.l.b16 %v525
      %v2408 = vunpack.c.h.b16 %v525
      %v2409 = vunpack.c.l.b16 %v526
      %v2410 = vunpack.c.l.b16 %v527
      %v2411 = vunpack.c.h.b16 %v527
      %v2412 = vunpack.c.l.b16 %v528
      %v2413 = vunpack.c.l.b16 %v529
      %v2414 = vunpack.c.h.b16 %v529
      %v2415 = vunpack.c.l.b16 %v530
      %v2416 = vunpack.c.l.b16 %v531
      %v2417 = vunpack.c.h.b16 %v531
      %v2418 = vunpack.c.l.b16 %v532
      %v2419 = vunpack.c.l.b16 %v533
      %v2420 = vunpack.c.h.b16 %v533
      %v2421 = vunpack.c.l.b16 %v534
      %v2422 = vunpack.c.l.b16 %v535
      %v2423 = vunpack.c.h.b16 %v535
      %v2424 = vunpack.c.l.b16 %v536
      %v2425 = vunpack.c.l.b16 %v537
      %v2426 = vunpack.c.h.b16 %v537
      %v2427 = vunpack.c.l.b16 %v538
      %v2428 = vunpack.c.l.b16 %v539
      %v2429 = vunpack.c.h.b16 %v539
      %v2430 = vunpack.c.l.b16 %v540
      %v2431 = vunpack.c.l.b16 %v541
      %v2432 = vunpack.c.h.b16 %v541
      %v2433 = vunpack.c.l.b16 %v542
      %v2434 = vunpack.c.l.b16 %v543
      %v2435 = vunpack.c.h.b16 %v543
      %v2436 = vunpack.c.l.b16 %v544
      %v2437 = vunpack.c.l.b16 %v545
      %v2438 = vunpack.c.h.b16 %v545
      %v2439 = vunpack.c.l.b16 %v546
      %v2440 = vunpack.c.l.b16 %v547
      %v2441 = vunpack.c.h.b16 %v547
      %v2442 = vunpack.c.l.b16 %v548
      %v2443 = vunpack.c.l.b16 %v549
      %v2444 = vunpack.c.h.b16 %v549
      %v2445 = vunpack.c.l.b16 %v550
      %v2446 = vunpack.c.l.b16 %v551
      %v2447 = vunpack.c.h.b16 %v551
      %v2448 = vunpack.c.l.b16 %v552
      %v2449 = vunpack.c.l.b16 %v553
      %v2450 = vunpack.c.h.b16 %v553
      %v2451 = vunpack.c.l.b16 %v554
      %v2452 = vunpack.c.l.b16 %v555
      %v2453 = vunpack.c.h.b16 %v555
      %v2454 = vunpack.c.l.b16 %v556
      %v2455 = vunpack.c.l.b16 %v557
      %v2456 = vunpack.c.h.b16 %v557
      %v2457 = vunpack.c.l.b16 %v558
      %v2458 = vunpack.c.l.b16 %v559
      %v2459 = vunpack.c.h.b16 %v559
      %v2460 = vunpack.c.l.b16 %v560
      %v2461 = vunpack.c.l.b16 %v561
      %v2462 = vunpack.c.h.b16 %v561
      %v2463 = vunpack.c.l.b16 %v562
      %v2464 = vunpack.c.l.b16 %v563
      %v2465 = vunpack.c.h.b16 %v563
      %v2466 = vunpack.c.l.b16 %v564
      %v2467 = vunpack.c.l.b16 %v565
      %v2468 = vunpack.c.h.b16 %v565
      %v2469 = vunpack.c.l.b16 %v566
      %v2470 = vunpack.c.l.b16 %v567
      %v2471 = vunpack.c.h.b16 %v567
      %v2472 = vunpack.c.l.b16 %v568
      %v2473 = vunpack.c.l.b16 %v569
      %v2474 = vunpack.c.h.b16 %v569
      %v2475 = vunpack.c.l.b16 %v570
      %v2476 = vunpack.c.l.b16 %v571
      %v2477 = vunpack.c.h.b16 %v571
      %v2478 = vunpack.c.l.b16 %v572
      %v2479 = vunpack.c.l.b16 %v573
      %v2480 = vunpack.c.h.b16 %v573
      %v2481 = vunpack.c.l.b16 %v574
      %v2482 = vunpack.c.l.b16 %v575
      %v2483 = vunpack.c.h.b16 %v575
      %v2484 = vunpack.c.l.b16 %v576
      %v2485 = vunpack.c.l.b16 %v577
      %v2486 = vunpack.c.h.b16 %v577
      %v2487 = vunpack.c.l.b16 %v578
      %v2488 = vunpack.c.l.b16 %v579
      %v2489 = vunpack.c.h.b16 %v579
      %v2490 = vunpack.c.l.b16 %v580
      %v2491 = vunpack.c.l.b16 %v581
      %v2492 = vunpack.c.h.b16 %v581
      %v2493 = vunpack.c.l.b16 %v582
      %v2494 = vunpack.c.l.b16 %v583
      %v2495 = vunpack.c.h.b16 %v583
      %v2496 = vunpack.c.l.b16 %v584
      %v2497 = vunpack.c.l.b16 %v585
      %v2498 = vunpack.c.h.b16 %v585
      %v2499 = vunpack.c.l.b16 %v586
      %v2500 = vunpack.c.l.b16 %v587
      %v2501 = vunpack.c.h.b16 %v587
      %v2502 = vunpack.c.l.b16 %v588
      %v2503 = vunpack.c.l.b16 %v589
      %v2504 = vunpack.c.h.b16 %v589
      %v2505 = vunpack.c.l.b16 %v590
      %v2506 = vunpack.c.l.b16 %v591
      %v2507 = vunpack.c.h.b16 %v591
      %v2508 = vunpack.c.l.b16 %v592
      %v2509 = vunpack.c.l.b16 %v593
      %v2510 = vunpack.c.h.b16 %v593
      %v2511 = vunpack.c.l.b16 %v594
      %v2512 = vunpack.c.l.b16 %v595
      %v2513 = vunpack.c.h.b16 %v595
      %v2514 = vunpack.c.l.b16 %v596
      %v2515 = vunpack.c.l.b16 %v597
      %v2516 = vunpack.c.h.b16 %v597
      %v2517 = vunpack.c.l.b16 %v598
      %v2518 = vunpack.c.l.b16 %v599
      %v2519 = vunpack.c.h.b16 %v599
      %v2520 = vunpack.c.l.b16 %v600
      %v2521 = vunpack.c.l.b16 %v601
      %v2522 = vunpack.c.h.b16 %v601
      %v2523 = vunpack.c.l.b16 %v602
      %v2524 = vunpack.c.l.b16 %v603
      %v2525 = vunpack.c.h.b16 %v603
      %v2526 = vunpack.c.l.b16 %v604
      %v2527 = vunpack.c.l.b16 %v605
      %v2528 = vunpack.c.h.b16 %v605
      %v2529 = vunpack.c.l.b16 %v606
      %v2530 = vunpack.c.l.b16 %v607
      %v2531 = vunpack.c.h.b16 %v607
      %v2532 = vunpack.c.l.b16 %v608
      %v2533 = vunpack.c.l.b16 %v609
      %v2534 = vunpack.c.h.b16 %v609
      %v2535 = vunpack.c.l.b16 %v610
      %v2536 = vunpack.c.l.b16 %v611
      %v2537 = vunpack.c.h.b16 %v611
      %v2538 = vunpack.c.l.b16 %v612
      %v2539 = vunpack.c.l.b16 %v613
      %v2540 = vunpack.c.h.b16 %v613
      %v2541 = vunpack.c.l.b16 %v614
      %v2542 = vunpack.c.l.b16 %v615
      %v2543 = vunpack.c.h.b16 %v615
      %v2544 = vunpack.c.l.b16 %v616
      %v2545 = vunpack.c.l.b16 %v617
      %v2546 = vunpack.c.h.b16 %v617
      %v2547 = vunpack.c.l.b16 %v618
      %v2548 = vunpack.c.l.b16 %v619
      %v2549 = vunpack.c.h.b16 %v619
      %v2550 = vunpack.c.l.b16 %v620
      %v2551 = vunpack.c.l.b16 %v621
      %v2552 = vunpack.c.h.b16 %v621
      %v2553 = vunpack.c.l.b16 %v622
      %v2554 = vunpack.c.l.b16 %v623
      %v2555 = vunpack.c.h.b16 %v623
      %v2556 = vunpack.c.l.b16 %v624
      %v2557 = vunpack.c.l.b16 %v625
      %v2558 = vunpack.c.h.b16 %v625
      %v2559 = vunpack.c.l.b16 %v626
      %v2560 = vunpack.c.l.b16 %v627
      %v2561 = vunpack.c.h.b16 %v627
      %v2562 = vunpack.c.l.b16 %v628
      %v2563 = vunpack.c.l.b16 %v629
      %v2564 = vunpack.c.h.b16 %v629
      %v2565 = vunpack.c.l.b16 %v630
      %v2566 = vunpack.c.l.b16 %v631
      %v2567 = vunpack.c.h.b16 %v631
      %v2568 = vunpack.c.l.b16 %v632
      %v2569 = vunpack.c.l.b16 %v633
      %v2570 = vunpack.c.h.b16 %v633
      %v2571 = vunpack.c.l.b16 %v634
      %v2572 = vunpack.c.l.b16 %v635
      %v2573 = vunpack.c.h.b16 %v635
      %v2574 = vunpack.c.l.b16 %v636
      %v2575 = vunpack.c.l.b16 %v637
      %v2576 = vunpack.c.h.b16 %v637
      %v2577 = vunpack.c.l.b16 %v638
      %v2578 = vunpack.c.l.b16 %v639
      %v2579 = vunpack.c.h.b16 %v639
      %v2580 = vunpack.c.l.b16 %v640
      %v2581 = vunpack.c.l.b16 %v641
      %v2582 = vunpack.c.h.b16 %v641
      %v2583 = vunpack.c.l.b16 %v642
      %v2584 = vunpack.c.l.b16 %v643
      %v2585 = vunpack.c.h.b16 %v643
      %v2586 = vunpack.c.l.b16 %v644
      %v2587 = vunpack.c.l.b16 %v645
      %v2588 = vunpack.c.h.b16 %v645
      %v2589 = vunpack.c.l.b16 %v646
      %v2590 = vunpack.c.l.b16 %v647
      %v2591 = vunpack.c.h.b16 %v647
      %v2592 = vunpack.c.l.b16 %v648
      %v2593 = vunpack.c.l.b16 %v649
      %v2594 = vunpack.c.h.b16 %v649
      %v2595 = vunpack.c.l.b16 %v650
      %v2596 = vunpack.c.l.b16 %v651
      %v2597 = vunpack.c.h.b16 %v651
      %v2598 = vunpack.c.l.b16 %v652
      %v2599 = vunpack.c.l.b16 %v653
      %v2600 = vunpack.c.h.b16 %v653
      %v2601 = vunpack.c.l.b16 %v654
      %v2602 = vunpack.c.l.b16 %v655
      %v2603 = vunpack.c.h.b16 %v655
      %v2604 = vunpack.c.l.b16 %v656
      %v2605 = vunpack.c.l.b16 %v657
      %v2606 = vunpack.c.h.b16 %v657
      %v2607 = vunpack.c.l.b16 %v658
      %v2608 = vunpack.c.l.b16 %v659
      %v2609 = vunpack.c.h.b16 %v659
      %v2610 = vunpack.c.l.b16 %v660
      %v2611 = vunpack.c.l.b16 %v661
      %v2612 = vunpack.c.h.b16 %v661
      %v2613 = vunpack.c.l.b16 %v662
      %v2614 = vunpack.c.l.b16 %v663
      %v2615 = vunpack.c.h.b16 %v663
      %v2616 = vunpack.c.l.b16 %v664
      %v2617 = vunpack.c.l.b16 %v665
      %v2618 = vunpack.c.h.b16 %v665
      %v2619 = vunpack.c.l.b16 %v666
      %v2620 = vunpack.c.l.b16 %v667
      %v2621 = vunpack.c.h.b16 %v667
      %v2622 = vunpack.c.l.b16 %v668
      %v2623 = vunpack.c.l.b16 %v669
      %v2624 = vunpack.c.h.b16 %v669
      %v2625 = vunpack.c.l.b16 %v670
      %v2626 = vunpack.c.l.b16 %v671
      %v2627 = vunpack.c.h.b16 %v671
      %v2628 = vunpack.c.l.b16 %v672
      %v2629 = vunpack.c.l.b16 %v673
      %v2630 = vunpack.c.h.b16 %v673
      %v2631 = vunpack.c.l.b16 %v674
      %v2632 = vunpack.c.l.b16 %v675
      %v2633 = vunpack.c.h.b16 %v675
      %v2634 = vunpack.c.l.b16 %v676
      %v2635 = vunpack.c.l.b16 %v677
      %v2636 = vunpack.c.h.b16 %v677
      %v2637 = vunpack.c.l.b16 %v678
      %v2638 = vunpack.c.l.b16 %v679
      %v2639 = vunpack.c.h.b16 %v679
      %v2640 = vunpack.c.l.b16 %v680
      %v2641 = vunpack.c.l.b16 %v681
      %v2642 = vunpack.c.h.b16 %v681
      %v2643 = vunpack.c.l.b16 %v682
      %v2644 = vunpack.c.l.b16 %v683
      %v2645 = vunpack.c.h.b16 %v683
      %v2646 = vunpack.c.l.b16 %v684
      %v2647 = vunpack.c.l.b16 %v685
      %v2648 = vunpack.c.h.b16 %v685
      %v2649 = vunpack.c.l.b16 %v686
      %v2650 = vunpack.c.l.b16 %v687
      %v2651 = vunpack.c.h.b16 %v687
      %v2652 = vunpack.c.l.b16 %v688
      %v2653 = vunpack.c.l.b16 %v689
      %v2654 = vunpack.c.h.b16 %v689
      %v2655 = vunpack.c.l.b16 %v690
      %v2656 = vunpack.c.l.b16 %v691
      %v2657 = vunpack.c.h.b16 %v691
      %v2658 = vunpack.c.l.b16 %v692
      %v2659 = vunpack.c.l.b16 %v693
      %v2660 = vunpack.c.h.b16 %v693
      %v2661 = vunpack.c.l.b16 %v694
      %v2662 = vunpack.c.l.b16 %v695
      %v2663 = vunpack.c.h.b16 %v695
      %v2664 = vunpack.c.l.b16 %v696
      %v2665 = vunpack.c.l.b16 %v697
      %v2666 = vunpack.c.h.b16 %v697
      %v2667 = vunpack.c.l.b16 %v698
      %v2668 = vunpack.c.l.b16 %v699
      %v2669 = vunpack.c.h.b16 %v699
      %v2670 = vunpack.c.l.b16 %v700
      %v2671 = vunpack.c.l.b16 %v701
      %v2672 = vunpack.c.h.b16 %v701
      %v2673 = vunpack.c.l.b16 %v702
      %v2674 = vunpack.c.l.b16 %v703
      %v2675 = vunpack.c.h.b16 %v703
      %v2676 = vunpack.c.l.b16 %v704
      %v2677 = vunpack.c.l.b16 %v705
      %v2678 = vunpack.c.h.b16 %v705
      %v2679 = vunpack.c.l.b16 %v706
      %v2680 = vunpack.c.l.b16 %v707
      %v2681 = vunpack.c.h.b16 %v707
      %v2682 = vunpack.c.l.b16 %v708
      %v2683 = vunpack.c.l.b16 %v709
      %v2684 = vunpack.c.h.b16 %v709
      %v2685 = vunpack.c.l.b16 %v710
      %v2686 = vunpack.c.l.b16 %v711
      %v2687 = vunpack.c.h.b16 %v711
      %v2688 = vunpack.c.l.b16 %v712
      %v2689 = vunpack.c.l.b16 %v713
      %v2690 = vunpack.c.h.b16 %v713
      %v2691 = vunpack.c.l.b16 %v714
      %v2692 = vunpack.c.l.b16 %v715
      %v2693 = vunpack.c.h.b16 %v715
      %v2694 = vunpack.c.l.b16 %v716
      %v2695 = vunpack.c.l.b16 %v717
      %v2696 = vunpack.c.h.b16 %v717
      %v2697 = vunpack.c.l.b16 %v718
      %v2698 = vunpack.c.l.b16 %v719
      %v2699 = vunpack.c.h.b16 %v719
      %v2700 = vunpack.c.l.b16 %v720
      %v2701 = vunpack.c.l.b16 %v721
      %v2702 = vunpack.c.h.b16 %v721
      %v2703 = vunpack.c.l.b16 %v722
      %v2704 = vunpack.c.l.b16 %v723
      %v2705 = vunpack.c.h.b16 %v723
      %v2706 = vunpack.c.l.b16 %v724
      %v2707 = vunpack.c.l.b16 %v725
      %v2708 = vunpack.c.h.b16 %v725
      %v2709 = vunpack.c.l.b16 %v726
      %v2710 = vunpack.c.l.b16 %v727
      %v2711 = vunpack.c.h.b16 %v727
      %v2712 = vunpack.c.l.b16 %v728
      %v2713 = vunpack.c.l.b16 %v729
      %v2714 = vunpack.c.h.b16 %v729
      %v2715 = vunpack.c.l.b16 %v730
      %v2716 = vunpack.c.l.b16 %v731
      %v2717 = vunpack.c.h.b16 %v731
      %v2718 = vunpack.c.l.b16 %v732
      %v2719 = vunpack.c.l.b16 %v733
      %v2720 = vunpack.c.h.b16 %v733
      %v2721 = vunpack.c.l.b16 %v734
      %v2722 = vunpack.c.l.b16 %v735
      %v2723 = vunpack.c.h.b16 %v735
      %v2724 = vunpack.c.l.b16 %v736
      %v2725 = vunpack.c.l.b16 %v737
      %v2726 = vunpack.c.h.b16 %v737
      %v2727 = vunpack.c.l.b16 %v738
      %v2728 = vunpack.c.l.b16 %v739
      %v2729 = vunpack.c.h.b16 %v739
      %v2730 = vunpack.c.l.b16 %v740
      %v2731 = vunpack.c.l.b16 %v741
      %v2732 = vunpack.c.h.b16 %v741
      %v2733 = vunpack.c.l.b16 %v742
      %v2734 = vunpack.c.l.b16 %v743
      %v2735 = vunpack.c.h.b16 %v743
      %v2736 = vunpack.c.l.b16 %v744
      %v2737 = vunpack.c.l.b16 %v745
      %v2738 = vunpack.c.h.b16 %v745
      %v2739 = vunpack.c.l.b16 %v746
      %v2740 = vunpack.c.l.b16 %v747
      %v2741 = vunpack.c.h.b16 %v747
      %v2742 = vunpack.c.l.b16 %v748
      %v2743 = vunpack.c.l.b16 %v749
      %v2744 = vunpack.c.h.b16 %v749
      %v2745 = vunpack.c.l.b16 %v750
      %v2746 = vunpack.c.l.b16 %v751
      %v2747 = vunpack.c.h.b16 %v751
      %v2748 = vunpack.c.l.b16 %v752
      %v2749 = vunpack.c.l.b16 %v753
      %v2750 = vunpack.c.h.b16 %v753
      %v2751 = vunpack.c.l.b16 %v754
      %v2752 = vunpack.c.l.b16 %v755
      %v2753 = vunpack.c.h.b16 %v755
      %v2754 = vunpack.c.l.b16 %v756
      %v2755 = vunpack.c.l.b16 %v757
      %v2756 = vunpack.c.h.b16 %v757
      %v2757 = vunpack.c.l.b16 %v758
      %v2758 = vunpack.c.l.b16 %v759
      %v2759 = vunpack.c.h.b16 %v759
      %v2760 = vunpack.c.l.b16 %v760
      %v2761 = vunpack.c.l.b16 %v761
      %v2762 = vunpack.c.h.b16 %v761
      %v2763 = vunpack.c.l.b16 %v762
      %v2764 = vunpack.c.l.b16 %v763
      %v2765 = vunpack.c.h.b16 %v763
      %v2766 = vunpack.c.l.b16 %v764
      %v2767 = vunpack.c.l.b16 %v765
      %v2768 = vunpack.c.h.b16 %v765
      %v2769 = vunpack.c.l.b16 %v766
      %v2770 = vunpack.c.l.b16 %v767
      %v2771 = vunpack.c.h.b16 %v767
      %v2772 = vunpack.c.l.b16 %v768
      %v2773 = vunpack.c.l.b16 %v769
      %v2774 = vunpack.c.h.b16 %v769
      %v2775 = vunpack.c.l.b16 %v770
      %v2776 = vunpack.c.l.b16 %v771
      %v2777 = vunpack.c.h.b16 %v771
      %v2778 = vunpack.c.l.b16 %v772
      %v2779 = vunpack.c.l.b16 %v773
      %v2780 = vunpack.c.h.b16 %v773
      %v2781 = vunpack.c.l.b16 %v774
      %v2782 = vunpack.c.l.b16 %v775
      %v2783 = vunpack.c.h.b16 %v775
      %v2784 = vunpack.c.l.b16 %v776
      %v2785 = vunpack.c.l.b16 %v777
      %v2786 = vunpack.c.h.b16 %v777
      %v2787 = vunpack.c.l.b16 %v778
      %v2788 = vunpack.c.l.b16 %v779
      %v2789 = vunpack.c.h.b16 %v779
      %v2790 = vunpack.c.l.b16 %v780
      %v2791 = vunpack.c.l.b16 %v781
      %v2792 = vunpack.c.h.b16 %v781
      %v2793 = vunpack.c.l.b16 %v782
      %v2794 = vunpack.c.l.b16 %v783
      %v2795 = vunpack.c.h.b16 %v783
      %v2796 = vunpack.c.l.b16 %v784
      %v2797 = vunpack.c.l.b16 %v785
      %v2798 = vunpack.c.h.b16 %v785
      %v2799 = vunpack.c.l.b16 %v786
      %v2800 = vunpack.c.l.b16 %v787
      %v2801 = vunpack.c.h.b16 %v787
      %v2802 = vunpack.c.l.b16 %v788
      %v2803 = vunpack.c.l.b16 %v789
      %v2804 = vunpack.c.h.b16 %v789
      %v2805 = vunpack.c.l.b16 %v790
      %v2806 = vunpack.c.l.b16 %v791
      %v2807 = vunpack.c.h.b16 %v791
      %v2808 = vunpack.c.l.b16 %v792
      %v2809 = vunpack.c.l.b16 %v793
      %v2810 = vunpack.c.h.b16 %v793
      %v2811 = vunpack.c.l.b16 %v794
      %v2812 = vunpack.c.l.b16 %v795
      %v2813 = vunpack.c.h.b16 %v795
      %v2814 = vunpack.c.l.b16 %v796
      %v2815 = vunpack.c.l.b16 %v797
      %v2816 = vunpack.c.h.b16 %v797
      %v2817 = vunpack.c.l.b16 %v798
      %v2818 = vunpack.c.l.b16 %v799
      %v2819 = vunpack.c.h.b16 %v799
      %v2820 = vunpack.c.l.b16 %v800
      %v2821 = vunpack.c.l.b16 %v801
      %v2822 = vunpack.c.h.b16 %v801
      %v2823 = vunpack.c.l.b16 %v802
      %v2824 = vunpack.c.l.b16 %v803
      %v2825 = vunpack.c.h.b16 %v803
      %v2826 = vunpack.c.l.b16 %v804
      %v2827 = vunpack.c.l.b16 %v805
      %v2828 = vunpack.c.h.b16 %v805
      %v2829 = vunpack.c.l.b16 %v806
      %v2830 = vunpack.c.l.b16 %v807
      %v2831 = vunpack.c.h.b16 %v807
      %v2832 = vunpack.c.l.b16 %v808
      %v2833 = vunpack.c.l.b16 %v809
      %v2834 = vunpack.c.h.b16 %v809
      %v2835 = vunpack.c.l.b16 %v810
      %v2836 = vunpack.c.l.b16 %v811
      %v2837 = vunpack.c.h.b16 %v811
      %v2838 = vunpack.c.l.b16 %v812
      %v2839 = vunpack.c.l.b16 %v813
      %v2840 = vunpack.c.h.b16 %v813
      %v2841 = vunpack.c.l.b16 %v814
      %v2842 = vunpack.c.l.b16 %v815
      %v2843 = vunpack.c.h.b16 %v815
      %v2844 = vunpack.c.l.b16 %v816
      %v2845 = vunpack.c.l.b16 %v817
      %v2846 = vunpack.c.h.b16 %v817
      %v2847 = vunpack.c.l.b16 %v818
      %v2848 = vunpack.c.l.b16 %v819
      %v2849 = vunpack.c.h.b16 %v819
      %v2850 = vunpack.c.l.b16 %v820
      %v2851 = vunpack.c.l.b16 %v821
      %v2852 = vunpack.c.h.b16 %v821
      %v2853 = vunpack.c.l.b16 %v822
      %v2854 = vunpack.c.l.b16 %v823
      %v2855 = vunpack.c.h.b16 %v823
      %v2856 = vunpack.c.l.b16 %v824
      %v2857 = vunpack.c.l.b16 %v825
      %v2858 = vunpack.c.h.b16 %v825
      %v2859 = vunpack.c.l.b16 %v826
      %v2860 = vunpack.c.l.b16 %v827
      %v2861 = vunpack.c.h.b16 %v827
      %v2862 = vunpack.c.l.b16 %v828
      %v2863 = vunpack.c.l.b16 %v829
      %v2864 = vunpack.c.h.b16 %v829
      %v2865 = vunpack.c.l.b16 %v830
      %v2866 = vunpack.c.l.b16 %v831
      %v2867 = vunpack.c.h.b16 %v831
      %v2868 = vunpack.c.l.b16 %v832
      %v2869 = vunpack.c.l.b16 %v833
      %v2870 = vunpack.c.h.b16 %v833
      %v2871 = vunpack.c.l.b16 %v834
      %v2872 = vunpack.c.l.b16 %v835
      %v2873 = vunpack.c.h.b16 %v835
      %v2874 = vunpack.c.l.b16 %v836
      %v2875 = vunpack.c.l.b16 %v837
      %v2876 = vunpack.c.h.b16 %v837
      %v2877 = vunpack.c.l.b16 %v838
      %v2878 = vunpack.c.l.b16 %v839
      %v2879 = vunpack.c.h.b16 %v839
      %v2880 = vunpack.c.l.b16 %v840
      %v2881 = vunpack.c.l.b16 %v841
      %v2882 = vunpack.c.h.b16 %v841
      %v2883 = vunpack.c.l.b16 %v842
      %v2884 = vunpack.c.l.b16 %v843
      %v2885 = vunpack.c.h.b16 %v843
      %v2886 = vunpack.c.l.b16 %v844
      %v2887 = vunpack.c.l.b16 %v845
      %v2888 = vunpack.c.h.b16 %v845
      %v2889 = vunpack.c.l.b16 %v846
      %v2890 = vunpack.c.l.b16 %v847
      %v2891 = vunpack.c.h.b16 %v847
      %v2892 = vunpack.c.l.b16 %v848
      %v2893 = vunpack.c.l.b16 %v849
      %v2894 = vunpack.c.h.b16 %v849
      %v2895 = vunpack.c.l.b16 %v850
      %v2896 = vunpack.c.l.b16 %v851
      %v2897 = vunpack.c.h.b16 %v851
      %v2898 = vunpack.c.l.b16 %v852
      %v2899 = vunpack.c.l.b16 %v853
      %v2900 = vunpack.c.h.b16 %v853
      %v2901 = vunpack.c.l.b16 %v854
      %v2902 = vunpack.c.l.b16 %v855
      %v2903 = vunpack.c.h.b16 %v855
      %v2904 = vunpack.c.l.b16 %v856
      %v2905 = vunpack.c.l.b16 %v857
      %v2906 = vunpack.c.h.b16 %v857
      %v2907 = vunpack.c.l.b16 %v858
      %v2908 = vunpack.c.l.b16 %v859
      %v2909 = vunpack.c.h.b16 %v859
      %v2910 = vunpack.c.l.b16 %v860
      %v2911 = vunpack.c.l.b16 %v861
      %v2912 = vunpack.c.h.b16 %v861
      %v2913 = vunpack.c.l.b16 %v862
      %v2914 = vunpack.c.l.b16 %v863
      %v2915 = vunpack.c.h.b16 %v863
      %v2916 = vunpack.c.l.b16 %v864
      %v2917 = vunpack.c.l.b16 %v865
      %v2918 = vunpack.c.h.b16 %v865
      %v2919 = vunpack.c.l.b16 %v866
      %v2920 = vunpack.c.l.b16 %v867
      %v2921 = vunpack.c.h.b16 %v867
      %v2922 = vunpack.c.l.b16 %v868
      %v2923 = vunpack.c.l.b16 %v869
      %v2924 = vunpack.c.h.b16 %v869
      %v2925 = vunpack.c.l.b16 %v870
      %v2926 = vunpack.c.l.b16 %v871
      %v2927 = vunpack.c.h.b16 %v871
      %v2928 = vunpack.c.l.b16 %v872
      %v2929 = vunpack.c.l.b16 %v873
      %v2930 = vunpack.c.h.b16 %v873
      %v2931 = vunpack.c.l.b16 %v874
      %v2932 = vunpack.c.l.b16 %v875
      %v2933 = vunpack.c.h.b16 %v875
      %v2934 = vunpack.c.l.b16 %v876
      %v2935 = vunpack.c.l.b16 %v877
      %v2936 = vunpack.c.h.b16 %v877
      %v2937 = vunpack.c.l.b16 %v878
      %v2938 = vunpack.c.l.b16 %v879
      %v2939 = vunpack.c.h.b16 %v879
      %v2940 = vunpack.c.l.b16 %v880
      %v2941 = vunpack.c.l.b16 %v881
      %v2942 = vunpack.c.h.b16 %v881
      %v2943 = vunpack.c.l.b16 %v882
      %v2944 = vunpack.c.l.b16 %v883
      %v2945 = vunpack.c.h.b16 %v883
      %v2946 = vunpack.c.l.b16 %v884
      %v2947 = vunpack.c.l.b16 %v885
      %v2948 = vunpack.c.h.b16 %v885
      %v2949 = vunpack.c.l.b16 %v886
      %v2950 = vunpack.c.l.b16 %v887
      %v2951 = vunpack.c.h.b16 %v887
      %v2952 = vunpack.c.l.b16 %v888
      %v2953 = vunpack.c.l.b16 %v889
      %v2954 = vunpack.c.h.b16 %v889
      %v2955 = vunpack.c.l.b16 %v890
      %v2956 = vunpack.c.l.b16 %v891
      %v2957 = vunpack.c.h.b16 %v891
      %v2958 = vunpack.c.l.b16 %v892
      %v2959 = vunpack.c.l.b16 %v893
      %v2960 = vunpack.c.h.b16 %v893
      %v2961 = vunpack.c.l.b16 %v894
      %v2962 = vunpack.c.l.b16 %v895
      %v2963 = vunpack.c.h.b16 %v895
      %v2964 = vunpack.c.l.b16 %v896
      %v2965 = vunpack.c.l.b16 %v897
      %v2966 = vunpack.c.h.b16 %v897
      %v2967 = vunpack.c.l.b16 %v898
      %v2968 = vunpack.c.l.b16 %v899
      %v2969 = vunpack.c.h.b16 %v899
      %v2970 = vunpack.c.l.b16 %v900
      %v2971 = vunpack.c.l.b16 %v901
      %v2972 = vunpack.c.h.b16 %v901
      %v2973 = vunpack.c.l.b16 %v902
      %v2974 = vunpack.c.l.b16 %v903
      %v2975 = vunpack.c.h.b16 %v903
      %v2976 = vunpack.c.l.b16 %v904
      %v2977 = vunpack.c.l.b16 %v905
      %v2978 = vunpack.c.h.b16 %v905
      %v2979 = vunpack.c.l.b16 %v906
      %v2980 = vunpack.c.l.b16 %v907
      %v2981 = vunpack.c.h.b16 %v907
      %v2982 = vunpack.c.l.b16 %v908
      %v2983 = vunpack.c.l.b16 %v909
      %v2984 = vunpack.c.h.b16 %v909
      %v2985 = vunpack.c.l.b16 %v910
      %v2986 = vunpack.c.l.b16 %v911
      %v2987 = vunpack.c.h.b16 %v911
      %v2988 = vunpack.c.l.b16 %v912
      %v2989 = vunpack.c.l.b16 %v913
      %v2990 = vunpack.c.h.b16 %v913
      %v2991 = vunpack.c.l.b16 %v914
      %v2992 = vunpack.c.l.b16 %v915
      %v2993 = vunpack.c.h.b16 %v915
      %v2994 = vunpack.c.l.b16 %v916
      %v2995 = vunpack.c.l.b16 %v917
      %v2996 = vunpack.c.h.b16 %v917
      %v2997 = vunpack.c.l.b16 %v918
      %v2998 = vunpack.c.l.b16 %v919
      %v2999 = vunpack.c.h.b16 %v919
      %v3000 = vunpack.c.l.b16 %v920
      %v3001 = vunpack.c.l.b16 %v921
      %v3002 = vunpack.c.h.b16 %v921
      %v3003 = vunpack.c.l.b16 %v922
      %v3004 = vunpack.c.l.b16 %v923
      %v3005 = vunpack.c.h.b16 %v923
      %v3006 = vunpack.c.l.b16 %v924
      %v3007 = vunpack.c.l.b16 %v925
      %v3008 = vunpack.c.h.b16 %v925
      %v3009 = vunpack.c.l.b16 %v926
      %v3010 = vunpack.c.l.b16 %v927
      %v3011 = vunpack.c.h.b16 %v927
      %v3012 = vunpack.c.l.b16 %v928
      %v3013 = vunpack.c.l.b16 %v929
      %v3014 = vunpack.c.h.b16 %v929
      %v3015 = vunpack.c.l.b16 %v930
      %v3016 = vunpack.c.l.b16 %v931
      %v3017 = vunpack.c.h.b16 %v931
      %v3018 = vunpack.c.l.b16 %v932
      %v3019 = vunpack.c.l.b16 %v933
      %v3020 = vunpack.c.h.b16 %v933
      %v3021 = vunpack.c.l.b16 %v934
      %v3022 = vunpack.c.l.b16 %v935
      %v3023 = vunpack.c.h.b16 %v935
      %v3024 = vunpack.c.l.b16 %v936
      %v3025 = vunpack.c.l.b16 %v937
      %v3026 = vunpack.c.h.b16 %v937
      %v3027 = vunpack.c.l.b16 %v938
      %v3028 = vunpack.c.l.b16 %v939
      %v3029 = vunpack.c.h.b16 %v939
      %v3030 = vunpack.c.l.b16 %v940
      %v3031 = vunpack.c.l.b16 %v941
      %v3032 = vunpack.c.h.b16 %v941
      %v3033 = vunpack.c.l.b16 %v942
      %v3034 = vunpack.c.l.b16 %v943
      %v3035 = vunpack.c.h.b16 %v943
      %v3036 = vunpack.c.l.b16 %v944
      %v3037 = vunpack.c.l.b16 %v945
      %v3038 = vunpack.c.h.b16 %v945
      %v3039 = vunpack.c.l.b16 %v946
      %v3040 = vunpack.c.l.b16 %v947
      %v3041 = vunpack.c.h.b16 %v947
      %v3042 = vunpack.c.l.b16 %v948
      %v3043 = vunpack.c.l.b16 %v949
      %v3044 = vunpack.c.h.b16 %v949
      %v3045 = vunpack.c.l.b16 %v950
      %v3046 = vunpack.c.l.b16 %v951
      %v3047 = vunpack.c.h.b16 %v951
      %v3048 = vunpack.c.l.b16 %v952
      %v3049 = vunpack.c.l.b16 %v953
      %v3050 = vunpack.c.h.b16 %v953
      %v3051 = vunpack.c.l.b16 %v954
      %v3052 = vunpack.c.l.b16 %v955
      %v3053 = vunpack.c.h.b16 %v955
      %v3054 = vunpack.c.l.b16 %v956
      %v3055 = vunpack.c.l.b16 %v957
      %v3056 = vunpack.c.h.b16 %v957
      %v3057 = vunpack.c.l.b16 %v958
      %v3058 = vunpack.c.l.b16 %v959
      %v3059 = vunpack.c.h.b16 %v959
      %v3060 = vunpack.c.l.b16 %v960
      %v3061 = vunpack.c.l.b16 %v961
      %v3062 = vunpack.c.h.b16 %v961
      %v3063 = vunpack.c.l.b16 %v962
      %v3064 = vunpack.c.l.b16 %v963
      %v3065 = vunpack.c.h.b16 %v963
      %v3066 = vunpack.c.l.b16 %v964
      %v3067 = vunpack.c.l.b16 %v965
      %v3068 = vunpack.c.h.b16 %v965
      %v3069 = vunpack.c.l.b16 %v966
      %v3070 = vunpack.c.l.b16 %v967
      %v3071 = vunpack.c.h.b16 %v967
      %v3072 = vunpack.c.l.b16 %v968
      %v3073 = vunpack.c.l.b16 %v969
      %v3074 = vunpack.c.h.b16 %v969
      %v3075 = vunpack.c.l.b16 %v970
      %v3076 = vunpack.c.l.b16 %v971
      %v3077 = vunpack.c.h.b16 %v971
      %v3078 = vunpack.c.l.b16 %v972
      %v3079 = vunpack.c.l.b16 %v973
      %v3080 = vunpack.c.h.b16 %v973
      %v3081 = vunpack.c.l.b16 %v974
      %v3082 = vunpack.c.l.b16 %v975
      %v3083 = vunpack.c.h.b16 %v975
      %v3084 = vunpack.c.l.b16 %v976
      %v3085 = vunpack.c.l.b16 %v977
      %v3086 = vunpack.c.h.b16 %v977
      %v3087 = vunpack.c.l.b16 %v978
      %v3088 = vunpack.c.l.b16 %v979
      %v3089 = vunpack.c.h.b16 %v979
      %v3090 = vunpack.c.l.b16 %v980
      %v3091 = vunpack.c.l.b16 %v981
      %v3092 = vunpack.c.h.b16 %v981
      %v3093 = vunpack.c.l.b16 %v982
      %v3094 = vunpack.c.l.b16 %v983
      %v3095 = vunpack.c.h.b16 %v983
      %v3096 = vunpack.c.l.b16 %v984
      %v3097 = vunpack.c.l.b16 %v985
      %v3098 = vunpack.c.h.b16 %v985
      %v3099 = vunpack.c.l.b16 %v986
      %v3100 = vunpack.c.l.b16 %v987
      %v3101 = vunpack.c.h.b16 %v987
      %v3102 = vunpack.c.l.b16 %v988
      %v3103 = vunpack.c.l.b16 %v989
      %v3104 = vunpack.c.h.b16 %v989
      %v3105 = vunpack.c.l.b16 %v990
      %v3106 = vunpack.c.l.b16 %v991
      %v3107 = vunpack.c.h.b16 %v991
      %v3108 = vunpack.c.l.b16 %v992
      %v3109 = vunpack.c.l.b16 %v993
      %v3110 = vunpack.c.h.b16 %v993
      %v3111 = vunpack.c.l.b16 %v994
      %v3112 = vunpack.c.l.b16 %v995
      %v3113 = vunpack.c.h.b16 %v995
      %v3114 = vunpack.c.l.b16 %v996
      %v3115 = vunpack.c.l.b16 %v997
      %v3116 = vunpack.c.h.b16 %v997
      %v3117 = vunpack.c.l.b16 %v998
      %v3118 = vunpack.c.l.b16 %v999
      %v3119 = vunpack.c.h.b16 %v999
      %v3120 = vunpack.c.l.b16 %v1000
      %v3121 = vunpack.c.l.b16 %v1001
      %v3122 = vunpack.c.h.b16 %v1001
      %v3123 = vunpack.c.l.b16 %v1002
      %v3124 = vunpack.c.l.b16 %v1003
      %v3125 = vunpack.c.h.b16 %v1003
      %v3126 = vunpack.c.l.b16 %v1004
      %v3127 = vunpack.c.l.b16 %v1005
      %v3128 = vunpack.c.h.b16 %v1005
      %v3129 = vunpack.c.l.b16 %v1006
      %v3130 = vunpack.c.l.b16 %v1007
      %v3131 = vunpack.c.h.b16 %v1007
      %v3132 = vunpack.c.l.b16 %v1008
      %v3133 = vunpack.c.l.b16 %v1009
      %v3134 = vunpack.c.h.b16 %v1009
      %v3135 = vunpack.c.l.b16 %v1010
      %v3136 = vunpack.c.l.b16 %v1011
      %v3137 = vunpack.c.h.b16 %v1011
      %v3138 = vunpack.c.l.b16 %v1012
      %v3139 = vunpack.c.l.b16 %v1013
      %v3140 = vunpack.c.h.b16 %v1013
      %v3141 = vunpack.c.l.b16 %v1014
      %v3142 = vunpack.c.l.b16 %v1015
      %v3143 = vunpack.c.h.b16 %v1015
      %v3144 = vunpack.c.l.b16 %v1016
      %v3145 = vunpack.c.l.b16 %v1017
      %v3146 = vunpack.c.h.b16 %v1017
      %v3147 = vunpack.c.l.b16 %v1018
      %v3148 = vunpack.c.l.b16 %v1019
      %v3149 = vunpack.c.h.b16 %v1019
      %v3150 = vunpack.c.l.b16 %v1020
      %v3151 = vunpack.c.l.b16 %v1021
      %v3152 = vunpack.c.h.b16 %v1021
      %v3153 = vunpack.c.l.b16 %v1022
      %v3154 = vunpack.c.l.b16 %v1023
      %v3155 = vunpack.c.h.b16 %v1023
      %v3156 = vunpack.c.l.b16 %v1024
      %v3157 = vunpack.c.l.b16 %v1025
      %v3158 = vunpack.c.h.b16 %v1025
      %v3159 = vunpack.c.l.b16 %v1026
      %v3160 = vunpack.c.l.b16 %v1027
      %v3161 = vunpack.c.h.b16 %v1027
      %v3162 = vunpack.c.l.b16 %v1028
      %v3163 = vunpack.c.l.b16 %v1029
      %v3164 = vunpack.c.h.b16 %v1029
      %v3165 = vunpack.c.l.b16 %v1030
      %v3166 = vunpack.c.l.b16 %v1031
      %v3167 = vunpack.c.h.b16 %v1031
      %v3168 = vunpack.c.l.b16 %v1032
      %v3169 = vunpack.c.l.b16 %v1033
      %v3170 = vunpack.c.h.b16 %v1033
      %v3171 = vunpack.c.l.b16 %v1034
      %v3172 = vunpack.c.l.b16 %v1035
      %v3173 = vunpack.c.h.b16 %v1035
      %v3174 = vunpack.c.l.b16 %v1036
      %v3175 = vunpack.c.l.b16 %v1037
      %v3176 = vunpack.c.h.b16 %v1037
      %v3177 = vunpack.c.l.b16 %v1038
      %v3178 = vunpack.c.l.b16 %v1039
      %v3179 = vunpack.c.h.b16 %v1039
      %v3180 = vunpack.c.l.b16 %v1040
      %v3181 = vunpack.c.l.b16 %v1041
      %v3182 = vunpack.c.h.b16 %v1041
      %v3183 = vunpack.c.l.b16 %v1042
      %v3184 = vunpack.c.l.b16 %v1043
      %v3185 = vunpack.c.h.b16 %v1043
      %v3186 = vunpack.c.l.b16 %v1044
      %v3187 = vunpack.c.l.b16 %v1045
      %v3188 = vunpack.c.h.b16 %v1045
      %v3189 = vunpack.c.l.b16 %v1046
      %v3190 = vunpack.c.l.b16 %v1047
      %v3191 = vunpack.c.h.b16 %v1047
      %v3192 = vunpack.c.l.b16 %v1048
      %v3193 = vunpack.c.l.b16 %v1049
      %v3194 = vunpack.c.h.b16 %v1049
      %v3195 = vunpack.c.l.b16 %v1050
      %v3196 = vunpack.c.l.b16 %v1051
      %v3197 = vunpack.c.h.b16 %v1051
      %v3198 = vunpack.c.l.b16 %v1052
      %v3199 = vunpack.c.l.b16 %v1053
      %v3200 = vunpack.c.h.b16 %v1053
      %v3201 = vunpack.c.l.b16 %v1054
      %v3202 = vunpack.c.l.b16 %v1055
      %v3203 = vunpack.c.h.b16 %v1055
      %v3204 = vunpack.c.l.b16 %v1056
      %v3205 = vunpack.c.l.b16 %v1057
      %v3206 = vunpack.c.h.b16 %v1057
      %v3207 = vunpack.c.l.b16 %v1058
      %v3208 = vunpack.c.l.b16 %v1059
      %v3209 = vunpack.c.h.b16 %v1059
      %v3210 = vunpack.c.l.b16 %v1060
      %v3211 = vpack.c.b16 %v2038, %v2035
      %v3212 = vpack.c.b16 %v2039, %v2036
      %v3213 = vpack.c.b16 %v2040, %v2037
      %v3214 = vpack.c.b16 %v2044, %v2041
      %v3215 = vpack.c.b16 %v2045, %v2042
      %v3216 = vpack.c.b16 %v2046, %v2043
      %v3217 = vpack.c.b16 %v2050, %v2047
      %v3218 = vpack.c.b16 %v2051, %v2048
      %v3219 = vpack.c.b16 %v2052, %v2049
      %v3220 = vpack.c.b16 %v2056, %v2053
      %v3221 = vpack.c.b16 %v2057, %v2054
      %v3222 = vpack.c.b16 %v2058, %v2055
      %v3223 = vpack.c.b16 %v2062, %v2059
      %v3224 = vpack.c.b16 %v2063, %v2060
      %v3225 = vpack.c.b16 %v2064, %v2061
      %v3226 = vpack.c.b16 %v2068, %v2065
      %v3227 = vpack.c.b16 %v2069, %v2066
      %v3228 = vpack.c.b16 %v2070, %v2067
      %v3229 = vpack.c.b16 %v2074, %v2071
      %v3230 = vpack.c.b16 %v2075, %v2072
      %v3231 = vpack.c.b16 %v2076, %v2073
      %v3232 = vpack.c.b16 %v2080, %v2077
      %v3233 = vpack.c.b16 %v2081, %v2078
      %v3234 = vpack.c.b16 %v2082, %v2079
      %v3235 = vpack.c.b16 %v2086, %v2083
      %v3236 = vpack.c.b16 %v2087, %v2084
      %v3237 = vpack.c.b16 %v2088, %v2085
      %v3238 = vpack.c.b16 %v2092, %v2089
      %v3239 = vpack.c.b16 %v2093, %v2090
      %v3240 = vpack.c.b16 %v2094, %v2091
      %v3241 = vpack.c.b16 %v2098, %v2095
      %v3242 = vpack.c.b16 %v2099, %v2096
      %v3243 = vpack.c.b16 %v2100, %v2097
      %v3244 = vpack.c.b16 %v2104, %v2101
      %v3245 = vpack.c.b16 %v2105, %v2102
      %v3246 = vpack.c.b16 %v2106, %v2103
      %v3247 = vpack.c.b16 %v2110, %v2107
      %v3248 = vpack.c.b16 %v2111, %v2108
      %v3249 = vpack.c.b16 %v2112, %v2109
      %v3250 = vpack.c.b16 %v2116, %v2113
      %v3251 = vpack.c.b16 %v2117, %v2114
      %v3252 = vpack.c.b16 %v2118, %v2115
      %v3253 = vpack.c.b16 %v2122, %v2119
      %v3254 = vpack.c.b16 %v2123, %v2120
      %v3255 = vpack.c.b16 %v2124, %v2121
      %v3256 = vpack.c.b16 %v2128, %v2125
      %v3257 = vpack.c.b16 %v2129, %v2126
      %v3258 = vpack.c.b16 %v2130, %v2127
      %v3259 = vpack.c.b16 %v2134, %v2131
      %v3260 = vpack.c.b16 %v2135, %v2132
      %v3261 = vpack.c.b16 %v2136, %v2133
      %v3262 = vpack.c.b16 %v2140, %v2137
      %v3263 = vpack.c.b16 %v2141, %v2138
      %v3264 = vpack.c.b16 %v2142, %v2139
      %v3265 = vpack.c.b16 %v2146, %v2143
      %v3266 = vpack.c.b16 %v2147, %v2144
      %v3267 = vpack.c.b16 %v2148, %v2145
      %v3268 = vpack.c.b16 %v2152, %v2149
      %v3269 = vpack.c.b16 %v2153, %v2150
      %v3270 = vpack.c.b16 %v2154, %v2151
      %v3271 = vpack.c.b16 %v2158, %v2155
      %v3272 = vpack.c.b16 %v2159, %v2156
      %v3273 = vpack.c.b16 %v2160, %v2157
      %v3274 = vpack.c.b16 %v2164, %v2161
      %v3275 = vpack.c.b16 %v2165, %v2162
      %v3276 = vpack.c.b16 %v2166, %v2163
      %v3277 = vpack.c.b16 %v2170, %v2167
      %v3278 = vpack.c.b16 %v2171, %v2168
      %v3279 = vpack.c.b16 %v2172, %v2169
      %v3280 = vpack.c.b16 %v2176, %v2173
      %v3281 = vpack.c.b16 %v2177, %v2174
      %v3282 = vpack.c.b16 %v2178, %v2175
      %v3283 = vpack.c.b16 %v2182, %v2179
      %v3284 = vpack.c.b16 %v2183, %v2180
      %v3285 = vpack.c.b16 %v2184, %v2181
      %v3286 = vpack.c.b16 %v2188, %v2185
      %v3287 = vpack.c.b16 %v2189, %v2186
      %v3288 = vpack.c.b16 %v2190, %v2187
      %v3289 = vpack.c.b16 %v2194, %v2191
      %v3290 = vpack.c.b16 %v2195, %v2192
      %v3291 = vpack.c.b16 %v2196, %v2193
      %v3292 = vpack.c.b16 %v2200, %v2197
      %v3293 = vpack.c.b16 %v2201, %v2198
      %v3294 = vpack.c.b16 %v2202, %v2199
      %v3295 = vpack.c.b16 %v2206, %v2203
      %v3296 = vpack.c.b16 %v2207, %v2204
      %v3297 = vpack.c.b16 %v2208, %v2205
      %v3298 = vpack.c.b16 %v2212, %v2209
      %v3299 = vpack.c.b16 %v2213, %v2210
      %v3300 = vpack.c.b16 %v2214, %v2211
      %v3301 = vpack.c.b16 %v2218, %v2215
      %v3302 = vpack.c.b16 %v2219, %v2216
      %v3303 = vpack.c.b16 %v2220, %v2217
      %v3304 = vpack.c.b16 %v2224, %v2221
      %v3305 = vpack.c.b16 %v2225, %v2222
      %v3306 = vpack.c.b16 %v2226, %v2223
      %v3307 = vpack.c.b16 %v2230, %v2227
      %v3308 = vpack.c.b16 %v2231, %v2228
      %v3309 = vpack.c.b16 %v2232, %v2229
      %v3310 = vpack.c.b16 %v2236, %v2233
      %v3311 = vpack.c.b16 %v2237, %v2234
      %v3312 = vpack.c.b16 %v2238, %v2235
      %v3313 = vpack.c.b16 %v2242, %v2239
      %v3314 = vpack.c.b16 %v2243, %v2240
      %v3315 = vpack.c.b16 %v2244, %v2241
      %v3316 = vpack.c.b16 %v2248, %v2245
      %v3317 = vpack.c.b16 %v2249, %v2246
      %v3318 = vpack.c.b16 %v2250, %v2247
      %v3319 = vpack.c.b16 %v2254, %v2251
      %v3320 = vpack.c.b16 %v2255, %v2252
      %v3321 = vpack.c.b16 %v2256, %v2253
      %v3322 = vpack.c.b16 %v2260, %v2257
      %v3323 = vpack.c.b16 %v2261, %v2258
      %v3324 = vpack.c.b16 %v2262, %v2259
      %v3325 = vpack.c.b16 %v2266, %v2263
      %v3326 = vpack.c.b16 %v2267, %v2264
      %v3327 = vpack.c.b16 %v2268, %v2265
      %v3328 = vpack.c.b16 %v2272, %v2269
      %v3329 = vpack.c.b16 %v2273, %v2270
      %v3330 = vpack.c.b16 %v2274, %v2271
      %v3331 = vpack.c.b16 %v2278, %v2275
      %v3332 = vpack.c.b16 %v2279, %v2276
      %v3333 = vpack.c.b16 %v2280, %v2277
      %v3334 = vpack.c.b16 %v2284, %v2281
      %v3335 = vpack.c.b16 %v2285, %v2282
      %v3336 = vpack.c.b16 %v2286, %v2283
      %v3337 = vpack.c.b16 %v2290, %v2287
      %v3338 = vpack.c.b16 %v2291, %v2288
      %v3339 = vpack.c.b16 %v2292, %v2289
      %v3340 = vpack.c.b16 %v2296, %v2293
      %v3341 = vpack.c.b16 %v2297, %v2294
      %v3342 = vpack.c.b16 %v2298, %v2295
      %v3343 = vpack.c.b16 %v2302, %v2299
      %v3344 = vpack.c.b16 %v2303, %v2300
      %v3345 = vpack.c.b16 %v2304, %v2301
      %v3346 = vpack.c.b16 %v2308, %v2305
      %v3347 = vpack.c.b16 %v2309, %v2306
      %v3348 = vpack.c.b16 %v2310, %v2307
      %v3349 = vpack.c.b16 %v2314, %v2311
      %v3350 = vpack.c.b16 %v2315, %v2312
      %v3351 = vpack.c.b16 %v2316, %v2313
      %v3352 = vpack.c.b16 %v2320, %v2317
      %v3353 = vpack.c.b16 %v2321, %v2318
      %v3354 = vpack.c.b16 %v2322, %v2319
      %v3355 = vpack.c.b16 %v2326, %v2323
      %v3356 = vpack.c.b16 %v2327, %v2324
      %v3357 = vpack.c.b16 %v2328, %v2325
      %v3358 = vpack.c.b16 %v2332, %v2329
      %v3359 = vpack.c.b16 %v2333, %v2330
      %v3360 = vpack.c.b16 %v2334, %v2331
      %v3361 = vpack.c.b16 %v2338, %v2335
      %v3362 = vpack.c.b16 %v2339, %v2336
      %v3363 = vpack.c.b16 %v2340, %v2337
      %v3364 = vpack.c.b16 %v2344, %v2341
      %v3365 = vpack.c.b16 %v2345, %v2342
      %v3366 = vpack.c.b16 %v2346, %v2343
      %v3367 = vpack.c.b16 %v2350, %v2347
      %v3368 = vpack.c.b16 %v2351, %v2348
      %v3369 = vpack.c.b16 %v2352, %v2349
      %v3370 = vpack.c.b16 %v2356, %v2353
      %v3371 = vpack.c.b16 %v2357, %v2354
      %v3372 = vpack.c.b16 %v2358, %v2355
      %v3373 = vpack.c.b16 %v2362, %v2359
      %v3374 = vpack.c.b16 %v2363, %v2360
      %v3375 = vpack.c.b16 %v2364, %v2361
      %v3376 = vpack.c.b16 %v2368, %v2365
      %v3377 = vpack.c.b16 %v2369, %v2366
      %v3378 = vpack.c.b16 %v2370, %v2367
      %v3379 = vpack.c.b16 %v2374, %v2371
      %v3380 = vpack.c.b16 %v2375, %v2372
      %v3381 = vpack.c.b16 %v2376, %v2373
      %v3382 = vpack.c.b16 %v2380, %v2377
      %v3383 = vpack.c.b16 %v2381, %v2378
      %v3384 = vpack.c.b16 %v2382, %v2379
      %v3385 = vpack.c.b16 %v2386, %v2383
      %v3386 = vpack.c.b16 %v2387, %v2384
      %v3387 = vpack.c.b16 %v2388, %v2385
      %v3388 = vpack.c.b16 %v2392, %v2389
      %v3389 = vpack.c.b16 %v2393, %v2390
      %v3390 = vpack.c.b16 %v2394, %v2391
      %v3391 = vpack.c.b16 %v2398, %v2395
      %v3392 = vpack.c.b16 %v2399, %v2396
      %v3393 = vpack.c.b16 %v2400, %v2397
      %v3394 = vpack.c.b16 %v2404, %v2401
      %v3395 = vpack.c.b16 %v2405, %v2402
      %v3396 = vpack.c.b16 %v2406, %v2403
      %v3397 = vpack.c.b16 %v2410, %v2407
      %v3398 = vpack.c.b16 %v2411, %v2408
      %v3399 = vpack.c.b16 %v2412, %v2409
      %v3400 = vpack.c.b16 %v2416, %v2413
      %v3401 = vpack.c.b16 %v2417, %v2414
      %v3402 = vpack.c.b16 %v2418, %v2415
      %v3403 = vpack.c.b16 %v2422, %v2419
      %v3404 = vpack.c.b16 %v2423, %v2420
      %v3405 = vpack.c.b16 %v2424, %v2421
      %v3406 = vpack.c.b16 %v2428, %v2425
      %v3407 = vpack.c.b16 %v2429, %v2426
      %v3408 = vpack.c.b16 %v2430, %v2427
      %v3409 = vpack.c.b16 %v2434, %v2431
      %v3410 = vpack.c.b16 %v2435, %v2432
      %v3411 = vpack.c.b16 %v2436, %v2433
      %v3412 = vpack.c.b16 %v2440, %v2437
      %v3413 = vpack.c.b16 %v2441, %v2438
      %v3414 = vpack.c.b16 %v2442, %v2439
      %v3415 = vpack.c.b16 %v2446, %v2443
      %v3416 = vpack.c.b16 %v2447, %v2444
      %v3417 = vpack.c.b16 %v2448, %v2445
      %v3418 = vpack.c.b16 %v2452, %v2449
      %v3419 = vpack.c.b16 %v2453, %v2450
      %v3420 = vpack.c.b16 %v2454, %v2451
      %v3421 = vpack.c.b16 %v2458, %v2455
      %v3422 = vpack.c.b16 %v2459, %v2456
      %v3423 = vpack.c.b16 %v2460, %v2457
      %v3424 = vpack.c.b16 %v2464, %v2461
      %v3425 = vpack.c.b16 %v2465, %v2462
      %v3426 = vpack.c.b16 %v2466, %v2463
      %v3427 = vpack.c.b16 %v2470, %v2467
      %v3428 = vpack.c.b16 %v2471, %v2468
      %v3429 = vpack.c.b16 %v2472, %v2469
      %v3430 = vpack.c.b16 %v2476, %v2473
      %v3431 = vpack.c.b16 %v2477, %v2474
      %v3432 = vpack.c.b16 %v2478, %v2475
      %v3433 = vpack.c.b16 %v2482, %v2479
      %v3434 = vpack.c.b16 %v2483, %v2480
      %v3435 = vpack.c.b16 %v2484, %v2481
      %v3436 = vpack.c.b16 %v2488, %v2485
      %v3437 = vpack.c.b16 %v2489, %v2486
      %v3438 = vpack.c.b16 %v2490, %v2487
      %v3439 = vpack.c.b16 %v2494, %v2491
      %v3440 = vpack.c.b16 %v2495, %v2492
      %v3441 = vpack.c.b16 %v2496, %v2493
      %v3442 = vpack.c.b16 %v2500, %v2497
      %v3443 = vpack.c.b16 %v2501, %v2498
      %v3444 = vpack.c.b16 %v2502, %v2499
      %v3445 = vpack.c.b16 %v2506, %v2503
      %v3446 = vpack.c.b16 %v2507, %v2504
      %v3447 = vpack.c.b16 %v2508, %v2505
      %v3448 = vpack.c.b16 %v2512, %v2509
      %v3449 = vpack.c.b16 %v2513, %v2510
      %v3450 = vpack.c.b16 %v2514, %v2511
      %v3451 = vpack.c.b16 %v2518, %v2515
      %v3452 = vpack.c.b16 %v2519, %v2516
      %v3453 = vpack.c.b16 %v2520, %v2517
      %v3454 = vpack.c.b16 %v2524, %v2521
      %v3455 = vpack.c.b16 %v2525, %v2522
      %v3456 = vpack.c.b16 %v2526, %v2523
      %v3457 = vpack.c.b16 %v2530, %v2527
      %v3458 = vpack.c.b16 %v2531, %v2528
      %v3459 = vpack.c.b16 %v2532, %v2529
      %v3460 = vpack.c.b16 %v2536, %v2533
      %v3461 = vpack.c.b16 %v2537, %v2534
      %v3462 = vpack.c.b16 %v2538, %v2535
      %v3463 = vpack.c.b16 %v2542, %v2539
      %v3464 = vpack.c.b16 %v2543, %v2540
      %v3465 = vpack.c.b16 %v2544, %v2541
      %v3466 = vpack.c.b16 %v2548, %v2545
      %v3467 = vpack.c.b16 %v2549, %v2546
      %v3468 = vpack.c.b16 %v2550, %v2547
      %v3469 = vpack.c.b16 %v2554, %v2551
      %v3470 = vpack.c.b16 %v2555, %v2552
      %v3471 = vpack.c.b16 %v2556, %v2553
      %v3472 = vpack.c.b16 %v2560, %v2557
      %v3473 = vpack.c.b16 %v2561, %v2558
      %v3474 = vpack.c.b16 %v2562, %v2559
      %v3475 = vpack.c.b16 %v2566, %v2563
      %v3476 = vpack.c.b16 %v2567, %v2564
      %v3477 = vpack.c.b16 %v2568, %v2565
      %v3478 = vpack.c.b16 %v2572, %v2569
      %v3479 = vpack.c.b16 %v2573, %v2570
      %v3480 = vpack.c.b16 %v2574, %v2571
      %v3481 = vpack.c.b16 %v2578, %v2575
      %v3482 = vpack.c.b16 %v2579, %v2576
      %v3483 = vpack.c.b16 %v2580, %v2577
      %v3484 = vpack.c.b16 %v2584, %v2581
      %v3485 = vpack.c.b16 %v2585, %v2582
      %v3486 = vpack.c.b16 %v2586, %v2583
      %v3487 = vpack.c.b16 %v2590, %v2587
      %v3488 = vpack.c.b16 %v2591, %v2588
      %v3489 = vpack.c.b16 %v2592, %v2589
      %v3490 = vpack.c.b16 %v2596, %v2593
      %v3491 = vpack.c.b16 %v2597, %v2594
      %v3492 = vpack.c.b16 %v2598, %v2595
      %v3493 = vpack.c.b16 %v2602, %v2599
      %v3494 = vpack.c.b16 %v2603, %v2600
      %v3495 = vpack.c.b16 %v2604, %v2601
      %v3496 = vpack.c.b16 %v2608, %v2605
      %v3497 = vpack.c.b16 %v2609, %v2606
      %v3498 = vpack.c.b16 %v2610, %v2607
      %v3499 = vpack.c.b16 %v2614, %v2611
      %v3500 = vpack.c.b16 %v2615, %v2612
      %v3501 = vpack.c.b16 %v2616, %v2613
      %v3502 = vpack.c.b16 %v2620, %v2617
      %v3503 = vpack.c.b16 %v2621, %v2618
      %v3504 = vpack.c.b16 %v2622, %v2619
      %v3505 = vpack.c.b16 %v2626, %v2623
      %v3506 = vpack.c.b16 %v2627, %v2624
      %v3507 = vpack.c.b16 %v2628, %v2625
      %v3508 = vpack.c.b16 %v2632, %v2629
      %v3509 = vpack.c.b16 %v2633, %v2630
      %v3510 = vpack.c.b16 %v2634, %v2631
      %v3511 = vpack.c.b16 %v2638, %v2635
      %v3512 = vpack.c.b16 %v2639, %v2636
      %v3513 = vpack.c.b16 %v2640, %v2637
      %v3514 = vpack.c.b16 %v2644, %v2641
      %v3515 = vpack.c.b16 %v2645, %v2642
      %v3516 = vpack.c.b16 %v2646, %v2643
      %v3517 = vpack.c.b16 %v2650, %v2647
      %v3518 = vpack.c.b16 %v2651, %v2648
      %v3519 = vpack.c.b16 %v2652, %v2649
      %v3520 = vpack.c.b16 %v2656, %v2653
      %v3521 = vpack.c.b16 %v2657, %v2654
      %v3522 = vpack.c.b16 %v2658, %v2655
      %v3523 = vpack.c.b16 %v2662, %v2659
      %v3524 = vpack.c.b16 %v2663, %v2660
      %v3525 = vpack.c.b16 %v2664, %v2661
      %v3526 = vpack.c.b16 %v2668, %v2665
      %v3527 = vpack.c.b16 %v2669, %v2666
      %v3528 = vpack.c.b16 %v2670, %v2667
      %v3529 = vpack.c.b16 %v2674, %v2671
      %v3530 = vpack.c.b16 %v2675, %v2672
      %v3531 = vpack.c.b16 %v2676, %v2673
      %v3532 = vpack.c.b16 %v2680, %v2677
      %v3533 = vpack.c.b16 %v2681, %v2678
      %v3534 = vpack.c.b16 %v2682, %v2679
      %v3535 = vpack.c.b16 %v2686, %v2683
      %v3536 = vpack.c.b16 %v2687, %v2684
      %v3537 = vpack.c.b16 %v2688, %v2685
      %v3538 = vpack.c.b16 %v2692, %v2689
      %v3539 = vpack.c.b16 %v2693, %v2690
      %v3540 = vpack.c.b16 %v2694, %v2691
      %v3541 = vpack.c.b16 %v2698, %v2695
      %v3542 = vpack.c.b16 %v2699, %v2696
      %v3543 = vpack.c.b16 %v2700, %v2697
      %v3544 = vpack.c.b16 %v2704, %v2701
      %v3545 = vpack.c.b16 %v2705, %v2702
      %v3546 = vpack.c.b16 %v2706, %v2703
      %v3547 = vpack.c.b16 %v2710, %v2707
      %v3548 = vpack.c.b16 %v2711, %v2708
      %v3549 = vpack.c.b16 %v2712, %v2709
      %v3550 = vpack.c.b16 %v2716, %v2713
      %v3551 = vpack.c.b16 %v2717, %v2714
      %v3552 = vpack.c.b16 %v2718, %v2715
      %v3553 = vpack.c.b16 %v2722, %v2719
      %v3554 = vpack.c.b16 %v2723, %v2720
      %v3555 = vpack.c.b16 %v2724, %v2721
      %v3556 = vpack.c.b16 %v2728, %v2725
      %v3557 = vpack.c.b16 %v2729, %v2726
      %v3558 = vpack.c.b16 %v2730, %v2727
      %v3559 = vpack.c.b16 %v2734, %v2731
      %v3560 = vpack.c.b16 %v2735, %v2732
      %v3561 = vpack.c.b16 %v2736, %v2733
      %v3562 = vpack.c.b16 %v2740, %v2737
      %v3563 = vpack.c.b16 %v2741, %v2738
      %v3564 = vpack.c.b16 %v2742, %v2739
      %v3565 = vpack.c.b16 %v2746, %v2743
      %v3566 = vpack.c.b16 %v2747, %v2744
      %v3567 = vpack.c.b16 %v2748, %v2745
      %v3568 = vpack.c.b16 %v2752, %v2749
      %v3569 = vpack.c.b16 %v2753, %v2750
      %v3570 = vpack.c.b16 %v2754, %v2751
      %v3571 = vpack.c.b16 %v2758, %v2755
      %v3572 = vpack.c.b16 %v2759, %v2756
      %v3573 = vpack.c.b16 %v2760, %v2757
      %v3574 = vpack.c.b16 %v2764, %v2761
      %v3575 = vpack.c.b16 %v2765, %v2762
      %v3576 = vpack.c.b16 %v2766, %v2763
      %v3577 = vpack.c.b16 %v2770, %v2767
      %v3578 = vpack.c.b16 %v2771, %v2768
      %v3579 = vpack.c.b16 %v2772, %v2769
      %v3580 = vpack.c.b16 %v2776, %v2773
      %v3581 = vpack.c.b16 %v2777, %v2774
      %v3582 = vpack.c.b16 %v2778, %v2775
      %v3583 = vpack.c.b16 %v2782, %v2779
      %v3584 = vpack.c.b16 %v2783, %v2780
      %v3585 = vpack.c.b16 %v2784, %v2781
      %v3586 = vpack.c.b16 %v2788, %v2785
      %v3587 = vpack.c.b16 %v2789, %v2786
      %v3588 = vpack.c.b16 %v2790, %v2787
      %v3589 = vpack.c.b16 %v2794, %v2791
      %v3590 = vpack.c.b16 %v2795, %v2792
      %v3591 = vpack.c.b16 %v2796, %v2793
      %v3592 = vpack.c.b16 %v2800, %v2797
      %v3593 = vpack.c.b16 %v2801, %v2798
      %v3594 = vpack.c.b16 %v2802, %v2799
      %v3595 = vpack.c.b16 %v2806, %v2803
      %v3596 = vpack.c.b16 %v2807, %v2804
      %v3597 = vpack.c.b16 %v2808, %v2805
      %v3598 = vpack.c.b16 %v2812, %v2809
      %v3599 = vpack.c.b16 %v2813, %v2810
      %v3600 = vpack.c.b16 %v2814, %v2811
      %v3601 = vpack.c.b16 %v2818, %v2815
      %v3602 = vpack.c.b16 %v2819, %v2816
      %v3603 = vpack.c.b16 %v2820, %v2817
      %v3604 = vpack.c.b16 %v2824, %v2821
      %v3605 = vpack.c.b16 %v2825, %v2822
      %v3606 = vpack.c.b16 %v2826, %v2823
      %v3607 = vpack.c.b16 %v2830, %v2827
      %v3608 = vpack.c.b16 %v2831, %v2828
      %v3609 = vpack.c.b16 %v2832, %v2829
      %v3610 = vpack.c.b16 %v2836, %v2833
      %v3611 = vpack.c.b16 %v2837, %v2834
      %v3612 = vpack.c.b16 %v2838, %v2835
      %v3613 = vpack.c.b16 %v2842, %v2839
      %v3614 = vpack.c.b16 %v2843, %v2840
      %v3615 = vpack.c.b16 %v2844, %v2841
      %v3616 = vpack.c.b16 %v2848, %v2845
      %v3617 = vpack.c.b16 %v2849, %v2846
      %v3618 = vpack.c.b16 %v2850, %v2847
      %v3619 = vpack.c.b16 %v2854, %v2851
      %v3620 = vpack.c.b16 %v2855, %v2852
      %v3621 = vpack.c.b16 %v2856, %v2853
      %v3622 = vpack.c.b16 %v2860, %v2857
      %v3623 = vpack.c.b16 %v2861, %v2858
      %v3624 = vpack.c.b16 %v2862, %v2859
      %v3625 = vpack.c.b16 %v2866, %v2863
      %v3626 = vpack.c.b16 %v2867, %v2864
      %v3627 = vpack.c.b16 %v2868, %v2865
      %v3628 = vpack.c.b16 %v2872, %v2869
      %v3629 = vpack.c.b16 %v2873, %v2870
      %v3630 = vpack.c.b16 %v2874, %v2871
      %v3631 = vpack.c.b16 %v2878, %v2875
      %v3632 = vpack.c.b16 %v2879, %v2876
      %v3633 = vpack.c.b16 %v2880, %v2877
      %v3634 = vpack.c.b16 %v2884, %v2881
      %v3635 = vpack.c.b16 %v2885, %v2882
      %v3636 = vpack.c.b16 %v2886, %v2883
      %v3637 = vpack.c.b16 %v2890, %v2887
      %v3638 = vpack.c.b16 %v2891, %v2888
      %v3639 = vpack.c.b16 %v2892, %v2889
      %v3640 = vpack.c.b16 %v2896, %v2893
      %v3641 = vpack.c.b16 %v2897, %v2894
      %v3642 = vpack.c.b16 %v2898, %v2895
      %v3643 = vpack.c.b16 %v2902, %v2899
      %v3644 = vpack.c.b16 %v2903, %v2900
      %v3645 = vpack.c.b16 %v2904, %v2901
      %v3646 = vpack.c.b16 %v2908, %v2905
      %v3647 = vpack.c.b16 %v2909, %v2906
      %v3648 = vpack.c.b16 %v2910, %v2907
      %v3649 = vpack.c.b16 %v2914, %v2911
      %v3650 = vpack.c.b16 %v2915, %v2912
      %v3651 = vpack.c.b16 %v2916, %v2913
      %v3652 = vpack.c.b16 %v2920, %v2917
      %v3653 = vpack.c.b16 %v2921, %v2918
      %v3654 = vpack.c.b16 %v2922, %v2919
      %v3655 = vpack.c.b16 %v2926, %v2923
      %v3656 = vpack.c.b16 %v2927, %v2924
      %v3657 = vpack.c.b16 %v2928, %v2925
      %v3658 = vpack.c.b16 %v2932, %v2929
      %v3659 = vpack.c.b16 %v2933, %v2930
      %v3660 = vpack.c.b16 %v2934, %v2931
      %v3661 = vpack.c.b16 %v2938, %v2935
      %v3662 = vpack.c.b16 %v2939, %v2936
      %v3663 = vpack.c.b16 %v2940, %v2937
      %v3664 = vpack.c.b16 %v2944, %v2941
      %v3665 = vpack.c.b16 %v2945, %v2942
      %v3666 = vpack.c.b16 %v2946, %v2943
      %v3667 = vpack.c.b16 %v2950, %v2947
      %v3668 = vpack.c.b16 %v2951, %v2948
      %v3669 = vpack.c.b16 %v2952, %v2949
      %v3670 = vpack.c.b16 %v2956, %v2953
      %v3671 = vpack.c.b16 %v2957, %v2954
      %v3672 = vpack.c.b16 %v2958, %v2955
      %v3673 = vpack.c.b16 %v2962, %v2959
      %v3674 = vpack.c.b16 %v2963, %v2960
      %v3675 = vpack.c.b16 %v2964, %v2961
      %v3676 = vpack.c.b16 %v2968, %v2965
      %v3677 = vpack.c.b16 %v2969, %v2966
      %v3678 = vpack.c.b16 %v2970, %v2967
      %v3679 = vpack.c.b16 %v2974, %v2971
      %v3680 = vpack.c.b16 %v2975, %v2972
      %v3681 = vpack.c.b16 %v2976, %v2973
      %v3682 = vpack.c.b16 %v2980, %v2977
      %v3683 = vpack.c.b16 %v2981, %v2978
      %v3684 = vpack.c.b16 %v2982, %v2979
      %v3685 = vpack.c.b16 %v2986, %v2983
      %v3686 = vpack.c.b16 %v2987, %v2984
      %v3687 = vpack.c.b16 %v2988, %v2985
      %v3688 = vpack.c.b16 %v2992, %v2989
      %v3689 = vpack.c.b16 %v2993, %v2990
      %v3690 = vpack.c.b16 %v2994, %v2991
      %v3691 = vpack.c.b16 %v2998, %v2995
      %v3692 = vpack.c.b16 %v2999, %v2996
      %v3693 = vpack.c.b16 %v3000, %v2997
      %v3694 = vpack.c.b16 %v3004, %v3001
      %v3695 = vpack.c.b16 %v3005, %v3002
      %v3696 = vpack.c.b16 %v3006, %v3003
      %v3697 = vpack.c.b16 %v3010, %v3007
      %v3698 = vpack.c.b16 %v3011, %v3008
      %v3699 = vpack.c.b16 %v3012, %v3009
      %v3700 = vpack.c.b16 %v3016, %v3013
      %v3701 = vpack.c.b16 %v3017, %v3014
      %v3702 = vpack.c.b16 %v3018, %v3015
      %v3703 = vpack.c.b16 %v3022, %v3019
      %v3704 = vpack.c.b16 %v3023, %v3020
      %v3705 = vpack.c.b16 %v3024, %v3021
      %v3706 = vpack.c.b16 %v3028, %v3025
      %v3707 = vpack.c.b16 %v3029, %v3026
      %v3708 = vpack.c.b16 %v3030, %v3027
      %v3709 = vpack.c.b16 %v3034, %v3031
      %v3710 = vpack.c.b16 %v3035, %v3032
      %v3711 = vpack.c.b16 %v3036, %v3033
      %v3712 = vpack.c.b16 %v3040, %v3037
      %v3713 = vpack.c.b16 %v3041, %v3038
      %v3714 = vpack.c.b16 %v3042, %v3039
      %v3715 = vpack.c.b16 %v3046, %v3043
      %v3716 = vpack.c.b16 %v3047, %v3044
      %v3717 = vpack.c.b16 %v3048, %v3045
      %v3718 = vpack.c.b16 %v3052, %v3049
      %v3719 = vpack.c.b16 %v3053, %v3050
      %v3720 = vpack.c.b16 %v3054, %v3051
      %v3721 = vpack.c.b16 %v3058, %v3055
      %v3722 = vpack.c.b16 %v3059, %v3056
      %v3723 = vpack.c.b16 %v3060, %v3057
      %v3724 = vpack.c.b16 %v3064, %v3061
      %v3725 = vpack.c.b16 %v3065, %v3062
      %v3726 = vpack.c.b16 %v3066, %v3063
      %v3727 = vpack.c.b16 %v3070, %v3067
      %v3728 = vpack.c.b16 %v3071, %v3068
      %v3729 = vpack.c.b16 %v3072, %v3069
      %v3730 = vpack.c.b16 %v3076, %v3073
      %v3731 = vpack.c.b16 %v3077, %v3074
      %v3732 = vpack.c.b16 %v3078, %v3075
      %v3733 = vpack.c.b16 %v3082, %v3079
      %v3734 = vpack.c.b16 %v3083, %v3080
      %v3735 = vpack.c.b16 %v3084, %v3081
      %v3736 = vpack.c.b16 %v3088, %v3085
      %v3737 = vpack.c.b16 %v3089, %v3086
      %v3738 = vpack.c.b16 %v3090, %v3087
      %v3739 = vpack.c.b16 %v3094, %v3091
      %v3740 = vpack.c.b16 %v3095, %v3092
      %v3741 = vpack.c.b16 %v3096, %v3093
      %v3742 = vpack.c.b16 %v3100, %v3097
      %v3743 = vpack.c.b16 %v3101, %v3098
      %v3744 = vpack.c.b16 %v3102, %v3099
      %v3745 = vpack.c.b16 %v3106, %v3103
      %v3746 = vpack.c.b16 %v3107, %v3104
      %v3747 = vpack.c.b16 %v3108, %v3105
      %v3748 = vpack.c.b16 %v3112, %v3109
      %v3749 = vpack.c.b16 %v3113, %v3110
      %v3750 = vpack.c.b16 %v3114, %v3111
      %v3751 = vpack.c.b16 %v3118, %v3115
      %v3752 = vpack.c.b16 %v3119, %v3116
      %v3753 = vpack.c.b16 %v3120, %v3117
      %v3754 = vpack.c.b16 %v3124, %v3121
      %v3755 = vpack.c.b16 %v3125, %v3122
      %v3756 = vpack.c.b16 %v3126, %v3123
      %v3757 = vpack.c.b16 %v3130, %v3127
      %v3758 = vpack.c.b16 %v3131, %v3128
      %v3759 = vpack.c.b16 %v3132, %v3129
      %v3760 = vpack.c.b16 %v3136, %v3133
      %v3761 = vpack.c.b16 %v3137, %v3134
      %v3762 = vpack.c.b16 %v3138, %v3135
      %v3763 = vpack.c.b16 %v3142, %v3139
      %v3764 = vpack.c.b16 %v3143, %v3140
      %v3765 = vpack.c.b16 %v3144, %v3141
      %v3766 = vpack.c.b16 %v3148, %v3145
      %v3767 = vpack.c.b16 %v3149, %v3146
      %v3768 = vpack.c.b16 %v3150, %v3147
      %v3769 = vpack.c.b16 %v3154, %v3151
      %v3770 = vpack.c.b16 %v3155, %v3152
      %v3771 = vpack.c.b16 %v3156, %v3153
      %v3772 = vpack.c.b16 %v3160, %v3157
      %v3773 = vpack.c.b16 %v3161, %v3158
      %v3774 = vpack.c.b16 %v3162, %v3159
      %v3775 = vpack.c.b16 %v3166, %v3163
      %v3776 = vpack.c.b16 %v3167, %v3164
      %v3777 = vpack.c.b16 %v3168, %v3165
      %v3778 = vpack.c.b16 %v3172, %v3169
      %v3779 = vpack.c.b16 %v3173, %v3170
      %v3780 = vpack.c.b16 %v3174, %v3171
      %v3781 = vpack.c.b16 %v3178, %v3175
      %v3782 = vpack.c.b16 %v3179, %v3176
      %v3783 = vpack.c.b16 %v3180, %v3177
      %v3784 = vpack.c.b16 %v3184, %v3181
      %v3785 = vpack.c.b16 %v3185, %v3182
      %v3786 = vpack.c.b16 %v3186, %v3183
      %v3787 = vpack.c.b16 %v3190, %v3187
      %v3788 = vpack.c.b16 %v3191, %v3188
      %v3789 = vpack.c.b16 %v3192, %v3189
      %v3790 = vpack.c.b16 %v3196, %v3193
      %v3791 = vpack.c.b16 %v3197, %v3194
      %v3792 = vpack.c.b16 %v3198, %v3195
      %v3793 = vpack.c.b16 %v3202, %v3199
      %v3794 = vpack.c.b16 %v3203, %v3200
      %v3795 = vpack.c.b16 %v3204, %v3201
      %v3796 = vpack.c.b16 %v3208, %v3205
      %v3797 = vpack.c.b16 %v3209, %v3206
      %v3798 = vpack.c.b16 %v3210, %v3207
      %v4388 = vlaneseq
      %v4389 = vshrl.u32 %v4388, 7
      %v4390 = vsub.s32 0, %v4389
      %v4391 = vrot.slane %v1061, %v4390
      %v4392 = vlaneseq
      %v4393 = vshrl.u32 %v4392, 7
      %v4394 = vsub.s32 1, %v4393
      %v4395 = vrot.slane %v1061, %v4394
      %v4396 = vlaneseq
      %v4397 = vshrl.u32 %v4396, 7
      %v4398 = vsub.s32 2, %v4397
      %v4399 = vrot.slane %v1061, %v4398
      %vm4403 = vcmask 523264
      %v4405 = vsel %vm4403, %v1226, 0
      %4407 = vmatprep.subr.bf16.mxu0 %v3212
      %4408 = vmatpush1.bf16.msra.mxu0 %v3211
      %4409 = vmatprep.subr.bf16.mxu0 %v3215
      %4410 = vmatpush1.bf16.msra.mxu0 %v3214
      %4411 = vmatprep.subr.bf16.mxu0 %v3218
      %4412 = vmatpush1.bf16.msra.mxu0 %v3217
      %4413 = vmatprep.subr.bf16.mxu0 %v3221
      %4414 = vmatpush1.bf16.msra.mxu0 %v3220
      %4415 = vmatprep.subr.bf16.mxu0 %v3224
      %4416 = vmatpush1.bf16.msra.mxu0 %v3223
      %4417 = vmatprep.subr.bf16.mxu0 %v3227
      %4418 = vmatpush1.bf16.msra.mxu0 %v3226
      %4419 = vmatprep.subr.bf16.mxu0 %v3230
      %4420 = vmatpush1.bf16.msra.mxu0 %v3229
      %4421 = vmatprep.subr.bf16.mxu0 %v3233
      %4422 = vmatpush1.bf16.msra.mxu0 %v3232
      %4423 = vmatprep.subr.bf16.mxu0 %v3236
      %4424 = vmatpush1.bf16.msra.mxu0 %v3235
      %4425 = vmatprep.subr.bf16.mxu0 %v3239
      %4426 = vmatpush1.bf16.msra.mxu0 %v3238
      %4427 = vmatprep.subr.bf16.mxu0 %v3242
      %4428 = vmatpush1.bf16.msra.mxu0 %v3241
      %4429 = vmatprep.subr.bf16.mxu0 %v3245
      %4430 = vmatpush1.bf16.msra.mxu0 %v3244
      %4431 = vmatprep.subr.bf16.mxu0 %v3248
      %4432 = vmatpush1.bf16.msra.mxu0 %v3247
      %4433 = vmatprep.subr.bf16.mxu0 %v3251
      %4434 = vmatpush1.bf16.msra.mxu0 %v3250
      %4435 = vmatprep.subr.bf16.mxu0 %v3254
      %4436 = vmatpush1.bf16.msra.mxu0 %v3253
      %4437 = vmatprep.subr.bf16.mxu0 %v3257
      %4438 = vmatpush1.bf16.msra.mxu0 %v3256
      %4439 = vmatprep.mubr.bf16.mxu0 %v1103
      %4440 = vmatmul.mubr.bf16.gmra.mrb[0].mxu0 %v1089
      %v4441 = vpop.f32.mrb[0].mxu0
      %v4442 = vadd.f32 %v4391, %v4441
      %v4443 = vpop.f32.mrb[0].mxu0
      %v4444 = vadd.f32 %v4395, %v4443
      %v4445 = vpop.f32.mrb[0].mxu0
      %v4446 = vpop.f32.mrb[0].mxu0
      %4447 = vdwg.mxu0
      %4448 = vmatprep.subr.bf16.mxu0 %v3260
      %4449 = vmatpush1.bf16.msra.mxu0 %v3259
      %4450 = vmatprep.subr.bf16.mxu0 %v3263
      %4451 = vmatpush1.bf16.msra.mxu0 %v3262
      %4452 = vmatprep.subr.bf16.mxu0 %v3266
      %4453 = vmatpush1.bf16.msra.mxu0 %v3265
      %4454 = vmatprep.subr.bf16.mxu0 %v3269
      %4455 = vmatpush1.bf16.msra.mxu0 %v3268
      %4456 = vmatprep.subr.bf16.mxu0 %v3272
      %4457 = vmatpush1.bf16.msra.mxu0 %v3271
      %4458 = vmatprep.subr.bf16.mxu0 %v3275
      %4459 = vmatpush1.bf16.msra.mxu0 %v3274
      %4460 = vmatprep.subr.bf16.mxu0 %v3278
      %4461 = vmatpush1.bf16.msra.mxu0 %v3277
      %4462 = vmatprep.subr.bf16.mxu0 %v3281
      %4463 = vmatpush1.bf16.msra.mxu0 %v3280
      %4464 = vmatprep.subr.bf16.mxu0 %v3284
      %4465 = vmatpush1.bf16.msra.mxu0 %v3283
      %4466 = vmatprep.subr.bf16.mxu0 %v3287
      %4467 = vmatpush1.bf16.msra.mxu0 %v3286
      %4468 = vmatprep.subr.bf16.mxu0 %v3290
      %4469 = vmatpush1.bf16.msra.mxu0 %v3289
      %4470 = vmatprep.subr.bf16.mxu0 %v3293
      %4471 = vmatpush1.bf16.msra.mxu0 %v3292
      %4472 = vmatprep.subr.bf16.mxu0 %v3296
      %4473 = vmatpush1.bf16.msra.mxu0 %v3295
      %4474 = vmatprep.subr.bf16.mxu0 %v3299
      %4475 = vmatpush1.bf16.msra.mxu0 %v3298
      %4476 = vmatprep.subr.bf16.mxu0 %v3302
      %4477 = vmatpush1.bf16.msra.mxu0 %v3301
      %4478 = vmatprep.subr.bf16.mxu0 %v3305
      %4479 = vmatpush1.bf16.msra.mxu0 %v3304
      %4480 = vmatprep.mubr.bf16.mxu0 %v1113
      %4481 = vmatmul.mubr.bf16.gmra.mrb[0].mxu0 %v1111
      %v4482 = vpop.f32.mrb[0].mxu0
      %v4483 = vadd.f32 %v4442, %v4482
      %v4484 = vpop.f32.mrb[0].mxu0
      %v4485 = vadd.f32 %v4444, %v4484
      %v4486 = vpop.f32.mrb[0].mxu0
      %v4487 = vpop.f32.mrb[0].mxu0
      %4488 = vdwg.mxu0
      %4489 = vmatprep.subr.bf16.mxu0 %v3308
      %4490 = vmatpush1.bf16.msra.mxu0 %v3307
      %4491 = vmatprep.subr.bf16.mxu0 %v3311
      %4492 = vmatpush1.bf16.msra.mxu0 %v3310
      %4493 = vmatprep.subr.bf16.mxu0 %v3314
      %4494 = vmatpush1.bf16.msra.mxu0 %v3313
      %4495 = vmatprep.subr.bf16.mxu0 %v3317
      %4496 = vmatpush1.bf16.msra.mxu0 %v3316
      %4497 = vmatprep.subr.bf16.mxu0 %v3320
      %4498 = vmatpush1.bf16.msra.mxu0 %v3319
      %4499 = vmatprep.subr.bf16.mxu0 %v3323
      %4500 = vmatpush1.bf16.msra.mxu0 %v3322
      %4501 = vmatprep.subr.bf16.mxu0 %v3326
      %4502 = vmatpush1.bf16.msra.mxu0 %v3325
      %4503 = vmatprep.subr.bf16.mxu0 %v3329
      %4504 = vmatpush1.bf16.msra.mxu0 %v3328
      %4505 = vmatprep.subr.bf16.mxu0 %v3332
      %4506 = vmatpush1.bf16.msra.mxu0 %v3331
      %4507 = vmatprep.subr.bf16.mxu0 %v3335
      %4508 = vmatpush1.bf16.msra.mxu0 %v3334
      %4509 = vmatprep.subr.bf16.mxu0 %v3338
      %4510 = vmatpush1.bf16.msra.mxu0 %v3337
      %4511 = vmatprep.subr.bf16.mxu0 %v3341
      %4512 = vmatpush1.bf16.msra.mxu0 %v3340
      %4513 = vmatprep.subr.bf16.mxu0 %v3344
      %4514 = vmatpush1.bf16.msra.mxu0 %v3343
      %4515 = vmatprep.subr.bf16.mxu0 %v3347
      %4516 = vmatpush1.bf16.msra.mxu0 %v3346
      %4517 = vmatprep.subr.bf16.mxu0 %v3350
      %4518 = vmatpush1.bf16.msra.mxu0 %v3349
      %4519 = vmatprep.subr.bf16.mxu0 %v3353
      %4520 = vmatpush1.bf16.msra.mxu0 %v3352
      %4521 = vmatprep.mubr.bf16.mxu0 %v1110
      %4522 = vmatmul.mubr.bf16.gmra.mrb[0].mxu0 %v1096
      %v4523 = vpop.f32.mrb[0].mxu0
      %v4524 = vadd.f32 %v4483, %v4523
      %v4525 = vpop.f32.mrb[0].mxu0
      %v4526 = vadd.f32 %v4485, %v4525
      %v4527 = vpop.f32.mrb[0].mxu0
      %v4528 = vpop.f32.mrb[0].mxu0
      %4529 = vdwg.mxu0
      %4530 = vmatprep.subr.bf16.mxu0 %v3356
      %4531 = vmatpush1.bf16.msra.mxu0 %v3355
      %4532 = vmatprep.subr.bf16.mxu0 %v3359
      %4533 = vmatpush1.bf16.msra.mxu0 %v3358
      %4534 = vmatprep.subr.bf16.mxu0 %v3362
      %4535 = vmatpush1.bf16.msra.mxu0 %v3361
      %4536 = vmatprep.subr.bf16.mxu0 %v3365
      %4537 = vmatpush1.bf16.msra.mxu0 %v3364
      %4538 = vmatprep.subr.bf16.mxu0 %v3368
      %4539 = vmatpush1.bf16.msra.mxu0 %v3367
      %4540 = vmatprep.subr.bf16.mxu0 %v3371
      %4541 = vmatpush1.bf16.msra.mxu0 %v3370
      %4542 = vmatprep.subr.bf16.mxu0 %v3374
      %4543 = vmatpush1.bf16.msra.mxu0 %v3373
      %4544 = vmatprep.subr.bf16.mxu0 %v3377
      %4545 = vmatpush1.bf16.msra.mxu0 %v3376
      %4546 = vmatprep.subr.bf16.mxu0 %v3380
      %4547 = vmatpush1.bf16.msra.mxu0 %v3379
      %4548 = vmatprep.subr.bf16.mxu0 %v3383
      %4549 = vmatpush1.bf16.msra.mxu0 %v3382
      %4550 = vmatprep.subr.bf16.mxu0 %v3386
      %4551 = vmatpush1.bf16.msra.mxu0 %v3385
      %4552 = vmatprep.subr.bf16.mxu0 %v3389
      %4553 = vmatpush1.bf16.msra.mxu0 %v3388
      %4554 = vmatprep.subr.bf16.mxu0 %v3392
      %4555 = vmatpush1.bf16.msra.mxu0 %v3391
      %4556 = vmatprep.subr.bf16.mxu0 %v3395
      %4557 = vmatpush1.bf16.msra.mxu0 %v3394
      %4558 = vmatprep.subr.bf16.mxu0 %v3398
      %4559 = vmatpush1.bf16.msra.mxu0 %v3397
      %4560 = vmatprep.subr.bf16.mxu0 %v3401
      %4561 = vmatpush1.bf16.msra.mxu0 %v3400
      %4562 = vmatprep.mubr.bf16.mxu0 %v1114
      %4563 = vmatmul.mubr.bf16.gmra.mrb[0].mxu0 %v1112
      %v4564 = vpop.f32.mrb[0].mxu0
      %v4565 = vadd.f32 %v4524, %v4564
      %v4566 = vpop.f32.mrb[0].mxu0
      %v4567 = vadd.f32 %v4526, %v4566
      %v4568 = vpop.f32.mrb[0].mxu0
      %v4569 = vpop.f32.mrb[0].mxu0
      %4570 = vdwg.mxu0
      %4571 = vmatprep.subr.bf16.mxu0 %v3404
      %4572 = vmatpush1.bf16.msra.mxu0 %v3403
      %4573 = vmatprep.subr.bf16.mxu0 %v3407
      %4574 = vmatpush1.bf16.msra.mxu0 %v3406
      %4575 = vmatprep.subr.bf16.mxu0 %v3410
      %4576 = vmatpush1.bf16.msra.mxu0 %v3409
      %4577 = vmatprep.subr.bf16.mxu0 %v3413
      %4578 = vmatpush1.bf16.msra.mxu0 %v3412
      %4579 = vmatprep.subr.bf16.mxu0 %v3416
      %4580 = vmatpush1.bf16.msra.mxu0 %v3415
      %4581 = vmatprep.subr.bf16.mxu0 %v3419
      %4582 = vmatpush1.bf16.msra.mxu0 %v3418
      %4583 = vmatprep.subr.bf16.mxu0 %v3422
      %4584 = vmatpush1.bf16.msra.mxu0 %v3421
      %4585 = vmatprep.subr.bf16.mxu0 %v3425
      %4586 = vmatpush1.bf16.msra.mxu0 %v3424
      %4587 = vmatprep.subr.bf16.mxu0 %v3428
      %4588 = vmatpush1.bf16.msra.mxu0 %v3427
      %4589 = vmatprep.subr.bf16.mxu0 %v3431
      %4590 = vmatpush1.bf16.msra.mxu0 %v3430
      %4591 = vmatprep.subr.bf16.mxu0 %v3434
      %4592 = vmatpush1.bf16.msra.mxu0 %v3433
      %4593 = vmatprep.subr.bf16.mxu0 %v3437
      %4594 = vmatpush1.bf16.msra.mxu0 %v3436
      %4595 = vmatprep.subr.bf16.mxu0 %v3440
      %4596 = vmatpush1.bf16.msra.mxu0 %v3439
      %4597 = vmatprep.subr.bf16.mxu0 %v3443
      %4598 = vmatpush1.bf16.msra.mxu0 %v3442
      %4599 = vmatprep.subr.bf16.mxu0 %v3446
      %4600 = vmatpush1.bf16.msra.mxu0 %v3445
      %4601 = vmatprep.subr.bf16.mxu0 %v3449
      %4602 = vmatpush1.bf16.msra.mxu0 %v3448
      %4603 = vmatprep.mubr.bf16.mxu0 %v1152
      %4604 = vmatmul.mubr.bf16.gmra.mrb[0].mxu0 %v1138
      %v4605 = vpop.f32.mrb[0].mxu0
      %v4606 = vadd.f32 %v4565, %v4605
      %v4607 = vpop.f32.mrb[0].mxu0
      %v4608 = vadd.f32 %v4567, %v4607
      %v4609 = vpop.f32.mrb[0].mxu0
      %v4610 = vpop.f32.mrb[0].mxu0
      %4611 = vdwg.mxu0
      %4612 = vmatprep.subr.bf16.mxu0 %v3452
      %4613 = vmatpush1.bf16.msra.mxu0 %v3451
      %4614 = vmatprep.subr.bf16.mxu0 %v3455
      %4615 = vmatpush1.bf16.msra.mxu0 %v3454
      %4616 = vmatprep.subr.bf16.mxu0 %v3458
      %4617 = vmatpush1.bf16.msra.mxu0 %v3457
      %4618 = vmatprep.subr.bf16.mxu0 %v3461
      %4619 = vmatpush1.bf16.msra.mxu0 %v3460
      %4620 = vmatprep.subr.bf16.mxu0 %v3464
      %4621 = vmatpush1.bf16.msra.mxu0 %v3463
      %4622 = vmatprep.subr.bf16.mxu0 %v3467
      %4623 = vmatpush1.bf16.msra.mxu0 %v3466
      %4624 = vmatprep.subr.bf16.mxu0 %v3470
      %4625 = vmatpush1.bf16.msra.mxu0 %v3469
      %4626 = vmatprep.subr.bf16.mxu0 %v3473
      %4627 = vmatpush1.bf16.msra.mxu0 %v3472
      %4628 = vmatprep.subr.bf16.mxu0 %v3476
      %4629 = vmatpush1.bf16.msra.mxu0 %v3475
      %4630 = vmatprep.subr.bf16.mxu0 %v3479
      %4631 = vmatpush1.bf16.msra.mxu0 %v3478
      %4632 = vmatprep.subr.bf16.mxu0 %v3482
      %4633 = vmatpush1.bf16.msra.mxu0 %v3481
      %4634 = vmatprep.subr.bf16.mxu0 %v3485
      %4635 = vmatpush1.bf16.msra.mxu0 %v3484
      %4636 = vmatprep.subr.bf16.mxu0 %v3488
      %4637 = vmatpush1.bf16.msra.mxu0 %v3487
      %4638 = vmatprep.subr.bf16.mxu0 %v3491
      %4639 = vmatpush1.bf16.msra.mxu0 %v3490
      %4640 = vmatprep.subr.bf16.mxu0 %v3494
      %4641 = vmatpush1.bf16.msra.mxu0 %v3493
      %4642 = vmatprep.subr.bf16.mxu0 %v3497
      %4643 = vmatpush1.bf16.msra.mxu0 %v3496
      %4644 = vmatprep.mubr.bf16.mxu0 %v1162
      %4645 = vmatmul.mubr.bf16.gmra.mrb[0].mxu0 %v1160
      %v4646 = vpop.f32.mrb[0].mxu0
      %v4647 = vadd.f32 %v4606, %v4646
      %v4648 = vpop.f32.mrb[0].mxu0
      %v4649 = vadd.f32 %v4608, %v4648
      %v4650 = vpop.f32.mrb[0].mxu0
      %v4651 = vpop.f32.mrb[0].mxu0
      %4652 = vdwg.mxu0
      %4653 = vmatprep.subr.bf16.mxu0 %v3500
      %4654 = vmatpush1.bf16.msra.mxu0 %v3499
      %4655 = vmatprep.subr.bf16.mxu0 %v3503
      %4656 = vmatpush1.bf16.msra.mxu0 %v3502
      %4657 = vmatprep.subr.bf16.mxu0 %v3506
      %4658 = vmatpush1.bf16.msra.mxu0 %v3505
      %4659 = vmatprep.subr.bf16.mxu0 %v3509
      %4660 = vmatpush1.bf16.msra.mxu0 %v3508
      %4661 = vmatprep.subr.bf16.mxu0 %v3512
      %4662 = vmatpush1.bf16.msra.mxu0 %v3511
      %4663 = vmatprep.subr.bf16.mxu0 %v3515
      %4664 = vmatpush1.bf16.msra.mxu0 %v3514
      %4665 = vmatprep.subr.bf16.mxu0 %v3518
      %4666 = vmatpush1.bf16.msra.mxu0 %v3517
      %4667 = vmatprep.subr.bf16.mxu0 %v3521
      %4668 = vmatpush1.bf16.msra.mxu0 %v3520
      %4669 = vmatprep.subr.bf16.mxu0 %v3524
      %4670 = vmatpush1.bf16.msra.mxu0 %v3523
      %4671 = vmatprep.subr.bf16.mxu0 %v3527
      %4672 = vmatpush1.bf16.msra.mxu0 %v3526
      %4673 = vmatprep.subr.bf16.mxu0 %v3530
      %4674 = vmatpush1.bf16.msra.mxu0 %v3529
      %4675 = vmatprep.subr.bf16.mxu0 %v3533
      %4676 = vmatpush1.bf16.msra.mxu0 %v3532
      %4677 = vmatprep.subr.bf16.mxu0 %v3536
      %4678 = vmatpush1.bf16.msra.mxu0 %v3535
      %4679 = vmatprep.subr.bf16.mxu0 %v3539
      %4680 = vmatpush1.bf16.msra.mxu0 %v3538
      %4681 = vmatprep.subr.bf16.mxu0 %v3542
      %4682 = vmatpush1.bf16.msra.mxu0 %v3541
      %4683 = vmatprep.subr.bf16.mxu0 %v3545
      %4684 = vmatpush1.bf16.msra.mxu0 %v3544
      %4685 = vmatprep.mubr.bf16.mxu0 %v1159
      %4686 = vmatmul.mubr.bf16.gmra.mrb[0].mxu0 %v1145
      %v4687 = vpop.f32.mrb[0].mxu0
      %v4688 = vadd.f32 %v4647, %v4687
      %v4689 = vpop.f32.mrb[0].mxu0
      %v4690 = vadd.f32 %v4649, %v4689
      %v4691 = vpop.f32.mrb[0].mxu0
      %v4692 = vpop.f32.mrb[0].mxu0
      %4693 = vdwg.mxu0
      %4694 = vmatprep.subr.bf16.mxu0 %v3548
      %4695 = vmatpush1.bf16.msra.mxu0 %v3547
      %4696 = vmatprep.subr.bf16.mxu0 %v3551
      %4697 = vmatpush1.bf16.msra.mxu0 %v3550
      %4698 = vmatprep.subr.bf16.mxu0 %v3554
      %4699 = vmatpush1.bf16.msra.mxu0 %v3553
      %4700 = vmatprep.subr.bf16.mxu0 %v3557
      %4701 = vmatpush1.bf16.msra.mxu0 %v3556
      %4702 = vmatprep.subr.bf16.mxu0 %v3560
      %4703 = vmatpush1.bf16.msra.mxu0 %v3559
      %4704 = vmatprep.subr.bf16.mxu0 %v3563
      %4705 = vmatpush1.bf16.msra.mxu0 %v3562
      %4706 = vmatprep.subr.bf16.mxu0 %v3566
      %4707 = vmatpush1.bf16.msra.mxu0 %v3565
      %4708 = vmatprep.subr.bf16.mxu0 %v3569
      %4709 = vmatpush1.bf16.msra.mxu0 %v3568
      %4710 = vmatprep.subr.bf16.mxu0 %v3572
      %4711 = vmatpush1.bf16.msra.mxu0 %v3571
      %4712 = vmatprep.subr.bf16.mxu0 %v3575
      %4713 = vmatpush1.bf16.msra.mxu0 %v3574
      %4714 = vmatprep.subr.bf16.mxu0 %v3578
      %4715 = vmatpush1.bf16.msra.mxu0 %v3577
      %4716 = vmatprep.subr.bf16.mxu0 %v3581
      %4717 = vmatpush1.bf16.msra.mxu0 %v3580
      %4718 = vmatprep.subr.bf16.mxu0 %v3584
      %4719 = vmatpush1.bf16.msra.mxu0 %v3583
      %4720 = vmatprep.subr.bf16.mxu0 %v3587
      %4721 = vmatpush1.bf16.msra.mxu0 %v3586
      %4722 = vmatprep.subr.bf16.mxu0 %v3590
      %4723 = vmatpush1.bf16.msra.mxu0 %v3589
      %4724 = vmatprep.subr.bf16.mxu0 %v3593
      %4725 = vmatpush1.bf16.msra.mxu0 %v3592
      %4726 = vmatprep.mubr.bf16.mxu0 %v1163
      %4727 = vmatmul.mubr.bf16.gmra.mrb[0].mxu0 %v1161
      %v4728 = vpop.f32.mrb[0].mxu0
      %v4729 = vadd.f32 %v4688, %v4728
      %v4730 = vpop.f32.mrb[0].mxu0
      %v4731 = vadd.f32 %v4690, %v4730
      %v4732 = vpop.f32.mrb[0].mxu0
      %v4733 = vpop.f32.mrb[0].mxu0
      %4734 = vdwg.mxu0
      %4735 = vmatprep.subr.bf16.mxu0 %v3596
      %4736 = vmatpush1.bf16.msra.mxu0 %v3595
      %4737 = vmatprep.subr.bf16.mxu0 %v3599
      %4738 = vmatpush1.bf16.msra.mxu0 %v3598
      %4739 = vmatprep.subr.bf16.mxu0 %v3602
      %4740 = vmatpush1.bf16.msra.mxu0 %v3601
      %4741 = vmatprep.subr.bf16.mxu0 %v3605
      %4742 = vmatpush1.bf16.msra.mxu0 %v3604
      %4743 = vmatprep.subr.bf16.mxu0 %v3608
      %4744 = vmatpush1.bf16.msra.mxu0 %v3607
      %4745 = vmatprep.subr.bf16.mxu0 %v3611
      %4746 = vmatpush1.bf16.msra.mxu0 %v3610
      %4747 = vmatprep.subr.bf16.mxu0 %v3614
      %4748 = vmatpush1.bf16.msra.mxu0 %v3613
      %4749 = vmatprep.subr.bf16.mxu0 %v3617
      %4750 = vmatpush1.bf16.msra.mxu0 %v3616
      %4751 = vmatprep.subr.bf16.mxu0 %v3620
      %4752 = vmatpush1.bf16.msra.mxu0 %v3619
      %4753 = vmatprep.subr.bf16.mxu0 %v3623
      %4754 = vmatpush1.bf16.msra.mxu0 %v3622
      %4755 = vmatprep.subr.bf16.mxu0 %v3626
      %4756 = vmatpush1.bf16.msra.mxu0 %v3625
      %4757 = vmatprep.subr.bf16.mxu0 %v3629
      %4758 = vmatpush1.bf16.msra.mxu0 %v3628
      %4759 = vmatprep.subr.bf16.mxu0 %v3632
      %4760 = vmatpush1.bf16.msra.mxu0 %v3631
      %4761 = vmatprep.subr.bf16.mxu0 %v3635
      %4762 = vmatpush1.bf16.msra.mxu0 %v3634
      %4763 = vmatprep.subr.bf16.mxu0 %v3638
      %4764 = vmatpush1.bf16.msra.mxu0 %v3637
      %4765 = vmatprep.subr.bf16.mxu0 %v3641
      %4766 = vmatpush1.bf16.msra.mxu0 %v3640
      %4767 = vmatprep.mubr.bf16.mxu0 %v1201
      %4768 = vmatmul.mubr.bf16.gmra.mrb[0].mxu0 %v1187
      %v4769 = vpop.f32.mrb[0].mxu0
      %v4770 = vadd.f32 %v4729, %v4769
      %v4771 = vpop.f32.mrb[0].mxu0
      %v4772 = vadd.f32 %v4731, %v4771
      %v4773 = vpop.f32.mrb[0].mxu0
      %v4774 = vpop.f32.mrb[0].mxu0
      %4775 = vdwg.mxu0
      %4776 = vmatprep.subr.bf16.mxu0 %v3644
      %4777 = vmatpush1.bf16.msra.mxu0 %v3643
      %4778 = vmatprep.subr.bf16.mxu0 %v3647
      %4779 = vmatpush1.bf16.msra.mxu0 %v3646
      %4780 = vmatprep.subr.bf16.mxu0 %v3650
      %4781 = vmatpush1.bf16.msra.mxu0 %v3649
      %4782 = vmatprep.subr.bf16.mxu0 %v3653
      %4783 = vmatpush1.bf16.msra.mxu0 %v3652
      %4784 = vmatprep.subr.bf16.mxu0 %v3656
      %4785 = vmatpush1.bf16.msra.mxu0 %v3655
      %4786 = vmatprep.subr.bf16.mxu0 %v3659
      %4787 = vmatpush1.bf16.msra.mxu0 %v3658
      %4788 = vmatprep.subr.bf16.mxu0 %v3662
      %4789 = vmatpush1.bf16.msra.mxu0 %v3661
      %4790 = vmatprep.subr.bf16.mxu0 %v3665
      %4791 = vmatpush1.bf16.msra.mxu0 %v3664
      %4792 = vmatprep.subr.bf16.mxu0 %v3668
      %4793 = vmatpush1.bf16.msra.mxu0 %v3667
      %4794 = vmatprep.subr.bf16.mxu0 %v3671
      %4795 = vmatpush1.bf16.msra.mxu0 %v3670
      %4796 = vmatprep.subr.bf16.mxu0 %v3674
      %4797 = vmatpush1.bf16.msra.mxu0 %v3673
      %4798 = vmatprep.subr.bf16.mxu0 %v3677
      %4799 = vmatpush1.bf16.msra.mxu0 %v3676
      %4800 = vmatprep.subr.bf16.mxu0 %v3680
      %4801 = vmatpush1.bf16.msra.mxu0 %v3679
      %4802 = vmatprep.subr.bf16.mxu0 %v3683
      %4803 = vmatpush1.bf16.msra.mxu0 %v3682
      %4804 = vmatprep.subr.bf16.mxu0 %v3686
      %4805 = vmatpush1.bf16.msra.mxu0 %v3685
      %4806 = vmatprep.subr.bf16.mxu0 %v3689
      %4807 = vmatpush1.bf16.msra.mxu0 %v3688
      %4808 = vmatprep.mubr.bf16.mxu0 %v1211
      %4809 = vmatmul.mubr.bf16.gmra.mrb[0].mxu0 %v1209
      %v4810 = vpop.f32.mrb[0].mxu0
      %v4811 = vadd.f32 %v4770, %v4810
      %v4812 = vpop.f32.mrb[0].mxu0
      %v4813 = vadd.f32 %v4772, %v4812
      %v4814 = vpop.f32.mrb[0].mxu0
      %v4815 = vpop.f32.mrb[0].mxu0
      %4816 = vdwg.mxu0
      %4817 = vmatprep.subr.bf16.mxu0 %v3692
      %4818 = vmatpush1.bf16.msra.mxu0 %v3691
      %4819 = vmatprep.subr.bf16.mxu0 %v3695
      %4820 = vmatpush1.bf16.msra.mxu0 %v3694
      %4821 = vmatprep.subr.bf16.mxu0 %v3698
      %4822 = vmatpush1.bf16.msra.mxu0 %v3697
      %4823 = vmatprep.subr.bf16.mxu0 %v3701
      %4824 = vmatpush1.bf16.msra.mxu0 %v3700
      %4825 = vmatprep.subr.bf16.mxu0 %v3704
      %4826 = vmatpush1.bf16.msra.mxu0 %v3703
      %4827 = vmatprep.subr.bf16.mxu0 %v3707
      %4828 = vmatpush1.bf16.msra.mxu0 %v3706
      %4829 = vmatprep.subr.bf16.mxu0 %v3710
      %4830 = vmatpush1.bf16.msra.mxu0 %v3709
      %4831 = vmatprep.subr.bf16.mxu0 %v3713
      %4832 = vmatpush1.bf16.msra.mxu0 %v3712
      %4833 = vmatprep.subr.bf16.mxu0 %v3716
      %4834 = vmatpush1.bf16.msra.mxu0 %v3715
      %4835 = vmatprep.subr.bf16.mxu0 %v3719
      %4836 = vmatpush1.bf16.msra.mxu0 %v3718
      %4837 = vmatprep.subr.bf16.mxu0 %v3722
      %4838 = vmatpush1.bf16.msra.mxu0 %v3721
      %4839 = vmatprep.subr.bf16.mxu0 %v3725
      %4840 = vmatpush1.bf16.msra.mxu0 %v3724
      %4841 = vmatprep.subr.bf16.mxu0 %v3728
      %4842 = vmatpush1.bf16.msra.mxu0 %v3727
      %4843 = vmatprep.subr.bf16.mxu0 %v3731
      %4844 = vmatpush1.bf16.msra.mxu0 %v3730
      %4845 = vmatprep.subr.bf16.mxu0 %v3734
      %4846 = vmatpush1.bf16.msra.mxu0 %v3733
      %4847 = vmatprep.subr.bf16.mxu0 %v3737
      %4848 = vmatpush1.bf16.msra.mxu0 %v3736
      %4849 = vmatprep.mubr.bf16.mxu0 %v1208
      %4850 = vmatmul.mubr.bf16.gmra.mrb[0].mxu0 %v1194
      %v4851 = vpop.f32.mrb[0].mxu0
      %v4852 = vadd.f32 %v4811, %v4851
      %v4853 = vpop.f32.mrb[0].mxu0
      %v4854 = vadd.f32 %v4813, %v4853
      %v4855 = vpop.f32.mrb[0].mxu0
      %v4856 = vpop.f32.mrb[0].mxu0
      %4857 = vdwg.mxu0
      %4858 = vmatprep.subr.bf16.mxu0 %v3740
      %4859 = vmatpush1.bf16.msra.mxu0 %v3739
      %4860 = vmatprep.subr.bf16.mxu0 %v3743
      %4861 = vmatpush1.bf16.msra.mxu0 %v3742
      %4862 = vmatprep.subr.bf16.mxu0 %v3746
      %4863 = vmatpush1.bf16.msra.mxu0 %v3745
      %4864 = vmatprep.subr.bf16.mxu0 %v3749
      %4865 = vmatpush1.bf16.msra.mxu0 %v3748
      %4866 = vmatprep.subr.bf16.mxu0 %v3752
      %4867 = vmatpush1.bf16.msra.mxu0 %v3751
      %4868 = vmatprep.subr.bf16.mxu0 %v3755
      %4869 = vmatpush1.bf16.msra.mxu0 %v3754
      %4870 = vmatprep.subr.bf16.mxu0 %v3758
      %4871 = vmatpush1.bf16.msra.mxu0 %v3757
      %4872 = vmatprep.subr.bf16.mxu0 %v3761
      %4873 = vmatpush1.bf16.msra.mxu0 %v3760
      %4874 = vmatprep.subr.bf16.mxu0 %v3764
      %4875 = vmatpush1.bf16.msra.mxu0 %v3763
      %4876 = vmatprep.subr.bf16.mxu0 %v3767
      %4877 = vmatpush1.bf16.msra.mxu0 %v3766
      %4878 = vmatprep.subr.bf16.mxu0 %v3770
      %4879 = vmatpush1.bf16.msra.mxu0 %v3769
      %4880 = vmatprep.subr.bf16.mxu0 %v3773
      %4881 = vmatpush1.bf16.msra.mxu0 %v3772
      %4882 = vmatprep.subr.bf16.mxu0 %v3776
      %4883 = vmatpush1.bf16.msra.mxu0 %v3775
      %4884 = vmatprep.subr.bf16.mxu0 %v3779
      %4885 = vmatpush1.bf16.msra.mxu0 %v3778
      %4886 = vmatprep.subr.bf16.mxu0 %v3782
      %4887 = vmatpush1.bf16.msra.mxu0 %v3781
      %4888 = vmatprep.subr.bf16.mxu0 %v3785
      %4889 = vmatpush1.bf16.msra.mxu0 %v3784
      %4890 = vmatprep.mubr.bf16.mxu0 %v1212
      %4891 = vmatmul.mubr.bf16.gmra.mrb[0].mxu0 %v1210
      %v4892 = vpop.f32.mrb[0].mxu0
      %v4893 = vadd.f32 %v4852, %v4892
      %v4894 = vpop.f32.mrb[0].mxu0
      %v4895 = vadd.f32 %v4854, %v4894
      %v4896 = vpop.f32.mrb[0].mxu0
      %v4897 = vpop.f32.mrb[0].mxu0
      %4898 = vdwg.mxu0
      %4899 = vmatprep.subr.bf16.mxu0 %v3788
      %4900 = vmatpush1.bf16.msra.mxu0 %v3787
      %4901 = vmatprep.subr.bf16.mxu0 %v3791
      %4902 = vmatpush1.bf16.msra.mxu0 %v3790
      %4903 = vmatprep.subr.bf16.mxu0 %v3794
      %4904 = vmatpush1.bf16.msra.mxu0 %v3793
      %4905 = vmatprep.subr.bf16.mxu0 %v3797
      %4906 = vmatpush1.bf16.msra.mxu0 %v3796
      %4907 = vmatprep.subr.bf16.mxu0 0
      %4908 = vmatpush1.bf16.msra.mxu0 0
      %4909 = vmatprep.subr.bf16.mxu0 0
      %4910 = vmatpush1.bf16.msra.mxu0 0
      %4911 = vmatprep.subr.bf16.mxu0 0
      %4912 = vmatpush1.bf16.msra.mxu0 0
      %4913 = vmatprep.subr.bf16.mxu0 0
      %4914 = vmatpush1.bf16.msra.mxu0 0
      %4915 = vmatprep.subr.bf16.mxu0 0
      %4916 = vmatpush1.bf16.msra.mxu0 0
      %4917 = vmatprep.subr.bf16.mxu0 0
      %4918 = vmatpush1.bf16.msra.mxu0 0
      %4919 = vmatprep.subr.bf16.mxu0 0
      %4920 = vmatpush1.bf16.msra.mxu0 0
      %4921 = vmatprep.subr.bf16.mxu0 0
      %4922 = vmatpush1.bf16.msra.mxu0 0
      %4923 = vmatprep.subr.bf16.mxu0 0
      %4924 = vmatpush1.bf16.msra.mxu0 0
      %4925 = vmatprep.subr.bf16.mxu0 0
      %4926 = vmatpush1.bf16.msra.mxu0 0
      %4927 = vmatprep.subr.bf16.mxu0 0
      %4928 = vmatpush1.bf16.msra.mxu0 0
      %4929 = vmatprep.subr.bf16.mxu0 0
      %4930 = vmatpush1.bf16.msra.mxu0 0
      %4931 = vmatprep.mubr.bf16.mxu0 0
      %4932 = vmatmul.mubr.bf16.gmra.mrb[0].mxu0 %v4405
      %v4933 = vpop.f32.mrb[0].mxu0
      %v4934 = vadd.f32 %v4893, %v4933
      %v4935 = vpop.f32.mrb[0].mxu0
      %v4936 = vadd.f32 %v4895, %v4935
      %v4937 = vpop.f32.mrb[0].mxu0
      %v4938 = vpop.f32.mrb[0].mxu0
      %4939 = vdwg.mxu0
      %4940 = vmatprep.subr.bf16.mxu0 0
      %4941 = vmatpush1.bf16.msra.mxu0 %v3213
      %4942 = vmatprep.subr.bf16.mxu0 0
      %4943 = vmatpush1.bf16.msra.mxu0 %v3216
      %4944 = vmatprep.subr.bf16.mxu0 0
      %4945 = vmatpush1.bf16.msra.mxu0 %v3219
      %4946 = vmatprep.subr.bf16.mxu0 0
      %4947 = vmatpush1.bf16.msra.mxu0 %v3222
      %4948 = vmatprep.subr.bf16.mxu0 0
      %4949 = vmatpush1.bf16.msra.mxu0 %v3225
      %4950 = vmatprep.subr.bf16.mxu0 0
      %4951 = vmatpush1.bf16.msra.mxu0 %v3228
      %4952 = vmatprep.subr.bf16.mxu0 0
      %4953 = vmatpush1.bf16.msra.mxu0 %v3231
      %4954 = vmatprep.subr.bf16.mxu0 0
      %4955 = vmatpush1.bf16.msra.mxu0 %v3234
      %4956 = vmatprep.subr.bf16.mxu0 0
      %4957 = vmatpush1.bf16.msra.mxu0 %v3237
      %4958 = vmatprep.subr.bf16.mxu0 0
      %4959 = vmatpush1.bf16.msra.mxu0 %v3240
      %4960 = vmatprep.subr.bf16.mxu0 0
      %4961 = vmatpush1.bf16.msra.mxu0 %v3243
      %4962 = vmatprep.subr.bf16.mxu0 0
      %4963 = vmatpush1.bf16.msra.mxu0 %v3246
      %4964 = vmatprep.subr.bf16.mxu0 0
      %4965 = vmatpush1.bf16.msra.mxu0 %v3249
      %4966 = vmatprep.subr.bf16.mxu0 0
      %4967 = vmatpush1.bf16.msra.mxu0 %v3252
      %4968 = vmatprep.subr.bf16.mxu0 0
      %4969 = vmatpush1.bf16.msra.mxu0 %v3255
      %4970 = vmatprep.subr.bf16.mxu0 0
      %4971 = vmatpush1.bf16.msra.mxu0 %v3258
      %4972 = vmatprep.mubr.bf16.mxu0 %v1103
      %4973 = vmatmul.mubr.bf16.gmra.mrb[0].mxu0 %v1089
      %v4974 = vpop.f32.mrb[0].mxu0
      %v4975 = vadd.f32 %v4399, %v4974
      %v4976 = vpop.f32.mrb[0].mxu0
      %v4977 = vpop.f32.mrb[0].mxu0
      %v4978 = vpop.f32.mrb[0].mxu0
      %4979 = vdwg.mxu0
      %4980 = vmatprep.subr.bf16.mxu0 0
      %4981 = vmatpush1.bf16.msra.mxu0 %v3261
      %4982 = vmatprep.subr.bf16.mxu0 0
      %4983 = vmatpush1.bf16.msra.mxu0 %v3264
      %4984 = vmatprep.subr.bf16.mxu0 0
      %4985 = vmatpush1.bf16.msra.mxu0 %v3267
      %4986 = vmatprep.subr.bf16.mxu0 0
      %4987 = vmatpush1.bf16.msra.mxu0 %v3270
      %4988 = vmatprep.subr.bf16.mxu0 0
      %4989 = vmatpush1.bf16.msra.mxu0 %v3273
      %4990 = vmatprep.subr.bf16.mxu0 0
      %4991 = vmatpush1.bf16.msra.mxu0 %v3276
      %4992 = vmatprep.subr.bf16.mxu0 0
      %4993 = vmatpush1.bf16.msra.mxu0 %v3279
      %4994 = vmatprep.subr.bf16.mxu0 0
      %4995 = vmatpush1.bf16.msra.mxu0 %v3282
      %4996 = vmatprep.subr.bf16.mxu0 0
      %4997 = vmatpush1.bf16.msra.mxu0 %v3285
      %4998 = vmatprep.subr.bf16.mxu0 0
      %4999 = vmatpush1.bf16.msra.mxu0 %v3288
      %5000 = vmatprep.subr.bf16.mxu0 0
      %5001 = vmatpush1.bf16.msra.mxu0 %v3291
      %5002 = vmatprep.subr.bf16.mxu0 0
      %5003 = vmatpush1.bf16.msra.mxu0 %v3294
      %5004 = vmatprep.subr.bf16.mxu0 0
      %5005 = vmatpush1.bf16.msra.mxu0 %v3297
      %5006 = vmatprep.subr.bf16.mxu0 0
      %5007 = vmatpush1.bf16.msra.mxu0 %v3300
      %5008 = vmatprep.subr.bf16.mxu0 0
      %5009 = vmatpush1.bf16.msra.mxu0 %v3303
      %5010 = vmatprep.subr.bf16.mxu0 0
      %5011 = vmatpush1.bf16.msra.mxu0 %v3306
      %5012 = vmatprep.mubr.bf16.mxu0 %v1113
      %5013 = vmatmul.mubr.bf16.gmra.mrb[0].mxu0 %v1111
      %v5014 = vpop.f32.mrb[0].mxu0
      %v5015 = vadd.f32 %v4975, %v5014
      %v5016 = vpop.f32.mrb[0].mxu0
      %v5017 = vpop.f32.mrb[0].mxu0
      %v5018 = vpop.f32.mrb[0].mxu0
      %5019 = vdwg.mxu0
      %5020 = vmatprep.subr.bf16.mxu0 0
      %5021 = vmatpush1.bf16.msra.mxu0 %v3309
      %5022 = vmatprep.subr.bf16.mxu0 0
      %5023 = vmatpush1.bf16.msra.mxu0 %v3312
      %5024 = vmatprep.subr.bf16.mxu0 0
      %5025 = vmatpush1.bf16.msra.mxu0 %v3315
      %5026 = vmatprep.subr.bf16.mxu0 0
      %5027 = vmatpush1.bf16.msra.mxu0 %v3318
      %5028 = vmatprep.subr.bf16.mxu0 0
      %5029 = vmatpush1.bf16.msra.mxu0 %v3321
      %5030 = vmatprep.subr.bf16.mxu0 0
      %5031 = vmatpush1.bf16.msra.mxu0 %v3324
      %5032 = vmatprep.subr.bf16.mxu0 0
      %5033 = vmatpush1.bf16.msra.mxu0 %v3327
      %5034 = vmatprep.subr.bf16.mxu0 0
      %5035 = vmatpush1.bf16.msra.mxu0 %v3330
      %5036 = vmatprep.subr.bf16.mxu0 0
      %5037 = vmatpush1.bf16.msra.mxu0 %v3333
      %5038 = vmatprep.subr.bf16.mxu0 0
      %5039 = vmatpush1.bf16.msra.mxu0 %v3336
      %5040 = vmatprep.subr.bf16.mxu0 0
      %5041 = vmatpush1.bf16.msra.mxu0 %v3339
      %5042 = vmatprep.subr.bf16.mxu0 0
      %5043 = vmatpush1.bf16.msra.mxu0 %v3342
      %5044 = vmatprep.subr.bf16.mxu0 0
      %5045 = vmatpush1.bf16.msra.mxu0 %v3345
      %5046 = vmatprep.subr.bf16.mxu0 0
      %5047 = vmatpush1.bf16.msra.mxu0 %v3348
      %5048 = vmatprep.subr.bf16.mxu0 0
      %5049 = vmatpush1.bf16.msra.mxu0 %v3351
      %5050 = vmatprep.subr.bf16.mxu0 0
      %5051 = vmatpush1.bf16.msra.mxu0 %v3354
      %5052 = vmatprep.mubr.bf16.mxu0 %v1110
      %5053 = vmatmul.mubr.bf16.gmra.mrb[0].mxu0 %v1096
      %v5054 = vpop.f32.mrb[0].mxu0
      %v5055 = vadd.f32 %v5015, %v5054
      %v5056 = vpop.f32.mrb[0].mxu0
      %v5057 = vpop.f32.mrb[0].mxu0
      %v5058 = vpop.f32.mrb[0].mxu0
      %5059 = vdwg.mxu0
      %5060 = vmatprep.subr.bf16.mxu0 0
      %5061 = vmatpush1.bf16.msra.mxu0 %v3357
      %5062 = vmatprep.subr.bf16.mxu0 0
      %5063 = vmatpush1.bf16.msra.mxu0 %v3360
      %5064 = vmatprep.subr.bf16.mxu0 0
      %5065 = vmatpush1.bf16.msra.mxu0 %v3363
      %5066 = vmatprep.subr.bf16.mxu0 0
      %5067 = vmatpush1.bf16.msra.mxu0 %v3366
      %5068 = vmatprep.subr.bf16.mxu0 0
      %5069 = vmatpush1.bf16.msra.mxu0 %v3369
      %5070 = vmatprep.subr.bf16.mxu0 0
      %5071 = vmatpush1.bf16.msra.mxu0 %v3372
      %5072 = vmatprep.subr.bf16.mxu0 0
      %5073 = vmatpush1.bf16.msra.mxu0 %v3375
      %5074 = vmatprep.subr.bf16.mxu0 0
      %5075 = vmatpush1.bf16.msra.mxu0 %v3378
      %5076 = vmatprep.subr.bf16.mxu0 0
      %5077 = vmatpush1.bf16.msra.mxu0 %v3381
      %5078 = vmatprep.subr.bf16.mxu0 0
      %5079 = vmatpush1.bf16.msra.mxu0 %v3384
      %5080 = vmatprep.subr.bf16.mxu0 0
      %5081 = vmatpush1.bf16.msra.mxu0 %v3387
      %5082 = vmatprep.subr.bf16.mxu0 0
      %5083 = vmatpush1.bf16.msra.mxu0 %v3390
      %5084 = vmatprep.subr.bf16.mxu0 0
      %5085 = vmatpush1.bf16.msra.mxu0 %v3393
      %5086 = vmatprep.subr.bf16.mxu0 0
      %5087 = vmatpush1.bf16.msra.mxu0 %v3396
      %5088 = vmatprep.subr.bf16.mxu0 0
      %5089 = vmatpush1.bf16.msra.mxu0 %v3399
      %5090 = vmatprep.subr.bf16.mxu0 0
      %5091 = vmatpush1.bf16.msra.mxu0 %v3402
      %5092 = vmatprep.mubr.bf16.mxu0 %v1114
      %5093 = vmatmul.mubr.bf16.gmra.mrb[0].mxu0 %v1112
      %v5094 = vpop.f32.mrb[0].mxu0
      %v5095 = vadd.f32 %v5055, %v5094
      %v5096 = vpop.f32.mrb[0].mxu0
      %v5097 = vpop.f32.mrb[0].mxu0
      %v5098 = vpop.f32.mrb[0].mxu0
      %5099 = vdwg.mxu0
      %5100 = vmatprep.subr.bf16.mxu0 0
      %5101 = vmatpush1.bf16.msra.mxu0 %v3405
      %5102 = vmatprep.subr.bf16.mxu0 0
      %5103 = vmatpush1.bf16.msra.mxu0 %v3408
      %5104 = vmatprep.subr.bf16.mxu0 0
      %5105 = vmatpush1.bf16.msra.mxu0 %v3411
      %5106 = vmatprep.subr.bf16.mxu0 0
      %5107 = vmatpush1.bf16.msra.mxu0 %v3414
      %5108 = vmatprep.subr.bf16.mxu0 0
      %5109 = vmatpush1.bf16.msra.mxu0 %v3417
      %5110 = vmatprep.subr.bf16.mxu0 0
      %5111 = vmatpush1.bf16.msra.mxu0 %v3420
      %5112 = vmatprep.subr.bf16.mxu0 0
      %5113 = vmatpush1.bf16.msra.mxu0 %v3423
      %5114 = vmatprep.subr.bf16.mxu0 0
      %5115 = vmatpush1.bf16.msra.mxu0 %v3426
      %5116 = vmatprep.subr.bf16.mxu0 0
      %5117 = vmatpush1.bf16.msra.mxu0 %v3429
      %5118 = vmatprep.subr.bf16.mxu0 0
      %5119 = vmatpush1.bf16.msra.mxu0 %v3432
      %5120 = vmatprep.subr.bf16.mxu0 0
      %5121 = vmatpush1.bf16.msra.mxu0 %v3435
      %5122 = vmatprep.subr.bf16.mxu0 0
      %5123 = vmatpush1.bf16.msra.mxu0 %v3438
      %5124 = vmatprep.subr.bf16.mxu0 0
      %5125 = vmatpush1.bf16.msra.mxu0 %v3441
      %5126 = vmatprep.subr.bf16.mxu0 0
      %5127 = vmatpush1.bf16.msra.mxu0 %v3444
      %5128 = vmatprep.subr.bf16.mxu0 0
      %5129 = vmatpush1.bf16.msra.mxu0 %v3447
      %5130 = vmatprep.subr.bf16.mxu0 0
      %5131 = vmatpush1.bf16.msra.mxu0 %v3450
      %5132 = vmatprep.mubr.bf16.mxu0 %v1152
      %5133 = vmatmul.mubr.bf16.gmra.mrb[0].mxu0 %v1138
      %v5134 = vpop.f32.mrb[0].mxu0
      %v5135 = vadd.f32 %v5095, %v5134
      %v5136 = vpop.f32.mrb[0].mxu0
      %v5137 = vpop.f32.mrb[0].mxu0
      %v5138 = vpop.f32.mrb[0].mxu0
      %5139 = vdwg.mxu0
      %5140 = vmatprep.subr.bf16.mxu0 0
      %5141 = vmatpush1.bf16.msra.mxu0 %v3453
      %5142 = vmatprep.subr.bf16.mxu0 0
      %5143 = vmatpush1.bf16.msra.mxu0 %v3456
      %5144 = vmatprep.subr.bf16.mxu0 0
      %5145 = vmatpush1.bf16.msra.mxu0 %v3459
      %5146 = vmatprep.subr.bf16.mxu0 0
      %5147 = vmatpush1.bf16.msra.mxu0 %v3462
      %5148 = vmatprep.subr.bf16.mxu0 0
      %5149 = vmatpush1.bf16.msra.mxu0 %v3465
      %5150 = vmatprep.subr.bf16.mxu0 0
      %5151 = vmatpush1.bf16.msra.mxu0 %v3468
      %5152 = vmatprep.subr.bf16.mxu0 0
      %5153 = vmatpush1.bf16.msra.mxu0 %v3471
      %5154 = vmatprep.subr.bf16.mxu0 0
      %5155 = vmatpush1.bf16.msra.mxu0 %v3474
      %5156 = vmatprep.subr.bf16.mxu0 0
      %5157 = vmatpush1.bf16.msra.mxu0 %v3477
      %5158 = vmatprep.subr.bf16.mxu0 0
      %5159 = vmatpush1.bf16.msra.mxu0 %v3480
      %5160 = vmatprep.subr.bf16.mxu0 0
      %5161 = vmatpush1.bf16.msra.mxu0 %v3483
      %5162 = vmatprep.subr.bf16.mxu0 0
      %5163 = vmatpush1.bf16.msra.mxu0 %v3486
      %5164 = vmatprep.subr.bf16.mxu0 0
      %5165 = vmatpush1.bf16.msra.mxu0 %v3489
      %5166 = vmatprep.subr.bf16.mxu0 0
      %5167 = vmatpush1.bf16.msra.mxu0 %v3492
      %5168 = vmatprep.subr.bf16.mxu0 0
      %5169 = vmatpush1.bf16.msra.mxu0 %v3495
      %5170 = vmatprep.subr.bf16.mxu0 0
      %5171 = vmatpush1.bf16.msra.mxu0 %v3498
      %5172 = vmatprep.mubr.bf16.mxu0 %v1162
      %5173 = vmatmul.mubr.bf16.gmra.mrb[0].mxu0 %v1160
      %v5174 = vpop.f32.mrb[0].mxu0
      %v5175 = vadd.f32 %v5135, %v5174
      %v5176 = vpop.f32.mrb[0].mxu0
      %v5177 = vpop.f32.mrb[0].mxu0
      %v5178 = vpop.f32.mrb[0].mxu0
      %5179 = vdwg.mxu0
      %5180 = vmatprep.subr.bf16.mxu0 0
      %5181 = vmatpush1.bf16.msra.mxu0 %v3501
      %5182 = vmatprep.subr.bf16.mxu0 0
      %5183 = vmatpush1.bf16.msra.mxu0 %v3504
      %5184 = vmatprep.subr.bf16.mxu0 0
      %5185 = vmatpush1.bf16.msra.mxu0 %v3507
      %5186 = vmatprep.subr.bf16.mxu0 0
      %5187 = vmatpush1.bf16.msra.mxu0 %v3510
      %5188 = vmatprep.subr.bf16.mxu0 0
      %5189 = vmatpush1.bf16.msra.mxu0 %v3513
      %5190 = vmatprep.subr.bf16.mxu0 0
      %5191 = vmatpush1.bf16.msra.mxu0 %v3516
      %5192 = vmatprep.subr.bf16.mxu0 0
      %5193 = vmatpush1.bf16.msra.mxu0 %v3519
      %5194 = vmatprep.subr.bf16.mxu0 0
      %5195 = vmatpush1.bf16.msra.mxu0 %v3522
      %5196 = vmatprep.subr.bf16.mxu0 0
      %5197 = vmatpush1.bf16.msra.mxu0 %v3525
      %5198 = vmatprep.subr.bf16.mxu0 0
      %5199 = vmatpush1.bf16.msra.mxu0 %v3528
      %5200 = vmatprep.subr.bf16.mxu0 0
      %5201 = vmatpush1.bf16.msra.mxu0 %v3531
      %5202 = vmatprep.subr.bf16.mxu0 0
      %5203 = vmatpush1.bf16.msra.mxu0 %v3534
      %5204 = vmatprep.subr.bf16.mxu0 0
      %5205 = vmatpush1.bf16.msra.mxu0 %v3537
      %5206 = vmatprep.subr.bf16.mxu0 0
      %5207 = vmatpush1.bf16.msra.mxu0 %v3540
      %5208 = vmatprep.subr.bf16.mxu0 0
      %5209 = vmatpush1.bf16.msra.mxu0 %v3543
      %5210 = vmatprep.subr.bf16.mxu0 0
      %5211 = vmatpush1.bf16.msra.mxu0 %v3546
      %5212 = vmatprep.mubr.bf16.mxu0 %v1159
      %5213 = vmatmul.mubr.bf16.gmra.mrb[0].mxu0 %v1145
      %v5214 = vpop.f32.mrb[0].mxu0
      %v5215 = vadd.f32 %v5175, %v5214
      %v5216 = vpop.f32.mrb[0].mxu0
      %v5217 = vpop.f32.mrb[0].mxu0
      %v5218 = vpop.f32.mrb[0].mxu0
      %5219 = vdwg.mxu0
      %5220 = vmatprep.subr.bf16.mxu0 0
      %5221 = vmatpush1.bf16.msra.mxu0 %v3549
      %5222 = vmatprep.subr.bf16.mxu0 0
      %5223 = vmatpush1.bf16.msra.mxu0 %v3552
      %5224 = vmatprep.subr.bf16.mxu0 0
      %5225 = vmatpush1.bf16.msra.mxu0 %v3555
      %5226 = vmatprep.subr.bf16.mxu0 0
      %5227 = vmatpush1.bf16.msra.mxu0 %v3558
      %5228 = vmatprep.subr.bf16.mxu0 0
      %5229 = vmatpush1.bf16.msra.mxu0 %v3561
      %5230 = vmatprep.subr.bf16.mxu0 0
      %5231 = vmatpush1.bf16.msra.mxu0 %v3564
      %5232 = vmatprep.subr.bf16.mxu0 0
      %5233 = vmatpush1.bf16.msra.mxu0 %v3567
      %5234 = vmatprep.subr.bf16.mxu0 0
      %5235 = vmatpush1.bf16.msra.mxu0 %v3570
      %5236 = vmatprep.subr.bf16.mxu0 0
      %5237 = vmatpush1.bf16.msra.mxu0 %v3573
      %5238 = vmatprep.subr.bf16.mxu0 0
      %5239 = vmatpush1.bf16.msra.mxu0 %v3576
      %5240 = vmatprep.subr.bf16.mxu0 0
      %5241 = vmatpush1.bf16.msra.mxu0 %v3579
      %5242 = vmatprep.subr.bf16.mxu0 0
      %5243 = vmatpush1.bf16.msra.mxu0 %v3582
      %5244 = vmatprep.subr.bf16.mxu0 0
      %5245 = vmatpush1.bf16.msra.mxu0 %v3585
      %5246 = vmatprep.subr.bf16.mxu0 0
      %5247 = vmatpush1.bf16.msra.mxu0 %v3588
      %5248 = vmatprep.subr.bf16.mxu0 0
      %5249 = vmatpush1.bf16.msra.mxu0 %v3591
      %5250 = vmatprep.subr.bf16.mxu0 0
      %5251 = vmatpush1.bf16.msra.mxu0 %v3594
      %5252 = vmatprep.mubr.bf16.mxu0 %v1163
      %5253 = vmatmul.mubr.bf16.gmra.mrb[0].mxu0 %v1161
      %v5254 = vpop.f32.mrb[0].mxu0
      %v5255 = vadd.f32 %v5215, %v5254
      %v5256 = vpop.f32.mrb[0].mxu0
      %v5257 = vpop.f32.mrb[0].mxu0
      %v5258 = vpop.f32.mrb[0].mxu0
      %5259 = vdwg.mxu0
      %5260 = vmatprep.subr.bf16.mxu0 0
      %5261 = vmatpush1.bf16.msra.mxu0 %v3597
      %5262 = vmatprep.subr.bf16.mxu0 0
      %5263 = vmatpush1.bf16.msra.mxu0 %v3600
      %5264 = vmatprep.subr.bf16.mxu0 0
      %5265 = vmatpush1.bf16.msra.mxu0 %v3603
      %5266 = vmatprep.subr.bf16.mxu0 0
      %5267 = vmatpush1.bf16.msra.mxu0 %v3606
      %5268 = vmatprep.subr.bf16.mxu0 0
      %5269 = vmatpush1.bf16.msra.mxu0 %v3609
      %5270 = vmatprep.subr.bf16.mxu0 0
      %5271 = vmatpush1.bf16.msra.mxu0 %v3612
      %5272 = vmatprep.subr.bf16.mxu0 0
      %5273 = vmatpush1.bf16.msra.mxu0 %v3615
      %5274 = vmatprep.subr.bf16.mxu0 0
      %5275 = vmatpush1.bf16.msra.mxu0 %v3618
      %5276 = vmatprep.subr.bf16.mxu0 0
      %5277 = vmatpush1.bf16.msra.mxu0 %v3621
      %5278 = vmatprep.subr.bf16.mxu0 0
      %5279 = vmatpush1.bf16.msra.mxu0 %v3624
      %5280 = vmatprep.subr.bf16.mxu0 0
      %5281 = vmatpush1.bf16.msra.mxu0 %v3627
      %5282 = vmatprep.subr.bf16.mxu0 0
      %5283 = vmatpush1.bf16.msra.mxu0 %v3630
      %5284 = vmatprep.subr.bf16.mxu0 0
      %5285 = vmatpush1.bf16.msra.mxu0 %v3633
      %5286 = vmatprep.subr.bf16.mxu0 0
      %5287 = vmatpush1.bf16.msra.mxu0 %v3636
      %5288 = vmatprep.subr.bf16.mxu0 0
      %5289 = vmatpush1.bf16.msra.mxu0 %v3639
      %5290 = vmatprep.subr.bf16.mxu0 0
      %5291 = vmatpush1.bf16.msra.mxu0 %v3642
      %5292 = vmatprep.mubr.bf16.mxu0 %v1201
      %5293 = vmatmul.mubr.bf16.gmra.mrb[0].mxu0 %v1187
      %v5294 = vpop.f32.mrb[0].mxu0
      %v5295 = vadd.f32 %v5255, %v5294
      %v5296 = vpop.f32.mrb[0].mxu0
      %v5297 = vpop.f32.mrb[0].mxu0
      %v5298 = vpop.f32.mrb[0].mxu0
      %5299 = vdwg.mxu0
      %5300 = vmatprep.subr.bf16.mxu0 0
      %5301 = vmatpush1.bf16.msra.mxu0 %v3645
      %5302 = vmatprep.subr.bf16.mxu0 0
      %5303 = vmatpush1.bf16.msra.mxu0 %v3648
      %5304 = vmatprep.subr.bf16.mxu0 0
      %5305 = vmatpush1.bf16.msra.mxu0 %v3651
      %5306 = vmatprep.subr.bf16.mxu0 0
      %5307 = vmatpush1.bf16.msra.mxu0 %v3654
      %5308 = vmatprep.subr.bf16.mxu0 0
      %5309 = vmatpush1.bf16.msra.mxu0 %v3657
      %5310 = vmatprep.subr.bf16.mxu0 0
      %5311 = vmatpush1.bf16.msra.mxu0 %v3660
      %5312 = vmatprep.subr.bf16.mxu0 0
      %5313 = vmatpush1.bf16.msra.mxu0 %v3663
      %5314 = vmatprep.subr.bf16.mxu0 0
      %5315 = vmatpush1.bf16.msra.mxu0 %v3666
      %5316 = vmatprep.subr.bf16.mxu0 0
      %5317 = vmatpush1.bf16.msra.mxu0 %v3669
      %5318 = vmatprep.subr.bf16.mxu0 0
      %5319 = vmatpush1.bf16.msra.mxu0 %v3672
      %5320 = vmatprep.subr.bf16.mxu0 0
      %5321 = vmatpush1.bf16.msra.mxu0 %v3675
      %5322 = vmatprep.subr.bf16.mxu0 0
      %5323 = vmatpush1.bf16.msra.mxu0 %v3678
      %5324 = vmatprep.subr.bf16.mxu0 0
      %5325 = vmatpush1.bf16.msra.mxu0 %v3681
      %5326 = vmatprep.subr.bf16.mxu0 0
      %5327 = vmatpush1.bf16.msra.mxu0 %v3684
      %5328 = vmatprep.subr.bf16.mxu0 0
      %5329 = vmatpush1.bf16.msra.mxu0 %v3687
      %5330 = vmatprep.subr.bf16.mxu0 0
      %5331 = vmatpush1.bf16.msra.mxu0 %v3690
      %5332 = vmatprep.mubr.bf16.mxu0 %v1211
      %5333 = vmatmul.mubr.bf16.gmra.mrb[0].mxu0 %v1209
      %v5334 = vpop.f32.mrb[0].mxu0
      %v5335 = vadd.f32 %v5295, %v5334
      %v5336 = vpop.f32.mrb[0].mxu0
      %v5337 = vpop.f32.mrb[0].mxu0
      %v5338 = vpop.f32.mrb[0].mxu0
      %5339 = vdwg.mxu0
      %5340 = vmatprep.subr.bf16.mxu0 0
      %5341 = vmatpush1.bf16.msra.mxu0 %v3693
      %5342 = vmatprep.subr.bf16.mxu0 0
      %5343 = vmatpush1.bf16.msra.mxu0 %v3696
      %5344 = vmatprep.subr.bf16.mxu0 0
      %5345 = vmatpush1.bf16.msra.mxu0 %v3699
      %5346 = vmatprep.subr.bf16.mxu0 0
      %5347 = vmatpush1.bf16.msra.mxu0 %v3702
      %5348 = vmatprep.subr.bf16.mxu0 0
      %5349 = vmatpush1.bf16.msra.mxu0 %v3705
      %5350 = vmatprep.subr.bf16.mxu0 0
      %5351 = vmatpush1.bf16.msra.mxu0 %v3708
      %5352 = vmatprep.subr.bf16.mxu0 0
      %5353 = vmatpush1.bf16.msra.mxu0 %v3711
      %5354 = vmatprep.subr.bf16.mxu0 0
      %5355 = vmatpush1.bf16.msra.mxu0 %v3714
      %5356 = vmatprep.subr.bf16.mxu0 0
      %5357 = vmatpush1.bf16.msra.mxu0 %v3717
      %5358 = vmatprep.subr.bf16.mxu0 0
      %5359 = vmatpush1.bf16.msra.mxu0 %v3720
      %5360 = vmatprep.subr.bf16.mxu0 0
      %5361 = vmatpush1.bf16.msra.mxu0 %v3723
      %5362 = vmatprep.subr.bf16.mxu0 0
      %5363 = vmatpush1.bf16.msra.mxu0 %v3726
      %5364 = vmatprep.subr.bf16.mxu0 0
      %5365 = vmatpush1.bf16.msra.mxu0 %v3729
      %5366 = vmatprep.subr.bf16.mxu0 0
      %5367 = vmatpush1.bf16.msra.mxu0 %v3732
      %5368 = vmatprep.subr.bf16.mxu0 0
      %5369 = vmatpush1.bf16.msra.mxu0 %v3735
      %5370 = vmatprep.subr.bf16.mxu0 0
      %5371 = vmatpush1.bf16.msra.mxu0 %v3738
      %5372 = vmatprep.mubr.bf16.mxu0 %v1208
      %5373 = vmatmul.mubr.bf16.gmra.mrb[0].mxu0 %v1194
      %v5374 = vpop.f32.mrb[0].mxu0
      %v5375 = vadd.f32 %v5335, %v5374
      %v5376 = vpop.f32.mrb[0].mxu0
      %v5377 = vpop.f32.mrb[0].mxu0
      %v5378 = vpop.f32.mrb[0].mxu0
      %5379 = vdwg.mxu0
      %5380 = vmatprep.subr.bf16.mxu0 0
      %5381 = vmatpush1.bf16.msra.mxu0 %v3741
      %5382 = vmatprep.subr.bf16.mxu0 0
      %5383 = vmatpush1.bf16.msra.mxu0 %v3744
      %5384 = vmatprep.subr.bf16.mxu0 0
      %5385 = vmatpush1.bf16.msra.mxu0 %v3747
      %5386 = vmatprep.subr.bf16.mxu0 0
      %5387 = vmatpush1.bf16.msra.mxu0 %v3750
      %5388 = vmatprep.subr.bf16.mxu0 0
      %5389 = vmatpush1.bf16.msra.mxu0 %v3753
      %5390 = vmatprep.subr.bf16.mxu0 0
      %5391 = vmatpush1.bf16.msra.mxu0 %v3756
      %5392 = vmatprep.subr.bf16.mxu0 0
      %5393 = vmatpush1.bf16.msra.mxu0 %v3759
      %5394 = vmatprep.subr.bf16.mxu0 0
      %5395 = vmatpush1.bf16.msra.mxu0 %v3762
      %5396 = vmatprep.subr.bf16.mxu0 0
      %5397 = vmatpush1.bf16.msra.mxu0 %v3765
      %5398 = vmatprep.subr.bf16.mxu0 0
      %5399 = vmatpush1.bf16.msra.mxu0 %v3768
      %5400 = vmatprep.subr.bf16.mxu0 0
      %5401 = vmatpush1.bf16.msra.mxu0 %v3771
      %5402 = vmatprep.subr.bf16.mxu0 0
      %5403 = vmatpush1.bf16.msra.mxu0 %v3774
      %5404 = vmatprep.subr.bf16.mxu0 0
      %5405 = vmatpush1.bf16.msra.mxu0 %v3777
      %5406 = vmatprep.subr.bf16.mxu0 0
      %5407 = vmatpush1.bf16.msra.mxu0 %v3780
      %5408 = vmatprep.subr.bf16.mxu0 0
      %5409 = vmatpush1.bf16.msra.mxu0 %v3783
      %5410 = vmatprep.subr.bf16.mxu0 0
      %5411 = vmatpush1.bf16.msra.mxu0 %v3786
      %5412 = vmatprep.mubr.bf16.mxu0 %v1212
      %5413 = vmatmul.mubr.bf16.gmra.mrb[0].mxu0 %v1210
      %v5414 = vpop.f32.mrb[0].mxu0
      %v5415 = vadd.f32 %v5375, %v5414
      %v5416 = vpop.f32.mrb[0].mxu0
      %v5417 = vpop.f32.mrb[0].mxu0
      %v5418 = vpop.f32.mrb[0].mxu0
      %5419 = vdwg.mxu0
      %5420 = vmatprep.subr.bf16.mxu0 0
      %5421 = vmatpush1.bf16.msra.mxu0 %v3789
      %5422 = vmatprep.subr.bf16.mxu0 0
      %5423 = vmatpush1.bf16.msra.mxu0 %v3792
      %5424 = vmatprep.subr.bf16.mxu0 0
      %5425 = vmatpush1.bf16.msra.mxu0 %v3795
      %5426 = vmatprep.subr.bf16.mxu0 0
      %5427 = vmatpush1.bf16.msra.mxu0 %v3798
      %5428 = vmatprep.subr.bf16.mxu0 0
      %5429 = vmatpush1.bf16.msra.mxu0 0
      %5430 = vmatprep.subr.bf16.mxu0 0
      %5431 = vmatpush1.bf16.msra.mxu0 0
      %5432 = vmatprep.subr.bf16.mxu0 0
      %5433 = vmatpush1.bf16.msra.mxu0 0
      %5434 = vmatprep.subr.bf16.mxu0 0
      %5435 = vmatpush1.bf16.msra.mxu0 0
      %5436 = vmatprep.subr.bf16.mxu0 0
      %5437 = vmatpush1.bf16.msra.mxu0 0
      %5438 = vmatprep.subr.bf16.mxu0 0
      %5439 = vmatpush1.bf16.msra.mxu0 0
      %5440 = vmatprep.subr.bf16.mxu0 0
      %5441 = vmatpush1.bf16.msra.mxu0 0
      %5442 = vmatprep.subr.bf16.mxu0 0
      %5443 = vmatpush1.bf16.msra.mxu0 0
      %5444 = vmatprep.subr.bf16.mxu0 0
      %5445 = vmatpush1.bf16.msra.mxu0 0
      %5446 = vmatprep.subr.bf16.mxu0 0
      %5447 = vmatpush1.bf16.msra.mxu0 0
      %5448 = vmatprep.subr.bf16.mxu0 0
      %5449 = vmatpush1.bf16.msra.mxu0 0
      %5450 = vmatprep.subr.bf16.mxu0 0
      %5451 = vmatpush1.bf16.msra.mxu0 0
      %5452 = vmatprep.mubr.bf16.mxu0 0
      %5453 = vmatmul.mubr.bf16.gmra.mrb[0].mxu0 %v4405
      %v5454 = vpop.f32.mrb[0].mxu0
      %v5455 = vadd.f32 %v5415, %v5454
      %v5456 = vpop.f32.mrb[0].mxu0
      %v5457 = vpop.f32.mrb[0].mxu0
      %v5458 = vpop.f32.mrb[0].mxu0
      %5459 = vdwg.mxu0
      %v5460 = vmul.f32 %v4934, 0.01
      %v5461 = vmul.f32 %v4936, 0.01
      %v5462 = vmul.f32 %v5455, 0.01
      %v5463 = vmax.f32 %v4934, %v5460
      %v5464 = vmax.f32 %v4936, %v5461
      %v5465 = vmax.f32 %v5455, %v5462
      %v5466 = vpack.c.bf16 %v5463, %v5463
      %v5467 = vpack.c.bf16 %v5464, %v5464
      %v5468 = vpack.c.bf16 %v5465, %v5465
      %v5469 = vld [vmem:[%s265] sm:$0xf]
      %v5470 = vld [vmem:[%s265 + $0x4] sm:$0xf]
      %v5471 = vld [vmem:[%s265 + $0x8] sm:$0xf]
      %v5472 = vld [vmem:[%s265 + $0xc] sm:$0xf]
      %v5473 = vld [vmem:[%s265 + $0x10] sm:$0xf]
      %v5474 = vld [vmem:[%s265 + $0x14] sm:$0xf]
      %v5475 = vld [vmem:[%s265 + $0x18] sm:$0xf]
      %v5476 = vld [vmem:[%s265 + $0x1c] sm:$0xf]
      %v5477 = vld [vmem:[%s265 + $0x20] sm:$0xf]
      %v5478 = vld [vmem:[%s265 + $0x24] sm:$0xf]
      %v5479 = vld [vmem:[%s265 + $0x28] sm:$0xf]
      %v5480 = vld [vmem:[%s265 + $0x2c] sm:$0xf]
      %v5481 = vld [vmem:[%s265 + $0x30] sm:$0xf]
      %v5482 = vld [vmem:[%s265 + $0x34] sm:$0xf]
      %v5483 = vld [vmem:[%s265 + $0x38] sm:$0xf]
      %v5484 = vld [vmem:[%s265 + $0x3c] sm:$0xf]
      %v5485 = vld [vmem:[%s265 + $0x40] sm:$0xf]
      %v5486 = vld [vmem:[%s265 + $0x44] sm:$0xf]
      %v5487 = vld [vmem:[%s265 + $0x48] sm:$0xf]
      %v5488 = vld [vmem:[%s265 + $0x4c] sm:$0xf]
      %v5489 = vld [vmem:[%s265 + $0x50] sm:$0xf]
      %v5490 = vld [vmem:[%s265 + $0x54] sm:$0xf]
      %v5491 = vld [vmem:[%s265 + $0x58] sm:$0xf]
      %v5492 = vld [vmem:[%s265 + $0x5c] sm:$0xf]
      %v5493 = vld [vmem:[%s265 + $0x60] sm:$0xf]
      %v5494 = vld [vmem:[%s265 + $0x64] sm:$0xf]
      %v5495 = vld [vmem:[%s265 + $0x68] sm:$0xf]
      %v5496 = vld [vmem:[%s265 + $0x6c] sm:$0xf]
      %v5497 = vld [vmem:[%s265 + $0x70] sm:$0xf]
      %v5498 = vld [vmem:[%s265 + $0x74] sm:$0xf]
      %v5499 = vld [vmem:[%s265 + $0x78] sm:$0xf]
      %v5500 = vld [vmem:[%s265 + $0x7c] sm:$0xf]
      %v5501 = vld [vmem:[%s265 + $0x80] sm:$0xf]
      %v5502 = vld [vmem:[%s265 + $0x84] sm:$0xf]
      %v5503 = vld [vmem:[%s265 + $0x88] sm:$0xf]
      %v5504 = vld [vmem:[%s265 + $0x8c] sm:$0xf]
      %v5505 = vld [vmem:[%s265 + $0x90] sm:$0xf]
      %v5506 = vld [vmem:[%s265 + $0x94] sm:$0xf]
      %v5507 = vld [vmem:[%s265 + $0x98] sm:$0xf]
      %v5508 = vld [vmem:[%s265 + $0x9c] sm:$0xf]
      %v5509 = vld [vmem:[%s265 + $0xa0] sm:$0xf]
      %v5510 = vld [vmem:[%s265 + $0xa4] sm:$0xf]
      %v5511 = vld [vmem:[%s265 + $0xa8] sm:$0xf]
      %v5512 = vld [vmem:[%s265 + $0xac] sm:$0xf]
      %v5513 = vld [vmem:[%s265 + $0xb0] sm:$0xf]
      %v5514 = vld [vmem:[%s265 + $0xb4] sm:$0xf]
      %v5515 = vld [vmem:[%s265 + $0xb8] sm:$0xf]
      %v5516 = vld [vmem:[%s265 + $0xbc] sm:$0xf]
      %v5517 = vld [vmem:[%s268] sm:$0x1]
      %v5566 = vunpack.c.l.b16 %v5469
      %v5567 = vunpack.c.l.b16 %v5470
      %v5568 = vunpack.c.l.b16 %v5471
      %v5569 = vunpack.c.l.b16 %v5472
      %v5570 = vunpack.c.l.b16 %v5473
      %v5571 = vunpack.c.l.b16 %v5474
      %v5572 = vunpack.c.l.b16 %v5475
      %v5573 = vunpack.c.l.b16 %v5476
      %v5574 = vunpack.c.l.b16 %v5477
      %v5575 = vunpack.c.l.b16 %v5478
      %v5576 = vunpack.c.l.b16 %v5479
      %v5577 = vunpack.c.l.b16 %v5480
      %v5578 = vunpack.c.l.b16 %v5481
      %v5579 = vunpack.c.l.b16 %v5482
      %v5580 = vunpack.c.l.b16 %v5483
      %v5581 = vunpack.c.l.b16 %v5484
      %v5582 = vunpack.c.l.b16 %v5485
      %v5583 = vunpack.c.l.b16 %v5486
      %v5584 = vunpack.c.l.b16 %v5487
      %v5585 = vunpack.c.l.b16 %v5488
      %v5586 = vunpack.c.l.b16 %v5489
      %v5587 = vunpack.c.l.b16 %v5490
      %v5588 = vunpack.c.l.b16 %v5491
      %v5589 = vunpack.c.l.b16 %v5492
      %v5590 = vunpack.c.l.b16 %v5493
      %v5591 = vunpack.c.l.b16 %v5494
      %v5592 = vunpack.c.l.b16 %v5495
      %v5593 = vunpack.c.l.b16 %v5496
      %v5594 = vunpack.c.l.b16 %v5497
      %v5595 = vunpack.c.l.b16 %v5498
      %v5596 = vunpack.c.l.b16 %v5499
      %v5597 = vunpack.c.l.b16 %v5500
      %v5598 = vunpack.c.l.b16 %v5501
      %v5599 = vunpack.c.l.b16 %v5502
      %v5600 = vunpack.c.l.b16 %v5503
      %v5601 = vunpack.c.l.b16 %v5504
      %v5602 = vunpack.c.l.b16 %v5505
      %v5603 = vunpack.c.l.b16 %v5506
      %v5604 = vunpack.c.l.b16 %v5507
      %v5605 = vunpack.c.l.b16 %v5508
      %v5606 = vunpack.c.l.b16 %v5509
      %v5607 = vunpack.c.l.b16 %v5510
      %v5608 = vunpack.c.l.b16 %v5511
      %v5609 = vunpack.c.l.b16 %v5512
      %v5610 = vunpack.c.l.b16 %v5513
      %v5611 = vunpack.c.l.b16 %v5514
      %v5612 = vunpack.c.l.b16 %v5515
      %v5613 = vunpack.c.l.b16 %v5516
      %v5614 = vpack.c.b16 %v5567, %v5566
      %v5615 = vpack.c.b16 %v5569, %v5568
      %v5616 = vpack.c.b16 %v5571, %v5570
      %v5617 = vpack.c.b16 %v5573, %v5572
      %v5618 = vpack.c.b16 %v5575, %v5574
      %v5619 = vpack.c.b16 %v5577, %v5576
      %v5620 = vpack.c.b16 %v5579, %v5578
      %v5621 = vpack.c.b16 %v5581, %v5580
      %v5622 = vpack.c.b16 %v5583, %v5582
      %v5623 = vpack.c.b16 %v5585, %v5584
      %v5624 = vpack.c.b16 %v5587, %v5586
      %v5625 = vpack.c.b16 %v5589, %v5588
      %v5626 = vpack.c.b16 %v5591, %v5590
      %v5627 = vpack.c.b16 %v5593, %v5592
      %v5628 = vpack.c.b16 %v5595, %v5594
      %v5629 = vpack.c.b16 %v5597, %v5596
      %v5630 = vpack.c.b16 %v5599, %v5598
      %v5631 = vpack.c.b16 %v5601, %v5600
      %v5632 = vpack.c.b16 %v5603, %v5602
      %v5633 = vpack.c.b16 %v5605, %v5604
      %v5634 = vpack.c.b16 %v5607, %v5606
      %v5635 = vpack.c.b16 %v5609, %v5608
      %v5636 = vpack.c.b16 %v5611, %v5610
      %v5637 = vpack.c.b16 %v5613, %v5612
      %5662 = vmatprep.subr.bf16.mxu0 0
      %5663 = vmatpush1.bf16.msra.mxu0 %v5614
      %5664 = vmatprep.subr.bf16.mxu0 0
      %5665 = vmatpush1.bf16.msra.mxu0 %v5615
      %5666 = vmatprep.subr.bf16.mxu0 0
      %5667 = vmatpush1.bf16.msra.mxu0 %v5616
      %5668 = vmatprep.subr.bf16.mxu0 0
      %5669 = vmatpush1.bf16.msra.mxu0 %v5617
      %5670 = vmatprep.subr.bf16.mxu0 0
      %5671 = vmatpush1.bf16.msra.mxu0 %v5618
      %5672 = vmatprep.subr.bf16.mxu0 0
      %5673 = vmatpush1.bf16.msra.mxu0 %v5619
      %5674 = vmatprep.subr.bf16.mxu0 0
      %5675 = vmatpush1.bf16.msra.mxu0 %v5620
      %5676 = vmatprep.subr.bf16.mxu0 0
      %5677 = vmatpush1.bf16.msra.mxu0 %v5621
      %5678 = vmatprep.subr.bf16.mxu0 0
      %5679 = vmatpush1.bf16.msra.mxu0 %v5622
      %5680 = vmatprep.subr.bf16.mxu0 0
      %5681 = vmatpush1.bf16.msra.mxu0 %v5623
      %5682 = vmatprep.subr.bf16.mxu0 0
      %5683 = vmatpush1.bf16.msra.mxu0 %v5624
      %5684 = vmatprep.subr.bf16.mxu0 0
      %5685 = vmatpush1.bf16.msra.mxu0 %v5625
      %5686 = vmatprep.subr.bf16.mxu0 0
      %5687 = vmatpush1.bf16.msra.mxu0 %v5626
      %5688 = vmatprep.subr.bf16.mxu0 0
      %5689 = vmatpush1.bf16.msra.mxu0 %v5627
      %5690 = vmatprep.subr.bf16.mxu0 0
      %5691 = vmatpush1.bf16.msra.mxu0 %v5628
      %5692 = vmatprep.subr.bf16.mxu0 0
      %5693 = vmatpush1.bf16.msra.mxu0 %v5629
      %5694 = vmatprep.mubr.bf16.mxu0 %v5467
      %5695 = vmatmul.mubr.bf16.gmra.mrb[0].mxu0 %v5466
      %v5696 = vpop.f32.mrb[0].mxu0
      %v5697 = vadd.f32 %v5517, %v5696
      %v5698 = vpop.f32.mrb[0].mxu0
      %v5699 = vpop.f32.mrb[0].mxu0
      %v5700 = vpop.f32.mrb[0].mxu0
      %5701 = vdwg.mxu0
      %5702 = vmatprep.subr.bf16.mxu0 0
      %5703 = vmatpush1.bf16.msra.mxu0 %v5630
      %5704 = vmatprep.subr.bf16.mxu0 0
      %5705 = vmatpush1.bf16.msra.mxu0 %v5631
      %5706 = vmatprep.subr.bf16.mxu0 0
      %5707 = vmatpush1.bf16.msra.mxu0 %v5632
      %5708 = vmatprep.subr.bf16.mxu0 0
      %5709 = vmatpush1.bf16.msra.mxu0 %v5633
      %5710 = vmatprep.subr.bf16.mxu0 0
      %5711 = vmatpush1.bf16.msra.mxu0 %v5634
      %5712 = vmatprep.subr.bf16.mxu0 0
      %5713 = vmatpush1.bf16.msra.mxu0 %v5635
      %5714 = vmatprep.subr.bf16.mxu0 0
      %5715 = vmatpush1.bf16.msra.mxu0 %v5636
      %5716 = vmatprep.subr.bf16.mxu0 0
      %5717 = vmatpush1.bf16.msra.mxu0 %v5637
      %5718 = vmatprep.subr.bf16.mxu0 0
      %5719 = vmatpush1.bf16.msra.mxu0 0
      %5720 = vmatprep.subr.bf16.mxu0 0
      %5721 = vmatpush1.bf16.msra.mxu0 0
      %5722 = vmatprep.subr.bf16.mxu0 0
      %5723 = vmatpush1.bf16.msra.mxu0 0
      %5724 = vmatprep.subr.bf16.mxu0 0
      %5725 = vmatpush1.bf16.msra.mxu0 0
      %5726 = vmatprep.subr.bf16.mxu0 0
      %5727 = vmatpush1.bf16.msra.mxu0 0
      %5728 = vmatprep.subr.bf16.mxu0 0
      %5729 = vmatpush1.bf16.msra.mxu0 0
      %5730 = vmatprep.subr.bf16.mxu0 0
      %5731 = vmatpush1.bf16.msra.mxu0 0
      %5732 = vmatprep.subr.bf16.mxu0 0
      %5733 = vmatpush1.bf16.msra.mxu0 0
      %5734 = vmatprep.mubr.bf16.mxu0 0
      %5735 = vmatmul.mubr.bf16.gmra.mrb[0].mxu0 %v5468
      %v5736 = vpop.f32.mrb[0].mxu0
      %v5737 = vadd.f32 %v5697, %v5736
      %v5738 = vpop.f32.mrb[0].mxu0
      %v5739 = vpop.f32.mrb[0].mxu0
      %v5740 = vpop.f32.mrb[0].mxu0
      %5741 = vdwg.mxu0
      %5742 = vst [vmem:[%s271] sm:$0x1] %v5737
      %p5743 = scmp.lt.s32.totalorder %s16, 1
      %s5744 = scalar_select %p5743, %s16, 1
      %s5745 = scalar_lea.vmem %s5, %s5744
      // Predicated region
      $region41: #{a2c_forward.7} parent=39 // pred_check
        %p5746 = pneg %p159
      $region42: #{a2c_forward.7} parent=39 // pred_check_branch
        %5748 = sbr.rel (%p5746) target = $region44
      $region43: #{a2c_forward.7} parent=39 // pred_region
        _
      $region44: #{a2c_forward.7} parent=39 // pred_fallthru
        _
    $region40: #{a2c_forward.7} parent=5 // pred_fallthru
      _
    %p5749 = scmp.le.s32.totalorder 2, %s11
    // Predicated region
    $region45: #{a2c_forward.7} parent=5 // pred_check
      %p5750 = pneg %p5749
    $region46: #{a2c_forward.7} parent=5 // pred_check_branch
      %5752 = sbr.rel (%p5750) target = $region48
    $region47: #{a2c_forward.7} parent=5 // pred_region
      %s5753 = ssub.s32 %s11, 2
      // Predicated region
      $region49: #{a2c_forward.7} parent=47 // pred_check
        %p5754 = pneg %p165
      $region50: #{a2c_forward.7} parent=47 // pred_check_branch
        %5756 = sbr.rel (%p5754) target = $region52
      $region51: #{a2c_forward.7} parent=47 // pred_region
        %p5757 = scmp.lt.s32.totalorder %s17, 1
        %s5758 = scalar_select %p5757, %s17, 1
        %s5759 = scalar_lea.vmem %s5, %s5758
      $region52: #{a2c_forward.7} parent=47 // pred_fallthru
        _
    $region48: #{a2c_forward.7} parent=5 // pred_fallthru
      _
  $region6: #{a2c_forward.7} parent=0 // loop_footer
    %s15 = sadd.s32 1, %s11
  $region7: #{a2c_forward.7} parent=0 // loop_footer_branch
    %10 = sbr.rel target = $region3
  $region8: #{a2c_forward.7} parent=0 // loop_exit
    _

</llo_original>
